<compile_context>
chip_gen: v6e
topology: v6e:2x2x1
jax: 0.10.0
libtpu: 0.0.40
codegen_flags: <defaults>
</compile_context>

<pallas_src>
import functools

import jax
import jax.numpy as jnp
from jax.experimental import pallas as pl
from jax.experimental.pallas import tpu as pltpu


def _decoder_layer_kernel(
    # inputs (one batch-block per grid step)
    tgt_ref, mem_ref, qpos_ref, pos_ref,
    # self-attention params
    sa_w_ref, sa_b_ref, sa_ow_ref, sa_ob_ref,
    # cross-attention params
    ca_w_ref, ca_b_ref, ca_ow_ref, ca_ob_ref,
    # layernorm params
    ln1_g_ref, ln1_b_ref, ln2_g_ref, ln2_b_ref, ln3_g_ref, ln3_b_ref,
    # mlp params
    w1_ref, b1_ref, w2_ref, b2_ref,
    # output
    out_ref,
    *, nhead,
):
    f32 = jnp.float32
    bf16 = jnp.bfloat16

    Bblk, T, D = tgt_ref.shape
    S = mem_ref.shape[1]
    hd = D // nhead
    scale = 1.0 / float(hd) ** 0.5
    NT = Bblk * T
    NS = Bblk * S

    # Flatten the batch-block into the matmul M dimension (leading-dim merge,
    # layout-preserving).  All elementwise / LN math in f32.
    tgt = tgt_ref[...].astype(f32).reshape(NT, D)
    qpos = qpos_ref[...].astype(f32).reshape(NT, D)
    mem = mem_ref[...].astype(f32).reshape(NS, D)
    pos = pos_ref[...].astype(f32).reshape(NS, D)

    def add_layer_norm(y, g_ref, b_ref):
        # fused residual-add + two-pass LayerNorm (eps = torch 1e-5)
        mu = jnp.mean(y, axis=-1, keepdims=True)
        yc = y - mu
        var = jnp.mean(yc * yc, axis=-1, keepdims=True)
        return yc * jax.lax.rsqrt(var + 1e-5) * g_ref[...] + b_ref[...]

    def split_heads(x3):
        # (Bblk, n, D) -> (nhead*Bblk, n, hd), head-major along the batch axis.
        # Static lane slices + a major-axis concat: pure relayout (copy/XLU),
        # no MXU involvement.
        return jnp.concatenate(
            [x3[:, :, h * hd:(h + 1) * hd] for h in range(nhead)], axis=0)

    def merge_heads(x3, n):
        # (nhead*Bblk, n, hd) -> (Bblk*n, D), inverse relayout of split_heads.
        merged = jnp.concatenate(
            [x3[h * Bblk:(h + 1) * Bblk] for h in range(nhead)], axis=-1)
        return merged.reshape(Bblk * n, D)

    def mha(q_in, k_in, v_in, n_q, n_k,
            in_w_ref, in_b_ref, out_w_ref, out_b_ref, fuse_qk):
        in_w = in_w_ref[...]       # (D, 3D)  bf16
        in_b = in_b_ref[...]       # (1, 3D)  f32

        if fuse_qk:
            # q_in is k_in: one (NT, D) x (D, 2D) matmul projects both Q and K.
            qk = jnp.dot(q_in.astype(bf16), in_w[:, :2 * D],
                         preferred_element_type=f32) + in_b[:, :2 * D]
            q, k = qk[:, :D], qk[:, D:]
        else:
            q = jnp.dot(q_in.astype(bf16), in_w[:, :D],
                        preferred_element_type=f32) + in_b[:, :D]
            k = jnp.dot(k_in.astype(bf16), in_w[:, D:2 * D],
                        preferred_element_type=f32) + in_b[:, D:2 * D]
        v = jnp.dot(v_in.astype(bf16), in_w[:, 2 * D:],
                    preferred_element_type=f32) + in_b[:, 2 * D:]

        # scale applied once on projected Q (hoisted out of attention math).
        q = (q * scale).astype(bf16).reshape(Bblk, n_q, D)
        k = k.astype(bf16).reshape(Bblk, n_k, D)
        v = v.astype(bf16).reshape(Bblk, n_k, D)

        qh = split_heads(q)        # (H*Bblk, n_q, hd)
        kh = split_heads(k)        # (H*Bblk, n_k, hd)
        vh = split_heads(v)        # (H*Bblk, n_k, hd)

        # All heads and batch elements in ONE batched score / context matmul.
        s = jnp.einsum('btd,bsd->bts', qh, kh,
                       preferred_element_type=f32)       # (H*Bblk, n_q, n_k)
        s = s - jnp.max(s, axis=-1, keepdims=True)
        p = jnp.exp(s)
        # TODO(synk): for very large S on v5e, block the softmax over S so the
        # single (f32-only) EUP doesn't become the binding slot.
        p = p * pl.reciprocal(jnp.sum(p, axis=-1, keepdims=True), approx=True)
        ctx = jnp.einsum('bts,bsd->btd', p.astype(bf16), vh,
                         preferred_element_type=f32).astype(bf16)

        # One full-contraction (K=D) output projection over the merged heads.
        ctx_m = merge_heads(ctx, n_q)                    # (Bblk*n_q, D) bf16
        return jnp.dot(ctx_m, out_w_ref[...],
                       preferred_element_type=f32) + out_b_ref[...]

    # ---- self attention block ----
    qk_in = tgt + qpos
    x = mha(qk_in, qk_in, tgt, T, T,
            sa_w_ref, sa_b_ref, sa_ow_ref, sa_ob_ref, fuse_qk=True)
    t = add_layer_norm(tgt + x, ln1_g_ref, ln1_b_ref)

    # ---- cross attention block ----
    x = mha(t + qpos, mem + pos, mem, T, S,
            ca_w_ref, ca_b_ref, ca_ow_ref, ca_ob_ref, fuse_qk=False)
    t = add_layer_norm(t + x, ln2_g_ref, ln2_b_ref)

    # ---- MLP block (Linear -> ReLU -> Linear) ----
    h1 = jnp.dot(t.astype(bf16), w1_ref[...],
                 preferred_element_type=f32) + b1_ref[...]
    h1 = jnp.maximum(h1, 0.0)
    m = jnp.dot(h1.astype(bf16), w2_ref[...],
                preferred_element_type=f32) + b2_ref[...]
    t = add_layer_norm(t + m, ln3_g_ref, ln3_b_ref)

    out_ref[...] = t.reshape(Bblk, T, D).astype(out_ref.dtype)


def _device_kind():
    try:
        return jax.devices()[0].device_kind.lower()
    except Exception:
        return ""


def _pick_batch_block(B, T, two_tensorcores):
    """~512 rows per grid step for MXU M-dim fill and per-step-overhead
    amortization.  Only on dual-TensorCore parts (v7x) do we force >=2 grid
    steps so the 'parallel' batch axis can shard across cores; single-TC
    chips (v5e/v6e) get one large block."""
    bblk = max(1, min(B, 512 // max(T, 1)))
    if two_tensorcores and B >= 2:
        bblk = min(bblk, (B + 1) // 2)
    return bblk


def _build_in_specs(bblk, T, S, D, F, single_buffer_weights):
    def act_spec(seq_len):
        return pl.BlockSpec((bblk, seq_len, D), lambda b: (b, 0, 0))

    def w_spec(shape):
        idx = lambda b, _n=len(shape): (0,) * _n
        if single_buffer_weights:
            # Weight/bias blocks are grid-invariant: one VMEM buffer suffices,
            # halving their footprint (critical under v7x's 64 MiB VMEM).
            return pl.BlockSpec(shape, idx, pipeline_mode=pl.Buffered(1))
        return pl.BlockSpec(shape, idx)

    return [
        act_spec(T),                # tgt
        act_spec(S),                # memory
        act_spec(T),                # query_pos
        act_spec(S),                # pos
        w_spec((D, 3 * D)),         # sa in_proj W^T (bf16)
        w_spec((1, 3 * D)),         # sa in_proj b
        w_spec((D, D)),             # sa out_proj W^T (bf16)
        w_spec((1, D)),             # sa out_proj b
        w_spec((D, 3 * D)),         # ca in_proj W^T (bf16)
        w_spec((1, 3 * D)),         # ca in_proj b
        w_spec((D, D)),             # ca out_proj W^T (bf16)
        w_spec((1, D)),             # ca out_proj b
        w_spec((1, D)), w_spec((1, D)),   # ln1 gamma, beta
        w_spec((1, D)), w_spec((1, D)),   # ln2 gamma, beta
        w_spec((1, D)), w_spec((1, D)),   # ln3 gamma, beta
        w_spec((D, F)),             # mlp W1^T (bf16)
        w_spec((1, F)),             # mlp b1
        w_spec((F, D)),             # mlp W2^T (bf16)
        w_spec((1, D)),             # mlp b2
    ]


def _cost_estimate(B, T, S, D, F, nhead):
    flops = 0
    flops += 2 * B * T * D * 3 * D          # self-attn qkv projection
    flops += 2 * B * T * T * D * 2          # self-attn scores + context
    flops += 2 * B * T * D * D              # self-attn out projection
    flops += 2 * B * T * D * D              # cross-attn q projection
    flops += 2 * B * S * D * 2 * D          # cross-attn k/v projection
    flops += 2 * B * T * S * D * 2          # cross-attn scores + context
    flops += 2 * B * T * D * D              # cross-attn out projection
    flops += 2 * B * T * D * F * 2          # MLP
    transcendentals = B * nhead * (T * T + T * S) + 3 * B * T
    bytes_accessed = 4 * (2 * B * T * D + 2 * B * S * D + B * T * D)   # f32 acts in/out
    bytes_accessed += 2 * (2 * (D * 3 * D + D * D) + 2 * D * F)        # bf16 weights
    bytes_accessed += 4 * (2 * 4 * D + 6 * D + F + D)                  # f32 biases / LN
    return pl.CostEstimate(flops=int(flops),
                           transcendentals=int(transcendentals),
                           bytes_accessed=int(bytes_accessed))


def transformer_decoder_layer(tgt, memory, params, *, nhead,
                              query_pos=None, pos=None):
    """tgt: (B, T, D), memory: (B, S, D).  Returns (B, T, D)."""
    B, T, D = tgt.shape
    _, S, _ = memory.shape
    F = params["mlp_w1T"].shape[-1]

    if query_pos is None:
        query_pos = jnp.zeros_like(tgt)
    if pos is None:
        pos = jnp.zeros_like(memory)

    kind = _device_kind()
    is_v7 = ("v7" in kind) or ("7x" in kind)
    if is_v7:
        vmem_limit = 48 * 1024 * 1024       # headroom under the 64 MiB ceiling
    elif ("v5" in kind) or ("v6" in kind):
        vmem_limit = 96 * 1024 * 1024       # 128 MiB physical VMEM
    else:
        vmem_limit = None                   # unknown part: compiler default

    bblk = _pick_batch_block(B, T, two_tensorcores=is_v7)
    pad_b = (-B) % bblk
    if pad_b:
        # Pad B instead of shrinking bblk toward 1 for awkward batch sizes.
        pad3 = lambda x: jnp.pad(x, ((0, pad_b), (0, 0), (0, 0)))
        tgt_p, qpos_p, mem_p, pos_p = (pad3(tgt), pad3(query_pos),
                                       pad3(memory), pad3(pos))
    else:
        tgt_p, qpos_p, mem_p, pos_p = tgt, query_pos, memory, pos
    B_pad = B + pad_b
    grid = (B_pad // bblk,)

    # Weights should already be stored bf16 (see init_params); then this is a
    # no-op and no per-call convert / extra HBM round trip happens.
    _bf = lambda w: w if w.dtype == jnp.bfloat16 else w.astype(jnp.bfloat16)

    kernel = functools.partial(_decoder_layer_kernel, nhead=nhead)

    args = (
        tgt_p, mem_p, qpos_p, pos_p,
        _bf(params["sa_in_wT"]), params["sa_in_b"],
        _bf(params["sa_out_wT"]), params["sa_out_b"],
        _bf(params["ca_in_wT"]), params["ca_in_b"],
        _bf(params["ca_out_wT"]), params["ca_out_b"],
        params["ln1_g"], params["ln1_b"],
        params["ln2_g"], params["ln2_b"],
        params["ln3_g"], params["ln3_b"],
        _bf(params["mlp_w1T"]), params["mlp_b1"],
        _bf(params["mlp_w2T"]), params["mlp_b2"],
    )

    cost = _cost_estimate(B_pad, T, S, D, F, nhead)

    compiler_kwargs = dict(dimension_semantics=("parallel",))
    # TODO(synk): on v7x verify the batch axis actually shards across both
    # TensorCores; switch this axis to pltpu.CORE_PARALLEL if plain "parallel"
    # does not.
    if vmem_limit is not None:
        compiler_kwargs["vmem_limit_bytes"] = vmem_limit

    def run(single_buffer_weights):
        in_specs = _build_in_specs(bblk, T, S, D, F, single_buffer_weights)
        return pl.pallas_call(
            kernel,
            out_shape=jax.ShapeDtypeStruct((B_pad, T, D), tgt.dtype),
            grid_spec=pltpu.PrefetchScalarGridSpec(
                num_scalar_prefetch=0,
                grid=grid,
                in_specs=in_specs,
                out_specs=pl.BlockSpec((bblk, T, D), lambda b: (b, 0, 0)),
            ),
            compiler_params=pltpu.CompilerParams(**compiler_kwargs),
            cost_estimate=cost,
        )(*args)

    try:
        # Single-buffer the grid-invariant weight blocks.
        out = run(single_buffer_weights=True)
    except Exception:
        # pipeline_mode=pl.Buffered(1) not available on this jax/Mosaic
        # version; fall back to default double-buffered weight blocks.
        out = run(single_buffer_weights=False)

    return out[:B] if pad_b else out


def init_params(key, dmodel, dim_ff):
    """Deterministic synthetic parameters.  Linear weights are stored
    pre-transposed (in_features, out_features) so the kernel does x @ W^T,
    and are stored in bf16 once here (no per-call convert)."""
    ks = jax.random.split(key, 8)
    D, F = dmodel, dim_ff
    s = 0.02

    def nrm(k, shape, dtype=jnp.bfloat16):
        return (s * jax.random.normal(k, shape)).astype(dtype)

    params = {
        # MultiheadAttention in_proj_weight is (3D, D) in torch; store W^T=(D,3D)
        "sa_in_wT": nrm(ks[0], (D, 3 * D)),
        "sa_in_b": jnp.zeros((1, 3 * D), jnp.float32),
        "sa_out_wT": nrm(ks[1], (D, D)),
        "sa_out_b": jnp.zeros((1, D), jnp.float32),
        "ca_in_wT": nrm(ks[2], (D, 3 * D)),
        "ca_in_b": jnp.zeros((1, 3 * D), jnp.float32),
        "ca_out_wT": nrm(ks[3], (D, D)),
        "ca_out_b": jnp.zeros((1, D), jnp.float32),
        "ln1_g": jnp.ones((1, D), jnp.float32),
        "ln1_b": jnp.zeros((1, D), jnp.float32),
        "ln2_g": jnp.ones((1, D), jnp.float32),
        "ln2_b": jnp.zeros((1, D), jnp.float32),
        "ln3_g": jnp.ones((1, D), jnp.float32),
        "ln3_b": jnp.zeros((1, D), jnp.float32),
        "mlp_w1T": nrm(ks[4], (D, F)),
        "mlp_b1": nrm(ks[5], (1, F), jnp.float32),
        "mlp_w2T": nrm(ks[6], (F, D)),
        "mlp_b2": nrm(ks[7], (1, D), jnp.float32),
    }
    return params


if __name__ == "__main__":
    B, T, S = 2, 8, 16          # batch, tgt seq len, memory seq len
    D, H, F = 32, 4, 64         # dmodel, nhead, dim_ff
    # TODO(synk): for production shapes, pad T/S to sublane multiples and D to
    # a multiple of 128 (lane-dense output stores, unsliced head views); demo
    # keeps small shapes.

    key = jax.random.PRNGKey(0)
    k_tgt, k_mem, k_qpos, k_pos, k_par = jax.random.split(key, 5)

    tgt = jax.random.normal(k_tgt, (B, T, D), jnp.float32)
    memory = jax.random.normal(k_mem, (B, S, D), jnp.float32)
    query_pos = jax.random.normal(k_qpos, (B, T, D), jnp.float32)
    pos = jax.random.normal(k_pos, (B, S, D), jnp.float32)

    params = init_params(k_par, D, F)

    out = transformer_decoder_layer(
        tgt, memory, params, nhead=H, query_pos=query_pos, pos=pos)
    jax.block_until_ready(out)
    assert out.shape == (B, T, D)
    print("KERNEL_OK")
</pallas_src>

<mosaic_0001>
module attributes {stable_mosaic.version = 11 : i64} {
  func.func @_decoder_layer_kernel(%arg0: i32, %arg1: memref<2x8x32xf32, #tpu.memory_space<vmem>>, %arg2: memref<2x16x32xf32, #tpu.memory_space<vmem>>, %arg3: memref<2x8x32xf32, #tpu.memory_space<vmem>>, %arg4: memref<2x16x32xf32, #tpu.memory_space<vmem>>, %arg5: memref<32x96xbf16, #tpu.memory_space<vmem>>, %arg6: memref<1x96xf32, #tpu.memory_space<vmem>>, %arg7: memref<32x32xbf16, #tpu.memory_space<vmem>>, %arg8: memref<1x32xf32, #tpu.memory_space<vmem>>, %arg9: memref<32x96xbf16, #tpu.memory_space<vmem>>, %arg10: memref<1x96xf32, #tpu.memory_space<vmem>>, %arg11: memref<32x32xbf16, #tpu.memory_space<vmem>>, %arg12: memref<1x32xf32, #tpu.memory_space<vmem>>, %arg13: memref<1x32xf32, #tpu.memory_space<vmem>>, %arg14: memref<1x32xf32, #tpu.memory_space<vmem>>, %arg15: memref<1x32xf32, #tpu.memory_space<vmem>>, %arg16: memref<1x32xf32, #tpu.memory_space<vmem>>, %arg17: memref<1x32xf32, #tpu.memory_space<vmem>>, %arg18: memref<1x32xf32, #tpu.memory_space<vmem>>, %arg19: memref<32x64xbf16, #tpu.memory_space<vmem>>, %arg20: memref<1x64xf32, #tpu.memory_space<vmem>>, %arg21: memref<64x32xbf16, #tpu.memory_space<vmem>>, %arg22: memref<1x32xf32, #tpu.memory_space<vmem>>, %arg23: memref<2x8x32xf32, #tpu.memory_space<vmem>>) attributes {dimension_semantics = [#tpu.dimension_semantics<parallel>], iteration_bounds = array<i64: 1>, scalar_prefetch = 0 : i64, scratch_operands = 0 : i64, tpu.core_type = #tpu.core_type<tc>, window_params = [{transform_indices = @transform_0, window_bounds = array<i64: 2, 8, 32>}, {transform_indices = @transform_1, window_bounds = array<i64: 2, 16, 32>}, {transform_indices = @transform_2, window_bounds = array<i64: 2, 8, 32>}, {transform_indices = @transform_3, window_bounds = array<i64: 2, 16, 32>}, {pipeline_mode = #tpu.pipeline_mode<synchronous>, transform_indices = @transform_4, window_bounds = array<i64: 32, 96>}, {pipeline_mode = #tpu.pipeline_mode<synchronous>, transform_indices = @transform_5, window_bounds = array<i64: 1, 96>}, {pipeline_mode = #tpu.pipeline_mode<synchronous>, transform_indices = @transform_6, window_bounds = array<i64: 32, 32>}, {pipeline_mode = #tpu.pipeline_mode<synchronous>, transform_indices = @transform_7, window_bounds = array<i64: 1, 32>}, {pipeline_mode = #tpu.pipeline_mode<synchronous>, transform_indices = @transform_8, window_bounds = array<i64: 32, 96>}, {pipeline_mode = #tpu.pipeline_mode<synchronous>, transform_indices = @transform_9, window_bounds = array<i64: 1, 96>}, {pipeline_mode = #tpu.pipeline_mode<synchronous>, transform_indices = @transform_10, window_bounds = array<i64: 32, 32>}, {pipeline_mode = #tpu.pipeline_mode<synchronous>, transform_indices = @transform_11, window_bounds = array<i64: 1, 32>}, {pipeline_mode = #tpu.pipeline_mode<synchronous>, transform_indices = @transform_12, window_bounds = array<i64: 1, 32>}, {pipeline_mode = #tpu.pipeline_mode<synchronous>, transform_indices = @transform_13, window_bounds = array<i64: 1, 32>}, {pipeline_mode = #tpu.pipeline_mode<synchronous>, transform_indices = @transform_14, window_bounds = array<i64: 1, 32>}, {pipeline_mode = #tpu.pipeline_mode<synchronous>, transform_indices = @transform_15, window_bounds = array<i64: 1, 32>}, {pipeline_mode = #tpu.pipeline_mode<synchronous>, transform_indices = @transform_16, window_bounds = array<i64: 1, 32>}, {pipeline_mode = #tpu.pipeline_mode<synchronous>, transform_indices = @transform_17, window_bounds = array<i64: 1, 32>}, {pipeline_mode = #tpu.pipeline_mode<synchronous>, transform_indices = @transform_18, window_bounds = array<i64: 32, 64>}, {pipeline_mode = #tpu.pipeline_mode<synchronous>, transform_indices = @transform_19, window_bounds = array<i64: 1, 64>}, {pipeline_mode = #tpu.pipeline_mode<synchronous>, transform_indices = @transform_20, window_bounds = array<i64: 64, 32>}, {pipeline_mode = #tpu.pipeline_mode<synchronous>, transform_indices = @transform_21, window_bounds = array<i64: 1, 32>}, {transform_indices = @transform_22, window_bounds = array<i64: 2, 8, 32>}]} {
    %c0 = arith.constant 0 : index
    %c0_0 = arith.constant 0 : index
    %c0_1 = arith.constant 0 : index
    %0 = vector.load %arg1[%c0, %c0_0, %c0_1] : memref<2x8x32xf32, #tpu.memory_space<vmem>>, vector<2x8x32xf32>
    %1 = vector.shape_cast %0 : vector<2x8x32xf32> to vector<16x32xf32>
    %c0_2 = arith.constant 0 : index
    %c0_3 = arith.constant 0 : index
    %c0_4 = arith.constant 0 : index
    %2 = vector.load %arg3[%c0_2, %c0_3, %c0_4] : memref<2x8x32xf32, #tpu.memory_space<vmem>>, vector<2x8x32xf32>
    %3 = vector.shape_cast %2 : vector<2x8x32xf32> to vector<16x32xf32>
    %c0_5 = arith.constant 0 : index
    %c0_6 = arith.constant 0 : index
    %c0_7 = arith.constant 0 : index
    %4 = vector.load %arg2[%c0_5, %c0_6, %c0_7] : memref<2x16x32xf32, #tpu.memory_space<vmem>>, vector<2x16x32xf32>
    %5 = vector.shape_cast %4 : vector<2x16x32xf32> to vector<32x32xf32>
    %c0_8 = arith.constant 0 : index
    %c0_9 = arith.constant 0 : index
    %c0_10 = arith.constant 0 : index
    %6 = vector.load %arg4[%c0_8, %c0_9, %c0_10] : memref<2x16x32xf32, #tpu.memory_space<vmem>>, vector<2x16x32xf32>
    %7 = vector.shape_cast %6 : vector<2x16x32xf32> to vector<32x32xf32>
    %8 = arith.addf %1, %3 : vector<16x32xf32>
    %c0_11 = arith.constant 0 : index
    %c0_12 = arith.constant 0 : index
    %9 = vector.load %arg5[%c0_11, %c0_12] : memref<32x96xbf16, #tpu.memory_space<vmem>>, vector<32x96xbf16>
    %c0_13 = arith.constant 0 : index
    %c0_14 = arith.constant 0 : index
    %10 = vector.load %arg6[%c0_13, %c0_14] : memref<1x96xf32, #tpu.memory_space<vmem>>, vector<1x96xf32>
    %11 = arith.truncf %8 : vector<16x32xf32> to vector<16x32xbf16>
    %12 = vector.extract_strided_slice %9 {offsets = [0, 0], sizes = [32, 64], strides = [1, 1]} : vector<32x96xbf16> to vector<32x64xbf16>
    %cst = arith.constant dense<0.000000e+00> : vector<16x64xf32>
    %13 = tpu.matmul %11, %12, %cst {dimension_numbers = #tpu.dot_dimension_numbers<[1], [0], [0], [1], [0, 0, 1, 1], [], []>} : vector<16x32xbf16>, vector<32x64xbf16>, vector<16x64xf32> -> vector<16x64xf32>
    %14 = vector.extract_strided_slice %10 {offsets = [0, 0], sizes = [1, 64], strides = [1, 1]} : vector<1x96xf32> to vector<1x64xf32>
    %15 = vector.broadcast %14 : vector<1x64xf32> to vector<16x64xf32>
    %16 = arith.addf %13, %15 : vector<16x64xf32>
    %17 = vector.extract_strided_slice %16 {offsets = [0, 0], sizes = [16, 32], strides = [1, 1]} : vector<16x64xf32> to vector<16x32xf32>
    %18 = vector.extract_strided_slice %16 {offsets = [0, 32], sizes = [16, 32], strides = [1, 1]} : vector<16x64xf32> to vector<16x32xf32>
    %19 = arith.truncf %1 : vector<16x32xf32> to vector<16x32xbf16>
    %20 = vector.extract_strided_slice %9 {offsets = [0, 64], sizes = [32, 32], strides = [1, 1]} : vector<32x96xbf16> to vector<32x32xbf16>
    %cst_15 = arith.constant dense<0.000000e+00> : vector<16x32xf32>
    %21 = tpu.matmul %19, %20, %cst_15 {dimension_numbers = #tpu.dot_dimension_numbers<[1], [0], [0], [1], [0, 0, 1, 1], [], []>} : vector<16x32xbf16>, vector<32x32xbf16>, vector<16x32xf32> -> vector<16x32xf32>
    %22 = vector.extract_strided_slice %10 {offsets = [0, 64], sizes = [1, 32], strides = [1, 1]} : vector<1x96xf32> to vector<1x32xf32>
    %23 = vector.broadcast %22 : vector<1x32xf32> to vector<16x32xf32>
    %24 = arith.addf %21, %23 : vector<16x32xf32>
    %cst_16 = arith.constant 0.353553385 : f32
    %25 = vector.broadcast %cst_16 : f32 to vector<16x32xf32>
    %26 = arith.mulf %17, %25 : vector<16x32xf32>
    %27 = arith.truncf %26 : vector<16x32xf32> to vector<16x32xbf16>
    %28 = vector.shape_cast %27 : vector<16x32xbf16> to vector<2x8x32xbf16>
    %29 = arith.truncf %18 : vector<16x32xf32> to vector<16x32xbf16>
    %30 = vector.shape_cast %29 : vector<16x32xbf16> to vector<2x8x32xbf16>
    %31 = arith.truncf %24 : vector<16x32xf32> to vector<16x32xbf16>
    %32 = vector.shape_cast %31 : vector<16x32xbf16> to vector<2x8x32xbf16>
    %33 = vector.extract_strided_slice %28 {offsets = [0, 0, 0], sizes = [2, 8, 8], strides = [1, 1, 1]} : vector<2x8x32xbf16> to vector<2x8x8xbf16>
    %34 = vector.extract_strided_slice %28 {offsets = [0, 0, 8], sizes = [2, 8, 8], strides = [1, 1, 1]} : vector<2x8x32xbf16> to vector<2x8x8xbf16>
    %35 = vector.extract_strided_slice %28 {offsets = [0, 0, 16], sizes = [2, 8, 8], strides = [1, 1, 1]} : vector<2x8x32xbf16> to vector<2x8x8xbf16>
    %36 = vector.extract_strided_slice %28 {offsets = [0, 0, 24], sizes = [2, 8, 8], strides = [1, 1, 1]} : vector<2x8x32xbf16> to vector<2x8x8xbf16>
    %37 = tpu.concatenate %33, %34, %35, %36 in 0 : vector<2x8x8xbf16>, vector<2x8x8xbf16>, vector<2x8x8xbf16>, vector<2x8x8xbf16> -> vector<8x8x8xbf16>
    %38 = vector.extract_strided_slice %30 {offsets = [0, 0, 0], sizes = [2, 8, 8], strides = [1, 1, 1]} : vector<2x8x32xbf16> to vector<2x8x8xbf16>
    %39 = vector.extract_strided_slice %30 {offsets = [0, 0, 8], sizes = [2, 8, 8], strides = [1, 1, 1]} : vector<2x8x32xbf16> to vector<2x8x8xbf16>
    %40 = vector.extract_strided_slice %30 {offsets = [0, 0, 16], sizes = [2, 8, 8], strides = [1, 1, 1]} : vector<2x8x32xbf16> to vector<2x8x8xbf16>
    %41 = vector.extract_strided_slice %30 {offsets = [0, 0, 24], sizes = [2, 8, 8], strides = [1, 1, 1]} : vector<2x8x32xbf16> to vector<2x8x8xbf16>
    %42 = tpu.concatenate %38, %39, %40, %41 in 0 : vector<2x8x8xbf16>, vector<2x8x8xbf16>, vector<2x8x8xbf16>, vector<2x8x8xbf16> -> vector<8x8x8xbf16>
    %43 = vector.extract_strided_slice %32 {offsets = [0, 0, 0], sizes = [2, 8, 8], strides = [1, 1, 1]} : vector<2x8x32xbf16> to vector<2x8x8xbf16>
    %44 = vector.extract_strided_slice %32 {offsets = [0, 0, 8], sizes = [2, 8, 8], strides = [1, 1, 1]} : vector<2x8x32xbf16> to vector<2x8x8xbf16>
    %45 = vector.extract_strided_slice %32 {offsets = [0, 0, 16], sizes = [2, 8, 8], strides = [1, 1, 1]} : vector<2x8x32xbf16> to vector<2x8x8xbf16>
    %46 = vector.extract_strided_slice %32 {offsets = [0, 0, 24], sizes = [2, 8, 8], strides = [1, 1, 1]} : vector<2x8x32xbf16> to vector<2x8x8xbf16>
    %47 = tpu.concatenate %43, %44, %45, %46 in 0 : vector<2x8x8xbf16>, vector<2x8x8xbf16>, vector<2x8x8xbf16>, vector<2x8x8xbf16> -> vector<8x8x8xbf16>
    "tpu.trace_start"() <{level = 10 : i32, message = "btd,bsd->bts"}> : () -> ()
    %cst_17 = arith.constant dense<0.000000e+00> : vector<8x8x8xf32>
    %48 = tpu.matmul %37, %42, %cst_17 {dimension_numbers = #tpu.dot_dimension_numbers<[2], [2], [1], [1], [0, 0, 0, 1, 1, 1], [0], [0]>} : vector<8x8x8xbf16>, vector<8x8x8xbf16>, vector<8x8x8xf32> -> vector<8x8x8xf32>
    "tpu.trace_stop"() : () -> ()
    %cst_18 = arith.constant dense<0xFF800000> : vector<8x8xf32>
    %49 = vector.multi_reduction <maximumf>, %48, %cst_18 [2] : vector<8x8x8xf32> to vector<8x8xf32>
    %50 = vector.shape_cast %49 : vector<8x8xf32> to vector<8x8x1xf32>
    %51 = vector.broadcast %50 : vector<8x8x1xf32> to vector<8x8x8xf32>
    %52 = arith.subf %48, %51 : vector<8x8x8xf32>
    %53 = math.exp %52 : vector<8x8x8xf32>
    %cst_19 = arith.constant dense<0.000000e+00> : vector<8x8xf32>
    %54 = vector.multi_reduction <add>, %53, %cst_19 [2] : vector<8x8x8xf32> to vector<8x8xf32>
    %55 = vector.shape_cast %54 : vector<8x8xf32> to vector<8x8x1xf32>
    %56 = tpu.reciprocal %55 {approx = true} : vector<8x8x1xf32> -> vector<8x8x1xf32>
    %57 = vector.broadcast %56 : vector<8x8x1xf32> to vector<8x8x8xf32>
    %58 = arith.mulf %53, %57 : vector<8x8x8xf32>
    %59 = arith.truncf %58 : vector<8x8x8xf32> to vector<8x8x8xbf16>
    "tpu.trace_start"() <{level = 10 : i32, message = "bts,bsd->btd"}> : () -> ()
    %cst_20 = arith.constant dense<0.000000e+00> : vector<8x8x8xf32>
    %60 = tpu.matmul %59, %47, %cst_20 {dimension_numbers = #tpu.dot_dimension_numbers<[2], [1], [1], [2], [0, 0, 0, 1, 1, 2], [0], [0]>} : vector<8x8x8xbf16>, vector<8x8x8xbf16>, vector<8x8x8xf32> -> vector<8x8x8xf32>
    "tpu.trace_stop"() : () -> ()
    %61 = arith.truncf %60 : vector<8x8x8xf32> to vector<8x8x8xbf16>
    %62 = vector.extract_strided_slice %61 {offsets = [0, 0, 0], sizes = [2, 8, 8], strides = [1, 1, 1]} : vector<8x8x8xbf16> to vector<2x8x8xbf16>
    %63 = vector.extract_strided_slice %61 {offsets = [2, 0, 0], sizes = [2, 8, 8], strides = [1, 1, 1]} : vector<8x8x8xbf16> to vector<2x8x8xbf16>
    %64 = vector.extract_strided_slice %61 {offsets = [4, 0, 0], sizes = [2, 8, 8], strides = [1, 1, 1]} : vector<8x8x8xbf16> to vector<2x8x8xbf16>
    %65 = vector.extract_strided_slice %61 {offsets = [6, 0, 0], sizes = [2, 8, 8], strides = [1, 1, 1]} : vector<8x8x8xbf16> to vector<2x8x8xbf16>
    %66 = tpu.concatenate %62, %63, %64, %65 in 2 : vector<2x8x8xbf16>, vector<2x8x8xbf16>, vector<2x8x8xbf16>, vector<2x8x8xbf16> -> vector<2x8x32xbf16>
    %67 = vector.shape_cast %66 : vector<2x8x32xbf16> to vector<16x32xbf16>
    %c0_21 = arith.constant 0 : index
    %c0_22 = arith.constant 0 : index
    %68 = vector.load %arg7[%c0_21, %c0_22] : memref<32x32xbf16, #tpu.memory_space<vmem>>, vector<32x32xbf16>
    %cst_23 = arith.constant dense<0.000000e+00> : vector<16x32xf32>
    %69 = tpu.matmul %67, %68, %cst_23 {dimension_numbers = #tpu.dot_dimension_numbers<[1], [0], [0], [1], [0, 0, 1, 1], [], []>} : vector<16x32xbf16>, vector<32x32xbf16>, vector<16x32xf32> -> vector<16x32xf32>
    %c0_24 = arith.constant 0 : index
    %c0_25 = arith.constant 0 : index
    %70 = vector.load %arg8[%c0_24, %c0_25] : memref<1x32xf32, #tpu.memory_space<vmem>>, vector<1x32xf32>
    %71 = vector.broadcast %70 : vector<1x32xf32> to vector<16x32xf32>
    %72 = arith.addf %69, %71 : vector<16x32xf32>
    %73 = arith.addf %1, %72 : vector<16x32xf32>
    %cst_26 = arith.constant dense<0.000000e+00> : vector<16xf32>
    %74 = vector.multi_reduction <add>, %73, %cst_26 [1] : vector<16x32xf32> to vector<16xf32>
    %75 = vector.shape_cast %74 : vector<16xf32> to vector<16x1xf32>
    %cst_27 = arith.constant 3.200000e+01 : f32
    %76 = vector.broadcast %cst_27 : f32 to vector<16x1xf32>
    %77 = arith.divf %75, %76 : vector<16x1xf32>
    %78 = vector.broadcast %77 : vector<16x1xf32> to vector<16x32xf32>
    %79 = arith.subf %73, %78 : vector<16x32xf32>
    %80 = arith.mulf %79, %79 : vector<16x32xf32>
    %cst_28 = arith.constant dense<0.000000e+00> : vector<16xf32>
    %81 = vector.multi_reduction <add>, %80, %cst_28 [1] : vector<16x32xf32> to vector<16xf32>
    %82 = vector.shape_cast %81 : vector<16xf32> to vector<16x1xf32>
    %cst_29 = arith.constant 3.200000e+01 : f32
    %83 = vector.broadcast %cst_29 : f32 to vector<16x1xf32>
    %84 = arith.divf %82, %83 : vector<16x1xf32>
    %cst_30 = arith.constant 9.99999974E-6 : f32
    %85 = vector.broadcast %cst_30 : f32 to vector<16x1xf32>
    %86 = arith.addf %84, %85 : vector<16x1xf32>
    %87 = math.rsqrt %86 : vector<16x1xf32>
    %88 = vector.broadcast %87 : vector<16x1xf32> to vector<16x32xf32>
    %89 = arith.mulf %79, %88 : vector<16x32xf32>
    %c0_31 = arith.constant 0 : index
    %c0_32 = arith.constant 0 : index
    %90 = vector.load %arg13[%c0_31, %c0_32] : memref<1x32xf32, #tpu.memory_space<vmem>>, vector<1x32xf32>
    %91 = vector.broadcast %90 : vector<1x32xf32> to vector<16x32xf32>
    %92 = arith.mulf %89, %91 : vector<16x32xf32>
    %c0_33 = arith.constant 0 : index
    %c0_34 = arith.constant 0 : index
    %93 = vector.load %arg14[%c0_33, %c0_34] : memref<1x32xf32, #tpu.memory_space<vmem>>, vector<1x32xf32>
    %94 = vector.broadcast %93 : vector<1x32xf32> to vector<16x32xf32>
    %95 = arith.addf %92, %94 : vector<16x32xf32>
    %96 = arith.addf %95, %3 : vector<16x32xf32>
    %97 = arith.addf %5, %7 : vector<32x32xf32>
    %c0_35 = arith.constant 0 : index
    %c0_36 = arith.constant 0 : index
    %98 = vector.load %arg9[%c0_35, %c0_36] : memref<32x96xbf16, #tpu.memory_space<vmem>>, vector<32x96xbf16>
    %c0_37 = arith.constant 0 : index
    %c0_38 = arith.constant 0 : index
    %99 = vector.load %arg10[%c0_37, %c0_38] : memref<1x96xf32, #tpu.memory_space<vmem>>, vector<1x96xf32>
    %100 = arith.truncf %96 : vector<16x32xf32> to vector<16x32xbf16>
    %101 = vector.extract_strided_slice %98 {offsets = [0, 0], sizes = [32, 32], strides = [1, 1]} : vector<32x96xbf16> to vector<32x32xbf16>
    %cst_39 = arith.constant dense<0.000000e+00> : vector<16x32xf32>
    %102 = tpu.matmul %100, %101, %cst_39 {dimension_numbers = #tpu.dot_dimension_numbers<[1], [0], [0], [1], [0, 0, 1, 1], [], []>} : vector<16x32xbf16>, vector<32x32xbf16>, vector<16x32xf32> -> vector<16x32xf32>
    %103 = vector.extract_strided_slice %99 {offsets = [0, 0], sizes = [1, 32], strides = [1, 1]} : vector<1x96xf32> to vector<1x32xf32>
    %104 = vector.broadcast %103 : vector<1x32xf32> to vector<16x32xf32>
    %105 = arith.addf %102, %104 : vector<16x32xf32>
    %106 = arith.truncf %97 : vector<32x32xf32> to vector<32x32xbf16>
    %107 = vector.extract_strided_slice %98 {offsets = [0, 32], sizes = [32, 32], strides = [1, 1]} : vector<32x96xbf16> to vector<32x32xbf16>
    %cst_40 = arith.constant dense<0.000000e+00> : vector<32x32xf32>
    %108 = tpu.matmul %106, %107, %cst_40 {dimension_numbers = #tpu.dot_dimension_numbers<[1], [0], [0], [1], [0, 0, 1, 1], [], []>} : vector<32x32xbf16>, vector<32x32xbf16>, vector<32x32xf32> -> vector<32x32xf32>
    %109 = vector.extract_strided_slice %99 {offsets = [0, 32], sizes = [1, 32], strides = [1, 1]} : vector<1x96xf32> to vector<1x32xf32>
    %110 = vector.broadcast %109 : vector<1x32xf32> to vector<32x32xf32>
    %111 = arith.addf %108, %110 : vector<32x32xf32>
    %112 = arith.truncf %5 : vector<32x32xf32> to vector<32x32xbf16>
    %113 = vector.extract_strided_slice %98 {offsets = [0, 64], sizes = [32, 32], strides = [1, 1]} : vector<32x96xbf16> to vector<32x32xbf16>
    %cst_41 = arith.constant dense<0.000000e+00> : vector<32x32xf32>
    %114 = tpu.matmul %112, %113, %cst_41 {dimension_numbers = #tpu.dot_dimension_numbers<[1], [0], [0], [1], [0, 0, 1, 1], [], []>} : vector<32x32xbf16>, vector<32x32xbf16>, vector<32x32xf32> -> vector<32x32xf32>
    %115 = vector.extract_strided_slice %99 {offsets = [0, 64], sizes = [1, 32], strides = [1, 1]} : vector<1x96xf32> to vector<1x32xf32>
    %116 = vector.broadcast %115 : vector<1x32xf32> to vector<32x32xf32>
    %117 = arith.addf %114, %116 : vector<32x32xf32>
    %cst_42 = arith.constant 0.353553385 : f32
    %118 = vector.broadcast %cst_42 : f32 to vector<16x32xf32>
    %119 = arith.mulf %105, %118 : vector<16x32xf32>
    %120 = arith.truncf %119 : vector<16x32xf32> to vector<16x32xbf16>
    %121 = vector.shape_cast %120 : vector<16x32xbf16> to vector<2x8x32xbf16>
    %122 = arith.truncf %111 : vector<32x32xf32> to vector<32x32xbf16>
    %123 = vector.shape_cast %122 : vector<32x32xbf16> to vector<2x16x32xbf16>
    %124 = arith.truncf %117 : vector<32x32xf32> to vector<32x32xbf16>
    %125 = vector.shape_cast %124 : vector<32x32xbf16> to vector<2x16x32xbf16>
    %126 = vector.extract_strided_slice %121 {offsets = [0, 0, 0], sizes = [2, 8, 8], strides = [1, 1, 1]} : vector<2x8x32xbf16> to vector<2x8x8xbf16>
    %127 = vector.extract_strided_slice %121 {offsets = [0, 0, 8], sizes = [2, 8, 8], strides = [1, 1, 1]} : vector<2x8x32xbf16> to vector<2x8x8xbf16>
    %128 = vector.extract_strided_slice %121 {offsets = [0, 0, 16], sizes = [2, 8, 8], strides = [1, 1, 1]} : vector<2x8x32xbf16> to vector<2x8x8xbf16>
    %129 = vector.extract_strided_slice %121 {offsets = [0, 0, 24], sizes = [2, 8, 8], strides = [1, 1, 1]} : vector<2x8x32xbf16> to vector<2x8x8xbf16>
    %130 = tpu.concatenate %126, %127, %128, %129 in 0 : vector<2x8x8xbf16>, vector<2x8x8xbf16>, vector<2x8x8xbf16>, vector<2x8x8xbf16> -> vector<8x8x8xbf16>
    %131 = vector.extract_strided_slice %123 {offsets = [0, 0, 0], sizes = [2, 16, 8], strides = [1, 1, 1]} : vector<2x16x32xbf16> to vector<2x16x8xbf16>
    %132 = vector.extract_strided_slice %123 {offsets = [0, 0, 8], sizes = [2, 16, 8], strides = [1, 1, 1]} : vector<2x16x32xbf16> to vector<2x16x8xbf16>
    %133 = vector.extract_strided_slice %123 {offsets = [0, 0, 16], sizes = [2, 16, 8], strides = [1, 1, 1]} : vector<2x16x32xbf16> to vector<2x16x8xbf16>
    %134 = vector.extract_strided_slice %123 {offsets = [0, 0, 24], sizes = [2, 16, 8], strides = [1, 1, 1]} : vector<2x16x32xbf16> to vector<2x16x8xbf16>
    %135 = tpu.concatenate %131, %132, %133, %134 in 0 : vector<2x16x8xbf16>, vector<2x16x8xbf16>, vector<2x16x8xbf16>, vector<2x16x8xbf16> -> vector<8x16x8xbf16>
    %136 = vector.extract_strided_slice %125 {offsets = [0, 0, 0], sizes = [2, 16, 8], strides = [1, 1, 1]} : vector<2x16x32xbf16> to vector<2x16x8xbf16>
    %137 = vector.extract_strided_slice %125 {offsets = [0, 0, 8], sizes = [2, 16, 8], strides = [1, 1, 1]} : vector<2x16x32xbf16> to vector<2x16x8xbf16>
    %138 = vector.extract_strided_slice %125 {offsets = [0, 0, 16], sizes = [2, 16, 8], strides = [1, 1, 1]} : vector<2x16x32xbf16> to vector<2x16x8xbf16>
    %139 = vector.extract_strided_slice %125 {offsets = [0, 0, 24], sizes = [2, 16, 8], strides = [1, 1, 1]} : vector<2x16x32xbf16> to vector<2x16x8xbf16>
    %140 = tpu.concatenate %136, %137, %138, %139 in 0 : vector<2x16x8xbf16>, vector<2x16x8xbf16>, vector<2x16x8xbf16>, vector<2x16x8xbf16> -> vector<8x16x8xbf16>
    "tpu.trace_start"() <{level = 10 : i32, message = "btd,bsd->bts"}> : () -> ()
    %cst_43 = arith.constant dense<0.000000e+00> : vector<8x8x16xf32>
    %141 = tpu.matmul %130, %135, %cst_43 {dimension_numbers = #tpu.dot_dimension_numbers<[2], [2], [1], [1], [0, 0, 0, 1, 1, 1], [0], [0]>} : vector<8x8x8xbf16>, vector<8x16x8xbf16>, vector<8x8x16xf32> -> vector<8x8x16xf32>
    "tpu.trace_stop"() : () -> ()
    %cst_44 = arith.constant dense<0xFF800000> : vector<8x8xf32>
    %142 = vector.multi_reduction <maximumf>, %141, %cst_44 [2] : vector<8x8x16xf32> to vector<8x8xf32>
    %143 = vector.shape_cast %142 : vector<8x8xf32> to vector<8x8x1xf32>
    %144 = vector.broadcast %143 : vector<8x8x1xf32> to vector<8x8x16xf32>
    %145 = arith.subf %141, %144 : vector<8x8x16xf32>
    %146 = math.exp %145 : vector<8x8x16xf32>
    %cst_45 = arith.constant dense<0.000000e+00> : vector<8x8xf32>
    %147 = vector.multi_reduction <add>, %146, %cst_45 [2] : vector<8x8x16xf32> to vector<8x8xf32>
    %148 = vector.shape_cast %147 : vector<8x8xf32> to vector<8x8x1xf32>
    %149 = tpu.reciprocal %148 {approx = true} : vector<8x8x1xf32> -> vector<8x8x1xf32>
    %150 = vector.broadcast %149 : vector<8x8x1xf32> to vector<8x8x16xf32>
    %151 = arith.mulf %146, %150 : vector<8x8x16xf32>
    %152 = arith.truncf %151 : vector<8x8x16xf32> to vector<8x8x16xbf16>
    "tpu.trace_start"() <{level = 10 : i32, message = "bts,bsd->btd"}> : () -> ()
    %cst_46 = arith.constant dense<0.000000e+00> : vector<8x8x8xf32>
    %153 = tpu.matmul %152, %140, %cst_46 {dimension_numbers = #tpu.dot_dimension_numbers<[2], [1], [1], [2], [0, 0, 0, 1, 1, 2], [0], [0]>} : vector<8x8x16xbf16>, vector<8x16x8xbf16>, vector<8x8x8xf32> -> vector<8x8x8xf32>
    "tpu.trace_stop"() : () -> ()
    %154 = arith.truncf %153 : vector<8x8x8xf32> to vector<8x8x8xbf16>
    %155 = vector.extract_strided_slice %154 {offsets = [0, 0, 0], sizes = [2, 8, 8], strides = [1, 1, 1]} : vector<8x8x8xbf16> to vector<2x8x8xbf16>
    %156 = vector.extract_strided_slice %154 {offsets = [2, 0, 0], sizes = [2, 8, 8], strides = [1, 1, 1]} : vector<8x8x8xbf16> to vector<2x8x8xbf16>
    %157 = vector.extract_strided_slice %154 {offsets = [4, 0, 0], sizes = [2, 8, 8], strides = [1, 1, 1]} : vector<8x8x8xbf16> to vector<2x8x8xbf16>
    %158 = vector.extract_strided_slice %154 {offsets = [6, 0, 0], sizes = [2, 8, 8], strides = [1, 1, 1]} : vector<8x8x8xbf16> to vector<2x8x8xbf16>
    %159 = tpu.concatenate %155, %156, %157, %158 in 2 : vector<2x8x8xbf16>, vector<2x8x8xbf16>, vector<2x8x8xbf16>, vector<2x8x8xbf16> -> vector<2x8x32xbf16>
    %160 = vector.shape_cast %159 : vector<2x8x32xbf16> to vector<16x32xbf16>
    %c0_47 = arith.constant 0 : index
    %c0_48 = arith.constant 0 : index
    %161 = vector.load %arg11[%c0_47, %c0_48] : memref<32x32xbf16, #tpu.memory_space<vmem>>, vector<32x32xbf16>
    %cst_49 = arith.constant dense<0.000000e+00> : vector<16x32xf32>
    %162 = tpu.matmul %160, %161, %cst_49 {dimension_numbers = #tpu.dot_dimension_numbers<[1], [0], [0], [1], [0, 0, 1, 1], [], []>} : vector<16x32xbf16>, vector<32x32xbf16>, vector<16x32xf32> -> vector<16x32xf32>
    %c0_50 = arith.constant 0 : index
    %c0_51 = arith.constant 0 : index
    %163 = vector.load %arg12[%c0_50, %c0_51] : memref<1x32xf32, #tpu.memory_space<vmem>>, vector<1x32xf32>
    %164 = vector.broadcast %163 : vector<1x32xf32> to vector<16x32xf32>
    %165 = arith.addf %162, %164 : vector<16x32xf32>
    %166 = arith.addf %95, %165 : vector<16x32xf32>
    %cst_52 = arith.constant dense<0.000000e+00> : vector<16xf32>
    %167 = vector.multi_reduction <add>, %166, %cst_52 [1] : vector<16x32xf32> to vector<16xf32>
    %168 = vector.shape_cast %167 : vector<16xf32> to vector<16x1xf32>
    %cst_53 = arith.constant 3.200000e+01 : f32
    %169 = vector.broadcast %cst_53 : f32 to vector<16x1xf32>
    %170 = arith.divf %168, %169 : vector<16x1xf32>
    %171 = vector.broadcast %170 : vector<16x1xf32> to vector<16x32xf32>
    %172 = arith.subf %166, %171 : vector<16x32xf32>
    %173 = arith.mulf %172, %172 : vector<16x32xf32>
    %cst_54 = arith.constant dense<0.000000e+00> : vector<16xf32>
    %174 = vector.multi_reduction <add>, %173, %cst_54 [1] : vector<16x32xf32> to vector<16xf32>
    %175 = vector.shape_cast %174 : vector<16xf32> to vector<16x1xf32>
    %cst_55 = arith.constant 3.200000e+01 : f32
    %176 = vector.broadcast %cst_55 : f32 to vector<16x1xf32>
    %177 = arith.divf %175, %176 : vector<16x1xf32>
    %cst_56 = arith.constant 9.99999974E-6 : f32
    %178 = vector.broadcast %cst_56 : f32 to vector<16x1xf32>
    %179 = arith.addf %177, %178 : vector<16x1xf32>
    %180 = math.rsqrt %179 : vector<16x1xf32>
    %181 = vector.broadcast %180 : vector<16x1xf32> to vector<16x32xf32>
    %182 = arith.mulf %172, %181 : vector<16x32xf32>
    %c0_57 = arith.constant 0 : index
    %c0_58 = arith.constant 0 : index
    %183 = vector.load %arg15[%c0_57, %c0_58] : memref<1x32xf32, #tpu.memory_space<vmem>>, vector<1x32xf32>
    %184 = vector.broadcast %183 : vector<1x32xf32> to vector<16x32xf32>
    %185 = arith.mulf %182, %184 : vector<16x32xf32>
    %c0_59 = arith.constant 0 : index
    %c0_60 = arith.constant 0 : index
    %186 = vector.load %arg16[%c0_59, %c0_60] : memref<1x32xf32, #tpu.memory_space<vmem>>, vector<1x32xf32>
    %187 = vector.broadcast %186 : vector<1x32xf32> to vector<16x32xf32>
    %188 = arith.addf %185, %187 : vector<16x32xf32>
    %189 = arith.truncf %188 : vector<16x32xf32> to vector<16x32xbf16>
    %c0_61 = arith.constant 0 : index
    %c0_62 = arith.constant 0 : index
    %190 = vector.load %arg19[%c0_61, %c0_62] : memref<32x64xbf16, #tpu.memory_space<vmem>>, vector<32x64xbf16>
    %cst_63 = arith.constant dense<0.000000e+00> : vector<16x64xf32>
    %191 = tpu.matmul %189, %190, %cst_63 {dimension_numbers = #tpu.dot_dimension_numbers<[1], [0], [0], [1], [0, 0, 1, 1], [], []>} : vector<16x32xbf16>, vector<32x64xbf16>, vector<16x64xf32> -> vector<16x64xf32>
    %c0_64 = arith.constant 0 : index
    %c0_65 = arith.constant 0 : index
    %192 = vector.load %arg20[%c0_64, %c0_65] : memref<1x64xf32, #tpu.memory_space<vmem>>, vector<1x64xf32>
    %193 = vector.broadcast %192 : vector<1x64xf32> to vector<16x64xf32>
    %194 = arith.addf %191, %193 : vector<16x64xf32>
    %cst_66 = arith.constant 0.000000e+00 : f32
    %195 = vector.broadcast %cst_66 : f32 to vector<16x64xf32>
    %196 = arith.maximumf %194, %195 : vector<16x64xf32>
    %197 = arith.truncf %196 : vector<16x64xf32> to vector<16x64xbf16>
    %c0_67 = arith.constant 0 : index
    %c0_68 = arith.constant 0 : index
    %198 = vector.load %arg21[%c0_67, %c0_68] : memref<64x32xbf16, #tpu.memory_space<vmem>>, vector<64x32xbf16>
    %cst_69 = arith.constant dense<0.000000e+00> : vector<16x32xf32>
    %199 = tpu.matmul %197, %198, %cst_69 {dimension_numbers = #tpu.dot_dimension_numbers<[1], [0], [0], [1], [0, 0, 1, 1], [], []>} : vector<16x64xbf16>, vector<64x32xbf16>, vector<16x32xf32> -> vector<16x32xf32>
    %c0_70 = arith.constant 0 : index
    %c0_71 = arith.constant 0 : index
    %200 = vector.load %arg22[%c0_70, %c0_71] : memref<1x32xf32, #tpu.memory_space<vmem>>, vector<1x32xf32>
    %201 = vector.broadcast %200 : vector<1x32xf32> to vector<16x32xf32>
    %202 = arith.addf %199, %201 : vector<16x32xf32>
    %203 = arith.addf %188, %202 : vector<16x32xf32>
    %cst_72 = arith.constant dense<0.000000e+00> : vector<16xf32>
    %204 = vector.multi_reduction <add>, %203, %cst_72 [1] : vector<16x32xf32> to vector<16xf32>
    %205 = vector.shape_cast %204 : vector<16xf32> to vector<16x1xf32>
    %cst_73 = arith.constant 3.200000e+01 : f32
    %206 = vector.broadcast %cst_73 : f32 to vector<16x1xf32>
    %207 = arith.divf %205, %206 : vector<16x1xf32>
    %208 = vector.broadcast %207 : vector<16x1xf32> to vector<16x32xf32>
    %209 = arith.subf %203, %208 : vector<16x32xf32>
    %210 = arith.mulf %209, %209 : vector<16x32xf32>
    %cst_74 = arith.constant dense<0.000000e+00> : vector<16xf32>
    %211 = vector.multi_reduction <add>, %210, %cst_74 [1] : vector<16x32xf32> to vector<16xf32>
    %212 = vector.shape_cast %211 : vector<16xf32> to vector<16x1xf32>
    %cst_75 = arith.constant 3.200000e+01 : f32
    %213 = vector.broadcast %cst_75 : f32 to vector<16x1xf32>
    %214 = arith.divf %212, %213 : vector<16x1xf32>
    %cst_76 = arith.constant 9.99999974E-6 : f32
    %215 = vector.broadcast %cst_76 : f32 to vector<16x1xf32>
    %216 = arith.addf %214, %215 : vector<16x1xf32>
    %217 = math.rsqrt %216 : vector<16x1xf32>
    %218 = vector.broadcast %217 : vector<16x1xf32> to vector<16x32xf32>
    %219 = arith.mulf %209, %218 : vector<16x32xf32>
    %c0_77 = arith.constant 0 : index
    %c0_78 = arith.constant 0 : index
    %220 = vector.load %arg17[%c0_77, %c0_78] : memref<1x32xf32, #tpu.memory_space<vmem>>, vector<1x32xf32>
    %221 = vector.broadcast %220 : vector<1x32xf32> to vector<16x32xf32>
    %222 = arith.mulf %219, %221 : vector<16x32xf32>
    %c0_79 = arith.constant 0 : index
    %c0_80 = arith.constant 0 : index
    %223 = vector.load %arg18[%c0_79, %c0_80] : memref<1x32xf32, #tpu.memory_space<vmem>>, vector<1x32xf32>
    %224 = vector.broadcast %223 : vector<1x32xf32> to vector<16x32xf32>
    %225 = arith.addf %222, %224 : vector<16x32xf32>
    %226 = vector.shape_cast %225 : vector<16x32xf32> to vector<2x8x32xf32>
    %c0_81 = arith.constant 0 : index
    %c0_82 = arith.constant 0 : index
    %c0_83 = arith.constant 0 : index
    %227 = vector.load %arg23[%c0_81, %c0_82, %c0_83] : memref<2x8x32xf32, #tpu.memory_space<vmem>>, vector<2x8x32xf32>
    tpu.vector_store %arg23[%c0_81, %c0_82, %c0_83], %226 {strides = array<i32>} : memref<2x8x32xf32, #tpu.memory_space<vmem>>, vector<2x8x32xf32>,
    return
  }
  func.func @transform_0(%arg0: i32) -> (i32, i32, i32) {
    %c0_i32 = arith.constant 0 : i32
    %c0_i32_0 = arith.constant 0 : i32
    %c0_i32_1 = arith.constant 0 : i32
    return %arg0, %c0_i32, %c0_i32_0 : i32, i32, i32
  }
  func.func @transform_1(%arg0: i32) -> (i32, i32, i32) {
    %c0_i32 = arith.constant 0 : i32
    %c0_i32_0 = arith.constant 0 : i32
    %c0_i32_1 = arith.constant 0 : i32
    return %arg0, %c0_i32, %c0_i32_0 : i32, i32, i32
  }
  func.func @transform_2(%arg0: i32) -> (i32, i32, i32) {
    %c0_i32 = arith.constant 0 : i32
    %c0_i32_0 = arith.constant 0 : i32
    %c0_i32_1 = arith.constant 0 : i32
    return %arg0, %c0_i32, %c0_i32_0 : i32, i32, i32
  }
  func.func @transform_3(%arg0: i32) -> (i32, i32, i32) {
    %c0_i32 = arith.constant 0 : i32
    %c0_i32_0 = arith.constant 0 : i32
    %c0_i32_1 = arith.constant 0 : i32
    return %arg0, %c0_i32, %c0_i32_0 : i32, i32, i32
  }
  func.func @transform_4(%arg0: i32) -> (i32, i32) {
    %c0_i32 = arith.constant 0 : i32
    %c0_i32_0 = arith.constant 0 : i32
    %c0_i32_1 = arith.constant 0 : i32
    return %c0_i32, %c0_i32_0 : i32, i32
  }
  func.func @transform_5(%arg0: i32) -> (i32, i32) {
    %c0_i32 = arith.constant 0 : i32
    %c0_i32_0 = arith.constant 0 : i32
    %c0_i32_1 = arith.constant 0 : i32
    return %c0_i32, %c0_i32_0 : i32, i32
  }
  func.func @transform_6(%arg0: i32) -> (i32, i32) {
    %c0_i32 = arith.constant 0 : i32
    %c0_i32_0 = arith.constant 0 : i32
    %c0_i32_1 = arith.constant 0 : i32
    return %c0_i32, %c0_i32_0 : i32, i32
  }
  func.func @transform_7(%arg0: i32) -> (i32, i32) {
    %c0_i32 = arith.constant 0 : i32
    %c0_i32_0 = arith.constant 0 : i32
    %c0_i32_1 = arith.constant 0 : i32
    return %c0_i32, %c0_i32_0 : i32, i32
  }
  func.func @transform_8(%arg0: i32) -> (i32, i32) {
    %c0_i32 = arith.constant 0 : i32
    %c0_i32_0 = arith.constant 0 : i32
    %c0_i32_1 = arith.constant 0 : i32
    return %c0_i32, %c0_i32_0 : i32, i32
  }
  func.func @transform_9(%arg0: i32) -> (i32, i32) {
    %c0_i32 = arith.constant 0 : i32
    %c0_i32_0 = arith.constant 0 : i32
    %c0_i32_1 = arith.constant 0 : i32
    return %c0_i32, %c0_i32_0 : i32, i32
  }
  func.func @transform_10(%arg0: i32) -> (i32, i32) {
    %c0_i32 = arith.constant 0 : i32
    %c0_i32_0 = arith.constant 0 : i32
    %c0_i32_1 = arith.constant 0 : i32
    return %c0_i32, %c0_i32_0 : i32, i32
  }
  func.func @transform_11(%arg0: i32) -> (i32, i32) {
    %c0_i32 = arith.constant 0 : i32
    %c0_i32_0 = arith.constant 0 : i32
    %c0_i32_1 = arith.constant 0 : i32
    return %c0_i32, %c0_i32_0 : i32, i32
  }
  func.func @transform_12(%arg0: i32) -> (i32, i32) {
    %c0_i32 = arith.constant 0 : i32
    %c0_i32_0 = arith.constant 0 : i32
    %c0_i32_1 = arith.constant 0 : i32
    return %c0_i32, %c0_i32_0 : i32, i32
  }
  func.func @transform_13(%arg0: i32) -> (i32, i32) {
    %c0_i32 = arith.constant 0 : i32
    %c0_i32_0 = arith.constant 0 : i32
    %c0_i32_1 = arith.constant 0 : i32
    return %c0_i32, %c0_i32_0 : i32, i32
  }
  func.func @transform_14(%arg0: i32) -> (i32, i32) {
    %c0_i32 = arith.constant 0 : i32
    %c0_i32_0 = arith.constant 0 : i32
    %c0_i32_1 = arith.constant 0 : i32
    return %c0_i32, %c0_i32_0 : i32, i32
  }
  func.func @transform_15(%arg0: i32) -> (i32, i32) {
    %c0_i32 = arith.constant 0 : i32
    %c0_i32_0 = arith.constant 0 : i32
    %c0_i32_1 = arith.constant 0 : i32
    return %c0_i32, %c0_i32_0 : i32, i32
  }
  func.func @transform_16(%arg0: i32) -> (i32, i32) {
    %c0_i32 = arith.constant 0 : i32
    %c0_i32_0 = arith.constant 0 : i32
    %c0_i32_1 = arith.constant 0 : i32
    return %c0_i32, %c0_i32_0 : i32, i32
  }
  func.func @transform_17(%arg0: i32) -> (i32, i32) {
    %c0_i32 = arith.constant 0 : i32
    %c0_i32_0 = arith.constant 0 : i32
    %c0_i32_1 = arith.constant 0 : i32
    return %c0_i32, %c0_i32_0 : i32, i32
  }
  func.func @transform_18(%arg0: i32) -> (i32, i32) {
    %c0_i32 = arith.constant 0 : i32
    %c0_i32_0 = arith.constant 0 : i32
    %c0_i32_1 = arith.constant 0 : i32
    return %c0_i32, %c0_i32_0 : i32, i32
  }
  func.func @transform_19(%arg0: i32) -> (i32, i32) {
    %c0_i32 = arith.constant 0 : i32
    %c0_i32_0 = arith.constant 0 : i32
    %c0_i32_1 = arith.constant 0 : i32
    return %c0_i32, %c0_i32_0 : i32, i32
  }
  func.func @transform_20(%arg0: i32) -> (i32, i32) {
    %c0_i32 = arith.constant 0 : i32
    %c0_i32_0 = arith.constant 0 : i32
    %c0_i32_1 = arith.constant 0 : i32
    return %c0_i32, %c0_i32_0 : i32, i32
  }
  func.func @transform_21(%arg0: i32) -> (i32, i32) {
    %c0_i32 = arith.constant 0 : i32
    %c0_i32_0 = arith.constant 0 : i32
    %c0_i32_1 = arith.constant 0 : i32
    return %c0_i32, %c0_i32_0 : i32, i32
  }
  func.func @transform_22(%arg0: i32) -> (i32, i32, i32) {
    %c0_i32 = arith.constant 0 : i32
    %c0_i32_0 = arith.constant 0 : i32
    %c0_i32_1 = arith.constant 0 : i32
    return %arg0, %c0_i32, %c0_i32_0 : i32, i32, i32
  }
}

module attributes {stable_mosaic.version = 11 : i64} {
  func.func @_decoder_layer_kernel(%arg0: i32, %arg1: memref<2x8x32xf32, #tpu.memory_space<vmem>>, %arg2: memref<2x16x32xf32, #tpu.memory_space<vmem>>, %arg3: memref<2x8x32xf32, #tpu.memory_space<vmem>>, %arg4: memref<2x16x32xf32, #tpu.memory_space<vmem>>, %arg5: memref<32x96xbf16, #tpu.memory_space<vmem>>, %arg6: memref<1x96xf32, #tpu.memory_space<vmem>>, %arg7: memref<32x32xbf16, #tpu.memory_space<vmem>>, %arg8: memref<1x32xf32, #tpu.memory_space<vmem>>, %arg9: memref<32x96xbf16, #tpu.memory_space<vmem>>, %arg10: memref<1x96xf32, #tpu.memory_space<vmem>>, %arg11: memref<32x32xbf16, #tpu.memory_space<vmem>>, %arg12: memref<1x32xf32, #tpu.memory_space<vmem>>, %arg13: memref<1x32xf32, #tpu.memory_space<vmem>>, %arg14: memref<1x32xf32, #tpu.memory_space<vmem>>, %arg15: memref<1x32xf32, #tpu.memory_space<vmem>>, %arg16: memref<1x32xf32, #tpu.memory_space<vmem>>, %arg17: memref<1x32xf32, #tpu.memory_space<vmem>>, %arg18: memref<1x32xf32, #tpu.memory_space<vmem>>, %arg19: memref<32x64xbf16, #tpu.memory_space<vmem>>, %arg20: memref<1x64xf32, #tpu.memory_space<vmem>>, %arg21: memref<64x32xbf16, #tpu.memory_space<vmem>>, %arg22: memref<1x32xf32, #tpu.memory_space<vmem>>, %arg23: memref<2x8x32xf32, #tpu.memory_space<vmem>>) attributes {dimension_semantics = [#tpu.dimension_semantics<parallel>], iteration_bounds = array<i64: 1>, scalar_prefetch = 0 : i64, scratch_operands = 0 : i64, tpu.core_type = #tpu.core_type<tc>, window_params = [{transform_indices = @transform_0, window_bounds = array<i64: 2, 8, 32>}, {transform_indices = @transform_1, window_bounds = array<i64: 2, 16, 32>}, {transform_indices = @transform_2, window_bounds = array<i64: 2, 8, 32>}, {transform_indices = @transform_3, window_bounds = array<i64: 2, 16, 32>}, {pipeline_mode = #tpu.pipeline_mode<synchronous>, transform_indices = @transform_4, window_bounds = array<i64: 32, 96>}, {pipeline_mode = #tpu.pipeline_mode<synchronous>, transform_indices = @transform_5, window_bounds = array<i64: 1, 96>}, {pipeline_mode = #tpu.pipeline_mode<synchronous>, transform_indices = @transform_6, window_bounds = array<i64: 32, 32>}, {pipeline_mode = #tpu.pipeline_mode<synchronous>, transform_indices = @transform_7, window_bounds = array<i64: 1, 32>}, {pipeline_mode = #tpu.pipeline_mode<synchronous>, transform_indices = @transform_8, window_bounds = array<i64: 32, 96>}, {pipeline_mode = #tpu.pipeline_mode<synchronous>, transform_indices = @transform_9, window_bounds = array<i64: 1, 96>}, {pipeline_mode = #tpu.pipeline_mode<synchronous>, transform_indices = @transform_10, window_bounds = array<i64: 32, 32>}, {pipeline_mode = #tpu.pipeline_mode<synchronous>, transform_indices = @transform_11, window_bounds = array<i64: 1, 32>}, {pipeline_mode = #tpu.pipeline_mode<synchronous>, transform_indices = @transform_12, window_bounds = array<i64: 1, 32>}, {pipeline_mode = #tpu.pipeline_mode<synchronous>, transform_indices = @transform_13, window_bounds = array<i64: 1, 32>}, {pipeline_mode = #tpu.pipeline_mode<synchronous>, transform_indices = @transform_14, window_bounds = array<i64: 1, 32>}, {pipeline_mode = #tpu.pipeline_mode<synchronous>, transform_indices = @transform_15, window_bounds = array<i64: 1, 32>}, {pipeline_mode = #tpu.pipeline_mode<synchronous>, transform_indices = @transform_16, window_bounds = array<i64: 1, 32>}, {pipeline_mode = #tpu.pipeline_mode<synchronous>, transform_indices = @transform_17, window_bounds = array<i64: 1, 32>}, {pipeline_mode = #tpu.pipeline_mode<synchronous>, transform_indices = @transform_18, window_bounds = array<i64: 32, 64>}, {pipeline_mode = #tpu.pipeline_mode<synchronous>, transform_indices = @transform_19, window_bounds = array<i64: 1, 64>}, {pipeline_mode = #tpu.pipeline_mode<synchronous>, transform_indices = @transform_20, window_bounds = array<i64: 64, 32>}, {pipeline_mode = #tpu.pipeline_mode<synchronous>, transform_indices = @transform_21, window_bounds = array<i64: 1, 32>}, {transform_indices = @transform_22, window_bounds = array<i64: 2, 8, 32>}]} {
    %c0 = arith.constant 0 : index
    %c0_0 = arith.constant 0 : index
    %c0_1 = arith.constant 0 : index
    %0 = vector.load %arg1[%c0, %c0_0, %c0_1] : memref<2x8x32xf32, #tpu.memory_space<vmem>>, vector<2x8x32xf32>
    %1 = vector.shape_cast %0 : vector<2x8x32xf32> to vector<16x32xf32>
    %c0_2 = arith.constant 0 : index
    %c0_3 = arith.constant 0 : index
    %c0_4 = arith.constant 0 : index
    %2 = vector.load %arg3[%c0_2, %c0_3, %c0_4] : memref<2x8x32xf32, #tpu.memory_space<vmem>>, vector<2x8x32xf32>
    %3 = vector.shape_cast %2 : vector<2x8x32xf32> to vector<16x32xf32>
    %c0_5 = arith.constant 0 : index
    %c0_6 = arith.constant 0 : index
    %c0_7 = arith.constant 0 : index
    %4 = vector.load %arg2[%c0_5, %c0_6, %c0_7] : memref<2x16x32xf32, #tpu.memory_space<vmem>>, vector<2x16x32xf32>
    %5 = vector.shape_cast %4 : vector<2x16x32xf32> to vector<32x32xf32>
    %c0_8 = arith.constant 0 : index
    %c0_9 = arith.constant 0 : index
    %c0_10 = arith.constant 0 : index
    %6 = vector.load %arg4[%c0_8, %c0_9, %c0_10] : memref<2x16x32xf32, #tpu.memory_space<vmem>>, vector<2x16x32xf32>
    %7 = vector.shape_cast %6 : vector<2x16x32xf32> to vector<32x32xf32>
    %8 = arith.addf %1, %3 : vector<16x32xf32>
    %c0_11 = arith.constant 0 : index
    %c0_12 = arith.constant 0 : index
    %9 = vector.load %arg5[%c0_11, %c0_12] : memref<32x96xbf16, #tpu.memory_space<vmem>>, vector<32x96xbf16>
    %c0_13 = arith.constant 0 : index
    %c0_14 = arith.constant 0 : index
    %10 = vector.load %arg6[%c0_13, %c0_14] : memref<1x96xf32, #tpu.memory_space<vmem>>, vector<1x96xf32>
    %11 = arith.truncf %8 : vector<16x32xf32> to vector<16x32xbf16>
    %12 = vector.extract_strided_slice %9 {offsets = [0, 0], sizes = [32, 64], strides = [1, 1]} : vector<32x96xbf16> to vector<32x64xbf16>
    %cst = arith.constant dense<0.000000e+00> : vector<16x64xf32>
    %13 = tpu.matmul %11, %12, %cst {dimension_numbers = #tpu.dot_dimension_numbers<[1], [0], [0], [1], [0, 0, 1, 1], [], []>} : vector<16x32xbf16>, vector<32x64xbf16>, vector<16x64xf32> -> vector<16x64xf32>
    %14 = vector.extract_strided_slice %10 {offsets = [0, 0], sizes = [1, 64], strides = [1, 1]} : vector<1x96xf32> to vector<1x64xf32>
    %15 = vector.broadcast %14 : vector<1x64xf32> to vector<16x64xf32>
    %16 = arith.addf %13, %15 : vector<16x64xf32>
    %17 = vector.extract_strided_slice %16 {offsets = [0, 0], sizes = [16, 32], strides = [1, 1]} : vector<16x64xf32> to vector<16x32xf32>
    %18 = vector.extract_strided_slice %16 {offsets = [0, 32], sizes = [16, 32], strides = [1, 1]} : vector<16x64xf32> to vector<16x32xf32>
    %19 = arith.truncf %1 : vector<16x32xf32> to vector<16x32xbf16>
    %20 = vector.extract_strided_slice %9 {offsets = [0, 64], sizes = [32, 32], strides = [1, 1]} : vector<32x96xbf16> to vector<32x32xbf16>
    %cst_15 = arith.constant dense<0.000000e+00> : vector<16x32xf32>
    %21 = tpu.matmul %19, %20, %cst_15 {dimension_numbers = #tpu.dot_dimension_numbers<[1], [0], [0], [1], [0, 0, 1, 1], [], []>} : vector<16x32xbf16>, vector<32x32xbf16>, vector<16x32xf32> -> vector<16x32xf32>
    %22 = vector.extract_strided_slice %10 {offsets = [0, 64], sizes = [1, 32], strides = [1, 1]} : vector<1x96xf32> to vector<1x32xf32>
    %23 = vector.broadcast %22 : vector<1x32xf32> to vector<16x32xf32>
    %24 = arith.addf %21, %23 : vector<16x32xf32>
    %cst_16 = arith.constant 0.353553385 : f32
    %25 = vector.broadcast %cst_16 : f32 to vector<16x32xf32>
    %26 = arith.mulf %17, %25 : vector<16x32xf32>
    %27 = arith.truncf %26 : vector<16x32xf32> to vector<16x32xbf16>
    %28 = vector.shape_cast %27 : vector<16x32xbf16> to vector<2x8x32xbf16>
    %29 = arith.truncf %18 : vector<16x32xf32> to vector<16x32xbf16>
    %30 = vector.shape_cast %29 : vector<16x32xbf16> to vector<2x8x32xbf16>
    %31 = arith.truncf %24 : vector<16x32xf32> to vector<16x32xbf16>
    %32 = vector.shape_cast %31 : vector<16x32xbf16> to vector<2x8x32xbf16>
    %33 = vector.extract_strided_slice %28 {offsets = [0, 0, 0], sizes = [2, 8, 8], strides = [1, 1, 1]} : vector<2x8x32xbf16> to vector<2x8x8xbf16>
    %34 = vector.extract_strided_slice %28 {offsets = [0, 0, 8], sizes = [2, 8, 8], strides = [1, 1, 1]} : vector<2x8x32xbf16> to vector<2x8x8xbf16>
    %35 = vector.extract_strided_slice %28 {offsets = [0, 0, 16], sizes = [2, 8, 8], strides = [1, 1, 1]} : vector<2x8x32xbf16> to vector<2x8x8xbf16>
    %36 = vector.extract_strided_slice %28 {offsets = [0, 0, 24], sizes = [2, 8, 8], strides = [1, 1, 1]} : vector<2x8x32xbf16> to vector<2x8x8xbf16>
    %37 = tpu.concatenate %33, %34, %35, %36 in 0 : vector<2x8x8xbf16>, vector<2x8x8xbf16>, vector<2x8x8xbf16>, vector<2x8x8xbf16> -> vector<8x8x8xbf16>
    %38 = vector.extract_strided_slice %30 {offsets = [0, 0, 0], sizes = [2, 8, 8], strides = [1, 1, 1]} : vector<2x8x32xbf16> to vector<2x8x8xbf16>
    %39 = vector.extract_strided_slice %30 {offsets = [0, 0, 8], sizes = [2, 8, 8], strides = [1, 1, 1]} : vector<2x8x32xbf16> to vector<2x8x8xbf16>
    %40 = vector.extract_strided_slice %30 {offsets = [0, 0, 16], sizes = [2, 8, 8], strides = [1, 1, 1]} : vector<2x8x32xbf16> to vector<2x8x8xbf16>
    %41 = vector.extract_strided_slice %30 {offsets = [0, 0, 24], sizes = [2, 8, 8], strides = [1, 1, 1]} : vector<2x8x32xbf16> to vector<2x8x8xbf16>
    %42 = tpu.concatenate %38, %39, %40, %41 in 0 : vector<2x8x8xbf16>, vector<2x8x8xbf16>, vector<2x8x8xbf16>, vector<2x8x8xbf16> -> vector<8x8x8xbf16>
    %43 = vector.extract_strided_slice %32 {offsets = [0, 0, 0], sizes = [2, 8, 8], strides = [1, 1, 1]} : vector<2x8x32xbf16> to vector<2x8x8xbf16>
    %44 = vector.extract_strided_slice %32 {offsets = [0, 0, 8], sizes = [2, 8, 8], strides = [1, 1, 1]} : vector<2x8x32xbf16> to vector<2x8x8xbf16>
    %45 = vector.extract_strided_slice %32 {offsets = [0, 0, 16], sizes = [2, 8, 8], strides = [1, 1, 1]} : vector<2x8x32xbf16> to vector<2x8x8xbf16>
    %46 = vector.extract_strided_slice %32 {offsets = [0, 0, 24], sizes = [2, 8, 8], strides = [1, 1, 1]} : vector<2x8x32xbf16> to vector<2x8x8xbf16>
    %47 = tpu.concatenate %43, %44, %45, %46 in 0 : vector<2x8x8xbf16>, vector<2x8x8xbf16>, vector<2x8x8xbf16>, vector<2x8x8xbf16> -> vector<8x8x8xbf16>
    "tpu.trace_start"() <{level = 10 : i32, message = "btd,bsd->bts"}> : () -> ()
    %cst_17 = arith.constant dense<0.000000e+00> : vector<8x8x8xf32>
    %48 = tpu.matmul %37, %42, %cst_17 {dimension_numbers = #tpu.dot_dimension_numbers<[2], [2], [1], [1], [0, 0, 0, 1, 1, 1], [0], [0]>} : vector<8x8x8xbf16>, vector<8x8x8xbf16>, vector<8x8x8xf32> -> vector<8x8x8xf32>
    "tpu.trace_stop"() : () -> ()
    %cst_18 = arith.constant dense<0xFF800000> : vector<8x8xf32>
    %49 = vector.multi_reduction <maximumf>, %48, %cst_18 [2] : vector<8x8x8xf32> to vector<8x8xf32>
    %50 = vector.shape_cast %49 : vector<8x8xf32> to vector<8x8x1xf32>
    %51 = vector.broadcast %50 : vector<8x8x1xf32> to vector<8x8x8xf32>
    %52 = arith.subf %48, %51 : vector<8x8x8xf32>
    %53 = math.exp %52 : vector<8x8x8xf32>
    %cst_19 = arith.constant dense<0.000000e+00> : vector<8x8xf32>
    %54 = vector.multi_reduction <add>, %53, %cst_19 [2] : vector<8x8x8xf32> to vector<8x8xf32>
    %55 = vector.shape_cast %54 : vector<8x8xf32> to vector<8x8x1xf32>
    %56 = tpu.reciprocal %55 {approx = true} : vector<8x8x1xf32> -> vector<8x8x1xf32>
    %57 = vector.broadcast %56 : vector<8x8x1xf32> to vector<8x8x8xf32>
    %58 = arith.mulf %53, %57 : vector<8x8x8xf32>
    %59 = arith.truncf %58 : vector<8x8x8xf32> to vector<8x8x8xbf16>
    "tpu.trace_start"() <{level = 10 : i32, message = "bts,bsd->btd"}> : () -> ()
    %cst_20 = arith.constant dense<0.000000e+00> : vector<8x8x8xf32>
    %60 = tpu.matmul %59, %47, %cst_20 {dimension_numbers = #tpu.dot_dimension_numbers<[2], [1], [1], [2], [0, 0, 0, 1, 1, 2], [0], [0]>} : vector<8x8x8xbf16>, vector<8x8x8xbf16>, vector<8x8x8xf32> -> vector<8x8x8xf32>
    "tpu.trace_stop"() : () -> ()
    %61 = arith.truncf %60 : vector<8x8x8xf32> to vector<8x8x8xbf16>
    %62 = vector.extract_strided_slice %61 {offsets = [0, 0, 0], sizes = [2, 8, 8], strides = [1, 1, 1]} : vector<8x8x8xbf16> to vector<2x8x8xbf16>
    %63 = vector.extract_strided_slice %61 {offsets = [2, 0, 0], sizes = [2, 8, 8], strides = [1, 1, 1]} : vector<8x8x8xbf16> to vector<2x8x8xbf16>
    %64 = vector.extract_strided_slice %61 {offsets = [4, 0, 0], sizes = [2, 8, 8], strides = [1, 1, 1]} : vector<8x8x8xbf16> to vector<2x8x8xbf16>
    %65 = vector.extract_strided_slice %61 {offsets = [6, 0, 0], sizes = [2, 8, 8], strides = [1, 1, 1]} : vector<8x8x8xbf16> to vector<2x8x8xbf16>
    %66 = tpu.concatenate %62, %63, %64, %65 in 2 : vector<2x8x8xbf16>, vector<2x8x8xbf16>, vector<2x8x8xbf16>, vector<2x8x8xbf16> -> vector<2x8x32xbf16>
    %67 = vector.shape_cast %66 : vector<2x8x32xbf16> to vector<16x32xbf16>
    %c0_21 = arith.constant 0 : index
    %c0_22 = arith.constant 0 : index
    %68 = vector.load %arg7[%c0_21, %c0_22] : memref<32x32xbf16, #tpu.memory_space<vmem>>, vector<32x32xbf16>
    %cst_23 = arith.constant dense<0.000000e+00> : vector<16x32xf32>
    %69 = tpu.matmul %67, %68, %cst_23 {dimension_numbers = #tpu.dot_dimension_numbers<[1], [0], [0], [1], [0, 0, 1, 1], [], []>} : vector<16x32xbf16>, vector<32x32xbf16>, vector<16x32xf32> -> vector<16x32xf32>
    %c0_24 = arith.constant 0 : index
    %c0_25 = arith.constant 0 : index
    %70 = vector.load %arg8[%c0_24, %c0_25] : memref<1x32xf32, #tpu.memory_space<vmem>>, vector<1x32xf32>
    %71 = vector.broadcast %70 : vector<1x32xf32> to vector<16x32xf32>
    %72 = arith.addf %69, %71 : vector<16x32xf32>
    %73 = arith.addf %1, %72 : vector<16x32xf32>
    %cst_26 = arith.constant dense<0.000000e+00> : vector<16xf32>
    %74 = vector.multi_reduction <add>, %73, %cst_26 [1] : vector<16x32xf32> to vector<16xf32>
    %75 = vector.shape_cast %74 : vector<16xf32> to vector<16x1xf32>
    %cst_27 = arith.constant 3.200000e+01 : f32
    %76 = vector.broadcast %cst_27 : f32 to vector<16x1xf32>
    %77 = arith.divf %75, %76 : vector<16x1xf32>
    %78 = vector.broadcast %77 : vector<16x1xf32> to vector<16x32xf32>
    %79 = arith.subf %73, %78 : vector<16x32xf32>
    %80 = arith.mulf %79, %79 : vector<16x32xf32>
    %cst_28 = arith.constant dense<0.000000e+00> : vector<16xf32>
    %81 = vector.multi_reduction <add>, %80, %cst_28 [1] : vector<16x32xf32> to vector<16xf32>
    %82 = vector.shape_cast %81 : vector<16xf32> to vector<16x1xf32>
    %cst_29 = arith.constant 3.200000e+01 : f32
    %83 = vector.broadcast %cst_29 : f32 to vector<16x1xf32>
    %84 = arith.divf %82, %83 : vector<16x1xf32>
    %cst_30 = arith.constant 9.99999974E-6 : f32
    %85 = vector.broadcast %cst_30 : f32 to vector<16x1xf32>
    %86 = arith.addf %84, %85 : vector<16x1xf32>
    %87 = math.rsqrt %86 : vector<16x1xf32>
    %88 = vector.broadcast %87 : vector<16x1xf32> to vector<16x32xf32>
    %89 = arith.mulf %79, %88 : vector<16x32xf32>
    %c0_31 = arith.constant 0 : index
    %c0_32 = arith.constant 0 : index
    %90 = vector.load %arg13[%c0_31, %c0_32] : memref<1x32xf32, #tpu.memory_space<vmem>>, vector<1x32xf32>
    %91 = vector.broadcast %90 : vector<1x32xf32> to vector<16x32xf32>
    %92 = arith.mulf %89, %91 : vector<16x32xf32>
    %c0_33 = arith.constant 0 : index
    %c0_34 = arith.constant 0 : index
    %93 = vector.load %arg14[%c0_33, %c0_34] : memref<1x32xf32, #tpu.memory_space<vmem>>, vector<1x32xf32>
    %94 = vector.broadcast %93 : vector<1x32xf32> to vector<16x32xf32>
    %95 = arith.addf %92, %94 : vector<16x32xf32>
    %96 = arith.addf %95, %3 : vector<16x32xf32>
    %97 = arith.addf %5, %7 : vector<32x32xf32>
    %c0_35 = arith.constant 0 : index
    %c0_36 = arith.constant 0 : index
    %98 = vector.load %arg9[%c0_35, %c0_36] : memref<32x96xbf16, #tpu.memory_space<vmem>>, vector<32x96xbf16>
    %c0_37 = arith.constant 0 : index
    %c0_38 = arith.constant 0 : index
    %99 = vector.load %arg10[%c0_37, %c0_38] : memref<1x96xf32, #tpu.memory_space<vmem>>, vector<1x96xf32>
    %100 = arith.truncf %96 : vector<16x32xf32> to vector<16x32xbf16>
    %101 = vector.extract_strided_slice %98 {offsets = [0, 0], sizes = [32, 32], strides = [1, 1]} : vector<32x96xbf16> to vector<32x32xbf16>
    %cst_39 = arith.constant dense<0.000000e+00> : vector<16x32xf32>
    %102 = tpu.matmul %100, %101, %cst_39 {dimension_numbers = #tpu.dot_dimension_numbers<[1], [0], [0], [1], [0, 0, 1, 1], [], []>} : vector<16x32xbf16>, vector<32x32xbf16>, vector<16x32xf32> -> vector<16x32xf32>
    %103 = vector.extract_strided_slice %99 {offsets = [0, 0], sizes = [1, 32], strides = [1, 1]} : vector<1x96xf32> to vector<1x32xf32>
    %104 = vector.broadcast %103 : vector<1x32xf32> to vector<16x32xf32>
    %105 = arith.addf %102, %104 : vector<16x32xf32>
    %106 = arith.truncf %97 : vector<32x32xf32> to vector<32x32xbf16>
    %107 = vector.extract_strided_slice %98 {offsets = [0, 32], sizes = [32, 32], strides = [1, 1]} : vector<32x96xbf16> to vector<32x32xbf16>
    %cst_40 = arith.constant dense<0.000000e+00> : vector<32x32xf32>
    %108 = tpu.matmul %106, %107, %cst_40 {dimension_numbers = #tpu.dot_dimension_numbers<[1], [0], [0], [1], [0, 0, 1, 1], [], []>} : vector<32x32xbf16>, vector<32x32xbf16>, vector<32x32xf32> -> vector<32x32xf32>
    %109 = vector.extract_strided_slice %99 {offsets = [0, 32], sizes = [1, 32], strides = [1, 1]} : vector<1x96xf32> to vector<1x32xf32>
    %110 = vector.broadcast %109 : vector<1x32xf32> to vector<32x32xf32>
    %111 = arith.addf %108, %110 : vector<32x32xf32>
    %112 = arith.truncf %5 : vector<32x32xf32> to vector<32x32xbf16>
    %113 = vector.extract_strided_slice %98 {offsets = [0, 64], sizes = [32, 32], strides = [1, 1]} : vector<32x96xbf16> to vector<32x32xbf16>
    %cst_41 = arith.constant dense<0.000000e+00> : vector<32x32xf32>
    %114 = tpu.matmul %112, %113, %cst_41 {dimension_numbers = #tpu.dot_dimension_numbers<[1], [0], [0], [1], [0, 0, 1, 1], [], []>} : vector<32x32xbf16>, vector<32x32xbf16>, vector<32x32xf32> -> vector<32x32xf32>
    %115 = vector.extract_strided_slice %99 {offsets = [0, 64], sizes = [1, 32], strides = [1, 1]} : vector<1x96xf32> to vector<1x32xf32>
    %116 = vector.broadcast %115 : vector<1x32xf32> to vector<32x32xf32>
    %117 = arith.addf %114, %116 : vector<32x32xf32>
    %cst_42 = arith.constant 0.353553385 : f32
    %118 = vector.broadcast %cst_42 : f32 to vector<16x32xf32>
    %119 = arith.mulf %105, %118 : vector<16x32xf32>
    %120 = arith.truncf %119 : vector<16x32xf32> to vector<16x32xbf16>
    %121 = vector.shape_cast %120 : vector<16x32xbf16> to vector<2x8x32xbf16>
    %122 = arith.truncf %111 : vector<32x32xf32> to vector<32x32xbf16>
    %123 = vector.shape_cast %122 : vector<32x32xbf16> to vector<2x16x32xbf16>
    %124 = arith.truncf %117 : vector<32x32xf32> to vector<32x32xbf16>
    %125 = vector.shape_cast %124 : vector<32x32xbf16> to vector<2x16x32xbf16>
    %126 = vector.extract_strided_slice %121 {offsets = [0, 0, 0], sizes = [2, 8, 8], strides = [1, 1, 1]} : vector<2x8x32xbf16> to vector<2x8x8xbf16>
    %127 = vector.extract_strided_slice %121 {offsets = [0, 0, 8], sizes = [2, 8, 8], strides = [1, 1, 1]} : vector<2x8x32xbf16> to vector<2x8x8xbf16>
    %128 = vector.extract_strided_slice %121 {offsets = [0, 0, 16], sizes = [2, 8, 8], strides = [1, 1, 1]} : vector<2x8x32xbf16> to vector<2x8x8xbf16>
    %129 = vector.extract_strided_slice %121 {offsets = [0, 0, 24], sizes = [2, 8, 8], strides = [1, 1, 1]} : vector<2x8x32xbf16> to vector<2x8x8xbf16>
    %130 = tpu.concatenate %126, %127, %128, %129 in 0 : vector<2x8x8xbf16>, vector<2x8x8xbf16>, vector<2x8x8xbf16>, vector<2x8x8xbf16> -> vector<8x8x8xbf16>
    %131 = vector.extract_strided_slice %123 {offsets = [0, 0, 0], sizes = [2, 16, 8], strides = [1, 1, 1]} : vector<2x16x32xbf16> to vector<2x16x8xbf16>
    %132 = vector.extract_strided_slice %123 {offsets = [0, 0, 8], sizes = [2, 16, 8], strides = [1, 1, 1]} : vector<2x16x32xbf16> to vector<2x16x8xbf16>
    %133 = vector.extract_strided_slice %123 {offsets = [0, 0, 16], sizes = [2, 16, 8], strides = [1, 1, 1]} : vector<2x16x32xbf16> to vector<2x16x8xbf16>
    %134 = vector.extract_strided_slice %123 {offsets = [0, 0, 24], sizes = [2, 16, 8], strides = [1, 1, 1]} : vector<2x16x32xbf16> to vector<2x16x8xbf16>
    %135 = tpu.concatenate %131, %132, %133, %134 in 0 : vector<2x16x8xbf16>, vector<2x16x8xbf16>, vector<2x16x8xbf16>, vector<2x16x8xbf16> -> vector<8x16x8xbf16>
    %136 = vector.extract_strided_slice %125 {offsets = [0, 0, 0], sizes = [2, 16, 8], strides = [1, 1, 1]} : vector<2x16x32xbf16> to vector<2x16x8xbf16>
    %137 = vector.extract_strided_slice %125 {offsets = [0, 0, 8], sizes = [2, 16, 8], strides = [1, 1, 1]} : vector<2x16x32xbf16> to vector<2x16x8xbf16>
    %138 = vector.extract_strided_slice %125 {offsets = [0, 0, 16], sizes = [2, 16, 8], strides = [1, 1, 1]} : vector<2x16x32xbf16> to vector<2x16x8xbf16>
    %139 = vector.extract_strided_slice %125 {offsets = [0, 0, 24], sizes = [2, 16, 8], strides = [1, 1, 1]} : vector<2x16x32xbf16> to vector<2x16x8xbf16>
    %140 = tpu.concatenate %136, %137, %138, %139 in 0 : vector<2x16x8xbf16>, vector<2x16x8xbf16>, vector<2x16x8xbf16>, vector<2x16x8xbf16> -> vector<8x16x8xbf16>
    "tpu.trace_start"() <{level = 10 : i32, message = "btd,bsd->bts"}> : () -> ()
    %cst_43 = arith.constant dense<0.000000e+00> : vector<8x8x16xf32>
    %141 = tpu.matmul %130, %135, %cst_43 {dimension_numbers = #tpu.dot_dimension_numbers<[2], [2], [1], [1], [0, 0, 0, 1, 1, 1], [0], [0]>} : vector<8x8x8xbf16>, vector<8x16x8xbf16>, vector<8x8x16xf32> -> vector<8x8x16xf32>
    "tpu.trace_stop"() : () -> ()
    %cst_44 = arith.constant dense<0xFF800000> : vector<8x8xf32>
    %142 = vector.multi_reduction <maximumf>, %141, %cst_44 [2] : vector<8x8x16xf32> to vector<8x8xf32>
    %143 = vector.shape_cast %142 : vector<8x8xf32> to vector<8x8x1xf32>
    %144 = vector.broadcast %143 : vector<8x8x1xf32> to vector<8x8x16xf32>
    %145 = arith.subf %141, %144 : vector<8x8x16xf32>
    %146 = math.exp %145 : vector<8x8x16xf32>
    %cst_45 = arith.constant dense<0.000000e+00> : vector<8x8xf32>
    %147 = vector.multi_reduction <add>, %146, %cst_45 [2] : vector<8x8x16xf32> to vector<8x8xf32>
    %148 = vector.shape_cast %147 : vector<8x8xf32> to vector<8x8x1xf32>
    %149 = tpu.reciprocal %148 {approx = true} : vector<8x8x1xf32> -> vector<8x8x1xf32>
    %150 = vector.broadcast %149 : vector<8x8x1xf32> to vector<8x8x16xf32>
    %151 = arith.mulf %146, %150 : vector<8x8x16xf32>
    %152 = arith.truncf %151 : vector<8x8x16xf32> to vector<8x8x16xbf16>
    "tpu.trace_start"() <{level = 10 : i32, message = "bts,bsd->btd"}> : () -> ()
    %cst_46 = arith.constant dense<0.000000e+00> : vector<8x8x8xf32>
    %153 = tpu.matmul %152, %140, %cst_46 {dimension_numbers = #tpu.dot_dimension_numbers<[2], [1], [1], [2], [0, 0, 0, 1, 1, 2], [0], [0]>} : vector<8x8x16xbf16>, vector<8x16x8xbf16>, vector<8x8x8xf32> -> vector<8x8x8xf32>
    "tpu.trace_stop"() : () -> ()
    %154 = arith.truncf %153 : vector<8x8x8xf32> to vector<8x8x8xbf16>
    %155 = vector.extract_strided_slice %154 {offsets = [0, 0, 0], sizes = [2, 8, 8], strides = [1, 1, 1]} : vector<8x8x8xbf16> to vector<2x8x8xbf16>
    %156 = vector.extract_strided_slice %154 {offsets = [2, 0, 0], sizes = [2, 8, 8], strides = [1, 1, 1]} : vector<8x8x8xbf16> to vector<2x8x8xbf16>
    %157 = vector.extract_strided_slice %154 {offsets = [4, 0, 0], sizes = [2, 8, 8], strides = [1, 1, 1]} : vector<8x8x8xbf16> to vector<2x8x8xbf16>
    %158 = vector.extract_strided_slice %154 {offsets = [6, 0, 0], sizes = [2, 8, 8], strides = [1, 1, 1]} : vector<8x8x8xbf16> to vector<2x8x8xbf16>
    %159 = tpu.concatenate %155, %156, %157, %158 in 2 : vector<2x8x8xbf16>, vector<2x8x8xbf16>, vector<2x8x8xbf16>, vector<2x8x8xbf16> -> vector<2x8x32xbf16>
    %160 = vector.shape_cast %159 : vector<2x8x32xbf16> to vector<16x32xbf16>
    %c0_47 = arith.constant 0 : index
    %c0_48 = arith.constant 0 : index
    %161 = vector.load %arg11[%c0_47, %c0_48] : memref<32x32xbf16, #tpu.memory_space<vmem>>, vector<32x32xbf16>
    %cst_49 = arith.constant dense<0.000000e+00> : vector<16x32xf32>
    %162 = tpu.matmul %160, %161, %cst_49 {dimension_numbers = #tpu.dot_dimension_numbers<[1], [0], [0], [1], [0, 0, 1, 1], [], []>} : vector<16x32xbf16>, vector<32x32xbf16>, vector<16x32xf32> -> vector<16x32xf32>
    %c0_50 = arith.constant 0 : index
    %c0_51 = arith.constant 0 : index
    %163 = vector.load %arg12[%c0_50, %c0_51] : memref<1x32xf32, #tpu.memory_space<vmem>>, vector<1x32xf32>
    %164 = vector.broadcast %163 : vector<1x32xf32> to vector<16x32xf32>
    %165 = arith.addf %162, %164 : vector<16x32xf32>
    %166 = arith.addf %95, %165 : vector<16x32xf32>
    %cst_52 = arith.constant dense<0.000000e+00> : vector<16xf32>
    %167 = vector.multi_reduction <add>, %166, %cst_52 [1] : vector<16x32xf32> to vector<16xf32>
    %168 = vector.shape_cast %167 : vector<16xf32> to vector<16x1xf32>
    %cst_53 = arith.constant 3.200000e+01 : f32
    %169 = vector.broadcast %cst_53 : f32 to vector<16x1xf32>
    %170 = arith.divf %168, %169 : vector<16x1xf32>
    %171 = vector.broadcast %170 : vector<16x1xf32> to vector<16x32xf32>
    %172 = arith.subf %166, %171 : vector<16x32xf32>
    %173 = arith.mulf %172, %172 : vector<16x32xf32>
    %cst_54 = arith.constant dense<0.000000e+00> : vector<16xf32>
    %174 = vector.multi_reduction <add>, %173, %cst_54 [1] : vector<16x32xf32> to vector<16xf32>
    %175 = vector.shape_cast %174 : vector<16xf32> to vector<16x1xf32>
    %cst_55 = arith.constant 3.200000e+01 : f32
    %176 = vector.broadcast %cst_55 : f32 to vector<16x1xf32>
    %177 = arith.divf %175, %176 : vector<16x1xf32>
    %cst_56 = arith.constant 9.99999974E-6 : f32
    %178 = vector.broadcast %cst_56 : f32 to vector<16x1xf32>
    %179 = arith.addf %177, %178 : vector<16x1xf32>
    %180 = math.rsqrt %179 : vector<16x1xf32>
    %181 = vector.broadcast %180 : vector<16x1xf32> to vector<16x32xf32>
    %182 = arith.mulf %172, %181 : vector<16x32xf32>
    %c0_57 = arith.constant 0 : index
    %c0_58 = arith.constant 0 : index
    %183 = vector.load %arg15[%c0_57, %c0_58] : memref<1x32xf32, #tpu.memory_space<vmem>>, vector<1x32xf32>
    %184 = vector.broadcast %183 : vector<1x32xf32> to vector<16x32xf32>
    %185 = arith.mulf %182, %184 : vector<16x32xf32>
    %c0_59 = arith.constant 0 : index
    %c0_60 = arith.constant 0 : index
    %186 = vector.load %arg16[%c0_59, %c0_60] : memref<1x32xf32, #tpu.memory_space<vmem>>, vector<1x32xf32>
    %187 = vector.broadcast %186 : vector<1x32xf32> to vector<16x32xf32>
    %188 = arith.addf %185, %187 : vector<16x32xf32>
    %189 = arith.truncf %188 : vector<16x32xf32> to vector<16x32xbf16>
    %c0_61 = arith.constant 0 : index
    %c0_62 = arith.constant 0 : index
    %190 = vector.load %arg19[%c0_61, %c0_62] : memref<32x64xbf16, #tpu.memory_space<vmem>>, vector<32x64xbf16>
    %cst_63 = arith.constant dense<0.000000e+00> : vector<16x64xf32>
    %191 = tpu.matmul %189, %190, %cst_63 {dimension_numbers = #tpu.dot_dimension_numbers<[1], [0], [0], [1], [0, 0, 1, 1], [], []>} : vector<16x32xbf16>, vector<32x64xbf16>, vector<16x64xf32> -> vector<16x64xf32>
    %c0_64 = arith.constant 0 : index
    %c0_65 = arith.constant 0 : index
    %192 = vector.load %arg20[%c0_64, %c0_65] : memref<1x64xf32, #tpu.memory_space<vmem>>, vector<1x64xf32>
    %193 = vector.broadcast %192 : vector<1x64xf32> to vector<16x64xf32>
    %194 = arith.addf %191, %193 : vector<16x64xf32>
    %cst_66 = arith.constant 0.000000e+00 : f32
    %195 = vector.broadcast %cst_66 : f32 to vector<16x64xf32>
    %196 = arith.maximumf %194, %195 : vector<16x64xf32>
    %197 = arith.truncf %196 : vector<16x64xf32> to vector<16x64xbf16>
    %c0_67 = arith.constant 0 : index
    %c0_68 = arith.constant 0 : index
    %198 = vector.load %arg21[%c0_67, %c0_68] : memref<64x32xbf16, #tpu.memory_space<vmem>>, vector<64x32xbf16>
    %cst_69 = arith.constant dense<0.000000e+00> : vector<16x32xf32>
    %199 = tpu.matmul %197, %198, %cst_69 {dimension_numbers = #tpu.dot_dimension_numbers<[1], [0], [0], [1], [0, 0, 1, 1], [], []>} : vector<16x64xbf16>, vector<64x32xbf16>, vector<16x32xf32> -> vector<16x32xf32>
    %c0_70 = arith.constant 0 : index
    %c0_71 = arith.constant 0 : index
    %200 = vector.load %arg22[%c0_70, %c0_71] : memref<1x32xf32, #tpu.memory_space<vmem>>, vector<1x32xf32>
    %201 = vector.broadcast %200 : vector<1x32xf32> to vector<16x32xf32>
    %202 = arith.addf %199, %201 : vector<16x32xf32>
    %203 = arith.addf %188, %202 : vector<16x32xf32>
    %cst_72 = arith.constant dense<0.000000e+00> : vector<16xf32>
    %204 = vector.multi_reduction <add>, %203, %cst_72 [1] : vector<16x32xf32> to vector<16xf32>
    %205 = vector.shape_cast %204 : vector<16xf32> to vector<16x1xf32>
    %cst_73 = arith.constant 3.200000e+01 : f32
    %206 = vector.broadcast %cst_73 : f32 to vector<16x1xf32>
    %207 = arith.divf %205, %206 : vector<16x1xf32>
    %208 = vector.broadcast %207 : vector<16x1xf32> to vector<16x32xf32>
    %209 = arith.subf %203, %208 : vector<16x32xf32>
    %210 = arith.mulf %209, %209 : vector<16x32xf32>
    %cst_74 = arith.constant dense<0.000000e+00> : vector<16xf32>
    %211 = vector.multi_reduction <add>, %210, %cst_74 [1] : vector<16x32xf32> to vector<16xf32>
    %212 = vector.shape_cast %211 : vector<16xf32> to vector<16x1xf32>
    %cst_75 = arith.constant 3.200000e+01 : f32
    %213 = vector.broadcast %cst_75 : f32 to vector<16x1xf32>
    %214 = arith.divf %212, %213 : vector<16x1xf32>
    %cst_76 = arith.constant 9.99999974E-6 : f32
    %215 = vector.broadcast %cst_76 : f32 to vector<16x1xf32>
    %216 = arith.addf %214, %215 : vector<16x1xf32>
    %217 = math.rsqrt %216 : vector<16x1xf32>
    %218 = vector.broadcast %217 : vector<16x1xf32> to vector<16x32xf32>
    %219 = arith.mulf %209, %218 : vector<16x32xf32>
    %c0_77 = arith.constant 0 : index
    %c0_78 = arith.constant 0 : index
    %220 = vector.load %arg17[%c0_77, %c0_78] : memref<1x32xf32, #tpu.memory_space<vmem>>, vector<1x32xf32>
    %221 = vector.broadcast %220 : vector<1x32xf32> to vector<16x32xf32>
    %222 = arith.mulf %219, %221 : vector<16x32xf32>
    %c0_79 = arith.constant 0 : index
    %c0_80 = arith.constant 0 : index
    %223 = vector.load %arg18[%c0_79, %c0_80] : memref<1x32xf32, #tpu.memory_space<vmem>>, vector<1x32xf32>
    %224 = vector.broadcast %223 : vector<1x32xf32> to vector<16x32xf32>
    %225 = arith.addf %222, %224 : vector<16x32xf32>
    %226 = vector.shape_cast %225 : vector<16x32xf32> to vector<2x8x32xf32>
    %c0_81 = arith.constant 0 : index
    %c0_82 = arith.constant 0 : index
    %c0_83 = arith.constant 0 : index
    %227 = vector.load %arg23[%c0_81, %c0_82, %c0_83] : memref<2x8x32xf32, #tpu.memory_space<vmem>>, vector<2x8x32xf32>
    tpu.vector_store %arg23[%c0_81, %c0_82, %c0_83], %226 {strides = array<i32>} : memref<2x8x32xf32, #tpu.memory_space<vmem>>, vector<2x8x32xf32>,
    return
  }
  func.func @transform_0(%arg0: i32) -> (i32, i32, i32) {
    %c0_i32 = arith.constant 0 : i32
    %c0_i32_0 = arith.constant 0 : i32
    %c0_i32_1 = arith.constant 0 : i32
    return %arg0, %c0_i32, %c0_i32_0 : i32, i32, i32
  }
  func.func @transform_1(%arg0: i32) -> (i32, i32, i32) {
    %c0_i32 = arith.constant 0 : i32
    %c0_i32_0 = arith.constant 0 : i32
    %c0_i32_1 = arith.constant 0 : i32
    return %arg0, %c0_i32, %c0_i32_0 : i32, i32, i32
  }
  func.func @transform_2(%arg0: i32) -> (i32, i32, i32) {
    %c0_i32 = arith.constant 0 : i32
    %c0_i32_0 = arith.constant 0 : i32
    %c0_i32_1 = arith.constant 0 : i32
    return %arg0, %c0_i32, %c0_i32_0 : i32, i32, i32
  }
  func.func @transform_3(%arg0: i32) -> (i32, i32, i32) {
    %c0_i32 = arith.constant 0 : i32
    %c0_i32_0 = arith.constant 0 : i32
    %c0_i32_1 = arith.constant 0 : i32
    return %arg0, %c0_i32, %c0_i32_0 : i32, i32, i32
  }
  func.func @transform_4(%arg0: i32) -> (i32, i32) {
    %c0_i32 = arith.constant 0 : i32
    %c0_i32_0 = arith.constant 0 : i32
    %c0_i32_1 = arith.constant 0 : i32
    return %c0_i32, %c0_i32_0 : i32, i32
  }
  func.func @transform_5(%arg0: i32) -> (i32, i32) {
    %c0_i32 = arith.constant 0 : i32
    %c0_i32_0 = arith.constant 0 : i32
    %c0_i32_1 = arith.constant 0 : i32
    return %c0_i32, %c0_i32_0 : i32, i32
  }
  func.func @transform_6(%arg0: i32) -> (i32, i32) {
    %c0_i32 = arith.constant 0 : i32
    %c0_i32_0 = arith.constant 0 : i32
    %c0_i32_1 = arith.constant 0 : i32
    return %c0_i32, %c0_i32_0 : i32, i32
  }
  func.func @transform_7(%arg0: i32) -> (i32, i32) {
    %c0_i32 = arith.constant 0 : i32
    %c0_i32_0 = arith.constant 0 : i32
    %c0_i32_1 = arith.constant 0 : i32
    return %c0_i32, %c0_i32_0 : i32, i32
  }
  func.func @transform_8(%arg0: i32) -> (i32, i32) {
    %c0_i32 = arith.constant 0 : i32
    %c0_i32_0 = arith.constant 0 : i32
    %c0_i32_1 = arith.constant 0 : i32
    return %c0_i32, %c0_i32_0 : i32, i32
  }
  func.func @transform_9(%arg0: i32) -> (i32, i32) {
    %c0_i32 = arith.constant 0 : i32
    %c0_i32_0 = arith.constant 0 : i32
    %c0_i32_1 = arith.constant 0 : i32
    return %c0_i32, %c0_i32_0 : i32, i32
  }
  func.func @transform_10(%arg0: i32) -> (i32, i32) {
    %c0_i32 = arith.constant 0 : i32
    %c0_i32_0 = arith.constant 0 : i32
    %c0_i32_1 = arith.constant 0 : i32
    return %c0_i32, %c0_i32_0 : i32, i32
  }
  func.func @transform_11(%arg0: i32) -> (i32, i32) {
    %c0_i32 = arith.constant 0 : i32
    %c0_i32_0 = arith.constant 0 : i32
    %c0_i32_1 = arith.constant 0 : i32
    return %c0_i32, %c0_i32_0 : i32, i32
  }
  func.func @transform_12(%arg0: i32) -> (i32, i32) {
    %c0_i32 = arith.constant 0 : i32
    %c0_i32_0 = arith.constant 0 : i32
    %c0_i32_1 = arith.constant 0 : i32
    return %c0_i32, %c0_i32_0 : i32, i32
  }
  func.func @transform_13(%arg0: i32) -> (i32, i32) {
    %c0_i32 = arith.constant 0 : i32
    %c0_i32_0 = arith.constant 0 : i32
    %c0_i32_1 = arith.constant 0 : i32
    return %c0_i32, %c0_i32_0 : i32, i32
  }
  func.func @transform_14(%arg0: i32) -> (i32, i32) {
    %c0_i32 = arith.constant 0 : i32
    %c0_i32_0 = arith.constant 0 : i32
    %c0_i32_1 = arith.constant 0 : i32
    return %c0_i32, %c0_i32_0 : i32, i32
  }
  func.func @transform_15(%arg0: i32) -> (i32, i32) {
    %c0_i32 = arith.constant 0 : i32
    %c0_i32_0 = arith.constant 0 : i32
    %c0_i32_1 = arith.constant 0 : i32
    return %c0_i32, %c0_i32_0 : i32, i32
  }
  func.func @transform_16(%arg0: i32) -> (i32, i32) {
    %c0_i32 = arith.constant 0 : i32
    %c0_i32_0 = arith.constant 0 : i32
    %c0_i32_1 = arith.constant 0 : i32
    return %c0_i32, %c0_i32_0 : i32, i32
  }
  func.func @transform_17(%arg0: i32) -> (i32, i32) {
    %c0_i32 = arith.constant 0 : i32
    %c0_i32_0 = arith.constant 0 : i32
    %c0_i32_1 = arith.constant 0 : i32
    return %c0_i32, %c0_i32_0 : i32, i32
  }
  func.func @transform_18(%arg0: i32) -> (i32, i32) {
    %c0_i32 = arith.constant 0 : i32
    %c0_i32_0 = arith.constant 0 : i32
    %c0_i32_1 = arith.constant 0 : i32
    return %c0_i32, %c0_i32_0 : i32, i32
  }
  func.func @transform_19(%arg0: i32) -> (i32, i32) {
    %c0_i32 = arith.constant 0 : i32
    %c0_i32_0 = arith.constant 0 : i32
    %c0_i32_1 = arith.constant 0 : i32
    return %c0_i32, %c0_i32_0 : i32, i32
  }
  func.func @transform_20(%arg0: i32) -> (i32, i32) {
    %c0_i32 = arith.constant 0 : i32
    %c0_i32_0 = arith.constant 0 : i32
    %c0_i32_1 = arith.constant 0 : i32
    return %c0_i32, %c0_i32_0 : i32, i32
  }
  func.func @transform_21(%arg0: i32) -> (i32, i32) {
    %c0_i32 = arith.constant 0 : i32
    %c0_i32_0 = arith.constant 0 : i32
    %c0_i32_1 = arith.constant 0 : i32
    return %c0_i32, %c0_i32_0 : i32, i32
  }
  func.func @transform_22(%arg0: i32) -> (i32, i32, i32) {
    %c0_i32 = arith.constant 0 : i32
    %c0_i32_0 = arith.constant 0 : i32
    %c0_i32_1 = arith.constant 0 : i32
    return %arg0, %c0_i32, %c0_i32_0 : i32, i32, i32
  }
}

</mosaic_0001>

<llo_original>
// kernel: tpu_custom_call.1
$region0: #{tpu_custom_call.1}
  #allocation0 [shape = 'u32[]', space=smem, size = 0x4, offset = 0x4, fixed_abs, tag = 'smem constant byte address 0x4 - core index']
  #allocation1 [shape = 'u32[144,128]{1,0:T(1,128)}', space=vmem, size = 0x12000, scoped, tag = 'internal scratch']
  %s0 = inlined_call_operand.vmem [shape: f32[2,8,32], index: 0, kind: input, shape index: {}]
  %s1 = inlined_call_operand.vmem [shape: f32[2,16,32], index: 1, kind: input, shape index: {}]
  %s2 = inlined_call_operand.hbm [shape: f32[2,8,32], index: 2, kind: input, shape index: {}]
  %s3 = inlined_call_operand.hbm [shape: f32[2,16,32], index: 3, kind: input, shape index: {}]
  %s4 = inlined_call_operand.hbm [shape: bf16[32,96], index: 4, kind: input, shape index: {}]
  %s5 = inlined_call_operand.hbm [shape: f32[1,96], index: 5, kind: input, shape index: {}]
  %s6 = inlined_call_operand.hbm [shape: bf16[32,32], index: 6, kind: input, shape index: {}]
  %s7 = inlined_call_operand.hbm [shape: f32[1,32], index: 7, kind: input, shape index: {}]
  %s8 = inlined_call_operand.hbm [shape: bf16[32,96], index: 8, kind: input, shape index: {}]
  %s9 = inlined_call_operand.hbm [shape: f32[1,96], index: 9, kind: input, shape index: {}]
  %s10 = inlined_call_operand.vmem [shape: bf16[32,32], index: 10, kind: input, shape index: {}]
  %s11 = inlined_call_operand.hbm [shape: f32[1,32], index: 11, kind: input, shape index: {}]
  %s12 = inlined_call_operand.hbm [shape: f32[1,32], index: 12, kind: input, shape index: {}]
  %s13 = inlined_call_operand.hbm [shape: f32[1,32], index: 13, kind: input, shape index: {}]
  %s14 = inlined_call_operand.hbm [shape: f32[1,32], index: 14, kind: input, shape index: {}]
  %s15 = inlined_call_operand.hbm [shape: f32[1,32], index: 15, kind: input, shape index: {}]
  %s16 = inlined_call_operand.hbm [shape: f32[1,32], index: 16, kind: input, shape index: {}]
  %s17 = inlined_call_operand.hbm [shape: f32[1,32], index: 17, kind: input, shape index: {}]
  %s18 = inlined_call_operand.hbm [shape: bf16[32,64], index: 18, kind: input, shape index: {}]
  %s19 = inlined_call_operand.vmem [shape: f32[1,64], index: 19, kind: input, shape index: {}]
  %s20 = inlined_call_operand.vmem [shape: bf16[64,32], index: 20, kind: input, shape index: {}]
  %s21 = inlined_call_operand.vmem [shape: f32[1,32], index: 21, kind: input, shape index: {}]
  %s22 = inlined_call_operand.hbm [shape: f32[2,8,32], index: 22, kind: output, shape index: {}]
  %s23 = sld [smem:[#allocation0]]
  $region162: #{tpu_custom_call.1} parent=0
    _
  %s25 = ssub.s32 1, %s23
  %s26 = scalar_select 0, %s25, %s23
  $region1: #{tpu_custom_call.1} parent=0
    #allocation2 [shape = 'u8[8192]{0}', space=vmem, size = 0x2000, scoped, tag = 'input window, operand 2, single buffered']
    #allocation3 [shape = 's32[1]{0}', space=sflag, size = 0x4, scoped, tag = 'scoped memory for tpu_custom_call.1']
    #allocation4 [shape = 's32[1]{0}', space=sflag, size = 0x4, scoped, tag = 'scoped memory for tpu_custom_call.1']
    #allocation5 [shape = 'u8[16384]{0}', space=vmem, size = 0x4000, scoped, tag = 'input window, operand 3, single buffered']
    #allocation6 [shape = 's32[1]{0}', space=sflag, size = 0x4, scoped, tag = 'scoped memory for tpu_custom_call.1']
    #allocation7 [shape = 'u8[8192]{0}', space=vmem, size = 0x2000, scoped, tag = 'input window, operand 4, single buffered']
    #allocation8 [shape = 'u8[512]{0}', space=vmem, size = 0x400, scoped, tag = 'input window, operand 5, single buffered']
    #allocation9 [shape = 's32[1]{0}', space=sflag, size = 0x4, scoped, tag = 'scoped memory for tpu_custom_call.1']
    #allocation10 [shape = 'u8[8192]{0}', space=vmem, size = 0x2000, scoped, tag = 'input window, operand 6, single buffered']
    #allocation11 [shape = 'u8[512]{0}', space=vmem, size = 0x400, scoped, tag = 'input window, operand 7, single buffered']
    #allocation12 [shape = 's32[1]{0}', space=sflag, size = 0x4, scoped, tag = 'scoped memory for tpu_custom_call.1']
    #allocation13 [shape = 'u8[8192]{0}', space=vmem, size = 0x2000, scoped, tag = 'input window, operand 8, single buffered']
    #allocation14 [shape = 'u8[512]{0}', space=vmem, size = 0x400, scoped, tag = 'input window, operand 9, single buffered']
    #allocation15 [shape = 's32[1]{0}', space=sflag, size = 0x4, scoped, tag = 'scoped memory for tpu_custom_call.1']
    #allocation16 [shape = 'u8[512]{0}', space=vmem, size = 0x400, scoped, tag = 'input window, operand 11, single buffered']
    #allocation17 [shape = 'u8[512]{0}', space=vmem, size = 0x400, scoped, tag = 'input window, operand 12, single buffered']
    #allocation18 [shape = 's32[1]{0}', space=sflag, size = 0x4, scoped, tag = 'scoped memory for tpu_custom_call.1']
    #allocation19 [shape = 'u8[512]{0}', space=vmem, size = 0x400, scoped, tag = 'input window, operand 13, single buffered']
    #allocation20 [shape = 'u8[512]{0}', space=vmem, size = 0x400, scoped, tag = 'input window, operand 14, single buffered']
    #allocation21 [shape = 's32[1]{0}', space=sflag, size = 0x4, scoped, tag = 'scoped memory for tpu_custom_call.1']
    #allocation22 [shape = 'u8[512]{0}', space=vmem, size = 0x400, scoped, tag = 'input window, operand 15, single buffered']
    #allocation23 [shape = 'u8[512]{0}', space=vmem, size = 0x400, scoped, tag = 'input window, operand 16, single buffered']
    #allocation24 [shape = 's32[1]{0}', space=sflag, size = 0x4, scoped, tag = 'scoped memory for tpu_custom_call.1']
    #allocation25 [shape = 'u8[512]{0}', space=vmem, size = 0x400, scoped, tag = 'input window, operand 17, single buffered']
    #allocation26 [shape = 'u8[8192]{0}', space=vmem, size = 0x2000, scoped, tag = 'input window, operand 18, single buffered']
    #allocation27 [shape = 's32[1]{0}', space=sflag, size = 0x4, scoped, tag = 'scoped memory for tpu_custom_call.1']
    #allocation28 [shape = 'u8[8192]{0}', space=vmem, size = 0x2000, scoped, tag = 'output window, operand 0, single buffered']
    %27 = vsyncpa [#allocation3], 0
    %28 = vsyncpa [#allocation6], 0
    %29 = vsyncpa [#allocation9], 0
    %30 = vsyncpa [#allocation12], 0
    %31 = vsyncpa [#allocation15], 0
    %32 = vsyncpa [#allocation18], 0
    %33 = vsyncpa [#allocation21], 0
    %34 = vsyncpa [#allocation24], 0
    %35 = vsyncpa [#allocation27], 0
    %36 = vsyncpa [#allocation4], 0
    // Predicated region
    $region2: #{tpu_custom_call.1} parent=1 // pred_check
      _
    $region3: #{tpu_custom_call.1} parent=1 // pred_check_branch
      %38 = sbr.rel (0) target = $region5
    $region4: #{tpu_custom_call.1} parent=1 // pred_region
      _
    $region5: #{tpu_custom_call.1} parent=1 // pred_fallthru
      _
    // Predicated region
    $region6: #{tpu_custom_call.1} parent=1 // pred_check
      _
    $region7: #{tpu_custom_call.1} parent=1 // pred_check_branch
      %40 = sbr.rel (0) target = $region9
    $region8: #{tpu_custom_call.1} parent=1 // pred_region
      _
    $region9: #{tpu_custom_call.1} parent=1 // pred_fallthru
      _
    // Predicated region
    $region10: #{tpu_custom_call.1} parent=1 // pred_check
      _
    $region11: #{tpu_custom_call.1} parent=1 // pred_check_branch
      %42 = sbr.rel (0) target = $region13
    $region12: #{tpu_custom_call.1} parent=1 // pred_region
      %s44 = ssub.s32 256, 256
      %45 = vsyncadd [#allocation3], %s44
      %s46 = sshll.u32 [#allocation2], 4
      %s47 = int_to_ptr.vmem [resolvable:$true] %s46
      %52 = dma.hbm_to_vmem [thread:$0]  %s2, 256, %s47, [#allocation3], 128, 128, 8
    $region13: #{tpu_custom_call.1} parent=1 // pred_fallthru
      _
    // Predicated region
    $region14: #{tpu_custom_call.1} parent=1 // pred_check
      _
    $region15: #{tpu_custom_call.1} parent=1 // pred_check_branch
      %54 = sbr.rel (0) target = $region17
    $region16: #{tpu_custom_call.1} parent=1 // pred_region
      %s56 = ssub.s32 512, 512
      %57 = vsyncadd [#allocation6], %s56
      %s58 = sshll.u32 [#allocation5], 4
      %s59 = int_to_ptr.vmem [resolvable:$true] %s58
      %64 = dma.hbm_to_vmem [thread:$0]  %s3, 512, %s59, [#allocation6], 128, 128, 8
    $region17: #{tpu_custom_call.1} parent=1 // pred_fallthru
      _
    // Predicated region
    $region18: #{tpu_custom_call.1} parent=1 // pred_check
      _
    $region19: #{tpu_custom_call.1} parent=1 // pred_check_branch
      %66 = sbr.rel (0) target = $region21
    $region20: #{tpu_custom_call.1} parent=1 // pred_region
      %s68 = ssub.s32 256, 256
      %69 = vsyncadd [#allocation6], %s68
      %s70 = sshll.u32 [#allocation7], 4
      %s71 = int_to_ptr.vmem [resolvable:$true] %s70
      %76 = dma.hbm_to_vmem [thread:$0]  %s4, 256, %s71, [#allocation6], 64, 64, 4
    $region21: #{tpu_custom_call.1} parent=1 // pred_fallthru
      _
    // Predicated region
    $region22: #{tpu_custom_call.1} parent=1 // pred_check
      _
    $region23: #{tpu_custom_call.1} parent=1 // pred_check_branch
      %78 = sbr.rel (0) target = $region25
    $region24: #{tpu_custom_call.1} parent=1 // pred_region
      %s80 = ssub.s32 16, 16
      %81 = vsyncadd [#allocation9], %s80
      %s83 = sshll.u32 [#allocation8], 4
      %s84 = int_to_ptr.vmem [resolvable:$true] %s83
      %86 = dma.hbm_to_vmem [thread:$0]  %s5, 16, %s84, [#allocation9]
    $region25: #{tpu_custom_call.1} parent=1 // pred_fallthru
      _
    // Predicated region
    $region26: #{tpu_custom_call.1} parent=1 // pred_check
      _
    $region27: #{tpu_custom_call.1} parent=1 // pred_check_branch
      %88 = sbr.rel (0) target = $region29
    $region28: #{tpu_custom_call.1} parent=1 // pred_region
      %s90 = ssub.s32 256, 256
      %91 = vsyncadd [#allocation9], %s90
      %s92 = sshll.u32 [#allocation10], 4
      %s93 = int_to_ptr.vmem [resolvable:$true] %s92
      %98 = dma.hbm_to_vmem [thread:$0]  %s6, 256, %s93, [#allocation9], 64, 64, 4
    $region29: #{tpu_custom_call.1} parent=1 // pred_fallthru
      _
    // Predicated region
    $region30: #{tpu_custom_call.1} parent=1 // pred_check
      _
    $region31: #{tpu_custom_call.1} parent=1 // pred_check_branch
      %100 = sbr.rel (0) target = $region33
    $region32: #{tpu_custom_call.1} parent=1 // pred_region
      %s102 = ssub.s32 16, 16
      %103 = vsyncadd [#allocation12], %s102
      %s105 = sshll.u32 [#allocation11], 4
      %s106 = int_to_ptr.vmem [resolvable:$true] %s105
      %108 = dma.hbm_to_vmem [thread:$0]  %s7, 16, %s106, [#allocation12]
    $region33: #{tpu_custom_call.1} parent=1 // pred_fallthru
      _
    // Predicated region
    $region34: #{tpu_custom_call.1} parent=1 // pred_check
      _
    $region35: #{tpu_custom_call.1} parent=1 // pred_check_branch
      %110 = sbr.rel (0) target = $region37
    $region36: #{tpu_custom_call.1} parent=1 // pred_region
      %s112 = ssub.s32 256, 256
      %113 = vsyncadd [#allocation12], %s112
      %s114 = sshll.u32 [#allocation13], 4
      %s115 = int_to_ptr.vmem [resolvable:$true] %s114
      %120 = dma.hbm_to_vmem [thread:$0]  %s8, 256, %s115, [#allocation12], 64, 64, 4
    $region37: #{tpu_custom_call.1} parent=1 // pred_fallthru
      _
    // Predicated region
    $region38: #{tpu_custom_call.1} parent=1 // pred_check
      _
    $region39: #{tpu_custom_call.1} parent=1 // pred_check_branch
      %122 = sbr.rel (0) target = $region41
    $region40: #{tpu_custom_call.1} parent=1 // pred_region
      %s124 = ssub.s32 16, 16
      %125 = vsyncadd [#allocation15], %s124
      %s127 = sshll.u32 [#allocation14], 4
      %s128 = int_to_ptr.vmem [resolvable:$true] %s127
      %130 = dma.hbm_to_vmem [thread:$0]  %s9, 16, %s128, [#allocation15]
    $region41: #{tpu_custom_call.1} parent=1 // pred_fallthru
      _
    // Predicated region
    $region42: #{tpu_custom_call.1} parent=1 // pred_check
      _
    $region43: #{tpu_custom_call.1} parent=1 // pred_check_branch
      %132 = sbr.rel (0) target = $region45
    $region44: #{tpu_custom_call.1} parent=1 // pred_region
      _
    $region45: #{tpu_custom_call.1} parent=1 // pred_fallthru
      _
    // Predicated region
    $region46: #{tpu_custom_call.1} parent=1 // pred_check
      _
    $region47: #{tpu_custom_call.1} parent=1 // pred_check_branch
      %134 = sbr.rel (0) target = $region49
    $region48: #{tpu_custom_call.1} parent=1 // pred_region
      %s136 = ssub.s32 16, 16
      %137 = vsyncadd [#allocation15], %s136
      %s139 = sshll.u32 [#allocation16], 4
      %s140 = int_to_ptr.vmem [resolvable:$true] %s139
      %142 = dma.hbm_to_vmem [thread:$0]  %s11, 16, %s140, [#allocation15]
    $region49: #{tpu_custom_call.1} parent=1 // pred_fallthru
      _
    // Predicated region
    $region50: #{tpu_custom_call.1} parent=1 // pred_check
      _
    $region51: #{tpu_custom_call.1} parent=1 // pred_check_branch
      %144 = sbr.rel (0) target = $region53
    $region52: #{tpu_custom_call.1} parent=1 // pred_region
      %s146 = ssub.s32 16, 16
      %147 = vsyncadd [#allocation18], %s146
      %s149 = sshll.u32 [#allocation17], 4
      %s150 = int_to_ptr.vmem [resolvable:$true] %s149
      %152 = dma.hbm_to_vmem [thread:$0]  %s12, 16, %s150, [#allocation18]
    $region53: #{tpu_custom_call.1} parent=1 // pred_fallthru
      _
    // Predicated region
    $region54: #{tpu_custom_call.1} parent=1 // pred_check
      _
    $region55: #{tpu_custom_call.1} parent=1 // pred_check_branch
      %154 = sbr.rel (0) target = $region57
    $region56: #{tpu_custom_call.1} parent=1 // pred_region
      %s156 = ssub.s32 16, 16
      %157 = vsyncadd [#allocation18], %s156
      %s159 = sshll.u32 [#allocation19], 4
      %s160 = int_to_ptr.vmem [resolvable:$true] %s159
      %162 = dma.hbm_to_vmem [thread:$0]  %s13, 16, %s160, [#allocation18]
    $region57: #{tpu_custom_call.1} parent=1 // pred_fallthru
      _
    // Predicated region
    $region58: #{tpu_custom_call.1} parent=1 // pred_check
      _
    $region59: #{tpu_custom_call.1} parent=1 // pred_check_branch
      %164 = sbr.rel (0) target = $region61
    $region60: #{tpu_custom_call.1} parent=1 // pred_region
      %s166 = ssub.s32 16, 16
      %167 = vsyncadd [#allocation21], %s166
      %s169 = sshll.u32 [#allocation20], 4
      %s170 = int_to_ptr.vmem [resolvable:$true] %s169
      %172 = dma.hbm_to_vmem [thread:$0]  %s14, 16, %s170, [#allocation21]
    $region61: #{tpu_custom_call.1} parent=1 // pred_fallthru
      _
    // Predicated region
    $region62: #{tpu_custom_call.1} parent=1 // pred_check
      _
    $region63: #{tpu_custom_call.1} parent=1 // pred_check_branch
      %174 = sbr.rel (0) target = $region65
    $region64: #{tpu_custom_call.1} parent=1 // pred_region
      %s176 = ssub.s32 16, 16
      %177 = vsyncadd [#allocation21], %s176
      %s179 = sshll.u32 [#allocation22], 4
      %s180 = int_to_ptr.vmem [resolvable:$true] %s179
      %182 = dma.hbm_to_vmem [thread:$0]  %s15, 16, %s180, [#allocation21]
    $region65: #{tpu_custom_call.1} parent=1 // pred_fallthru
      _
    // Predicated region
    $region66: #{tpu_custom_call.1} parent=1 // pred_check
      _
    $region67: #{tpu_custom_call.1} parent=1 // pred_check_branch
      %184 = sbr.rel (0) target = $region69
    $region68: #{tpu_custom_call.1} parent=1 // pred_region
      %s186 = ssub.s32 16, 16
      %187 = vsyncadd [#allocation24], %s186
      %s189 = sshll.u32 [#allocation23], 4
      %s190 = int_to_ptr.vmem [resolvable:$true] %s189
      %192 = dma.hbm_to_vmem [thread:$0]  %s16, 16, %s190, [#allocation24]
    $region69: #{tpu_custom_call.1} parent=1 // pred_fallthru
      _
    // Predicated region
    $region70: #{tpu_custom_call.1} parent=1 // pred_check
      _
    $region71: #{tpu_custom_call.1} parent=1 // pred_check_branch
      %194 = sbr.rel (0) target = $region73
    $region72: #{tpu_custom_call.1} parent=1 // pred_region
      %s196 = ssub.s32 16, 16
      %197 = vsyncadd [#allocation24], %s196
      %s199 = sshll.u32 [#allocation25], 4
      %s200 = int_to_ptr.vmem [resolvable:$true] %s199
      %202 = dma.hbm_to_vmem [thread:$0]  %s17, 16, %s200, [#allocation24]
    $region73: #{tpu_custom_call.1} parent=1 // pred_fallthru
      _
    // Predicated region
    $region74: #{tpu_custom_call.1} parent=1 // pred_check
      _
    $region75: #{tpu_custom_call.1} parent=1 // pred_check_branch
      %204 = sbr.rel (0) target = $region77
    $region76: #{tpu_custom_call.1} parent=1 // pred_region
      %s206 = ssub.s32 256, 256
      %207 = vsyncadd [#allocation27], %s206
      %s208 = sshll.u32 [#allocation26], 4
      %s209 = int_to_ptr.vmem [resolvable:$true] %s208
      %214 = dma.hbm_to_vmem [thread:$0]  %s18, 256, %s209, [#allocation27], 64, 64, 4
    $region77: #{tpu_custom_call.1} parent=1 // pred_fallthru
      _
    // Predicated region
    $region78: #{tpu_custom_call.1} parent=1 // pred_check
      _
    $region79: #{tpu_custom_call.1} parent=1 // pred_check_branch
      %216 = sbr.rel (0) target = $region81
    $region80: #{tpu_custom_call.1} parent=1 // pred_region
      _
    $region81: #{tpu_custom_call.1} parent=1 // pred_fallthru
      _
    // Predicated region
    $region82: #{tpu_custom_call.1} parent=1 // pred_check
      _
    $region83: #{tpu_custom_call.1} parent=1 // pred_check_branch
      %218 = sbr.rel (0) target = $region85
    $region84: #{tpu_custom_call.1} parent=1 // pred_region
      _
    $region85: #{tpu_custom_call.1} parent=1 // pred_fallthru
      _
    // Predicated region
    $region86: #{tpu_custom_call.1} parent=1 // pred_check
      _
    $region87: #{tpu_custom_call.1} parent=1 // pred_check_branch
      %220 = sbr.rel (0) target = $region89
    $region88: #{tpu_custom_call.1} parent=1 // pred_region
      _
    $region89: #{tpu_custom_call.1} parent=1 // pred_fallthru
      _
    // Predicated region
    $region90: #{tpu_custom_call.1} parent=1 // pred_check
      _
    $region91: #{tpu_custom_call.1} parent=1 // pred_check_branch
      %222 = sbr.rel (0) target = $region93
    $region92: #{tpu_custom_call.1} parent=1 // pred_region
      %223 = dma.done [#allocation3], 256
    $region93: #{tpu_custom_call.1} parent=1 // pred_fallthru
      _
    // Predicated region
    $region94: #{tpu_custom_call.1} parent=1 // pred_check
      _
    $region95: #{tpu_custom_call.1} parent=1 // pred_check_branch
      %225 = sbr.rel (0) target = $region97
    $region96: #{tpu_custom_call.1} parent=1 // pred_region
      %226 = dma.done [#allocation6], 512
    $region97: #{tpu_custom_call.1} parent=1 // pred_fallthru
      _
    // Predicated region
    $region98: #{tpu_custom_call.1} parent=1 // pred_check
      _
    $region99: #{tpu_custom_call.1} parent=1 // pred_check_branch
      %228 = sbr.rel (0) target = $region101
    $region100: #{tpu_custom_call.1} parent=1 // pred_region
      %229 = dma.done [#allocation6], 256
    $region101: #{tpu_custom_call.1} parent=1 // pred_fallthru
      _
    // Predicated region
    $region102: #{tpu_custom_call.1} parent=1 // pred_check
      _
    $region103: #{tpu_custom_call.1} parent=1 // pred_check_branch
      %231 = sbr.rel (0) target = $region105
    $region104: #{tpu_custom_call.1} parent=1 // pred_region
      %232 = dma.done [#allocation9], 16
    $region105: #{tpu_custom_call.1} parent=1 // pred_fallthru
      _
    // Predicated region
    $region106: #{tpu_custom_call.1} parent=1 // pred_check
      _
    $region107: #{tpu_custom_call.1} parent=1 // pred_check_branch
      %234 = sbr.rel (0) target = $region109
    $region108: #{tpu_custom_call.1} parent=1 // pred_region
      %235 = dma.done [#allocation9], 256
    $region109: #{tpu_custom_call.1} parent=1 // pred_fallthru
      _
    // Predicated region
    $region110: #{tpu_custom_call.1} parent=1 // pred_check
      _
    $region111: #{tpu_custom_call.1} parent=1 // pred_check_branch
      %237 = sbr.rel (0) target = $region113
    $region112: #{tpu_custom_call.1} parent=1 // pred_region
      %238 = dma.done [#allocation12], 16
    $region113: #{tpu_custom_call.1} parent=1 // pred_fallthru
      _
    // Predicated region
    $region114: #{tpu_custom_call.1} parent=1 // pred_check
      _
    $region115: #{tpu_custom_call.1} parent=1 // pred_check_branch
      %240 = sbr.rel (0) target = $region117
    $region116: #{tpu_custom_call.1} parent=1 // pred_region
      %241 = dma.done [#allocation12], 256
    $region117: #{tpu_custom_call.1} parent=1 // pred_fallthru
      _
    // Predicated region
    $region118: #{tpu_custom_call.1} parent=1 // pred_check
      _
    $region119: #{tpu_custom_call.1} parent=1 // pred_check_branch
      %243 = sbr.rel (0) target = $region121
    $region120: #{tpu_custom_call.1} parent=1 // pred_region
      %244 = dma.done [#allocation15], 16
    $region121: #{tpu_custom_call.1} parent=1 // pred_fallthru
      _
    // Predicated region
    $region122: #{tpu_custom_call.1} parent=1 // pred_check
      _
    $region123: #{tpu_custom_call.1} parent=1 // pred_check_branch
      %246 = sbr.rel (0) target = $region125
    $region124: #{tpu_custom_call.1} parent=1 // pred_region
      %247 = dma.done [#allocation15], 16
    $region125: #{tpu_custom_call.1} parent=1 // pred_fallthru
      _
    // Predicated region
    $region126: #{tpu_custom_call.1} parent=1 // pred_check
      _
    $region127: #{tpu_custom_call.1} parent=1 // pred_check_branch
      %249 = sbr.rel (0) target = $region129
    $region128: #{tpu_custom_call.1} parent=1 // pred_region
      %250 = dma.done [#allocation18], 16
    $region129: #{tpu_custom_call.1} parent=1 // pred_fallthru
      _
    // Predicated region
    $region130: #{tpu_custom_call.1} parent=1 // pred_check
      _
    $region131: #{tpu_custom_call.1} parent=1 // pred_check_branch
      %252 = sbr.rel (0) target = $region133
    $region132: #{tpu_custom_call.1} parent=1 // pred_region
      %253 = dma.done [#allocation18], 16
    $region133: #{tpu_custom_call.1} parent=1 // pred_fallthru
      _
    // Predicated region
    $region134: #{tpu_custom_call.1} parent=1 // pred_check
      _
    $region135: #{tpu_custom_call.1} parent=1 // pred_check_branch
      %255 = sbr.rel (0) target = $region137
    $region136: #{tpu_custom_call.1} parent=1 // pred_region
      %256 = dma.done [#allocation21], 16
    $region137: #{tpu_custom_call.1} parent=1 // pred_fallthru
      _
    // Predicated region
    $region138: #{tpu_custom_call.1} parent=1 // pred_check
      _
    $region139: #{tpu_custom_call.1} parent=1 // pred_check_branch
      %258 = sbr.rel (0) target = $region141
    $region140: #{tpu_custom_call.1} parent=1 // pred_region
      %259 = dma.done [#allocation21], 16
    $region141: #{tpu_custom_call.1} parent=1 // pred_fallthru
      _
    // Predicated region
    $region142: #{tpu_custom_call.1} parent=1 // pred_check
      _
    $region143: #{tpu_custom_call.1} parent=1 // pred_check_branch
      %261 = sbr.rel (0) target = $region145
    $region144: #{tpu_custom_call.1} parent=1 // pred_region
      %262 = dma.done [#allocation24], 16
    $region145: #{tpu_custom_call.1} parent=1 // pred_fallthru
      _
    // Predicated region
    $region146: #{tpu_custom_call.1} parent=1 // pred_check
      _
    $region147: #{tpu_custom_call.1} parent=1 // pred_check_branch
      %264 = sbr.rel (0) target = $region149
    $region148: #{tpu_custom_call.1} parent=1 // pred_region
      %265 = dma.done [#allocation24], 16
    $region149: #{tpu_custom_call.1} parent=1 // pred_fallthru
      _
    // Predicated region
    $region150: #{tpu_custom_call.1} parent=1 // pred_check
      _
    $region151: #{tpu_custom_call.1} parent=1 // pred_check_branch
      %267 = sbr.rel (0) target = $region153
    $region152: #{tpu_custom_call.1} parent=1 // pred_region
      %268 = dma.done [#allocation27], 256
    $region153: #{tpu_custom_call.1} parent=1 // pred_fallthru
      _
    %v270 = vld [vmem:[%s0] sm:$0xff]
    %v271 = vld [vmem:[%s0 + $0x8] sm:$0xff]
    %v272 = vld [vmem:[#allocation2] sm:$0xff]
    %v273 = vld [vmem:[#allocation2 + $0x8] sm:$0xff]
    %v274 = vld [vmem:[%s1] sm:$0xff]
    %v275 = vld [vmem:[%s1 + $0x8] sm:$0xff]
    %v276 = vld [vmem:[%s1 + $0x10] sm:$0xff]
    %v277 = vld [vmem:[%s1 + $0x18] sm:$0xff]
    %v278 = vld [vmem:[#allocation5] sm:$0xff]
    %v279 = vld [vmem:[#allocation5 + $0x8] sm:$0xff]
    %v280 = vld [vmem:[#allocation5 + $0x10] sm:$0xff]
    %v281 = vld [vmem:[#allocation5 + $0x18] sm:$0xff]
    %v282 = vadd.f32 %v270, %v272
    %v283 = vadd.f32 %v271, %v273
    %v284 = vld [vmem:[#allocation7] sm:$0xf]
    %v285 = vld [vmem:[#allocation7 + $0x4] sm:$0xf]
    %v286 = vld [vmem:[#allocation7 + $0x8] sm:$0xf]
    %v287 = vld [vmem:[#allocation7 + $0xc] sm:$0xf]
    %v288 = vld [vmem:[#allocation8] sm:$0x1]
    %v289 = vpack.c.bf16 %v283, %v282
    %v291 = vlaneseq
    %v292 = vshrl.u32 %v291, 7
    %v293 = vsub.s32 0, %v292
    %v294 = vrot.slane %v288, %v293
    %v300 = vunpack.c.l.b16 %v284
    %v301 = vunpack.c.l.b16 %v285
    %v302 = vunpack.c.l.b16 %v286
    %v303 = vunpack.c.l.b16 %v287
    %v304 = vpack.c.b16 %v301, %v300
    %v305 = vpack.c.b16 %v303, %v302
    %vm308 = vcmask 261120
    %v310 = vsel %vm308, %v289, 0
    %312 = vmatprep.subr.bf16.mxu0 0
    %313 = vmatpush1.bf16.msra.mxu0 0
    %314 = vmatprep.subr.bf16.mxu0 0
    %315 = vmatpush1.bf16.msra.mxu0 0
    %316 = vmatprep.subr.bf16.mxu0 0
    %317 = vmatpush1.bf16.msra.mxu0 0
    %318 = vmatprep.subr.bf16.mxu0 0
    %319 = vmatpush1.bf16.msra.mxu0 0
    %320 = vmatprep.subr.bf16.mxu0 0
    %321 = vmatpush1.bf16.msra.mxu0 0
    %322 = vmatprep.subr.bf16.mxu0 0
    %323 = vmatpush1.bf16.msra.mxu0 0
    %324 = vmatprep.subr.bf16.mxu0 0
    %325 = vmatpush1.bf16.msra.mxu0 %v305
    %326 = vmatprep.subr.bf16.mxu0 0
    %327 = vmatpush1.bf16.msra.mxu0 %v304
    %328 = vmatprep.subr.bf16.mxu0 0
    %329 = vmatpush2.bf16.msra.mxu0 0
    %330 = vmatprep.subr.bf16.mxu0 0
    %331 = vmatpush2.bf16.msra.mxu0 0
    %332 = vmatprep.subr.bf16.mxu0 0
    %333 = vmatpush2.bf16.msra.mxu0 0
    %334 = vmatprep.subr.bf16.mxu0 0
    %335 = vmatpush2.bf16.msra.mxu0 0
    %336 = vmatprep.subr.bf16.mxu0 0
    %337 = vmatpush2.bf16.msra.mxu0 0
    %338 = vmatprep.subr.bf16.mxu0 0
    %339 = vmatpush2.bf16.msra.mxu0 0
    %340 = vmatprep.subr.bf16.mxu0 0
    %341 = vmatpush2.bf16.msra.mxu0 0
    %342 = vmatprep.subr.bf16.mxu0 0
    %343 = vmatpush2.bf16.msra.mxu0 0
    %344 = vmatprep.mubr.bf16.mxu0 0
    %345 = vmatmul.mubr.bf16.gmra.mxu0 %v310
    %v346 = vpop.f32.mrf.mxu0
    %v347 = vadd.f32 %v294, %v346
    %v348 = vpop.f32.mrf.mxu0
    %v349 = vpop.f32.mrf.mxu0
    %v350 = vadd.f32 %v294, %v349
    %v351 = vpop.f32.mrf.mxu0
    %352 = vdwg.mxu0
    %v353 = vpack.c.bf16 %v271, %v270
    %354 = vrot.lane.b32.xlu0 %v304, 64
    %v355 = vpop.permute.xlu0 %354
    %356 = vrot.lane.b32.xlu0 %v305, 64
    %v357 = vpop.permute.xlu0 %356
    %360 = vrot.lane.b32.xlu0 %v294, 64
    %v361 = vpop.permute.xlu0 %360
    %v364 = vsel %vm308, %v353, 0
    %366 = vmatprep.subr.bf16.mxu0 0
    %367 = vmatpush1.bf16.msra.mxu0 0
    %368 = vmatprep.subr.bf16.mxu0 0
    %369 = vmatpush1.bf16.msra.mxu0 0
    %370 = vmatprep.subr.bf16.mxu0 0
    %371 = vmatpush1.bf16.msra.mxu0 0
    %372 = vmatprep.subr.bf16.mxu0 0
    %373 = vmatpush1.bf16.msra.mxu0 0
    %374 = vmatprep.subr.bf16.mxu0 0
    %375 = vmatpush1.bf16.msra.mxu0 0
    %376 = vmatprep.subr.bf16.mxu0 0
    %377 = vmatpush1.bf16.msra.mxu0 0
    %378 = vmatprep.subr.bf16.mxu0 0
    %379 = vmatpush1.bf16.msra.mxu0 %v357
    %380 = vmatprep.subr.bf16.mxu0 0
    %381 = vmatpush1.bf16.msra.mxu0 %v355
    %382 = vmatprep.subr.bf16.mxu0 0
    %383 = vmatpush2.bf16.msra.mxu0 0
    %384 = vmatprep.subr.bf16.mxu0 0
    %385 = vmatpush2.bf16.msra.mxu0 0
    %386 = vmatprep.subr.bf16.mxu0 0
    %387 = vmatpush2.bf16.msra.mxu0 0
    %388 = vmatprep.subr.bf16.mxu0 0
    %389 = vmatpush2.bf16.msra.mxu0 0
    %390 = vmatprep.subr.bf16.mxu0 0
    %391 = vmatpush2.bf16.msra.mxu0 0
    %392 = vmatprep.subr.bf16.mxu0 0
    %393 = vmatpush2.bf16.msra.mxu0 0
    %394 = vmatprep.subr.bf16.mxu0 0
    %395 = vmatpush2.bf16.msra.mxu0 0
    %396 = vmatprep.subr.bf16.mxu0 0
    %397 = vmatpush2.bf16.msra.mxu0 0
    %398 = vmatprep.mubr.bf16.mxu0 0
    %399 = vmatmul.mubr.bf16.gmra.mxu0 %v364
    %v400 = vpop.f32.mrf.mxu0
    %v401 = vadd.f32 %v361, %v400
    %v402 = vpop.f32.mrf.mxu0
    %v403 = vpop.f32.mrf.mxu0
    %v404 = vadd.f32 %v361, %v403
    %v405 = vpop.f32.mrf.mxu0
    %406 = vdwg.mxu0
    %v407 = vmul.f32 %v347, 0.35355338
    %v408 = vmul.f32 %v350, 0.35355338
    %v409 = vpack.c.bf16 %v408, %v407
    %v411 = vunpack.c.l.b16 %v409
    %v412 = vunpack.c.h.b16 %v409
    %v413 = vpack.c.b16 %v411, %v411
    %v414 = vpack.c.b16 %v412, %v412
    %v415 = vpack.c.bf16 %v350, %v347
    %v417 = vunpack.c.l.b16 %v415
    %v418 = vunpack.c.h.b16 %v415
    %v419 = vpack.c.b16 %v417, %v417
    %v420 = vpack.c.b16 %v418, %v418
    %v421 = vpack.c.bf16 %v404, %v401
    %v423 = vunpack.c.l.b16 %v421
    %v424 = vunpack.c.h.b16 %v421
    %v425 = vpack.c.b16 %v423, %v423
    %v426 = vpack.c.b16 %v424, %v424
    %427 = vrot.lane.b32.xlu0 %v413, 120
    %v428 = vpop.permute.xlu0 %427
    %429 = vrot.lane.b32.xlu0 %v414, 120
    %v430 = vpop.permute.xlu0 %429
    %431 = vrot.lane.b32.xlu0 %v413, 112
    %v432 = vpop.permute.xlu0 %431
    %433 = vrot.lane.b32.xlu0 %v414, 112
    %v434 = vpop.permute.xlu0 %433
    %435 = vrot.lane.b32.xlu0 %v413, 104
    %v436 = vpop.permute.xlu0 %435
    %437 = vrot.lane.b32.xlu0 %v414, 104
    %v438 = vpop.permute.xlu0 %437
    %439 = vrot.lane.b32.xlu0 %v419, 120
    %v440 = vpop.permute.xlu0 %439
    %441 = vrot.lane.b32.xlu0 %v420, 120
    %v442 = vpop.permute.xlu0 %441
    %443 = vrot.lane.b32.xlu0 %v419, 112
    %v444 = vpop.permute.xlu0 %443
    %445 = vrot.lane.b32.xlu0 %v420, 112
    %v446 = vpop.permute.xlu0 %445
    %447 = vrot.lane.b32.xlu0 %v419, 104
    %v448 = vpop.permute.xlu0 %447
    %449 = vrot.lane.b32.xlu0 %v420, 104
    %v450 = vpop.permute.xlu0 %449
    %451 = vrot.lane.b32.xlu0 %v425, 120
    %v452 = vpop.permute.xlu0 %451
    %453 = vrot.lane.b32.xlu0 %v426, 120
    %v454 = vpop.permute.xlu0 %453
    %455 = vrot.lane.b32.xlu0 %v425, 112
    %v456 = vpop.permute.xlu0 %455
    %457 = vrot.lane.b32.xlu0 %v426, 112
    %v458 = vpop.permute.xlu0 %457
    %459 = vrot.lane.b32.xlu0 %v425, 104
    %v460 = vpop.permute.xlu0 %459
    %461 = vrot.lane.b32.xlu0 %v426, 104
    %v462 = vpop.permute.xlu0 %461
    %463 = vrot.lane.b32.xlu0 %v419, 96
    %v464 = vpop.permute.xlu0 %463
    %vm465 = vcmask 64512
    %v467 = vsel %vm465, %v413, 0
    %v470 = vsel %vm465, %v464, 0
    %472 = vmatprep.subr.bf16.mxu0 0
    %473 = vmatpush1.bf16.xpose.msra.mxu0 0
    %474 = vmatprep.subr.bf16.mxu0 0
    %475 = vmatpush1.bf16.xpose.msra.mxu0 0
    %476 = vmatprep.subr.bf16.mxu0 0
    %477 = vmatpush1.bf16.xpose.msra.mxu0 0
    %478 = vmatprep.subr.bf16.mxu0 0
    %479 = vmatpush1.bf16.xpose.msra.mxu0 0
    %480 = vmatprep.subr.bf16.mxu0 0
    %481 = vmatpush1.bf16.xpose.msra.mxu0 0
    %482 = vmatprep.subr.bf16.mxu0 0
    %483 = vmatpush1.bf16.xpose.msra.mxu0 0
    %484 = vmatprep.subr.bf16.mxu0 0
    %485 = vmatpush1.bf16.xpose.msra.mxu0 0
    %486 = vmatprep.subr.bf16.mxu0 0
    %487 = vmatpush1.bf16.xpose.msra.mxu0 %v470
    %488 = vmatprep.subr.bf16.mxu0 0
    %489 = vmatpush2.bf16.xpose.msra.mxu0 0
    %490 = vmatprep.subr.bf16.mxu0 0
    %491 = vmatpush2.bf16.xpose.msra.mxu0 0
    %492 = vmatprep.subr.bf16.mxu0 0
    %493 = vmatpush2.bf16.xpose.msra.mxu0 0
    %494 = vmatprep.subr.bf16.mxu0 0
    %495 = vmatpush2.bf16.xpose.msra.mxu0 0
    %496 = vmatprep.subr.bf16.mxu0 0
    %497 = vmatpush2.bf16.xpose.msra.mxu0 0
    %498 = vmatprep.subr.bf16.mxu0 0
    %499 = vmatpush2.bf16.xpose.msra.mxu0 0
    %500 = vmatprep.subr.bf16.mxu0 0
    %501 = vmatpush2.bf16.xpose.msra.mxu0 0
    %502 = vmatprep.subr.bf16.mxu0 0
    %503 = vmatpush2.bf16.xpose.msra.mxu0 0
    %504 = vmatprep.mubr.bf16.mxu0 0
    %505 = vmatmul.mubr.bf16.gmra.mxu0 %v467
    %v506 = vpop.f32.mrf.mxu0
    %v507 = vadd.f32 0.0, %v506
    %v508 = vpop.f32.mrf.mxu0
    %v509 = vpop.f32.mrf.mxu0
    %v510 = vpop.f32.mrf.mxu0
    %511 = vdwg.mxu0
    %512 = vrot.lane.b32.xlu0 %v420, 96
    %v513 = vpop.permute.xlu0 %512
    %v515 = vsel %vm465, %v414, 0
    %v518 = vsel %vm465, %v513, 0
    %520 = vmatprep.subr.bf16.mxu0 0
    %521 = vmatpush1.bf16.xpose.msra.mxu0 0
    %522 = vmatprep.subr.bf16.mxu0 0
    %523 = vmatpush1.bf16.xpose.msra.mxu0 0
    %524 = vmatprep.subr.bf16.mxu0 0
    %525 = vmatpush1.bf16.xpose.msra.mxu0 0
    %526 = vmatprep.subr.bf16.mxu0 0
    %527 = vmatpush1.bf16.xpose.msra.mxu0 0
    %528 = vmatprep.subr.bf16.mxu0 0
    %529 = vmatpush1.bf16.xpose.msra.mxu0 0
    %530 = vmatprep.subr.bf16.mxu0 0
    %531 = vmatpush1.bf16.xpose.msra.mxu0 0
    %532 = vmatprep.subr.bf16.mxu0 0
    %533 = vmatpush1.bf16.xpose.msra.mxu0 0
    %534 = vmatprep.subr.bf16.mxu0 0
    %535 = vmatpush1.bf16.xpose.msra.mxu0 %v518
    %536 = vmatprep.subr.bf16.mxu0 0
    %537 = vmatpush2.bf16.xpose.msra.mxu0 0
    %538 = vmatprep.subr.bf16.mxu0 0
    %539 = vmatpush2.bf16.xpose.msra.mxu0 0
    %540 = vmatprep.subr.bf16.mxu0 0
    %541 = vmatpush2.bf16.xpose.msra.mxu0 0
    %542 = vmatprep.subr.bf16.mxu0 0
    %543 = vmatpush2.bf16.xpose.msra.mxu0 0
    %544 = vmatprep.subr.bf16.mxu0 0
    %545 = vmatpush2.bf16.xpose.msra.mxu0 0
    %546 = vmatprep.subr.bf16.mxu0 0
    %547 = vmatpush2.bf16.xpose.msra.mxu0 0
    %548 = vmatprep.subr.bf16.mxu0 0
    %549 = vmatpush2.bf16.xpose.msra.mxu0 0
    %550 = vmatprep.subr.bf16.mxu0 0
    %551 = vmatpush2.bf16.xpose.msra.mxu0 0
    %552 = vmatprep.mubr.bf16.mxu0 0
    %553 = vmatmul.mubr.bf16.gmra.mxu0 %v515
    %v554 = vpop.f32.mrf.mxu0
    %v555 = vadd.f32 0.0, %v554
    %v556 = vpop.f32.mrf.mxu0
    %v557 = vpop.f32.mrf.mxu0
    %v558 = vpop.f32.mrf.mxu0
    %559 = vdwg.mxu0
    %v560 = vunpack.c.l.b16 %v440
    %v561 = vpack.c.b16 %v560, %v560
    %562 = vrot.lane.b32.xlu0 %v561, 96
    %v563 = vpop.permute.xlu0 %562
    %v565 = vsel %vm465, %v428, 0
    %v568 = vsel %vm465, %v563, 0
    %570 = vmatprep.subr.bf16.mxu0 0
    %571 = vmatpush1.bf16.xpose.msra.mxu0 0
    %572 = vmatprep.subr.bf16.mxu0 0
    %573 = vmatpush1.bf16.xpose.msra.mxu0 0
    %574 = vmatprep.subr.bf16.mxu0 0
    %575 = vmatpush1.bf16.xpose.msra.mxu0 0
    %576 = vmatprep.subr.bf16.mxu0 0
    %577 = vmatpush1.bf16.xpose.msra.mxu0 0
    %578 = vmatprep.subr.bf16.mxu0 0
    %579 = vmatpush1.bf16.xpose.msra.mxu0 0
    %580 = vmatprep.subr.bf16.mxu0 0
    %581 = vmatpush1.bf16.xpose.msra.mxu0 0
    %582 = vmatprep.subr.bf16.mxu0 0
    %583 = vmatpush1.bf16.xpose.msra.mxu0 0
    %584 = vmatprep.subr.bf16.mxu0 0
    %585 = vmatpush1.bf16.xpose.msra.mxu0 %v568
    %586 = vmatprep.subr.bf16.mxu0 0
    %587 = vmatpush2.bf16.xpose.msra.mxu0 0
    %588 = vmatprep.subr.bf16.mxu0 0
    %589 = vmatpush2.bf16.xpose.msra.mxu0 0
    %590 = vmatprep.subr.bf16.mxu0 0
    %591 = vmatpush2.bf16.xpose.msra.mxu0 0
    %592 = vmatprep.subr.bf16.mxu0 0
    %593 = vmatpush2.bf16.xpose.msra.mxu0 0
    %594 = vmatprep.subr.bf16.mxu0 0
    %595 = vmatpush2.bf16.xpose.msra.mxu0 0
    %596 = vmatprep.subr.bf16.mxu0 0
    %597 = vmatpush2.bf16.xpose.msra.mxu0 0
    %598 = vmatprep.subr.bf16.mxu0 0
    %599 = vmatpush2.bf16.xpose.msra.mxu0 0
    %600 = vmatprep.subr.bf16.mxu0 0
    %601 = vmatpush2.bf16.xpose.msra.mxu0 0
    %602 = vmatprep.mubr.bf16.mxu0 0
    %603 = vmatmul.mubr.bf16.gmra.mxu0 %v565
    %v604 = vpop.f32.mrf.mxu0
    %v605 = vadd.f32 0.0, %v604
    %v606 = vpop.f32.mrf.mxu0
    %v607 = vpop.f32.mrf.mxu0
    %v608 = vpop.f32.mrf.mxu0
    %609 = vdwg.mxu0
    %v610 = vunpack.c.l.b16 %v442
    %v611 = vpack.c.b16 %v610, %v610
    %612 = vrot.lane.b32.xlu0 %v611, 96
    %v613 = vpop.permute.xlu0 %612
    %v615 = vsel %vm465, %v430, 0
    %v618 = vsel %vm465, %v613, 0
    %620 = vmatprep.subr.bf16.mxu0 0
    %621 = vmatpush1.bf16.xpose.msra.mxu0 0
    %622 = vmatprep.subr.bf16.mxu0 0
    %623 = vmatpush1.bf16.xpose.msra.mxu0 0
    %624 = vmatprep.subr.bf16.mxu0 0
    %625 = vmatpush1.bf16.xpose.msra.mxu0 0
    %626 = vmatprep.subr.bf16.mxu0 0
    %627 = vmatpush1.bf16.xpose.msra.mxu0 0
    %628 = vmatprep.subr.bf16.mxu0 0
    %629 = vmatpush1.bf16.xpose.msra.mxu0 0
    %630 = vmatprep.subr.bf16.mxu0 0
    %631 = vmatpush1.bf16.xpose.msra.mxu0 0
    %632 = vmatprep.subr.bf16.mxu0 0
    %633 = vmatpush1.bf16.xpose.msra.mxu0 0
    %634 = vmatprep.subr.bf16.mxu0 0
    %635 = vmatpush1.bf16.xpose.msra.mxu0 %v618
    %636 = vmatprep.subr.bf16.mxu0 0
    %637 = vmatpush2.bf16.xpose.msra.mxu0 0
    %638 = vmatprep.subr.bf16.mxu0 0
    %639 = vmatpush2.bf16.xpose.msra.mxu0 0
    %640 = vmatprep.subr.bf16.mxu0 0
    %641 = vmatpush2.bf16.xpose.msra.mxu0 0
    %642 = vmatprep.subr.bf16.mxu0 0
    %643 = vmatpush2.bf16.xpose.msra.mxu0 0
    %644 = vmatprep.subr.bf16.mxu0 0
    %645 = vmatpush2.bf16.xpose.msra.mxu0 0
    %646 = vmatprep.subr.bf16.mxu0 0
    %647 = vmatpush2.bf16.xpose.msra.mxu0 0
    %648 = vmatprep.subr.bf16.mxu0 0
    %649 = vmatpush2.bf16.xpose.msra.mxu0 0
    %650 = vmatprep.subr.bf16.mxu0 0
    %651 = vmatpush2.bf16.xpose.msra.mxu0 0
    %652 = vmatprep.mubr.bf16.mxu0 0
    %653 = vmatmul.mubr.bf16.gmra.mxu0 %v615
    %v654 = vpop.f32.mrf.mxu0
    %v655 = vadd.f32 0.0, %v654
    %v656 = vpop.f32.mrf.mxu0
    %v657 = vpop.f32.mrf.mxu0
    %v658 = vpop.f32.mrf.mxu0
    %659 = vdwg.mxu0
    %v660 = vunpack.c.l.b16 %v444
    %v661 = vpack.c.b16 %v660, %v660
    %662 = vrot.lane.b32.xlu0 %v661, 96
    %v663 = vpop.permute.xlu0 %662
    %v665 = vsel %vm465, %v432, 0
    %v668 = vsel %vm465, %v663, 0
    %670 = vmatprep.subr.bf16.mxu0 0
    %671 = vmatpush1.bf16.xpose.msra.mxu0 0
    %672 = vmatprep.subr.bf16.mxu0 0
    %673 = vmatpush1.bf16.xpose.msra.mxu0 0
    %674 = vmatprep.subr.bf16.mxu0 0
    %675 = vmatpush1.bf16.xpose.msra.mxu0 0
    %676 = vmatprep.subr.bf16.mxu0 0
    %677 = vmatpush1.bf16.xpose.msra.mxu0 0
    %678 = vmatprep.subr.bf16.mxu0 0
    %679 = vmatpush1.bf16.xpose.msra.mxu0 0
    %680 = vmatprep.subr.bf16.mxu0 0
    %681 = vmatpush1.bf16.xpose.msra.mxu0 0
    %682 = vmatprep.subr.bf16.mxu0 0
    %683 = vmatpush1.bf16.xpose.msra.mxu0 0
    %684 = vmatprep.subr.bf16.mxu0 0
    %685 = vmatpush1.bf16.xpose.msra.mxu0 %v668
    %686 = vmatprep.subr.bf16.mxu0 0
    %687 = vmatpush2.bf16.xpose.msra.mxu0 0
    %688 = vmatprep.subr.bf16.mxu0 0
    %689 = vmatpush2.bf16.xpose.msra.mxu0 0
    %690 = vmatprep.subr.bf16.mxu0 0
    %691 = vmatpush2.bf16.xpose.msra.mxu0 0
    %692 = vmatprep.subr.bf16.mxu0 0
    %693 = vmatpush2.bf16.xpose.msra.mxu0 0
    %694 = vmatprep.subr.bf16.mxu0 0
    %695 = vmatpush2.bf16.xpose.msra.mxu0 0
    %696 = vmatprep.subr.bf16.mxu0 0
    %697 = vmatpush2.bf16.xpose.msra.mxu0 0
    %698 = vmatprep.subr.bf16.mxu0 0
    %699 = vmatpush2.bf16.xpose.msra.mxu0 0
    %700 = vmatprep.subr.bf16.mxu0 0
    %701 = vmatpush2.bf16.xpose.msra.mxu0 0
    %702 = vmatprep.mubr.bf16.mxu0 0
    %703 = vmatmul.mubr.bf16.gmra.mxu0 %v665
    %v704 = vpop.f32.mrf.mxu0
    %v705 = vadd.f32 0.0, %v704
    %v706 = vpop.f32.mrf.mxu0
    %v707 = vpop.f32.mrf.mxu0
    %v708 = vpop.f32.mrf.mxu0
    %709 = vdwg.mxu0
    %v710 = vunpack.c.l.b16 %v446
    %v711 = vpack.c.b16 %v710, %v710
    %712 = vrot.lane.b32.xlu0 %v711, 96
    %v713 = vpop.permute.xlu0 %712
    %v715 = vsel %vm465, %v434, 0
    %v718 = vsel %vm465, %v713, 0
    %720 = vmatprep.subr.bf16.mxu0 0
    %721 = vmatpush1.bf16.xpose.msra.mxu0 0
    %722 = vmatprep.subr.bf16.mxu0 0
    %723 = vmatpush1.bf16.xpose.msra.mxu0 0
    %724 = vmatprep.subr.bf16.mxu0 0
    %725 = vmatpush1.bf16.xpose.msra.mxu0 0
    %726 = vmatprep.subr.bf16.mxu0 0
    %727 = vmatpush1.bf16.xpose.msra.mxu0 0
    %728 = vmatprep.subr.bf16.mxu0 0
    %729 = vmatpush1.bf16.xpose.msra.mxu0 0
    %730 = vmatprep.subr.bf16.mxu0 0
    %731 = vmatpush1.bf16.xpose.msra.mxu0 0
    %732 = vmatprep.subr.bf16.mxu0 0
    %733 = vmatpush1.bf16.xpose.msra.mxu0 0
    %734 = vmatprep.subr.bf16.mxu0 0
    %735 = vmatpush1.bf16.xpose.msra.mxu0 %v718
    %736 = vmatprep.subr.bf16.mxu0 0
    %737 = vmatpush2.bf16.xpose.msra.mxu0 0
    %738 = vmatprep.subr.bf16.mxu0 0
    %739 = vmatpush2.bf16.xpose.msra.mxu0 0
    %740 = vmatprep.subr.bf16.mxu0 0
    %741 = vmatpush2.bf16.xpose.msra.mxu0 0
    %742 = vmatprep.subr.bf16.mxu0 0
    %743 = vmatpush2.bf16.xpose.msra.mxu0 0
    %744 = vmatprep.subr.bf16.mxu0 0
    %745 = vmatpush2.bf16.xpose.msra.mxu0 0
    %746 = vmatprep.subr.bf16.mxu0 0
    %747 = vmatpush2.bf16.xpose.msra.mxu0 0
    %748 = vmatprep.subr.bf16.mxu0 0
    %749 = vmatpush2.bf16.xpose.msra.mxu0 0
    %750 = vmatprep.subr.bf16.mxu0 0
    %751 = vmatpush2.bf16.xpose.msra.mxu0 0
    %752 = vmatprep.mubr.bf16.mxu0 0
    %753 = vmatmul.mubr.bf16.gmra.mxu0 %v715
    %v754 = vpop.f32.mrf.mxu0
    %v755 = vadd.f32 0.0, %v754
    %v756 = vpop.f32.mrf.mxu0
    %v757 = vpop.f32.mrf.mxu0
    %v758 = vpop.f32.mrf.mxu0
    %759 = vdwg.mxu0
    %v760 = vunpack.c.l.b16 %v448
    %v761 = vpack.c.b16 %v760, %v760
    %762 = vrot.lane.b32.xlu0 %v761, 96
    %v763 = vpop.permute.xlu0 %762
    %v765 = vsel %vm465, %v436, 0
    %v768 = vsel %vm465, %v763, 0
    %770 = vmatprep.subr.bf16.mxu0 0
    %771 = vmatpush1.bf16.xpose.msra.mxu0 0
    %772 = vmatprep.subr.bf16.mxu0 0
    %773 = vmatpush1.bf16.xpose.msra.mxu0 0
    %774 = vmatprep.subr.bf16.mxu0 0
    %775 = vmatpush1.bf16.xpose.msra.mxu0 0
    %776 = vmatprep.subr.bf16.mxu0 0
    %777 = vmatpush1.bf16.xpose.msra.mxu0 0
    %778 = vmatprep.subr.bf16.mxu0 0
    %779 = vmatpush1.bf16.xpose.msra.mxu0 0
    %780 = vmatprep.subr.bf16.mxu0 0
    %781 = vmatpush1.bf16.xpose.msra.mxu0 0
    %782 = vmatprep.subr.bf16.mxu0 0
    %783 = vmatpush1.bf16.xpose.msra.mxu0 0
    %784 = vmatprep.subr.bf16.mxu0 0
    %785 = vmatpush1.bf16.xpose.msra.mxu0 %v768
    %786 = vmatprep.subr.bf16.mxu0 0
    %787 = vmatpush2.bf16.xpose.msra.mxu0 0
    %788 = vmatprep.subr.bf16.mxu0 0
    %789 = vmatpush2.bf16.xpose.msra.mxu0 0
    %790 = vmatprep.subr.bf16.mxu0 0
    %791 = vmatpush2.bf16.xpose.msra.mxu0 0
    %792 = vmatprep.subr.bf16.mxu0 0
    %793 = vmatpush2.bf16.xpose.msra.mxu0 0
    %794 = vmatprep.subr.bf16.mxu0 0
    %795 = vmatpush2.bf16.xpose.msra.mxu0 0
    %796 = vmatprep.subr.bf16.mxu0 0
    %797 = vmatpush2.bf16.xpose.msra.mxu0 0
    %798 = vmatprep.subr.bf16.mxu0 0
    %799 = vmatpush2.bf16.xpose.msra.mxu0 0
    %800 = vmatprep.subr.bf16.mxu0 0
    %801 = vmatpush2.bf16.xpose.msra.mxu0 0
    %802 = vmatprep.mubr.bf16.mxu0 0
    %803 = vmatmul.mubr.bf16.gmra.mxu0 %v765
    %v804 = vpop.f32.mrf.mxu0
    %v805 = vadd.f32 0.0, %v804
    %v806 = vpop.f32.mrf.mxu0
    %v807 = vpop.f32.mrf.mxu0
    %v808 = vpop.f32.mrf.mxu0
    %809 = vdwg.mxu0
    %v810 = vunpack.c.l.b16 %v450
    %v811 = vpack.c.b16 %v810, %v810
    %812 = vrot.lane.b32.xlu0 %v811, 96
    %v813 = vpop.permute.xlu0 %812
    %v815 = vsel %vm465, %v438, 0
    %v818 = vsel %vm465, %v813, 0
    %820 = vmatprep.subr.bf16.mxu0 0
    %821 = vmatpush1.bf16.xpose.msra.mxu0 0
    %822 = vmatprep.subr.bf16.mxu0 0
    %823 = vmatpush1.bf16.xpose.msra.mxu0 0
    %824 = vmatprep.subr.bf16.mxu0 0
    %825 = vmatpush1.bf16.xpose.msra.mxu0 0
    %826 = vmatprep.subr.bf16.mxu0 0
    %827 = vmatpush1.bf16.xpose.msra.mxu0 0
    %828 = vmatprep.subr.bf16.mxu0 0
    %829 = vmatpush1.bf16.xpose.msra.mxu0 0
    %830 = vmatprep.subr.bf16.mxu0 0
    %831 = vmatpush1.bf16.xpose.msra.mxu0 0
    %832 = vmatprep.subr.bf16.mxu0 0
    %833 = vmatpush1.bf16.xpose.msra.mxu0 0
    %834 = vmatprep.subr.bf16.mxu0 0
    %835 = vmatpush1.bf16.xpose.msra.mxu0 %v818
    %836 = vmatprep.subr.bf16.mxu0 0
    %837 = vmatpush2.bf16.xpose.msra.mxu0 0
    %838 = vmatprep.subr.bf16.mxu0 0
    %839 = vmatpush2.bf16.xpose.msra.mxu0 0
    %840 = vmatprep.subr.bf16.mxu0 0
    %841 = vmatpush2.bf16.xpose.msra.mxu0 0
    %842 = vmatprep.subr.bf16.mxu0 0
    %843 = vmatpush2.bf16.xpose.msra.mxu0 0
    %844 = vmatprep.subr.bf16.mxu0 0
    %845 = vmatpush2.bf16.xpose.msra.mxu0 0
    %846 = vmatprep.subr.bf16.mxu0 0
    %847 = vmatpush2.bf16.xpose.msra.mxu0 0
    %848 = vmatprep.subr.bf16.mxu0 0
    %849 = vmatpush2.bf16.xpose.msra.mxu0 0
    %850 = vmatprep.subr.bf16.mxu0 0
    %851 = vmatpush2.bf16.xpose.msra.mxu0 0
    %852 = vmatprep.mubr.bf16.mxu0 0
    %853 = vmatmul.mubr.bf16.gmra.mxu0 %v815
    %v854 = vpop.f32.mrf.mxu0
    %v855 = vadd.f32 0.0, %v854
    %v856 = vpop.f32.mrf.mxu0
    %v857 = vpop.f32.mrf.mxu0
    %v858 = vpop.f32.mrf.mxu0
    %859 = vdwg.mxu0
    %v860 = vsel %vm465, %v507, -inf
    %861 = vmax.xlane.f32.xlu0 %v860
    %v862 = vpop.xlane.xlu0 %861
    %v863 = vsel %vm465, %v555, -inf
    %864 = vmax.xlane.f32.xlu0 %v863
    %v865 = vpop.xlane.xlu0 %864
    %v866 = vsel %vm465, %v605, -inf
    %867 = vmax.xlane.f32.xlu0 %v866
    %v868 = vpop.xlane.xlu0 %867
    %v869 = vsel %vm465, %v655, -inf
    %870 = vmax.xlane.f32.xlu0 %v869
    %v871 = vpop.xlane.xlu0 %870
    %v872 = vsel %vm465, %v705, -inf
    %873 = vmax.xlane.f32.xlu0 %v872
    %v874 = vpop.xlane.xlu0 %873
    %v875 = vsel %vm465, %v755, -inf
    %876 = vmax.xlane.f32.xlu0 %v875
    %v877 = vpop.xlane.xlu0 %876
    %v878 = vsel %vm465, %v805, -inf
    %879 = vmax.xlane.f32.xlu0 %v878
    %v880 = vpop.xlane.xlu0 %879
    %v881 = vsel %vm465, %v855, -inf
    %882 = vmax.xlane.f32.xlu0 %v881
    %v883 = vpop.xlane.xlu0 %882
    %v884 = vsub.f32 %v507, %v862
    %v885 = vsub.f32 %v555, %v865
    %v886 = vsub.f32 %v605, %v868
    %v887 = vsub.f32 %v655, %v871
    %v888 = vsub.f32 %v705, %v874
    %v889 = vsub.f32 %v755, %v877
    %v890 = vsub.f32 %v805, %v880
    %v891 = vsub.f32 %v855, %v883
    %v892 = vmul.f32 %v884, 1.442695
    %v893 = vpow.pop %v892
    %v894 = vmul.f32 %v885, 1.442695
    %v895 = vpow.pop %v894
    %v896 = vmul.f32 %v886, 1.442695
    %v897 = vpow.pop %v896
    %v898 = vmul.f32 %v887, 1.442695
    %v899 = vpow.pop %v898
    %v900 = vmul.f32 %v888, 1.442695
    %v901 = vpow.pop %v900
    %v902 = vmul.f32 %v889, 1.442695
    %v903 = vpow.pop %v902
    %v904 = vmul.f32 %v890, 1.442695
    %v905 = vpow.pop %v904
    %v906 = vmul.f32 %v891, 1.442695
    %v907 = vpow.pop %v906
    %v908 = vsel %vm465, %v893, 0.0
    %909 = vadd.xlane.f32.xlu0 %v908
    %v910 = vpop.xlane.xlu0 %909
    %v911 = vsel %vm465, %v895, 0.0
    %912 = vadd.xlane.f32.xlu0 %v911
    %v913 = vpop.xlane.xlu0 %912
    %v914 = vsel %vm465, %v897, 0.0
    %915 = vadd.xlane.f32.xlu0 %v914
    %v916 = vpop.xlane.xlu0 %915
    %v917 = vsel %vm465, %v899, 0.0
    %918 = vadd.xlane.f32.xlu0 %v917
    %v919 = vpop.xlane.xlu0 %918
    %v920 = vsel %vm465, %v901, 0.0
    %921 = vadd.xlane.f32.xlu0 %v920
    %v922 = vpop.xlane.xlu0 %921
    %v923 = vsel %vm465, %v903, 0.0
    %924 = vadd.xlane.f32.xlu0 %v923
    %v925 = vpop.xlane.xlu0 %924
    %v926 = vsel %vm465, %v905, 0.0
    %927 = vadd.xlane.f32.xlu0 %v926
    %v928 = vpop.xlane.xlu0 %927
    %v929 = vsel %vm465, %v907, 0.0
    %930 = vadd.xlane.f32.xlu0 %v929
    %v931 = vpop.xlane.xlu0 %930
    %v932 = vrcp.pop %v910
    %v933 = vrcp.pop %v913
    %v934 = vrcp.pop %v916
    %v935 = vrcp.pop %v919
    %v936 = vrcp.pop %v922
    %v937 = vrcp.pop %v925
    %v938 = vrcp.pop %v928
    %v939 = vrcp.pop %v931
    %v940 = vmul.f32 %v893, %v932
    %v941 = vmul.f32 %v895, %v933
    %v942 = vmul.f32 %v897, %v934
    %v943 = vmul.f32 %v899, %v935
    %v944 = vmul.f32 %v901, %v936
    %v945 = vmul.f32 %v903, %v937
    %v946 = vmul.f32 %v905, %v938
    %v947 = vmul.f32 %v907, %v939
    %v948 = vpack.c.bf16 %v940, %v940
    %v949 = vpack.c.bf16 %v941, %v941
    %v950 = vpack.c.bf16 %v942, %v942
    %v951 = vpack.c.bf16 %v943, %v943
    %v952 = vpack.c.bf16 %v944, %v944
    %v953 = vpack.c.bf16 %v945, %v945
    %v954 = vpack.c.bf16 %v946, %v946
    %v955 = vpack.c.bf16 %v947, %v947
    %v957 = vsel %vm465, %v948, 0
    %vm959 = vcmask 1043456
    %v961 = vsel %vm959, %v425, 0
    %963 = vmatprep.subr.bf16.mxu0 0
    %964 = vmatpush1.bf16.msra.mxu0 0
    %965 = vmatprep.subr.bf16.mxu0 0
    %966 = vmatpush1.bf16.msra.mxu0 0
    %967 = vmatprep.subr.bf16.mxu0 0
    %968 = vmatpush1.bf16.msra.mxu0 0
    %969 = vmatprep.subr.bf16.mxu0 0
    %970 = vmatpush1.bf16.msra.mxu0 0
    %971 = vmatprep.subr.bf16.mxu0 0
    %972 = vmatpush1.bf16.msra.mxu0 0
    %973 = vmatprep.subr.bf16.mxu0 0
    %974 = vmatpush1.bf16.msra.mxu0 0
    %975 = vmatprep.subr.bf16.mxu0 0
    %976 = vmatpush1.bf16.msra.mxu0 0
    %977 = vmatprep.subr.bf16.mxu0 0
    %978 = vmatpush1.bf16.msra.mxu0 %v961
    %979 = vmatprep.subr.bf16.mxu0 0
    %980 = vmatpush2.bf16.msra.mxu0 0
    %981 = vmatprep.subr.bf16.mxu0 0
    %982 = vmatpush2.bf16.msra.mxu0 0
    %983 = vmatprep.subr.bf16.mxu0 0
    %984 = vmatpush2.bf16.msra.mxu0 0
    %985 = vmatprep.subr.bf16.mxu0 0
    %986 = vmatpush2.bf16.msra.mxu0 0
    %987 = vmatprep.subr.bf16.mxu0 0
    %988 = vmatpush2.bf16.msra.mxu0 0
    %989 = vmatprep.subr.bf16.mxu0 0
    %990 = vmatpush2.bf16.msra.mxu0 0
    %991 = vmatprep.subr.bf16.mxu0 0
    %992 = vmatpush2.bf16.msra.mxu0 0
    %993 = vmatprep.subr.bf16.mxu0 0
    %994 = vmatpush2.bf16.msra.mxu0 0
    %995 = vmatprep.mubr.bf16.mxu0 0
    %996 = vmatmul.mubr.bf16.gmra.mxu0 %v957
    %v997 = vpop.f32.mrf.mxu0
    %v998 = vadd.f32 0.0, %v997
    %v999 = vpop.f32.mrf.mxu0
    %v1000 = vpop.f32.mrf.mxu0
    %v1001 = vpop.f32.mrf.mxu0
    %1002 = vdwg.mxu0
    %v1004 = vsel %vm465, %v949, 0
    %v1007 = vsel %vm959, %v426, 0
    %1009 = vmatprep.subr.bf16.mxu0 0
    %1010 = vmatpush1.bf16.msra.mxu0 0
    %1011 = vmatprep.subr.bf16.mxu0 0
    %1012 = vmatpush1.bf16.msra.mxu0 0
    %1013 = vmatprep.subr.bf16.mxu0 0
    %1014 = vmatpush1.bf16.msra.mxu0 0
    %1015 = vmatprep.subr.bf16.mxu0 0
    %1016 = vmatpush1.bf16.msra.mxu0 0
    %1017 = vmatprep.subr.bf16.mxu0 0
    %1018 = vmatpush1.bf16.msra.mxu0 0
    %1019 = vmatprep.subr.bf16.mxu0 0
    %1020 = vmatpush1.bf16.msra.mxu0 0
    %1021 = vmatprep.subr.bf16.mxu0 0
    %1022 = vmatpush1.bf16.msra.mxu0 0
    %1023 = vmatprep.subr.bf16.mxu0 0
    %1024 = vmatpush1.bf16.msra.mxu0 %v1007
    %1025 = vmatprep.subr.bf16.mxu0 0
    %1026 = vmatpush2.bf16.msra.mxu0 0
    %1027 = vmatprep.subr.bf16.mxu0 0
    %1028 = vmatpush2.bf16.msra.mxu0 0
    %1029 = vmatprep.subr.bf16.mxu0 0
    %1030 = vmatpush2.bf16.msra.mxu0 0
    %1031 = vmatprep.subr.bf16.mxu0 0
    %1032 = vmatpush2.bf16.msra.mxu0 0
    %1033 = vmatprep.subr.bf16.mxu0 0
    %1034 = vmatpush2.bf16.msra.mxu0 0
    %1035 = vmatprep.subr.bf16.mxu0 0
    %1036 = vmatpush2.bf16.msra.mxu0 0
    %1037 = vmatprep.subr.bf16.mxu0 0
    %1038 = vmatpush2.bf16.msra.mxu0 0
    %1039 = vmatprep.subr.bf16.mxu0 0
    %1040 = vmatpush2.bf16.msra.mxu0 0
    %1041 = vmatprep.mubr.bf16.mxu0 0
    %1042 = vmatmul.mubr.bf16.gmra.mxu0 %v1004
    %v1043 = vpop.f32.mrf.mxu0
    %v1044 = vadd.f32 0.0, %v1043
    %v1045 = vpop.f32.mrf.mxu0
    %v1046 = vpop.f32.mrf.mxu0
    %v1047 = vpop.f32.mrf.mxu0
    %1048 = vdwg.mxu0
    %v1050 = vsel %vm465, %v950, 0
    %v1053 = vsel %vm959, %v452, 0
    %1055 = vmatprep.subr.bf16.mxu0 0
    %1056 = vmatpush1.bf16.msra.mxu0 0
    %1057 = vmatprep.subr.bf16.mxu0 0
    %1058 = vmatpush1.bf16.msra.mxu0 0
    %1059 = vmatprep.subr.bf16.mxu0 0
    %1060 = vmatpush1.bf16.msra.mxu0 0
    %1061 = vmatprep.subr.bf16.mxu0 0
    %1062 = vmatpush1.bf16.msra.mxu0 0
    %1063 = vmatprep.subr.bf16.mxu0 0
    %1064 = vmatpush1.bf16.msra.mxu0 0
    %1065 = vmatprep.subr.bf16.mxu0 0
    %1066 = vmatpush1.bf16.msra.mxu0 0
    %1067 = vmatprep.subr.bf16.mxu0 0
    %1068 = vmatpush1.bf16.msra.mxu0 0
    %1069 = vmatprep.subr.bf16.mxu0 0
    %1070 = vmatpush1.bf16.msra.mxu0 %v1053
    %1071 = vmatprep.subr.bf16.mxu0 0
    %1072 = vmatpush2.bf16.msra.mxu0 0
    %1073 = vmatprep.subr.bf16.mxu0 0
    %1074 = vmatpush2.bf16.msra.mxu0 0
    %1075 = vmatprep.subr.bf16.mxu0 0
    %1076 = vmatpush2.bf16.msra.mxu0 0
    %1077 = vmatprep.subr.bf16.mxu0 0
    %1078 = vmatpush2.bf16.msra.mxu0 0
    %1079 = vmatprep.subr.bf16.mxu0 0
    %1080 = vmatpush2.bf16.msra.mxu0 0
    %1081 = vmatprep.subr.bf16.mxu0 0
    %1082 = vmatpush2.bf16.msra.mxu0 0
    %1083 = vmatprep.subr.bf16.mxu0 0
    %1084 = vmatpush2.bf16.msra.mxu0 0
    %1085 = vmatprep.subr.bf16.mxu0 0
    %1086 = vmatpush2.bf16.msra.mxu0 0
    %1087 = vmatprep.mubr.bf16.mxu0 0
    %1088 = vmatmul.mubr.bf16.gmra.mxu0 %v1050
    %v1089 = vpop.f32.mrf.mxu0
    %v1090 = vadd.f32 0.0, %v1089
    %v1091 = vpop.f32.mrf.mxu0
    %v1092 = vpop.f32.mrf.mxu0
    %v1093 = vpop.f32.mrf.mxu0
    %1094 = vdwg.mxu0
    %v1096 = vsel %vm465, %v951, 0
    %v1099 = vsel %vm959, %v454, 0
    %1101 = vmatprep.subr.bf16.mxu0 0
    %1102 = vmatpush1.bf16.msra.mxu0 0
    %1103 = vmatprep.subr.bf16.mxu0 0
    %1104 = vmatpush1.bf16.msra.mxu0 0
    %1105 = vmatprep.subr.bf16.mxu0 0
    %1106 = vmatpush1.bf16.msra.mxu0 0
    %1107 = vmatprep.subr.bf16.mxu0 0
    %1108 = vmatpush1.bf16.msra.mxu0 0
    %1109 = vmatprep.subr.bf16.mxu0 0
    %1110 = vmatpush1.bf16.msra.mxu0 0
    %1111 = vmatprep.subr.bf16.mxu0 0
    %1112 = vmatpush1.bf16.msra.mxu0 0
    %1113 = vmatprep.subr.bf16.mxu0 0
    %1114 = vmatpush1.bf16.msra.mxu0 0
    %1115 = vmatprep.subr.bf16.mxu0 0
    %1116 = vmatpush1.bf16.msra.mxu0 %v1099
    %1117 = vmatprep.subr.bf16.mxu0 0
    %1118 = vmatpush2.bf16.msra.mxu0 0
    %1119 = vmatprep.subr.bf16.mxu0 0
    %1120 = vmatpush2.bf16.msra.mxu0 0
    %1121 = vmatprep.subr.bf16.mxu0 0
    %1122 = vmatpush2.bf16.msra.mxu0 0
    %1123 = vmatprep.subr.bf16.mxu0 0
    %1124 = vmatpush2.bf16.msra.mxu0 0
    %1125 = vmatprep.subr.bf16.mxu0 0
    %1126 = vmatpush2.bf16.msra.mxu0 0
    %1127 = vmatprep.subr.bf16.mxu0 0
    %1128 = vmatpush2.bf16.msra.mxu0 0
    %1129 = vmatprep.subr.bf16.mxu0 0
    %1130 = vmatpush2.bf16.msra.mxu0 0
    %1131 = vmatprep.subr.bf16.mxu0 0
    %1132 = vmatpush2.bf16.msra.mxu0 0
    %1133 = vmatprep.mubr.bf16.mxu0 0
    %1134 = vmatmul.mubr.bf16.gmra.mxu0 %v1096
    %v1135 = vpop.f32.mrf.mxu0
    %v1136 = vadd.f32 0.0, %v1135
    %v1137 = vpop.f32.mrf.mxu0
    %v1138 = vpop.f32.mrf.mxu0
    %v1139 = vpop.f32.mrf.mxu0
    %1140 = vdwg.mxu0
    %v1142 = vsel %vm465, %v952, 0
    %v1145 = vsel %vm959, %v456, 0
    %1147 = vmatprep.subr.bf16.mxu0 0
    %1148 = vmatpush1.bf16.msra.mxu0 0
    %1149 = vmatprep.subr.bf16.mxu0 0
    %1150 = vmatpush1.bf16.msra.mxu0 0
    %1151 = vmatprep.subr.bf16.mxu0 0
    %1152 = vmatpush1.bf16.msra.mxu0 0
    %1153 = vmatprep.subr.bf16.mxu0 0
    %1154 = vmatpush1.bf16.msra.mxu0 0
    %1155 = vmatprep.subr.bf16.mxu0 0
    %1156 = vmatpush1.bf16.msra.mxu0 0
    %1157 = vmatprep.subr.bf16.mxu0 0
    %1158 = vmatpush1.bf16.msra.mxu0 0
    %1159 = vmatprep.subr.bf16.mxu0 0
    %1160 = vmatpush1.bf16.msra.mxu0 0
    %1161 = vmatprep.subr.bf16.mxu0 0
    %1162 = vmatpush1.bf16.msra.mxu0 %v1145
    %1163 = vmatprep.subr.bf16.mxu0 0
    %1164 = vmatpush2.bf16.msra.mxu0 0
    %1165 = vmatprep.subr.bf16.mxu0 0
    %1166 = vmatpush2.bf16.msra.mxu0 0
    %1167 = vmatprep.subr.bf16.mxu0 0
    %1168 = vmatpush2.bf16.msra.mxu0 0
    %1169 = vmatprep.subr.bf16.mxu0 0
    %1170 = vmatpush2.bf16.msra.mxu0 0
    %1171 = vmatprep.subr.bf16.mxu0 0
    %1172 = vmatpush2.bf16.msra.mxu0 0
    %1173 = vmatprep.subr.bf16.mxu0 0
    %1174 = vmatpush2.bf16.msra.mxu0 0
    %1175 = vmatprep.subr.bf16.mxu0 0
    %1176 = vmatpush2.bf16.msra.mxu0 0
    %1177 = vmatprep.subr.bf16.mxu0 0
    %1178 = vmatpush2.bf16.msra.mxu0 0
    %1179 = vmatprep.mubr.bf16.mxu0 0
    %1180 = vmatmul.mubr.bf16.gmra.mxu0 %v1142
    %v1181 = vpop.f32.mrf.mxu0
    %v1182 = vadd.f32 0.0, %v1181
    %v1183 = vpop.f32.mrf.mxu0
    %v1184 = vpop.f32.mrf.mxu0
    %v1185 = vpop.f32.mrf.mxu0
    %1186 = vdwg.mxu0
    %v1188 = vsel %vm465, %v953, 0
    %v1191 = vsel %vm959, %v458, 0
    %1193 = vmatprep.subr.bf16.mxu0 0
    %1194 = vmatpush1.bf16.msra.mxu0 0
    %1195 = vmatprep.subr.bf16.mxu0 0
    %1196 = vmatpush1.bf16.msra.mxu0 0
    %1197 = vmatprep.subr.bf16.mxu0 0
    %1198 = vmatpush1.bf16.msra.mxu0 0
    %1199 = vmatprep.subr.bf16.mxu0 0
    %1200 = vmatpush1.bf16.msra.mxu0 0
    %1201 = vmatprep.subr.bf16.mxu0 0
    %1202 = vmatpush1.bf16.msra.mxu0 0
    %1203 = vmatprep.subr.bf16.mxu0 0
    %1204 = vmatpush1.bf16.msra.mxu0 0
    %1205 = vmatprep.subr.bf16.mxu0 0
    %1206 = vmatpush1.bf16.msra.mxu0 0
    %1207 = vmatprep.subr.bf16.mxu0 0
    %1208 = vmatpush1.bf16.msra.mxu0 %v1191
    %1209 = vmatprep.subr.bf16.mxu0 0
    %1210 = vmatpush2.bf16.msra.mxu0 0
    %1211 = vmatprep.subr.bf16.mxu0 0
    %1212 = vmatpush2.bf16.msra.mxu0 0
    %1213 = vmatprep.subr.bf16.mxu0 0
    %1214 = vmatpush2.bf16.msra.mxu0 0
    %1215 = vmatprep.subr.bf16.mxu0 0
    %1216 = vmatpush2.bf16.msra.mxu0 0
    %1217 = vmatprep.subr.bf16.mxu0 0
    %1218 = vmatpush2.bf16.msra.mxu0 0
    %1219 = vmatprep.subr.bf16.mxu0 0
    %1220 = vmatpush2.bf16.msra.mxu0 0
    %1221 = vmatprep.subr.bf16.mxu0 0
    %1222 = vmatpush2.bf16.msra.mxu0 0
    %1223 = vmatprep.subr.bf16.mxu0 0
    %1224 = vmatpush2.bf16.msra.mxu0 0
    %1225 = vmatprep.mubr.bf16.mxu0 0
    %1226 = vmatmul.mubr.bf16.gmra.mxu0 %v1188
    %v1227 = vpop.f32.mrf.mxu0
    %v1228 = vadd.f32 0.0, %v1227
    %v1229 = vpop.f32.mrf.mxu0
    %v1230 = vpop.f32.mrf.mxu0
    %v1231 = vpop.f32.mrf.mxu0
    %1232 = vdwg.mxu0
    %v1234 = vsel %vm465, %v954, 0
    %v1237 = vsel %vm959, %v460, 0
    %1239 = vmatprep.subr.bf16.mxu0 0
    %1240 = vmatpush1.bf16.msra.mxu0 0
    %1241 = vmatprep.subr.bf16.mxu0 0
    %1242 = vmatpush1.bf16.msra.mxu0 0
    %1243 = vmatprep.subr.bf16.mxu0 0
    %1244 = vmatpush1.bf16.msra.mxu0 0
    %1245 = vmatprep.subr.bf16.mxu0 0
    %1246 = vmatpush1.bf16.msra.mxu0 0
    %1247 = vmatprep.subr.bf16.mxu0 0
    %1248 = vmatpush1.bf16.msra.mxu0 0
    %1249 = vmatprep.subr.bf16.mxu0 0
    %1250 = vmatpush1.bf16.msra.mxu0 0
    %1251 = vmatprep.subr.bf16.mxu0 0
    %1252 = vmatpush1.bf16.msra.mxu0 0
    %1253 = vmatprep.subr.bf16.mxu0 0
    %1254 = vmatpush1.bf16.msra.mxu0 %v1237
    %1255 = vmatprep.subr.bf16.mxu0 0
    %1256 = vmatpush2.bf16.msra.mxu0 0
    %1257 = vmatprep.subr.bf16.mxu0 0
    %1258 = vmatpush2.bf16.msra.mxu0 0
    %1259 = vmatprep.subr.bf16.mxu0 0
    %1260 = vmatpush2.bf16.msra.mxu0 0
    %1261 = vmatprep.subr.bf16.mxu0 0
    %1262 = vmatpush2.bf16.msra.mxu0 0
    %1263 = vmatprep.subr.bf16.mxu0 0
    %1264 = vmatpush2.bf16.msra.mxu0 0
    %1265 = vmatprep.subr.bf16.mxu0 0
    %1266 = vmatpush2.bf16.msra.mxu0 0
    %1267 = vmatprep.subr.bf16.mxu0 0
    %1268 = vmatpush2.bf16.msra.mxu0 0
    %1269 = vmatprep.subr.bf16.mxu0 0
    %1270 = vmatpush2.bf16.msra.mxu0 0
    %1271 = vmatprep.mubr.bf16.mxu0 0
    %1272 = vmatmul.mubr.bf16.gmra.mxu0 %v1234
    %v1273 = vpop.f32.mrf.mxu0
    %v1274 = vadd.f32 0.0, %v1273
    %v1275 = vpop.f32.mrf.mxu0
    %v1276 = vpop.f32.mrf.mxu0
    %v1277 = vpop.f32.mrf.mxu0
    %1278 = vdwg.mxu0
    %v1280 = vsel %vm465, %v955, 0
    %v1283 = vsel %vm959, %v462, 0
    %1285 = vmatprep.subr.bf16.mxu0 0
    %1286 = vmatpush1.bf16.msra.mxu0 0
    %1287 = vmatprep.subr.bf16.mxu0 0
    %1288 = vmatpush1.bf16.msra.mxu0 0
    %1289 = vmatprep.subr.bf16.mxu0 0
    %1290 = vmatpush1.bf16.msra.mxu0 0
    %1291 = vmatprep.subr.bf16.mxu0 0
    %1292 = vmatpush1.bf16.msra.mxu0 0
    %1293 = vmatprep.subr.bf16.mxu0 0
    %1294 = vmatpush1.bf16.msra.mxu0 0
    %1295 = vmatprep.subr.bf16.mxu0 0
    %1296 = vmatpush1.bf16.msra.mxu0 0
    %1297 = vmatprep.subr.bf16.mxu0 0
    %1298 = vmatpush1.bf16.msra.mxu0 0
    %1299 = vmatprep.subr.bf16.mxu0 0
    %1300 = vmatpush1.bf16.msra.mxu0 %v1283
    %1301 = vmatprep.subr.bf16.mxu0 0
    %1302 = vmatpush2.bf16.msra.mxu0 0
    %1303 = vmatprep.subr.bf16.mxu0 0
    %1304 = vmatpush2.bf16.msra.mxu0 0
    %1305 = vmatprep.subr.bf16.mxu0 0
    %1306 = vmatpush2.bf16.msra.mxu0 0
    %1307 = vmatprep.subr.bf16.mxu0 0
    %1308 = vmatpush2.bf16.msra.mxu0 0
    %1309 = vmatprep.subr.bf16.mxu0 0
    %1310 = vmatpush2.bf16.msra.mxu0 0
    %1311 = vmatprep.subr.bf16.mxu0 0
    %1312 = vmatpush2.bf16.msra.mxu0 0
    %1313 = vmatprep.subr.bf16.mxu0 0
    %1314 = vmatpush2.bf16.msra.mxu0 0
    %1315 = vmatprep.subr.bf16.mxu0 0
    %1316 = vmatpush2.bf16.msra.mxu0 0
    %1317 = vmatprep.mubr.bf16.mxu0 0
    %1318 = vmatmul.mubr.bf16.gmra.mxu0 %v1280
    %v1319 = vpop.f32.mrf.mxu0
    %v1320 = vadd.f32 0.0, %v1319
    %v1321 = vpop.f32.mrf.mxu0
    %v1322 = vpop.f32.mrf.mxu0
    %v1323 = vpop.f32.mrf.mxu0
    %1324 = vdwg.mxu0
    %v1325 = vpack.c.bf16 %v998, %v998
    %v1326 = vpack.c.bf16 %v1044, %v1044
    %v1327 = vpack.c.bf16 %v1090, %v1090
    %v1328 = vpack.c.bf16 %v1136, %v1136
    %v1329 = vpack.c.bf16 %v1182, %v1182
    %v1330 = vpack.c.bf16 %v1228, %v1228
    %v1331 = vpack.c.bf16 %v1274, %v1274
    %v1332 = vpack.c.bf16 %v1320, %v1320
    %1335 = vrot.lane.b32.xlu0 %v1327, 8
    %v1336 = vpop.permute.xlu0 %1335
    %1337 = vrot.lane.b32.xlu0 %v1328, 8
    %v1338 = vpop.permute.xlu0 %1337
    %1341 = vrot.lane.b32.xlu0 %v1329, 16
    %v1342 = vpop.permute.xlu0 %1341
    %1343 = vrot.lane.b32.xlu0 %v1330, 16
    %v1344 = vpop.permute.xlu0 %1343
    %1347 = vrot.lane.b32.xlu0 %v1331, 24
    %v1348 = vpop.permute.xlu0 %1347
    %1349 = vrot.lane.b32.xlu0 %v1332, 24
    %v1350 = vpop.permute.xlu0 %1349
    %v1353 = vsel %vm465, %v1325, %v1336
    %v1356 = vsel %vm465, %v1326, %v1338
    %vm1357 = vcmask 130048
    %v1359 = vsel %vm1357, %v1353, %v1342
    %v1361 = vsel %vm1357, %v1356, %v1344
    %vm1362 = vcmask 195584
    %v1364 = vsel %vm1362, %v1359, %v1348
    %v1366 = vsel %vm1362, %v1361, %v1350
    %v1367 = vld [vmem:[#allocation10] sm:$0xf]
    %v1368 = vld [vmem:[#allocation10 + $0x4] sm:$0xf]
    %v1369 = vld [vmem:[#allocation10 + $0x8] sm:$0xf]
    %v1370 = vld [vmem:[#allocation10 + $0xc] sm:$0xf]
    %v1371 = vld [vmem:[#allocation11] sm:$0x1]
    %v1373 = vlaneseq
    %v1374 = vshrl.u32 %v1373, 7
    %v1375 = vsub.s32 0, %v1374
    %v1376 = vrot.slane %v1371, %v1375
    %v1380 = vunpack.c.l.b16 %v1364
    %v1381 = vunpack.c.l.b16 %v1366
    %v1382 = vpack.c.b16 %v1381, %v1380
    %v1387 = vunpack.c.l.b16 %v1367
    %v1388 = vunpack.c.l.b16 %v1368
    %v1389 = vunpack.c.l.b16 %v1369
    %v1390 = vunpack.c.l.b16 %v1370
    %v1391 = vpack.c.b16 %v1388, %v1387
    %v1392 = vpack.c.b16 %v1390, %v1389
    %v1396 = vsel %vm308, %v1382, 0
    %1398 = vmatprep.subr.bf16.mxu0 0
    %1399 = vmatpush1.bf16.msra.mxu0 0
    %1400 = vmatprep.subr.bf16.mxu0 0
    %1401 = vmatpush1.bf16.msra.mxu0 0
    %1402 = vmatprep.subr.bf16.mxu0 0
    %1403 = vmatpush1.bf16.msra.mxu0 0
    %1404 = vmatprep.subr.bf16.mxu0 0
    %1405 = vmatpush1.bf16.msra.mxu0 0
    %1406 = vmatprep.subr.bf16.mxu0 0
    %1407 = vmatpush1.bf16.msra.mxu0 0
    %1408 = vmatprep.subr.bf16.mxu0 0
    %1409 = vmatpush1.bf16.msra.mxu0 0
    %1410 = vmatprep.subr.bf16.mxu0 0
    %1411 = vmatpush1.bf16.msra.mxu0 %v1392
    %1412 = vmatprep.subr.bf16.mxu0 0
    %1413 = vmatpush1.bf16.msra.mxu0 %v1391
    %1414 = vmatprep.subr.bf16.mxu0 0
    %1415 = vmatpush2.bf16.msra.mxu0 0
    %1416 = vmatprep.subr.bf16.mxu0 0
    %1417 = vmatpush2.bf16.msra.mxu0 0
    %1418 = vmatprep.subr.bf16.mxu0 0
    %1419 = vmatpush2.bf16.msra.mxu0 0
    %1420 = vmatprep.subr.bf16.mxu0 0
    %1421 = vmatpush2.bf16.msra.mxu0 0
    %1422 = vmatprep.subr.bf16.mxu0 0
    %1423 = vmatpush2.bf16.msra.mxu0 0
    %1424 = vmatprep.subr.bf16.mxu0 0
    %1425 = vmatpush2.bf16.msra.mxu0 0
    %1426 = vmatprep.subr.bf16.mxu0 0
    %1427 = vmatpush2.bf16.msra.mxu0 0
    %1428 = vmatprep.subr.bf16.mxu0 0
    %1429 = vmatpush2.bf16.msra.mxu0 0
    %1430 = vmatprep.mubr.bf16.mxu0 0
    %1431 = vmatmul.mubr.bf16.gmra.mxu0 %v1396
    %v1432 = vpop.f32.mrf.mxu0
    %v1433 = vadd.f32 %v1376, %v1432
    %v1434 = vpop.f32.mrf.mxu0
    %v1435 = vpop.f32.mrf.mxu0
    %v1436 = vadd.f32 %v1376, %v1435
    %v1437 = vpop.f32.mrf.mxu0
    %1438 = vdwg.mxu0
    %v1439 = vadd.f32 %v270, %v1433
    %v1440 = vadd.f32 %v271, %v1436
    %v1441 = vsel %vm308, %v1439, 0.0
    %1442 = vadd.xlane.f32.xlu0 %v1441
    %v1443 = vpop.xlane.xlu0 %1442
    %v1444 = vsel %vm308, %v1440, 0.0
    %1445 = vadd.xlane.f32.xlu0 %v1444
    %v1446 = vpop.xlane.xlu0 %1445
    %v1447 = vrcp.pop 32.0
    %v1448 = vmul.f32 %v1443, %v1447
    %v1449 = vmul.f32 %v1446, %v1447
    %v1450 = vsub.f32 %v1439, %v1448
    %v1451 = vsub.f32 %v1440, %v1449
    %v1452 = vmul.f32 %v1450, %v1450
    %v1453 = vmul.f32 %v1451, %v1451
    %v1454 = vsel %vm308, %v1452, 0.0
    %1455 = vadd.xlane.f32.xlu0 %v1454
    %v1456 = vpop.xlane.xlu0 %1455
    %v1457 = vsel %vm308, %v1453, 0.0
    %1458 = vadd.xlane.f32.xlu0 %v1457
    %v1459 = vpop.xlane.xlu0 %1458
    %v1460 = vmul.f32 %v1456, %v1447
    %v1461 = vmul.f32 %v1459, %v1447
    %v1462 = vadd.f32 %v1460, 1e-05
    %v1463 = vadd.f32 %v1461, 1e-05
    %v1464 = vrsqrt.pop %v1462
    %v1465 = vrsqrt.pop %v1463
    %v1466 = vmul.f32 %v1450, %v1464
    %v1467 = vmul.f32 %v1451, %v1465
    %v1468 = vld [vmem:[#allocation17] sm:$0x1]
    %v1470 = vlaneseq
    %v1471 = vshrl.u32 %v1470, 7
    %v1472 = vsub.s32 0, %v1471
    %v1473 = vrot.slane %v1468, %v1472
    %v1475 = vmul.f32 %v1466, %v1473
    %v1476 = vmul.f32 %v1467, %v1473
    %v1477 = vld [vmem:[#allocation19] sm:$0x1]
    %v1479 = vlaneseq
    %v1480 = vshrl.u32 %v1479, 7
    %v1481 = vsub.s32 0, %v1480
    %v1482 = vrot.slane %v1477, %v1481
    %v1484 = vadd.f32 %v1475, %v1482
    %v1485 = vadd.f32 %v1476, %v1482
    %v1486 = vadd.f32 %v1484, %v272
    %v1487 = vadd.f32 %v1485, %v273
    %v1488 = vadd.f32 %v274, %v278
    %v1489 = vadd.f32 %v275, %v279
    %v1490 = vadd.f32 %v276, %v280
    %v1491 = vadd.f32 %v277, %v281
    %v1492 = vld [vmem:[#allocation13] sm:$0xf]
    %v1493 = vld [vmem:[#allocation13 + $0x4] sm:$0xf]
    %v1494 = vld [vmem:[#allocation13 + $0x8] sm:$0xf]
    %v1495 = vld [vmem:[#allocation13 + $0xc] sm:$0xf]
    %v1496 = vld [vmem:[#allocation14] sm:$0x1]
    %v1497 = vpack.c.bf16 %v1487, %v1486
    %v1499 = vlaneseq
    %v1500 = vshrl.u32 %v1499, 7
    %v1501 = vsub.s32 0, %v1500
    %v1502 = vrot.slane %v1496, %v1501
    %v1508 = vunpack.c.l.b16 %v1492
    %v1509 = vunpack.c.l.b16 %v1493
    %v1510 = vunpack.c.l.b16 %v1494
    %v1511 = vunpack.c.l.b16 %v1495
    %v1512 = vpack.c.b16 %v1509, %v1508
    %v1513 = vpack.c.b16 %v1511, %v1510
    %v1517 = vsel %vm308, %v1497, 0
    %1519 = vmatprep.subr.bf16.mxu0 0
    %1520 = vmatpush1.bf16.msra.mxu0 0
    %1521 = vmatprep.subr.bf16.mxu0 0
    %1522 = vmatpush1.bf16.msra.mxu0 0
    %1523 = vmatprep.subr.bf16.mxu0 0
    %1524 = vmatpush1.bf16.msra.mxu0 0
    %1525 = vmatprep.subr.bf16.mxu0 0
    %1526 = vmatpush1.bf16.msra.mxu0 0
    %1527 = vmatprep.subr.bf16.mxu0 0
    %1528 = vmatpush1.bf16.msra.mxu0 0
    %1529 = vmatprep.subr.bf16.mxu0 0
    %1530 = vmatpush1.bf16.msra.mxu0 0
    %1531 = vmatprep.subr.bf16.mxu0 0
    %1532 = vmatpush1.bf16.msra.mxu0 %v1513
    %1533 = vmatprep.subr.bf16.mxu0 0
    %1534 = vmatpush1.bf16.msra.mxu0 %v1512
    %1535 = vmatprep.subr.bf16.mxu0 0
    %1536 = vmatpush2.bf16.msra.mxu0 0
    %1537 = vmatprep.subr.bf16.mxu0 0
    %1538 = vmatpush2.bf16.msra.mxu0 0
    %1539 = vmatprep.subr.bf16.mxu0 0
    %1540 = vmatpush2.bf16.msra.mxu0 0
    %1541 = vmatprep.subr.bf16.mxu0 0
    %1542 = vmatpush2.bf16.msra.mxu0 0
    %1543 = vmatprep.subr.bf16.mxu0 0
    %1544 = vmatpush2.bf16.msra.mxu0 0
    %1545 = vmatprep.subr.bf16.mxu0 0
    %1546 = vmatpush2.bf16.msra.mxu0 0
    %1547 = vmatprep.subr.bf16.mxu0 0
    %1548 = vmatpush2.bf16.msra.mxu0 0
    %1549 = vmatprep.subr.bf16.mxu0 0
    %1550 = vmatpush2.bf16.msra.mxu0 0
    %1551 = vmatprep.mubr.bf16.mxu0 0
    %1552 = vmatmul.mubr.bf16.gmra.mxu0 %v1517
    %v1553 = vpop.f32.mrf.mxu0
    %v1554 = vadd.f32 %v1502, %v1553
    %v1555 = vpop.f32.mrf.mxu0
    %v1556 = vpop.f32.mrf.mxu0
    %v1557 = vadd.f32 %v1502, %v1556
    %v1558 = vpop.f32.mrf.mxu0
    %1559 = vdwg.mxu0
    %v1560 = vpack.c.bf16 %v1489, %v1488
    %v1561 = vpack.c.bf16 %v1491, %v1490
    %1562 = vrot.lane.b32.xlu0 %v1512, 96
    %v1563 = vpop.permute.xlu0 %1562
    %1564 = vrot.lane.b32.xlu0 %v1513, 96
    %v1565 = vpop.permute.xlu0 %1564
    %1568 = vrot.lane.b32.xlu0 %v1502, 96
    %v1569 = vpop.permute.xlu0 %1568
    %v1572 = vsel %vm308, %v1560, 0
    %v1575 = vsel %vm308, %v1561, 0
    %1577 = vmatprep.subr.bf16.mxu0 0
    %1578 = vmatpush1.bf16.msra.mxu0 0
    %1579 = vmatprep.subr.bf16.mxu0 0
    %1580 = vmatpush1.bf16.msra.mxu0 0
    %1581 = vmatprep.subr.bf16.mxu0 0
    %1582 = vmatpush1.bf16.msra.mxu0 0
    %1583 = vmatprep.subr.bf16.mxu0 0
    %1584 = vmatpush1.bf16.msra.mxu0 0
    %1585 = vmatprep.subr.bf16.mxu0 0
    %1586 = vmatpush1.bf16.msra.mxu0 0
    %1587 = vmatprep.subr.bf16.mxu0 0
    %1588 = vmatpush1.bf16.msra.mxu0 0
    %1589 = vmatprep.subr.bf16.mxu0 0
    %1590 = vmatpush1.bf16.msra.mxu0 %v1565
    %1591 = vmatprep.subr.bf16.mxu0 0
    %1592 = vmatpush1.bf16.msra.mxu0 %v1563
    %1593 = vmatprep.subr.bf16.mxu0 0
    %1594 = vmatpush2.bf16.msra.mxu0 0
    %1595 = vmatprep.subr.bf16.mxu0 0
    %1596 = vmatpush2.bf16.msra.mxu0 0
    %1597 = vmatprep.subr.bf16.mxu0 0
    %1598 = vmatpush2.bf16.msra.mxu0 0
    %1599 = vmatprep.subr.bf16.mxu0 0
    %1600 = vmatpush2.bf16.msra.mxu0 0
    %1601 = vmatprep.subr.bf16.mxu0 0
    %1602 = vmatpush2.bf16.msra.mxu0 0
    %1603 = vmatprep.subr.bf16.mxu0 0
    %1604 = vmatpush2.bf16.msra.mxu0 0
    %1605 = vmatprep.subr.bf16.mxu0 0
    %1606 = vmatpush2.bf16.msra.mxu0 0
    %1607 = vmatprep.subr.bf16.mxu0 0
    %1608 = vmatpush2.bf16.msra.mxu0 0
    %1609 = vmatprep.mubr.bf16.mxu0 0
    %1610 = vmatmul.mubr.bf16.gmra.mxu0 %v1572
    %v1611 = vpop.f32.mrf.mxu0
    %v1612 = vadd.f32 %v1569, %v1611
    %v1613 = vpop.f32.mrf.mxu0
    %v1614 = vpop.f32.mrf.mxu0
    %v1615 = vadd.f32 %v1569, %v1614
    %v1616 = vpop.f32.mrf.mxu0
    %1617 = vmatprep.mubr.bf16.mxu0 0
    %1618 = vmatmul.mubr.bf16.gmra.mxu0 %v1575
    %v1619 = vpop.f32.mrf.mxu0
    %v1620 = vadd.f32 %v1569, %v1619
    %v1621 = vpop.f32.mrf.mxu0
    %v1622 = vpop.f32.mrf.mxu0
    %v1623 = vadd.f32 %v1569, %v1622
    %v1624 = vpop.f32.mrf.mxu0
    %1625 = vdwg.mxu0
    %v1626 = vpack.c.bf16 %v275, %v274
    %v1627 = vpack.c.bf16 %v277, %v276
    %1628 = vrot.lane.b32.xlu0 %v1512, 64
    %v1629 = vpop.permute.xlu0 %1628
    %1630 = vrot.lane.b32.xlu0 %v1513, 64
    %v1631 = vpop.permute.xlu0 %1630
    %1634 = vrot.lane.b32.xlu0 %v1502, 64
    %v1635 = vpop.permute.xlu0 %1634
    %v1638 = vsel %vm308, %v1626, 0
    %v1641 = vsel %vm308, %v1627, 0
    %1643 = vmatprep.subr.bf16.mxu0 0
    %1644 = vmatpush1.bf16.msra.mxu0 0
    %1645 = vmatprep.subr.bf16.mxu0 0
    %1646 = vmatpush1.bf16.msra.mxu0 0
    %1647 = vmatprep.subr.bf16.mxu0 0
    %1648 = vmatpush1.bf16.msra.mxu0 0
    %1649 = vmatprep.subr.bf16.mxu0 0
    %1650 = vmatpush1.bf16.msra.mxu0 0
    %1651 = vmatprep.subr.bf16.mxu0 0
    %1652 = vmatpush1.bf16.msra.mxu0 0
    %1653 = vmatprep.subr.bf16.mxu0 0
    %1654 = vmatpush1.bf16.msra.mxu0 0
    %1655 = vmatprep.subr.bf16.mxu0 0
    %1656 = vmatpush1.bf16.msra.mxu0 %v1631
    %1657 = vmatprep.subr.bf16.mxu0 0
    %1658 = vmatpush1.bf16.msra.mxu0 %v1629
    %1659 = vmatprep.subr.bf16.mxu0 0
    %1660 = vmatpush2.bf16.msra.mxu0 0
    %1661 = vmatprep.subr.bf16.mxu0 0
    %1662 = vmatpush2.bf16.msra.mxu0 0
    %1663 = vmatprep.subr.bf16.mxu0 0
    %1664 = vmatpush2.bf16.msra.mxu0 0
    %1665 = vmatprep.subr.bf16.mxu0 0
    %1666 = vmatpush2.bf16.msra.mxu0 0
    %1667 = vmatprep.subr.bf16.mxu0 0
    %1668 = vmatpush2.bf16.msra.mxu0 0
    %1669 = vmatprep.subr.bf16.mxu0 0
    %1670 = vmatpush2.bf16.msra.mxu0 0
    %1671 = vmatprep.subr.bf16.mxu0 0
    %1672 = vmatpush2.bf16.msra.mxu0 0
    %1673 = vmatprep.subr.bf16.mxu0 0
    %1674 = vmatpush2.bf16.msra.mxu0 0
    %1675 = vmatprep.mubr.bf16.mxu0 0
    %1676 = vmatmul.mubr.bf16.gmra.mxu0 %v1638
    %v1677 = vpop.f32.mrf.mxu0
    %v1678 = vadd.f32 %v1635, %v1677
    %v1679 = vpop.f32.mrf.mxu0
    %v1680 = vpop.f32.mrf.mxu0
    %v1681 = vadd.f32 %v1635, %v1680
    %v1682 = vpop.f32.mrf.mxu0
    %1683 = vmatprep.mubr.bf16.mxu0 0
    %1684 = vmatmul.mubr.bf16.gmra.mxu0 %v1641
    %v1685 = vpop.f32.mrf.mxu0
    %v1686 = vadd.f32 %v1635, %v1685
    %v1687 = vpop.f32.mrf.mxu0
    %v1688 = vpop.f32.mrf.mxu0
    %v1689 = vadd.f32 %v1635, %v1688
    %v1690 = vpop.f32.mrf.mxu0
    %1691 = vdwg.mxu0
    %v1692 = vmul.f32 %v1554, 0.35355338
    %v1693 = vmul.f32 %v1557, 0.35355338
    %v1694 = vpack.c.bf16 %v1693, %v1692
    %v1696 = vunpack.c.l.b16 %v1694
    %v1697 = vunpack.c.h.b16 %v1694
    %v1698 = vpack.c.b16 %v1696, %v1696
    %v1699 = vpack.c.b16 %v1697, %v1697
    %v1700 = vpack.c.bf16 %v1615, %v1612
    %v1701 = vpack.c.bf16 %v1623, %v1620
    %v1702 = vpack.c.bf16 %v1681, %v1678
    %v1703 = vpack.c.bf16 %v1689, %v1686
    %1704 = vrot.lane.b32.xlu0 %v1698, 120
    %v1705 = vpop.permute.xlu0 %1704
    %1706 = vrot.lane.b32.xlu0 %v1699, 120
    %v1707 = vpop.permute.xlu0 %1706
    %1708 = vrot.lane.b32.xlu0 %v1698, 112
    %v1709 = vpop.permute.xlu0 %1708
    %1710 = vrot.lane.b32.xlu0 %v1699, 112
    %v1711 = vpop.permute.xlu0 %1710
    %1712 = vrot.lane.b32.xlu0 %v1698, 104
    %v1713 = vpop.permute.xlu0 %1712
    %1714 = vrot.lane.b32.xlu0 %v1699, 104
    %v1715 = vpop.permute.xlu0 %1714
    %1718 = vrot.lane.b32.xlu0 %v1700, 120
    %v1719 = vpop.permute.xlu0 %1718
    %1720 = vrot.lane.b32.xlu0 %v1701, 120
    %v1721 = vpop.permute.xlu0 %1720
    %1722 = vrot.lane.b32.xlu0 %v1700, 112
    %v1723 = vpop.permute.xlu0 %1722
    %1724 = vrot.lane.b32.xlu0 %v1701, 112
    %v1725 = vpop.permute.xlu0 %1724
    %1726 = vrot.lane.b32.xlu0 %v1700, 104
    %v1727 = vpop.permute.xlu0 %1726
    %1728 = vrot.lane.b32.xlu0 %v1701, 104
    %v1729 = vpop.permute.xlu0 %1728
    %1732 = vrot.lane.b32.xlu0 %v1702, 120
    %v1733 = vpop.permute.xlu0 %1732
    %1734 = vrot.lane.b32.xlu0 %v1703, 120
    %v1735 = vpop.permute.xlu0 %1734
    %1738 = vrot.lane.b32.xlu0 %v1702, 112
    %v1739 = vpop.permute.xlu0 %1738
    %1740 = vrot.lane.b32.xlu0 %v1703, 112
    %v1741 = vpop.permute.xlu0 %1740
    %1744 = vrot.lane.b32.xlu0 %v1702, 104
    %v1745 = vpop.permute.xlu0 %1744
    %1746 = vrot.lane.b32.xlu0 %v1703, 104
    %v1747 = vpop.permute.xlu0 %1746
    %v1751 = vsel %vm465, %v1698, 0
    %v1754 = vsel %vm465, %v1700, 0
    %1756 = vmatprep.subr.bf16.mxu0 0
    %1757 = vmatpush1.bf16.xpose.msra.mxu0 0
    %1758 = vmatprep.subr.bf16.mxu0 0
    %1759 = vmatpush1.bf16.xpose.msra.mxu0 0
    %1760 = vmatprep.subr.bf16.mxu0 0
    %1761 = vmatpush1.bf16.xpose.msra.mxu0 0
    %1762 = vmatprep.subr.bf16.mxu0 0
    %1763 = vmatpush1.bf16.xpose.msra.mxu0 0
    %1764 = vmatprep.subr.bf16.mxu0 0
    %1765 = vmatpush1.bf16.xpose.msra.mxu0 0
    %1766 = vmatprep.subr.bf16.mxu0 0
    %1767 = vmatpush1.bf16.xpose.msra.mxu0 0
    %1768 = vmatprep.subr.bf16.mxu0 0
    %1769 = vmatpush1.bf16.xpose.msra.mxu0 0
    %1770 = vmatprep.subr.bf16.mxu0 0
    %1771 = vmatpush1.bf16.xpose.msra.mxu0 %v1754
    %1772 = vmatprep.subr.bf16.mxu0 0
    %1773 = vmatpush2.bf16.xpose.msra.mxu0 0
    %1774 = vmatprep.subr.bf16.mxu0 0
    %1775 = vmatpush2.bf16.xpose.msra.mxu0 0
    %1776 = vmatprep.subr.bf16.mxu0 0
    %1777 = vmatpush2.bf16.xpose.msra.mxu0 0
    %1778 = vmatprep.subr.bf16.mxu0 0
    %1779 = vmatpush2.bf16.xpose.msra.mxu0 0
    %1780 = vmatprep.subr.bf16.mxu0 0
    %1781 = vmatpush2.bf16.xpose.msra.mxu0 0
    %1782 = vmatprep.subr.bf16.mxu0 0
    %1783 = vmatpush2.bf16.xpose.msra.mxu0 0
    %1784 = vmatprep.subr.bf16.mxu0 0
    %1785 = vmatpush2.bf16.xpose.msra.mxu0 0
    %1786 = vmatprep.subr.bf16.mxu0 0
    %1787 = vmatpush2.bf16.xpose.msra.mxu0 0
    %1788 = vmatprep.mubr.bf16.mxu0 0
    %1789 = vmatmul.mubr.bf16.gmra.mxu0 %v1751
    %v1790 = vpop.f32.mrf.mxu0
    %v1791 = vadd.f32 0.0, %v1790
    %v1792 = vpop.f32.mrf.mxu0
    %v1793 = vpop.f32.mrf.mxu0
    %v1794 = vpop.f32.mrf.mxu0
    %1795 = vdwg.mxu0
    %v1797 = vsel %vm465, %v1699, 0
    %v1800 = vsel %vm465, %v1701, 0
    %1802 = vmatprep.subr.bf16.mxu0 0
    %1803 = vmatpush1.bf16.xpose.msra.mxu0 0
    %1804 = vmatprep.subr.bf16.mxu0 0
    %1805 = vmatpush1.bf16.xpose.msra.mxu0 0
    %1806 = vmatprep.subr.bf16.mxu0 0
    %1807 = vmatpush1.bf16.xpose.msra.mxu0 0
    %1808 = vmatprep.subr.bf16.mxu0 0
    %1809 = vmatpush1.bf16.xpose.msra.mxu0 0
    %1810 = vmatprep.subr.bf16.mxu0 0
    %1811 = vmatpush1.bf16.xpose.msra.mxu0 0
    %1812 = vmatprep.subr.bf16.mxu0 0
    %1813 = vmatpush1.bf16.xpose.msra.mxu0 0
    %1814 = vmatprep.subr.bf16.mxu0 0
    %1815 = vmatpush1.bf16.xpose.msra.mxu0 0
    %1816 = vmatprep.subr.bf16.mxu0 0
    %1817 = vmatpush1.bf16.xpose.msra.mxu0 %v1800
    %1818 = vmatprep.subr.bf16.mxu0 0
    %1819 = vmatpush2.bf16.xpose.msra.mxu0 0
    %1820 = vmatprep.subr.bf16.mxu0 0
    %1821 = vmatpush2.bf16.xpose.msra.mxu0 0
    %1822 = vmatprep.subr.bf16.mxu0 0
    %1823 = vmatpush2.bf16.xpose.msra.mxu0 0
    %1824 = vmatprep.subr.bf16.mxu0 0
    %1825 = vmatpush2.bf16.xpose.msra.mxu0 0
    %1826 = vmatprep.subr.bf16.mxu0 0
    %1827 = vmatpush2.bf16.xpose.msra.mxu0 0
    %1828 = vmatprep.subr.bf16.mxu0 0
    %1829 = vmatpush2.bf16.xpose.msra.mxu0 0
    %1830 = vmatprep.subr.bf16.mxu0 0
    %1831 = vmatpush2.bf16.xpose.msra.mxu0 0
    %1832 = vmatprep.subr.bf16.mxu0 0
    %1833 = vmatpush2.bf16.xpose.msra.mxu0 0
    %1834 = vmatprep.mubr.bf16.mxu0 0
    %1835 = vmatmul.mubr.bf16.gmra.mxu0 %v1797
    %v1836 = vpop.f32.mrf.mxu0
    %v1837 = vadd.f32 0.0, %v1836
    %v1838 = vpop.f32.mrf.mxu0
    %v1839 = vpop.f32.mrf.mxu0
    %v1840 = vpop.f32.mrf.mxu0
    %1841 = vdwg.mxu0
    %v1843 = vsel %vm465, %v1705, 0
    %v1846 = vsel %vm465, %v1719, 0
    %1848 = vmatprep.subr.bf16.mxu0 0
    %1849 = vmatpush1.bf16.xpose.msra.mxu0 0
    %1850 = vmatprep.subr.bf16.mxu0 0
    %1851 = vmatpush1.bf16.xpose.msra.mxu0 0
    %1852 = vmatprep.subr.bf16.mxu0 0
    %1853 = vmatpush1.bf16.xpose.msra.mxu0 0
    %1854 = vmatprep.subr.bf16.mxu0 0
    %1855 = vmatpush1.bf16.xpose.msra.mxu0 0
    %1856 = vmatprep.subr.bf16.mxu0 0
    %1857 = vmatpush1.bf16.xpose.msra.mxu0 0
    %1858 = vmatprep.subr.bf16.mxu0 0
    %1859 = vmatpush1.bf16.xpose.msra.mxu0 0
    %1860 = vmatprep.subr.bf16.mxu0 0
    %1861 = vmatpush1.bf16.xpose.msra.mxu0 0
    %1862 = vmatprep.subr.bf16.mxu0 0
    %1863 = vmatpush1.bf16.xpose.msra.mxu0 %v1846
    %1864 = vmatprep.subr.bf16.mxu0 0
    %1865 = vmatpush2.bf16.xpose.msra.mxu0 0
    %1866 = vmatprep.subr.bf16.mxu0 0
    %1867 = vmatpush2.bf16.xpose.msra.mxu0 0
    %1868 = vmatprep.subr.bf16.mxu0 0
    %1869 = vmatpush2.bf16.xpose.msra.mxu0 0
    %1870 = vmatprep.subr.bf16.mxu0 0
    %1871 = vmatpush2.bf16.xpose.msra.mxu0 0
    %1872 = vmatprep.subr.bf16.mxu0 0
    %1873 = vmatpush2.bf16.xpose.msra.mxu0 0
    %1874 = vmatprep.subr.bf16.mxu0 0
    %1875 = vmatpush2.bf16.xpose.msra.mxu0 0
    %1876 = vmatprep.subr.bf16.mxu0 0
    %1877 = vmatpush2.bf16.xpose.msra.mxu0 0
    %1878 = vmatprep.subr.bf16.mxu0 0
    %1879 = vmatpush2.bf16.xpose.msra.mxu0 0
    %1880 = vmatprep.mubr.bf16.mxu0 0
    %1881 = vmatmul.mubr.bf16.gmra.mxu0 %v1843
    %v1882 = vpop.f32.mrf.mxu0
    %v1883 = vadd.f32 0.0, %v1882
    %v1884 = vpop.f32.mrf.mxu0
    %v1885 = vpop.f32.mrf.mxu0
    %v1886 = vpop.f32.mrf.mxu0
    %1887 = vdwg.mxu0
    %v1889 = vsel %vm465, %v1707, 0
    %v1892 = vsel %vm465, %v1721, 0
    %1894 = vmatprep.subr.bf16.mxu0 0
    %1895 = vmatpush1.bf16.xpose.msra.mxu0 0
    %1896 = vmatprep.subr.bf16.mxu0 0
    %1897 = vmatpush1.bf16.xpose.msra.mxu0 0
    %1898 = vmatprep.subr.bf16.mxu0 0
    %1899 = vmatpush1.bf16.xpose.msra.mxu0 0
    %1900 = vmatprep.subr.bf16.mxu0 0
    %1901 = vmatpush1.bf16.xpose.msra.mxu0 0
    %1902 = vmatprep.subr.bf16.mxu0 0
    %1903 = vmatpush1.bf16.xpose.msra.mxu0 0
    %1904 = vmatprep.subr.bf16.mxu0 0
    %1905 = vmatpush1.bf16.xpose.msra.mxu0 0
    %1906 = vmatprep.subr.bf16.mxu0 0
    %1907 = vmatpush1.bf16.xpose.msra.mxu0 0
    %1908 = vmatprep.subr.bf16.mxu0 0
    %1909 = vmatpush1.bf16.xpose.msra.mxu0 %v1892
    %1910 = vmatprep.subr.bf16.mxu0 0
    %1911 = vmatpush2.bf16.xpose.msra.mxu0 0
    %1912 = vmatprep.subr.bf16.mxu0 0
    %1913 = vmatpush2.bf16.xpose.msra.mxu0 0
    %1914 = vmatprep.subr.bf16.mxu0 0
    %1915 = vmatpush2.bf16.xpose.msra.mxu0 0
    %1916 = vmatprep.subr.bf16.mxu0 0
    %1917 = vmatpush2.bf16.xpose.msra.mxu0 0
    %1918 = vmatprep.subr.bf16.mxu0 0
    %1919 = vmatpush2.bf16.xpose.msra.mxu0 0
    %1920 = vmatprep.subr.bf16.mxu0 0
    %1921 = vmatpush2.bf16.xpose.msra.mxu0 0
    %1922 = vmatprep.subr.bf16.mxu0 0
    %1923 = vmatpush2.bf16.xpose.msra.mxu0 0
    %1924 = vmatprep.subr.bf16.mxu0 0
    %1925 = vmatpush2.bf16.xpose.msra.mxu0 0
    %1926 = vmatprep.mubr.bf16.mxu0 0
    %1927 = vmatmul.mubr.bf16.gmra.mxu0 %v1889
    %v1928 = vpop.f32.mrf.mxu0
    %v1929 = vadd.f32 0.0, %v1928
    %v1930 = vpop.f32.mrf.mxu0
    %v1931 = vpop.f32.mrf.mxu0
    %v1932 = vpop.f32.mrf.mxu0
    %1933 = vdwg.mxu0
    %v1935 = vsel %vm465, %v1709, 0
    %v1938 = vsel %vm465, %v1723, 0
    %1940 = vmatprep.subr.bf16.mxu0 0
    %1941 = vmatpush1.bf16.xpose.msra.mxu0 0
    %1942 = vmatprep.subr.bf16.mxu0 0
    %1943 = vmatpush1.bf16.xpose.msra.mxu0 0
    %1944 = vmatprep.subr.bf16.mxu0 0
    %1945 = vmatpush1.bf16.xpose.msra.mxu0 0
    %1946 = vmatprep.subr.bf16.mxu0 0
    %1947 = vmatpush1.bf16.xpose.msra.mxu0 0
    %1948 = vmatprep.subr.bf16.mxu0 0
    %1949 = vmatpush1.bf16.xpose.msra.mxu0 0
    %1950 = vmatprep.subr.bf16.mxu0 0
    %1951 = vmatpush1.bf16.xpose.msra.mxu0 0
    %1952 = vmatprep.subr.bf16.mxu0 0
    %1953 = vmatpush1.bf16.xpose.msra.mxu0 0
    %1954 = vmatprep.subr.bf16.mxu0 0
    %1955 = vmatpush1.bf16.xpose.msra.mxu0 %v1938
    %1956 = vmatprep.subr.bf16.mxu0 0
    %1957 = vmatpush2.bf16.xpose.msra.mxu0 0
    %1958 = vmatprep.subr.bf16.mxu0 0
    %1959 = vmatpush2.bf16.xpose.msra.mxu0 0
    %1960 = vmatprep.subr.bf16.mxu0 0
    %1961 = vmatpush2.bf16.xpose.msra.mxu0 0
    %1962 = vmatprep.subr.bf16.mxu0 0
    %1963 = vmatpush2.bf16.xpose.msra.mxu0 0
    %1964 = vmatprep.subr.bf16.mxu0 0
    %1965 = vmatpush2.bf16.xpose.msra.mxu0 0
    %1966 = vmatprep.subr.bf16.mxu0 0
    %1967 = vmatpush2.bf16.xpose.msra.mxu0 0
    %1968 = vmatprep.subr.bf16.mxu0 0
    %1969 = vmatpush2.bf16.xpose.msra.mxu0 0
    %1970 = vmatprep.subr.bf16.mxu0 0
    %1971 = vmatpush2.bf16.xpose.msra.mxu0 0
    %1972 = vmatprep.mubr.bf16.mxu0 0
    %1973 = vmatmul.mubr.bf16.gmra.mxu0 %v1935
    %v1974 = vpop.f32.mrf.mxu0
    %v1975 = vadd.f32 0.0, %v1974
    %v1976 = vpop.f32.mrf.mxu0
    %v1977 = vpop.f32.mrf.mxu0
    %v1978 = vpop.f32.mrf.mxu0
    %1979 = vdwg.mxu0
    %v1981 = vsel %vm465, %v1711, 0
    %v1984 = vsel %vm465, %v1725, 0
    %1986 = vmatprep.subr.bf16.mxu0 0
    %1987 = vmatpush1.bf16.xpose.msra.mxu0 0
    %1988 = vmatprep.subr.bf16.mxu0 0
    %1989 = vmatpush1.bf16.xpose.msra.mxu0 0
    %1990 = vmatprep.subr.bf16.mxu0 0
    %1991 = vmatpush1.bf16.xpose.msra.mxu0 0
    %1992 = vmatprep.subr.bf16.mxu0 0
    %1993 = vmatpush1.bf16.xpose.msra.mxu0 0
    %1994 = vmatprep.subr.bf16.mxu0 0
    %1995 = vmatpush1.bf16.xpose.msra.mxu0 0
    %1996 = vmatprep.subr.bf16.mxu0 0
    %1997 = vmatpush1.bf16.xpose.msra.mxu0 0
    %1998 = vmatprep.subr.bf16.mxu0 0
    %1999 = vmatpush1.bf16.xpose.msra.mxu0 0
    %2000 = vmatprep.subr.bf16.mxu0 0
    %2001 = vmatpush1.bf16.xpose.msra.mxu0 %v1984
    %2002 = vmatprep.subr.bf16.mxu0 0
    %2003 = vmatpush2.bf16.xpose.msra.mxu0 0
    %2004 = vmatprep.subr.bf16.mxu0 0
    %2005 = vmatpush2.bf16.xpose.msra.mxu0 0
    %2006 = vmatprep.subr.bf16.mxu0 0
    %2007 = vmatpush2.bf16.xpose.msra.mxu0 0
    %2008 = vmatprep.subr.bf16.mxu0 0
    %2009 = vmatpush2.bf16.xpose.msra.mxu0 0
    %2010 = vmatprep.subr.bf16.mxu0 0
    %2011 = vmatpush2.bf16.xpose.msra.mxu0 0
    %2012 = vmatprep.subr.bf16.mxu0 0
    %2013 = vmatpush2.bf16.xpose.msra.mxu0 0
    %2014 = vmatprep.subr.bf16.mxu0 0
    %2015 = vmatpush2.bf16.xpose.msra.mxu0 0
    %2016 = vmatprep.subr.bf16.mxu0 0
    %2017 = vmatpush2.bf16.xpose.msra.mxu0 0
    %2018 = vmatprep.mubr.bf16.mxu0 0
    %2019 = vmatmul.mubr.bf16.gmra.mxu0 %v1981
    %v2020 = vpop.f32.mrf.mxu0
    %v2021 = vadd.f32 0.0, %v2020
    %v2022 = vpop.f32.mrf.mxu0
    %v2023 = vpop.f32.mrf.mxu0
    %v2024 = vpop.f32.mrf.mxu0
    %2025 = vdwg.mxu0
    %v2027 = vsel %vm465, %v1713, 0
    %v2030 = vsel %vm465, %v1727, 0
    %2032 = vmatprep.subr.bf16.mxu0 0
    %2033 = vmatpush1.bf16.xpose.msra.mxu0 0
    %2034 = vmatprep.subr.bf16.mxu0 0
    %2035 = vmatpush1.bf16.xpose.msra.mxu0 0
    %2036 = vmatprep.subr.bf16.mxu0 0
    %2037 = vmatpush1.bf16.xpose.msra.mxu0 0
    %2038 = vmatprep.subr.bf16.mxu0 0
    %2039 = vmatpush1.bf16.xpose.msra.mxu0 0
    %2040 = vmatprep.subr.bf16.mxu0 0
    %2041 = vmatpush1.bf16.xpose.msra.mxu0 0
    %2042 = vmatprep.subr.bf16.mxu0 0
    %2043 = vmatpush1.bf16.xpose.msra.mxu0 0
    %2044 = vmatprep.subr.bf16.mxu0 0
    %2045 = vmatpush1.bf16.xpose.msra.mxu0 0
    %2046 = vmatprep.subr.bf16.mxu0 0
    %2047 = vmatpush1.bf16.xpose.msra.mxu0 %v2030
    %2048 = vmatprep.subr.bf16.mxu0 0
    %2049 = vmatpush2.bf16.xpose.msra.mxu0 0
    %2050 = vmatprep.subr.bf16.mxu0 0
    %2051 = vmatpush2.bf16.xpose.msra.mxu0 0
    %2052 = vmatprep.subr.bf16.mxu0 0
    %2053 = vmatpush2.bf16.xpose.msra.mxu0 0
    %2054 = vmatprep.subr.bf16.mxu0 0
    %2055 = vmatpush2.bf16.xpose.msra.mxu0 0
    %2056 = vmatprep.subr.bf16.mxu0 0
    %2057 = vmatpush2.bf16.xpose.msra.mxu0 0
    %2058 = vmatprep.subr.bf16.mxu0 0
    %2059 = vmatpush2.bf16.xpose.msra.mxu0 0
    %2060 = vmatprep.subr.bf16.mxu0 0
    %2061 = vmatpush2.bf16.xpose.msra.mxu0 0
    %2062 = vmatprep.subr.bf16.mxu0 0
    %2063 = vmatpush2.bf16.xpose.msra.mxu0 0
    %2064 = vmatprep.mubr.bf16.mxu0 0
    %2065 = vmatmul.mubr.bf16.gmra.mxu0 %v2027
    %v2066 = vpop.f32.mrf.mxu0
    %v2067 = vadd.f32 0.0, %v2066
    %v2068 = vpop.f32.mrf.mxu0
    %v2069 = vpop.f32.mrf.mxu0
    %v2070 = vpop.f32.mrf.mxu0
    %2071 = vdwg.mxu0
    %v2073 = vsel %vm465, %v1715, 0
    %v2076 = vsel %vm465, %v1729, 0
    %2078 = vmatprep.subr.bf16.mxu0 0
    %2079 = vmatpush1.bf16.xpose.msra.mxu0 0
    %2080 = vmatprep.subr.bf16.mxu0 0
    %2081 = vmatpush1.bf16.xpose.msra.mxu0 0
    %2082 = vmatprep.subr.bf16.mxu0 0
    %2083 = vmatpush1.bf16.xpose.msra.mxu0 0
    %2084 = vmatprep.subr.bf16.mxu0 0
    %2085 = vmatpush1.bf16.xpose.msra.mxu0 0
    %2086 = vmatprep.subr.bf16.mxu0 0
    %2087 = vmatpush1.bf16.xpose.msra.mxu0 0
    %2088 = vmatprep.subr.bf16.mxu0 0
    %2089 = vmatpush1.bf16.xpose.msra.mxu0 0
    %2090 = vmatprep.subr.bf16.mxu0 0
    %2091 = vmatpush1.bf16.xpose.msra.mxu0 0
    %2092 = vmatprep.subr.bf16.mxu0 0
    %2093 = vmatpush1.bf16.xpose.msra.mxu0 %v2076
    %2094 = vmatprep.subr.bf16.mxu0 0
    %2095 = vmatpush2.bf16.xpose.msra.mxu0 0
    %2096 = vmatprep.subr.bf16.mxu0 0
    %2097 = vmatpush2.bf16.xpose.msra.mxu0 0
    %2098 = vmatprep.subr.bf16.mxu0 0
    %2099 = vmatpush2.bf16.xpose.msra.mxu0 0
    %2100 = vmatprep.subr.bf16.mxu0 0
    %2101 = vmatpush2.bf16.xpose.msra.mxu0 0
    %2102 = vmatprep.subr.bf16.mxu0 0
    %2103 = vmatpush2.bf16.xpose.msra.mxu0 0
    %2104 = vmatprep.subr.bf16.mxu0 0
    %2105 = vmatpush2.bf16.xpose.msra.mxu0 0
    %2106 = vmatprep.subr.bf16.mxu0 0
    %2107 = vmatpush2.bf16.xpose.msra.mxu0 0
    %2108 = vmatprep.subr.bf16.mxu0 0
    %2109 = vmatpush2.bf16.xpose.msra.mxu0 0
    %2110 = vmatprep.mubr.bf16.mxu0 0
    %2111 = vmatmul.mubr.bf16.gmra.mxu0 %v2073
    %v2112 = vpop.f32.mrf.mxu0
    %v2113 = vadd.f32 0.0, %v2112
    %v2114 = vpop.f32.mrf.mxu0
    %v2115 = vpop.f32.mrf.mxu0
    %v2116 = vpop.f32.mrf.mxu0
    %2117 = vdwg.mxu0
    %v2118 = vsel %vm1357, %v1791, -inf
    %2119 = vmax.xlane.f32.xlu0 %v2118
    %v2120 = vpop.xlane.xlu0 %2119
    %v2121 = vsel %vm1357, %v1837, -inf
    %2122 = vmax.xlane.f32.xlu0 %v2121
    %v2123 = vpop.xlane.xlu0 %2122
    %v2124 = vsel %vm1357, %v1883, -inf
    %2125 = vmax.xlane.f32.xlu0 %v2124
    %v2126 = vpop.xlane.xlu0 %2125
    %v2127 = vsel %vm1357, %v1929, -inf
    %2128 = vmax.xlane.f32.xlu0 %v2127
    %v2129 = vpop.xlane.xlu0 %2128
    %v2130 = vsel %vm1357, %v1975, -inf
    %2131 = vmax.xlane.f32.xlu0 %v2130
    %v2132 = vpop.xlane.xlu0 %2131
    %v2133 = vsel %vm1357, %v2021, -inf
    %2134 = vmax.xlane.f32.xlu0 %v2133
    %v2135 = vpop.xlane.xlu0 %2134
    %v2136 = vsel %vm1357, %v2067, -inf
    %2137 = vmax.xlane.f32.xlu0 %v2136
    %v2138 = vpop.xlane.xlu0 %2137
    %v2139 = vsel %vm1357, %v2113, -inf
    %2140 = vmax.xlane.f32.xlu0 %v2139
    %v2141 = vpop.xlane.xlu0 %2140
    %v2142 = vsub.f32 %v1791, %v2120
    %v2143 = vsub.f32 %v1837, %v2123
    %v2144 = vsub.f32 %v1883, %v2126
    %v2145 = vsub.f32 %v1929, %v2129
    %v2146 = vsub.f32 %v1975, %v2132
    %v2147 = vsub.f32 %v2021, %v2135
    %v2148 = vsub.f32 %v2067, %v2138
    %v2149 = vsub.f32 %v2113, %v2141
    %v2150 = vmul.f32 %v2142, 1.442695
    %v2151 = vpow.pop %v2150
    %v2152 = vmul.f32 %v2143, 1.442695
    %v2153 = vpow.pop %v2152
    %v2154 = vmul.f32 %v2144, 1.442695
    %v2155 = vpow.pop %v2154
    %v2156 = vmul.f32 %v2145, 1.442695
    %v2157 = vpow.pop %v2156
    %v2158 = vmul.f32 %v2146, 1.442695
    %v2159 = vpow.pop %v2158
    %v2160 = vmul.f32 %v2147, 1.442695
    %v2161 = vpow.pop %v2160
    %v2162 = vmul.f32 %v2148, 1.442695
    %v2163 = vpow.pop %v2162
    %v2164 = vmul.f32 %v2149, 1.442695
    %v2165 = vpow.pop %v2164
    %v2166 = vsel %vm1357, %v2151, 0.0
    %2167 = vadd.xlane.f32.xlu0 %v2166
    %v2168 = vpop.xlane.xlu0 %2167
    %v2169 = vsel %vm1357, %v2153, 0.0
    %2170 = vadd.xlane.f32.xlu0 %v2169
    %v2171 = vpop.xlane.xlu0 %2170
    %v2172 = vsel %vm1357, %v2155, 0.0
    %2173 = vadd.xlane.f32.xlu0 %v2172
    %v2174 = vpop.xlane.xlu0 %2173
    %v2175 = vsel %vm1357, %v2157, 0.0
    %2176 = vadd.xlane.f32.xlu0 %v2175
    %v2177 = vpop.xlane.xlu0 %2176
    %v2178 = vsel %vm1357, %v2159, 0.0
    %2179 = vadd.xlane.f32.xlu0 %v2178
    %v2180 = vpop.xlane.xlu0 %2179
    %v2181 = vsel %vm1357, %v2161, 0.0
    %2182 = vadd.xlane.f32.xlu0 %v2181
    %v2183 = vpop.xlane.xlu0 %2182
    %v2184 = vsel %vm1357, %v2163, 0.0
    %2185 = vadd.xlane.f32.xlu0 %v2184
    %v2186 = vpop.xlane.xlu0 %2185
    %v2187 = vsel %vm1357, %v2165, 0.0
    %2188 = vadd.xlane.f32.xlu0 %v2187
    %v2189 = vpop.xlane.xlu0 %2188
    %v2190 = vrcp.pop %v2168
    %v2191 = vrcp.pop %v2171
    %v2192 = vrcp.pop %v2174
    %v2193 = vrcp.pop %v2177
    %v2194 = vrcp.pop %v2180
    %v2195 = vrcp.pop %v2183
    %v2196 = vrcp.pop %v2186
    %v2197 = vrcp.pop %v2189
    %v2198 = vmul.f32 %v2151, %v2190
    %v2199 = vmul.f32 %v2153, %v2191
    %v2200 = vmul.f32 %v2155, %v2192
    %v2201 = vmul.f32 %v2157, %v2193
    %v2202 = vmul.f32 %v2159, %v2194
    %v2203 = vmul.f32 %v2161, %v2195
    %v2204 = vmul.f32 %v2163, %v2196
    %v2205 = vmul.f32 %v2165, %v2197
    %v2206 = vpack.c.bf16 %v2198, %v2198
    %v2207 = vpack.c.bf16 %v2199, %v2199
    %v2208 = vpack.c.bf16 %v2200, %v2200
    %v2209 = vpack.c.bf16 %v2201, %v2201
    %v2210 = vpack.c.bf16 %v2202, %v2202
    %v2211 = vpack.c.bf16 %v2203, %v2203
    %v2212 = vpack.c.bf16 %v2204, %v2204
    %v2213 = vpack.c.bf16 %v2205, %v2205
    %v2215 = vsel %vm1357, %v2206, 0
    %2217 = vmatprep.subr.bf16.mxu0 0
    %2218 = vmatpush1.bf16.msra.mxu0 0
    %2219 = vmatprep.subr.bf16.mxu0 0
    %2220 = vmatpush1.bf16.msra.mxu0 0
    %2221 = vmatprep.subr.bf16.mxu0 0
    %2222 = vmatpush1.bf16.msra.mxu0 0
    %2223 = vmatprep.subr.bf16.mxu0 0
    %2224 = vmatpush1.bf16.msra.mxu0 0
    %2225 = vmatprep.subr.bf16.mxu0 0
    %2226 = vmatpush1.bf16.msra.mxu0 0
    %2227 = vmatprep.subr.bf16.mxu0 0
    %2228 = vmatpush1.bf16.msra.mxu0 0
    %2229 = vmatprep.subr.bf16.mxu0 0
    %2230 = vmatpush1.bf16.msra.mxu0 0
    %2231 = vmatprep.subr.bf16.mxu0 0
    %2232 = vmatpush1.bf16.msra.mxu0 %v1702
    %2233 = vmatprep.subr.bf16.mxu0 0
    %2234 = vmatpush2.bf16.msra.mxu0 0
    %2235 = vmatprep.subr.bf16.mxu0 0
    %2236 = vmatpush2.bf16.msra.mxu0 0
    %2237 = vmatprep.subr.bf16.mxu0 0
    %2238 = vmatpush2.bf16.msra.mxu0 0
    %2239 = vmatprep.subr.bf16.mxu0 0
    %2240 = vmatpush2.bf16.msra.mxu0 0
    %2241 = vmatprep.subr.bf16.mxu0 0
    %2242 = vmatpush2.bf16.msra.mxu0 0
    %2243 = vmatprep.subr.bf16.mxu0 0
    %2244 = vmatpush2.bf16.msra.mxu0 0
    %2245 = vmatprep.subr.bf16.mxu0 0
    %2246 = vmatpush2.bf16.msra.mxu0 0
    %2247 = vmatprep.subr.bf16.mxu0 0
    %2248 = vmatpush2.bf16.msra.mxu0 0
    %2249 = vmatprep.mubr.bf16.mxu0 0
    %2250 = vmatmul.mubr.bf16.gmra.mxu0 %v2215
    %v2251 = vpop.f32.mrf.mxu0
    %v2252 = vadd.f32 0.0, %v2251
    %v2253 = vpop.f32.mrf.mxu0
    %v2254 = vpop.f32.mrf.mxu0
    %v2255 = vpop.f32.mrf.mxu0
    %2256 = vdwg.mxu0
    %v2258 = vsel %vm1357, %v2207, 0
    %2260 = vmatprep.subr.bf16.mxu0 0
    %2261 = vmatpush1.bf16.msra.mxu0 0
    %2262 = vmatprep.subr.bf16.mxu0 0
    %2263 = vmatpush1.bf16.msra.mxu0 0
    %2264 = vmatprep.subr.bf16.mxu0 0
    %2265 = vmatpush1.bf16.msra.mxu0 0
    %2266 = vmatprep.subr.bf16.mxu0 0
    %2267 = vmatpush1.bf16.msra.mxu0 0
    %2268 = vmatprep.subr.bf16.mxu0 0
    %2269 = vmatpush1.bf16.msra.mxu0 0
    %2270 = vmatprep.subr.bf16.mxu0 0
    %2271 = vmatpush1.bf16.msra.mxu0 0
    %2272 = vmatprep.subr.bf16.mxu0 0
    %2273 = vmatpush1.bf16.msra.mxu0 0
    %2274 = vmatprep.subr.bf16.mxu0 0
    %2275 = vmatpush1.bf16.msra.mxu0 %v1703
    %2276 = vmatprep.subr.bf16.mxu0 0
    %2277 = vmatpush2.bf16.msra.mxu0 0
    %2278 = vmatprep.subr.bf16.mxu0 0
    %2279 = vmatpush2.bf16.msra.mxu0 0
    %2280 = vmatprep.subr.bf16.mxu0 0
    %2281 = vmatpush2.bf16.msra.mxu0 0
    %2282 = vmatprep.subr.bf16.mxu0 0
    %2283 = vmatpush2.bf16.msra.mxu0 0
    %2284 = vmatprep.subr.bf16.mxu0 0
    %2285 = vmatpush2.bf16.msra.mxu0 0
    %2286 = vmatprep.subr.bf16.mxu0 0
    %2287 = vmatpush2.bf16.msra.mxu0 0
    %2288 = vmatprep.subr.bf16.mxu0 0
    %2289 = vmatpush2.bf16.msra.mxu0 0
    %2290 = vmatprep.subr.bf16.mxu0 0
    %2291 = vmatpush2.bf16.msra.mxu0 0
    %2292 = vmatprep.mubr.bf16.mxu0 0
    %2293 = vmatmul.mubr.bf16.gmra.mxu0 %v2258
    %v2294 = vpop.f32.mrf.mxu0
    %v2295 = vadd.f32 0.0, %v2294
    %v2296 = vpop.f32.mrf.mxu0
    %v2297 = vpop.f32.mrf.mxu0
    %v2298 = vpop.f32.mrf.mxu0
    %2299 = vdwg.mxu0
    %v2301 = vsel %vm1357, %v2208, 0
    %2303 = vmatprep.subr.bf16.mxu0 0
    %2304 = vmatpush1.bf16.msra.mxu0 0
    %2305 = vmatprep.subr.bf16.mxu0 0
    %2306 = vmatpush1.bf16.msra.mxu0 0
    %2307 = vmatprep.subr.bf16.mxu0 0
    %2308 = vmatpush1.bf16.msra.mxu0 0
    %2309 = vmatprep.subr.bf16.mxu0 0
    %2310 = vmatpush1.bf16.msra.mxu0 0
    %2311 = vmatprep.subr.bf16.mxu0 0
    %2312 = vmatpush1.bf16.msra.mxu0 0
    %2313 = vmatprep.subr.bf16.mxu0 0
    %2314 = vmatpush1.bf16.msra.mxu0 0
    %2315 = vmatprep.subr.bf16.mxu0 0
    %2316 = vmatpush1.bf16.msra.mxu0 0
    %2317 = vmatprep.subr.bf16.mxu0 0
    %2318 = vmatpush1.bf16.msra.mxu0 %v1733
    %2319 = vmatprep.subr.bf16.mxu0 0
    %2320 = vmatpush2.bf16.msra.mxu0 0
    %2321 = vmatprep.subr.bf16.mxu0 0
    %2322 = vmatpush2.bf16.msra.mxu0 0
    %2323 = vmatprep.subr.bf16.mxu0 0
    %2324 = vmatpush2.bf16.msra.mxu0 0
    %2325 = vmatprep.subr.bf16.mxu0 0
    %2326 = vmatpush2.bf16.msra.mxu0 0
    %2327 = vmatprep.subr.bf16.mxu0 0
    %2328 = vmatpush2.bf16.msra.mxu0 0
    %2329 = vmatprep.subr.bf16.mxu0 0
    %2330 = vmatpush2.bf16.msra.mxu0 0
    %2331 = vmatprep.subr.bf16.mxu0 0
    %2332 = vmatpush2.bf16.msra.mxu0 0
    %2333 = vmatprep.subr.bf16.mxu0 0
    %2334 = vmatpush2.bf16.msra.mxu0 0
    %2335 = vmatprep.mubr.bf16.mxu0 0
    %2336 = vmatmul.mubr.bf16.gmra.mxu0 %v2301
    %v2337 = vpop.f32.mrf.mxu0
    %v2338 = vadd.f32 0.0, %v2337
    %v2339 = vpop.f32.mrf.mxu0
    %v2340 = vpop.f32.mrf.mxu0
    %v2341 = vpop.f32.mrf.mxu0
    %2342 = vdwg.mxu0
    %v2344 = vsel %vm1357, %v2209, 0
    %2346 = vmatprep.subr.bf16.mxu0 0
    %2347 = vmatpush1.bf16.msra.mxu0 0
    %2348 = vmatprep.subr.bf16.mxu0 0
    %2349 = vmatpush1.bf16.msra.mxu0 0
    %2350 = vmatprep.subr.bf16.mxu0 0
    %2351 = vmatpush1.bf16.msra.mxu0 0
    %2352 = vmatprep.subr.bf16.mxu0 0
    %2353 = vmatpush1.bf16.msra.mxu0 0
    %2354 = vmatprep.subr.bf16.mxu0 0
    %2355 = vmatpush1.bf16.msra.mxu0 0
    %2356 = vmatprep.subr.bf16.mxu0 0
    %2357 = vmatpush1.bf16.msra.mxu0 0
    %2358 = vmatprep.subr.bf16.mxu0 0
    %2359 = vmatpush1.bf16.msra.mxu0 0
    %2360 = vmatprep.subr.bf16.mxu0 0
    %2361 = vmatpush1.bf16.msra.mxu0 %v1735
    %2362 = vmatprep.subr.bf16.mxu0 0
    %2363 = vmatpush2.bf16.msra.mxu0 0
    %2364 = vmatprep.subr.bf16.mxu0 0
    %2365 = vmatpush2.bf16.msra.mxu0 0
    %2366 = vmatprep.subr.bf16.mxu0 0
    %2367 = vmatpush2.bf16.msra.mxu0 0
    %2368 = vmatprep.subr.bf16.mxu0 0
    %2369 = vmatpush2.bf16.msra.mxu0 0
    %2370 = vmatprep.subr.bf16.mxu0 0
    %2371 = vmatpush2.bf16.msra.mxu0 0
    %2372 = vmatprep.subr.bf16.mxu0 0
    %2373 = vmatpush2.bf16.msra.mxu0 0
    %2374 = vmatprep.subr.bf16.mxu0 0
    %2375 = vmatpush2.bf16.msra.mxu0 0
    %2376 = vmatprep.subr.bf16.mxu0 0
    %2377 = vmatpush2.bf16.msra.mxu0 0
    %2378 = vmatprep.mubr.bf16.mxu0 0
    %2379 = vmatmul.mubr.bf16.gmra.mxu0 %v2344
    %v2380 = vpop.f32.mrf.mxu0
    %v2381 = vadd.f32 0.0, %v2380
    %v2382 = vpop.f32.mrf.mxu0
    %v2383 = vpop.f32.mrf.mxu0
    %v2384 = vpop.f32.mrf.mxu0
    %2385 = vdwg.mxu0
    %v2387 = vsel %vm1357, %v2210, 0
    %2389 = vmatprep.subr.bf16.mxu0 0
    %2390 = vmatpush1.bf16.msra.mxu0 0
    %2391 = vmatprep.subr.bf16.mxu0 0
    %2392 = vmatpush1.bf16.msra.mxu0 0
    %2393 = vmatprep.subr.bf16.mxu0 0
    %2394 = vmatpush1.bf16.msra.mxu0 0
    %2395 = vmatprep.subr.bf16.mxu0 0
    %2396 = vmatpush1.bf16.msra.mxu0 0
    %2397 = vmatprep.subr.bf16.mxu0 0
    %2398 = vmatpush1.bf16.msra.mxu0 0
    %2399 = vmatprep.subr.bf16.mxu0 0
    %2400 = vmatpush1.bf16.msra.mxu0 0
    %2401 = vmatprep.subr.bf16.mxu0 0
    %2402 = vmatpush1.bf16.msra.mxu0 0
    %2403 = vmatprep.subr.bf16.mxu0 0
    %2404 = vmatpush1.bf16.msra.mxu0 %v1739
    %2405 = vmatprep.subr.bf16.mxu0 0
    %2406 = vmatpush2.bf16.msra.mxu0 0
    %2407 = vmatprep.subr.bf16.mxu0 0
    %2408 = vmatpush2.bf16.msra.mxu0 0
    %2409 = vmatprep.subr.bf16.mxu0 0
    %2410 = vmatpush2.bf16.msra.mxu0 0
    %2411 = vmatprep.subr.bf16.mxu0 0
    %2412 = vmatpush2.bf16.msra.mxu0 0
    %2413 = vmatprep.subr.bf16.mxu0 0
    %2414 = vmatpush2.bf16.msra.mxu0 0
    %2415 = vmatprep.subr.bf16.mxu0 0
    %2416 = vmatpush2.bf16.msra.mxu0 0
    %2417 = vmatprep.subr.bf16.mxu0 0
    %2418 = vmatpush2.bf16.msra.mxu0 0
    %2419 = vmatprep.subr.bf16.mxu0 0
    %2420 = vmatpush2.bf16.msra.mxu0 0
    %2421 = vmatprep.mubr.bf16.mxu0 0
    %2422 = vmatmul.mubr.bf16.gmra.mxu0 %v2387
    %v2423 = vpop.f32.mrf.mxu0
    %v2424 = vadd.f32 0.0, %v2423
    %v2425 = vpop.f32.mrf.mxu0
    %v2426 = vpop.f32.mrf.mxu0
    %v2427 = vpop.f32.mrf.mxu0
    %2428 = vdwg.mxu0
    %v2430 = vsel %vm1357, %v2211, 0
    %2432 = vmatprep.subr.bf16.mxu0 0
    %2433 = vmatpush1.bf16.msra.mxu0 0
    %2434 = vmatprep.subr.bf16.mxu0 0
    %2435 = vmatpush1.bf16.msra.mxu0 0
    %2436 = vmatprep.subr.bf16.mxu0 0
    %2437 = vmatpush1.bf16.msra.mxu0 0
    %2438 = vmatprep.subr.bf16.mxu0 0
    %2439 = vmatpush1.bf16.msra.mxu0 0
    %2440 = vmatprep.subr.bf16.mxu0 0
    %2441 = vmatpush1.bf16.msra.mxu0 0
    %2442 = vmatprep.subr.bf16.mxu0 0
    %2443 = vmatpush1.bf16.msra.mxu0 0
    %2444 = vmatprep.subr.bf16.mxu0 0
    %2445 = vmatpush1.bf16.msra.mxu0 0
    %2446 = vmatprep.subr.bf16.mxu0 0
    %2447 = vmatpush1.bf16.msra.mxu0 %v1741
    %2448 = vmatprep.subr.bf16.mxu0 0
    %2449 = vmatpush2.bf16.msra.mxu0 0
    %2450 = vmatprep.subr.bf16.mxu0 0
    %2451 = vmatpush2.bf16.msra.mxu0 0
    %2452 = vmatprep.subr.bf16.mxu0 0
    %2453 = vmatpush2.bf16.msra.mxu0 0
    %2454 = vmatprep.subr.bf16.mxu0 0
    %2455 = vmatpush2.bf16.msra.mxu0 0
    %2456 = vmatprep.subr.bf16.mxu0 0
    %2457 = vmatpush2.bf16.msra.mxu0 0
    %2458 = vmatprep.subr.bf16.mxu0 0
    %2459 = vmatpush2.bf16.msra.mxu0 0
    %2460 = vmatprep.subr.bf16.mxu0 0
    %2461 = vmatpush2.bf16.msra.mxu0 0
    %2462 = vmatprep.subr.bf16.mxu0 0
    %2463 = vmatpush2.bf16.msra.mxu0 0
    %2464 = vmatprep.mubr.bf16.mxu0 0
    %2465 = vmatmul.mubr.bf16.gmra.mxu0 %v2430
    %v2466 = vpop.f32.mrf.mxu0
    %v2467 = vadd.f32 0.0, %v2466
    %v2468 = vpop.f32.mrf.mxu0
    %v2469 = vpop.f32.mrf.mxu0
    %v2470 = vpop.f32.mrf.mxu0
    %2471 = vdwg.mxu0
    %v2473 = vsel %vm1357, %v2212, 0
    %2475 = vmatprep.subr.bf16.mxu0 0
    %2476 = vmatpush1.bf16.msra.mxu0 0
    %2477 = vmatprep.subr.bf16.mxu0 0
    %2478 = vmatpush1.bf16.msra.mxu0 0
    %2479 = vmatprep.subr.bf16.mxu0 0
    %2480 = vmatpush1.bf16.msra.mxu0 0
    %2481 = vmatprep.subr.bf16.mxu0 0
    %2482 = vmatpush1.bf16.msra.mxu0 0
    %2483 = vmatprep.subr.bf16.mxu0 0
    %2484 = vmatpush1.bf16.msra.mxu0 0
    %2485 = vmatprep.subr.bf16.mxu0 0
    %2486 = vmatpush1.bf16.msra.mxu0 0
    %2487 = vmatprep.subr.bf16.mxu0 0
    %2488 = vmatpush1.bf16.msra.mxu0 0
    %2489 = vmatprep.subr.bf16.mxu0 0
    %2490 = vmatpush1.bf16.msra.mxu0 %v1745
    %2491 = vmatprep.subr.bf16.mxu0 0
    %2492 = vmatpush2.bf16.msra.mxu0 0
    %2493 = vmatprep.subr.bf16.mxu0 0
    %2494 = vmatpush2.bf16.msra.mxu0 0
    %2495 = vmatprep.subr.bf16.mxu0 0
    %2496 = vmatpush2.bf16.msra.mxu0 0
    %2497 = vmatprep.subr.bf16.mxu0 0
    %2498 = vmatpush2.bf16.msra.mxu0 0
    %2499 = vmatprep.subr.bf16.mxu0 0
    %2500 = vmatpush2.bf16.msra.mxu0 0
    %2501 = vmatprep.subr.bf16.mxu0 0
    %2502 = vmatpush2.bf16.msra.mxu0 0
    %2503 = vmatprep.subr.bf16.mxu0 0
    %2504 = vmatpush2.bf16.msra.mxu0 0
    %2505 = vmatprep.subr.bf16.mxu0 0
    %2506 = vmatpush2.bf16.msra.mxu0 0
    %2507 = vmatprep.mubr.bf16.mxu0 0
    %2508 = vmatmul.mubr.bf16.gmra.mxu0 %v2473
    %v2509 = vpop.f32.mrf.mxu0
    %v2510 = vadd.f32 0.0, %v2509
    %v2511 = vpop.f32.mrf.mxu0
    %v2512 = vpop.f32.mrf.mxu0
    %v2513 = vpop.f32.mrf.mxu0
    %2514 = vdwg.mxu0
    %v2516 = vsel %vm1357, %v2213, 0
    %2518 = vmatprep.subr.bf16.mxu0 0
    %2519 = vmatpush1.bf16.msra.mxu0 0
    %2520 = vmatprep.subr.bf16.mxu0 0
    %2521 = vmatpush1.bf16.msra.mxu0 0
    %2522 = vmatprep.subr.bf16.mxu0 0
    %2523 = vmatpush1.bf16.msra.mxu0 0
    %2524 = vmatprep.subr.bf16.mxu0 0
    %2525 = vmatpush1.bf16.msra.mxu0 0
    %2526 = vmatprep.subr.bf16.mxu0 0
    %2527 = vmatpush1.bf16.msra.mxu0 0
    %2528 = vmatprep.subr.bf16.mxu0 0
    %2529 = vmatpush1.bf16.msra.mxu0 0
    %2530 = vmatprep.subr.bf16.mxu0 0
    %2531 = vmatpush1.bf16.msra.mxu0 0
    %2532 = vmatprep.subr.bf16.mxu0 0
    %2533 = vmatpush1.bf16.msra.mxu0 %v1747
    %2534 = vmatprep.subr.bf16.mxu0 0
    %2535 = vmatpush2.bf16.msra.mxu0 0
    %2536 = vmatprep.subr.bf16.mxu0 0
    %2537 = vmatpush2.bf16.msra.mxu0 0
    %2538 = vmatprep.subr.bf16.mxu0 0
    %2539 = vmatpush2.bf16.msra.mxu0 0
    %2540 = vmatprep.subr.bf16.mxu0 0
    %2541 = vmatpush2.bf16.msra.mxu0 0
    %2542 = vmatprep.subr.bf16.mxu0 0
    %2543 = vmatpush2.bf16.msra.mxu0 0
    %2544 = vmatprep.subr.bf16.mxu0 0
    %2545 = vmatpush2.bf16.msra.mxu0 0
    %2546 = vmatprep.subr.bf16.mxu0 0
    %2547 = vmatpush2.bf16.msra.mxu0 0
    %2548 = vmatprep.subr.bf16.mxu0 0
    %2549 = vmatpush2.bf16.msra.mxu0 0
    %2550 = vmatprep.mubr.bf16.mxu0 0
    %2551 = vmatmul.mubr.bf16.gmra.mxu0 %v2516
    %v2552 = vpop.f32.mrf.mxu0
    %v2553 = vadd.f32 0.0, %v2552
    %v2554 = vpop.f32.mrf.mxu0
    %v2555 = vpop.f32.mrf.mxu0
    %v2556 = vpop.f32.mrf.mxu0
    %2557 = vdwg.mxu0
    %v2558 = vpack.c.bf16 %v2252, %v2252
    %v2559 = vpack.c.bf16 %v2295, %v2295
    %v2560 = vpack.c.bf16 %v2338, %v2338
    %v2561 = vpack.c.bf16 %v2381, %v2381
    %v2562 = vpack.c.bf16 %v2424, %v2424
    %v2563 = vpack.c.bf16 %v2467, %v2467
    %v2564 = vpack.c.bf16 %v2510, %v2510
    %v2565 = vpack.c.bf16 %v2553, %v2553
    %2568 = vrot.lane.b32.xlu0 %v2560, 8
    %v2569 = vpop.permute.xlu0 %2568
    %2570 = vrot.lane.b32.xlu0 %v2561, 8
    %v2571 = vpop.permute.xlu0 %2570
    %2574 = vrot.lane.b32.xlu0 %v2562, 16
    %v2575 = vpop.permute.xlu0 %2574
    %2576 = vrot.lane.b32.xlu0 %v2563, 16
    %v2577 = vpop.permute.xlu0 %2576
    %2580 = vrot.lane.b32.xlu0 %v2564, 24
    %v2581 = vpop.permute.xlu0 %2580
    %2582 = vrot.lane.b32.xlu0 %v2565, 24
    %v2583 = vpop.permute.xlu0 %2582
    %v2586 = vsel %vm465, %v2558, %v2569
    %v2589 = vsel %vm465, %v2559, %v2571
    %v2591 = vsel %vm1357, %v2586, %v2575
    %v2593 = vsel %vm1357, %v2589, %v2577
    %v2595 = vsel %vm1362, %v2591, %v2581
    %v2597 = vsel %vm1362, %v2593, %v2583
    %v2598 = vld [vmem:[%s10] sm:$0xf]
    %v2599 = vld [vmem:[%s10 + $0x4] sm:$0xf]
    %v2600 = vld [vmem:[%s10 + $0x8] sm:$0xf]
    %v2601 = vld [vmem:[%s10 + $0xc] sm:$0xf]
    %v2602 = vld [vmem:[#allocation16] sm:$0x1]
    %v2604 = vlaneseq
    %v2605 = vshrl.u32 %v2604, 7
    %v2606 = vsub.s32 0, %v2605
    %v2607 = vrot.slane %v2602, %v2606
    %v2611 = vunpack.c.l.b16 %v2595
    %v2612 = vunpack.c.l.b16 %v2597
    %v2613 = vpack.c.b16 %v2612, %v2611
    %v2618 = vunpack.c.l.b16 %v2598
    %v2619 = vunpack.c.l.b16 %v2599
    %v2620 = vunpack.c.l.b16 %v2600
    %v2621 = vunpack.c.l.b16 %v2601
    %v2622 = vpack.c.b16 %v2619, %v2618
    %v2623 = vpack.c.b16 %v2621, %v2620
    %v2627 = vsel %vm308, %v2613, 0
    %2629 = vmatprep.subr.bf16.mxu0 0
    %2630 = vmatpush1.bf16.msra.mxu0 0
    %2631 = vmatprep.subr.bf16.mxu0 0
    %2632 = vmatpush1.bf16.msra.mxu0 0
    %2633 = vmatprep.subr.bf16.mxu0 0
    %2634 = vmatpush1.bf16.msra.mxu0 0
    %2635 = vmatprep.subr.bf16.mxu0 0
    %2636 = vmatpush1.bf16.msra.mxu0 0
    %2637 = vmatprep.subr.bf16.mxu0 0
    %2638 = vmatpush1.bf16.msra.mxu0 0
    %2639 = vmatprep.subr.bf16.mxu0 0
    %2640 = vmatpush1.bf16.msra.mxu0 0
    %2641 = vmatprep.subr.bf16.mxu0 0
    %2642 = vmatpush1.bf16.msra.mxu0 %v2623
    %2643 = vmatprep.subr.bf16.mxu0 0
    %2644 = vmatpush1.bf16.msra.mxu0 %v2622
    %2645 = vmatprep.subr.bf16.mxu0 0
    %2646 = vmatpush2.bf16.msra.mxu0 0
    %2647 = vmatprep.subr.bf16.mxu0 0
    %2648 = vmatpush2.bf16.msra.mxu0 0
    %2649 = vmatprep.subr.bf16.mxu0 0
    %2650 = vmatpush2.bf16.msra.mxu0 0
    %2651 = vmatprep.subr.bf16.mxu0 0
    %2652 = vmatpush2.bf16.msra.mxu0 0
    %2653 = vmatprep.subr.bf16.mxu0 0
    %2654 = vmatpush2.bf16.msra.mxu0 0
    %2655 = vmatprep.subr.bf16.mxu0 0
    %2656 = vmatpush2.bf16.msra.mxu0 0
    %2657 = vmatprep.subr.bf16.mxu0 0
    %2658 = vmatpush2.bf16.msra.mxu0 0
    %2659 = vmatprep.subr.bf16.mxu0 0
    %2660 = vmatpush2.bf16.msra.mxu0 0
    %2661 = vmatprep.mubr.bf16.mxu0 0
    %2662 = vmatmul.mubr.bf16.gmra.mxu0 %v2627
    %v2663 = vpop.f32.mrf.mxu0
    %v2664 = vadd.f32 %v2607, %v2663
    %v2665 = vpop.f32.mrf.mxu0
    %v2666 = vpop.f32.mrf.mxu0
    %v2667 = vadd.f32 %v2607, %v2666
    %v2668 = vpop.f32.mrf.mxu0
    %2669 = vdwg.mxu0
    %v2670 = vadd.f32 %v1484, %v2664
    %v2671 = vadd.f32 %v1485, %v2667
    %v2672 = vsel %vm308, %v2670, 0.0
    %2673 = vadd.xlane.f32.xlu0 %v2672
    %v2674 = vpop.xlane.xlu0 %2673
    %v2675 = vsel %vm308, %v2671, 0.0
    %2676 = vadd.xlane.f32.xlu0 %v2675
    %v2677 = vpop.xlane.xlu0 %2676
    %v2678 = vmul.f32 %v2674, %v1447
    %v2679 = vmul.f32 %v2677, %v1447
    %v2680 = vsub.f32 %v2670, %v2678
    %v2681 = vsub.f32 %v2671, %v2679
    %v2682 = vmul.f32 %v2680, %v2680
    %v2683 = vmul.f32 %v2681, %v2681
    %v2684 = vsel %vm308, %v2682, 0.0
    %2685 = vadd.xlane.f32.xlu0 %v2684
    %v2686 = vpop.xlane.xlu0 %2685
    %v2687 = vsel %vm308, %v2683, 0.0
    %2688 = vadd.xlane.f32.xlu0 %v2687
    %v2689 = vpop.xlane.xlu0 %2688
    %v2690 = vmul.f32 %v2686, %v1447
    %v2691 = vmul.f32 %v2689, %v1447
    %v2692 = vadd.f32 %v2690, 1e-05
    %v2693 = vadd.f32 %v2691, 1e-05
    %v2694 = vrsqrt.pop %v2692
    %v2695 = vrsqrt.pop %v2693
    %v2696 = vmul.f32 %v2680, %v2694
    %v2697 = vmul.f32 %v2681, %v2695
    %v2698 = vld [vmem:[#allocation20] sm:$0x1]
    %v2700 = vlaneseq
    %v2701 = vshrl.u32 %v2700, 7
    %v2702 = vsub.s32 0, %v2701
    %v2703 = vrot.slane %v2698, %v2702
    %v2705 = vmul.f32 %v2696, %v2703
    %v2706 = vmul.f32 %v2697, %v2703
    %v2707 = vld [vmem:[#allocation22] sm:$0x1]
    %v2709 = vlaneseq
    %v2710 = vshrl.u32 %v2709, 7
    %v2711 = vsub.s32 0, %v2710
    %v2712 = vrot.slane %v2707, %v2711
    %v2714 = vadd.f32 %v2705, %v2712
    %v2715 = vadd.f32 %v2706, %v2712
    %v2716 = vpack.c.bf16 %v2715, %v2714
    %v2717 = vld [vmem:[#allocation26] sm:$0xf]
    %v2718 = vld [vmem:[#allocation26 + $0x4] sm:$0xf]
    %v2719 = vld [vmem:[#allocation26 + $0x8] sm:$0xf]
    %v2720 = vld [vmem:[#allocation26 + $0xc] sm:$0xf]
    %v2721 = vld [vmem:[%s19] sm:$0x1]
    %v2723 = vlaneseq
    %v2724 = vshrl.u32 %v2723, 7
    %v2725 = vsub.s32 0, %v2724
    %v2726 = vrot.slane %v2721, %v2725
    %v2732 = vunpack.c.l.b16 %v2717
    %v2733 = vunpack.c.l.b16 %v2718
    %v2734 = vunpack.c.l.b16 %v2719
    %v2735 = vunpack.c.l.b16 %v2720
    %v2736 = vpack.c.b16 %v2733, %v2732
    %v2737 = vpack.c.b16 %v2735, %v2734
    %v2741 = vsel %vm308, %v2716, 0
    %2743 = vmatprep.subr.bf16.mxu0 0
    %2744 = vmatpush1.bf16.msra.mxu0 0
    %2745 = vmatprep.subr.bf16.mxu0 0
    %2746 = vmatpush1.bf16.msra.mxu0 0
    %2747 = vmatprep.subr.bf16.mxu0 0
    %2748 = vmatpush1.bf16.msra.mxu0 0
    %2749 = vmatprep.subr.bf16.mxu0 0
    %2750 = vmatpush1.bf16.msra.mxu0 0
    %2751 = vmatprep.subr.bf16.mxu0 0
    %2752 = vmatpush1.bf16.msra.mxu0 0
    %2753 = vmatprep.subr.bf16.mxu0 0
    %2754 = vmatpush1.bf16.msra.mxu0 0
    %2755 = vmatprep.subr.bf16.mxu0 0
    %2756 = vmatpush1.bf16.msra.mxu0 %v2737
    %2757 = vmatprep.subr.bf16.mxu0 0
    %2758 = vmatpush1.bf16.msra.mxu0 %v2736
    %2759 = vmatprep.subr.bf16.mxu0 0
    %2760 = vmatpush2.bf16.msra.mxu0 0
    %2761 = vmatprep.subr.bf16.mxu0 0
    %2762 = vmatpush2.bf16.msra.mxu0 0
    %2763 = vmatprep.subr.bf16.mxu0 0
    %2764 = vmatpush2.bf16.msra.mxu0 0
    %2765 = vmatprep.subr.bf16.mxu0 0
    %2766 = vmatpush2.bf16.msra.mxu0 0
    %2767 = vmatprep.subr.bf16.mxu0 0
    %2768 = vmatpush2.bf16.msra.mxu0 0
    %2769 = vmatprep.subr.bf16.mxu0 0
    %2770 = vmatpush2.bf16.msra.mxu0 0
    %2771 = vmatprep.subr.bf16.mxu0 0
    %2772 = vmatpush2.bf16.msra.mxu0 0
    %2773 = vmatprep.subr.bf16.mxu0 0
    %2774 = vmatpush2.bf16.msra.mxu0 0
    %2775 = vmatprep.mubr.bf16.mxu0 0
    %2776 = vmatmul.mubr.bf16.gmra.mxu0 %v2741
    %v2777 = vpop.f32.mrf.mxu0
    %v2778 = vadd.f32 %v2726, %v2777
    %v2779 = vpop.f32.mrf.mxu0
    %v2780 = vpop.f32.mrf.mxu0
    %v2781 = vadd.f32 %v2726, %v2780
    %v2782 = vpop.f32.mrf.mxu0
    %2783 = vdwg.mxu0
    %v2784 = vmax.f32 %v2778, 0.0
    %v2785 = vmax.f32 %v2781, 0.0
    %v2786 = vpack.c.bf16 %v2785, %v2784
    %v2787 = vld [vmem:[%s20] sm:$0xf]
    %v2788 = vld [vmem:[%s20 + $0x4] sm:$0xf]
    %v2789 = vld [vmem:[%s20 + $0x8] sm:$0xf]
    %v2790 = vld [vmem:[%s20 + $0xc] sm:$0xf]
    %v2791 = vld [vmem:[%s20 + $0x10] sm:$0xf]
    %v2792 = vld [vmem:[%s20 + $0x14] sm:$0xf]
    %v2793 = vld [vmem:[%s20 + $0x18] sm:$0xf]
    %v2794 = vld [vmem:[%s20 + $0x1c] sm:$0xf]
    %v2795 = vld [vmem:[%s21] sm:$0x1]
    %v2797 = vlaneseq
    %v2798 = vshrl.u32 %v2797, 7
    %v2799 = vsub.s32 0, %v2798
    %v2800 = vrot.slane %v2795, %v2799
    %v2810 = vunpack.c.l.b16 %v2787
    %v2811 = vunpack.c.l.b16 %v2788
    %v2812 = vunpack.c.l.b16 %v2789
    %v2813 = vunpack.c.l.b16 %v2790
    %v2814 = vunpack.c.l.b16 %v2791
    %v2815 = vunpack.c.l.b16 %v2792
    %v2816 = vunpack.c.l.b16 %v2793
    %v2817 = vunpack.c.l.b16 %v2794
    %v2818 = vpack.c.b16 %v2811, %v2810
    %v2819 = vpack.c.b16 %v2813, %v2812
    %v2820 = vpack.c.b16 %v2815, %v2814
    %v2821 = vpack.c.b16 %v2817, %v2816
    %vm2826 = vcmask 523264
    %v2828 = vsel %vm2826, %v2786, 0
    %2830 = vmatprep.subr.bf16.mxu0 0
    %2831 = vmatpush1.bf16.msra.mxu0 0
    %2832 = vmatprep.subr.bf16.mxu0 0
    %2833 = vmatpush1.bf16.msra.mxu0 0
    %2834 = vmatprep.subr.bf16.mxu0 0
    %2835 = vmatpush1.bf16.msra.mxu0 0
    %2836 = vmatprep.subr.bf16.mxu0 0
    %2837 = vmatpush1.bf16.msra.mxu0 0
    %2838 = vmatprep.subr.bf16.mxu0 0
    %2839 = vmatpush1.bf16.msra.mxu0 %v2821
    %2840 = vmatprep.subr.bf16.mxu0 0
    %2841 = vmatpush1.bf16.msra.mxu0 %v2820
    %2842 = vmatprep.subr.bf16.mxu0 0
    %2843 = vmatpush1.bf16.msra.mxu0 %v2819
    %2844 = vmatprep.subr.bf16.mxu0 0
    %2845 = vmatpush1.bf16.msra.mxu0 %v2818
    %2846 = vmatprep.subr.bf16.mxu0 0
    %2847 = vmatpush2.bf16.msra.mxu0 0
    %2848 = vmatprep.subr.bf16.mxu0 0
    %2849 = vmatpush2.bf16.msra.mxu0 0
    %2850 = vmatprep.subr.bf16.mxu0 0
    %2851 = vmatpush2.bf16.msra.mxu0 0
    %2852 = vmatprep.subr.bf16.mxu0 0
    %2853 = vmatpush2.bf16.msra.mxu0 0
    %2854 = vmatprep.subr.bf16.mxu0 0
    %2855 = vmatpush2.bf16.msra.mxu0 0
    %2856 = vmatprep.subr.bf16.mxu0 0
    %2857 = vmatpush2.bf16.msra.mxu0 0
    %2858 = vmatprep.subr.bf16.mxu0 0
    %2859 = vmatpush2.bf16.msra.mxu0 0
    %2860 = vmatprep.subr.bf16.mxu0 0
    %2861 = vmatpush2.bf16.msra.mxu0 0
    %2862 = vmatprep.mubr.bf16.mxu0 0
    %2863 = vmatmul.mubr.bf16.gmra.mxu0 %v2828
    %v2864 = vpop.f32.mrf.mxu0
    %v2865 = vadd.f32 %v2800, %v2864
    %v2866 = vpop.f32.mrf.mxu0
    %v2867 = vpop.f32.mrf.mxu0
    %v2868 = vadd.f32 %v2800, %v2867
    %v2869 = vpop.f32.mrf.mxu0
    %2870 = vdwg.mxu0
    %v2871 = vadd.f32 %v2714, %v2865
    %v2872 = vadd.f32 %v2715, %v2868
    %v2873 = vsel %vm308, %v2871, 0.0
    %2874 = vadd.xlane.f32.xlu0 %v2873
    %v2875 = vpop.xlane.xlu0 %2874
    %v2876 = vsel %vm308, %v2872, 0.0
    %2877 = vadd.xlane.f32.xlu0 %v2876
    %v2878 = vpop.xlane.xlu0 %2877
    %v2879 = vmul.f32 %v2875, %v1447
    %v2880 = vmul.f32 %v2878, %v1447
    %v2881 = vsub.f32 %v2871, %v2879
    %v2882 = vsub.f32 %v2872, %v2880
    %v2883 = vmul.f32 %v2881, %v2881
    %v2884 = vmul.f32 %v2882, %v2882
    %v2885 = vsel %vm308, %v2883, 0.0
    %2886 = vadd.xlane.f32.xlu0 %v2885
    %v2887 = vpop.xlane.xlu0 %2886
    %v2888 = vsel %vm308, %v2884, 0.0
    %2889 = vadd.xlane.f32.xlu0 %v2888
    %v2890 = vpop.xlane.xlu0 %2889
    %v2891 = vmul.f32 %v2887, %v1447
    %v2892 = vmul.f32 %v2890, %v1447
    %v2893 = vadd.f32 %v2891, 1e-05
    %v2894 = vadd.f32 %v2892, 1e-05
    %v2895 = vrsqrt.pop %v2893
    %v2896 = vrsqrt.pop %v2894
    %v2897 = vmul.f32 %v2881, %v2895
    %v2898 = vmul.f32 %v2882, %v2896
    %v2899 = vld [vmem:[#allocation23] sm:$0x1]
    %v2901 = vlaneseq
    %v2902 = vshrl.u32 %v2901, 7
    %v2903 = vsub.s32 0, %v2902
    %v2904 = vrot.slane %v2899, %v2903
    %v2906 = vmul.f32 %v2897, %v2904
    %v2907 = vmul.f32 %v2898, %v2904
    %v2908 = vld [vmem:[#allocation25] sm:$0x1]
    %v2910 = vlaneseq
    %v2911 = vshrl.u32 %v2910, 7
    %v2912 = vsub.s32 0, %v2911
    %v2913 = vrot.slane %v2908, %v2912
    %v2915 = vadd.f32 %v2906, %v2913
    %v2916 = vadd.f32 %v2907, %v2913
    %2917 = vst.msk [vmem:[#allocation28] sm:$0xff] %vm308, %v2915
    %2918 = vst.msk [vmem:[#allocation28 + $0x8] sm:$0xff] %vm308, %v2916
    // Predicated region
    $region154: #{tpu_custom_call.1} parent=1 // pred_check
      _
    $region155: #{tpu_custom_call.1} parent=1 // pred_check_branch
      %2920 = sbr.rel (0) target = $region157
    $region156: #{tpu_custom_call.1} parent=1 // pred_region
      %s2922 = ssub.s32 256, 256
      %2923 = vsyncadd [#allocation4], %s2922
      %s2924 = sshll.u32 [#allocation28], 4
      %s2925 = int_to_ptr.vmem [resolvable:$true] %s2924
      %2930 = dma.vmem_to_hbm [thread:$0]  %s2925, 256, %s22, [#allocation4], 128, 128, 8
    $region157: #{tpu_custom_call.1} parent=1 // pred_fallthru
      _
    // Predicated region
    $region158: #{tpu_custom_call.1} parent=1 // pred_check
      _
    $region159: #{tpu_custom_call.1} parent=1 // pred_check_branch
      %2932 = sbr.rel (0) target = $region161
    $region160: #{tpu_custom_call.1} parent=1 // pred_region
      %2933 = dma.done [#allocation4], 256
    $region161: #{tpu_custom_call.1} parent=1 // pred_fallthru
      _
    %2934 = vsyncpa [#allocation3], 1
    %2935 = vsyncpa [#allocation6], 1
    %2936 = vsyncpa [#allocation9], 1
    %2937 = vsyncpa [#allocation12], 1
    %2938 = vsyncpa [#allocation15], 1
    %2939 = vsyncpa [#allocation18], 1
    %2940 = vsyncpa [#allocation21], 1
    %2941 = vsyncpa [#allocation24], 1
    %2942 = vsyncpa [#allocation27], 1
    %2943 = vsyncpa [#allocation4], 1

// kernel: tpu_custom_call.1
$region0: #{tpu_custom_call.1}
  #allocation0 [shape = 'u32[]', space=smem, size = 0x4, offset = 0x4, fixed_abs, tag = 'smem constant byte address 0x4 - core index']
  #allocation1 [shape = 'u32[144,128]{1,0:T(1,128)}', space=vmem, size = 0x12000, scoped, tag = 'internal scratch']
  %s0 = inlined_call_operand.vmem [shape: f32[2,8,32], index: 0, kind: input, shape index: {}]
  %s1 = inlined_call_operand.vmem [shape: f32[2,16,32], index: 1, kind: input, shape index: {}]
  %s2 = inlined_call_operand.hbm [shape: f32[2,8,32], index: 2, kind: input, shape index: {}]
  %s3 = inlined_call_operand.hbm [shape: f32[2,16,32], index: 3, kind: input, shape index: {}]
  %s4 = inlined_call_operand.hbm [shape: bf16[32,96], index: 4, kind: input, shape index: {}]
  %s5 = inlined_call_operand.hbm [shape: f32[1,96], index: 5, kind: input, shape index: {}]
  %s6 = inlined_call_operand.hbm [shape: bf16[32,32], index: 6, kind: input, shape index: {}]
  %s7 = inlined_call_operand.hbm [shape: f32[1,32], index: 7, kind: input, shape index: {}]
  %s8 = inlined_call_operand.hbm [shape: bf16[32,96], index: 8, kind: input, shape index: {}]
  %s9 = inlined_call_operand.hbm [shape: f32[1,96], index: 9, kind: input, shape index: {}]
  %s10 = inlined_call_operand.vmem [shape: bf16[32,32], index: 10, kind: input, shape index: {}]
  %s11 = inlined_call_operand.hbm [shape: f32[1,32], index: 11, kind: input, shape index: {}]
  %s12 = inlined_call_operand.hbm [shape: f32[1,32], index: 12, kind: input, shape index: {}]
  %s13 = inlined_call_operand.hbm [shape: f32[1,32], index: 13, kind: input, shape index: {}]
  %s14 = inlined_call_operand.hbm [shape: f32[1,32], index: 14, kind: input, shape index: {}]
  %s15 = inlined_call_operand.hbm [shape: f32[1,32], index: 15, kind: input, shape index: {}]
  %s16 = inlined_call_operand.hbm [shape: f32[1,32], index: 16, kind: input, shape index: {}]
  %s17 = inlined_call_operand.hbm [shape: f32[1,32], index: 17, kind: input, shape index: {}]
  %s18 = inlined_call_operand.hbm [shape: bf16[32,64], index: 18, kind: input, shape index: {}]
  %s19 = inlined_call_operand.vmem [shape: f32[1,64], index: 19, kind: input, shape index: {}]
  %s20 = inlined_call_operand.vmem [shape: bf16[64,32], index: 20, kind: input, shape index: {}]
  %s21 = inlined_call_operand.vmem [shape: f32[1,32], index: 21, kind: input, shape index: {}]
  %s22 = inlined_call_operand.hbm [shape: f32[2,8,32], index: 22, kind: output, shape index: {}]
  %s23 = sld [smem:[#allocation0]]
  $region162: #{tpu_custom_call.1} parent=0
    _
  %s25 = ssub.s32 1, %s23
  %s26 = scalar_select 0, %s25, %s23
  $region1: #{tpu_custom_call.1} parent=0
    #allocation2 [shape = 'u8[8192]{0}', space=vmem, size = 0x2000, scoped, tag = 'input window, operand 2, single buffered']
    #allocation3 [shape = 's32[1]{0}', space=sflag, size = 0x4, scoped, tag = 'scoped memory for tpu_custom_call.1']
    #allocation4 [shape = 's32[1]{0}', space=sflag, size = 0x4, scoped, tag = 'scoped memory for tpu_custom_call.1']
    #allocation5 [shape = 'u8[16384]{0}', space=vmem, size = 0x4000, scoped, tag = 'input window, operand 3, single buffered']
    #allocation6 [shape = 's32[1]{0}', space=sflag, size = 0x4, scoped, tag = 'scoped memory for tpu_custom_call.1']
    #allocation7 [shape = 'u8[8192]{0}', space=vmem, size = 0x2000, scoped, tag = 'input window, operand 4, single buffered']
    #allocation8 [shape = 'u8[512]{0}', space=vmem, size = 0x400, scoped, tag = 'input window, operand 5, single buffered']
    #allocation9 [shape = 's32[1]{0}', space=sflag, size = 0x4, scoped, tag = 'scoped memory for tpu_custom_call.1']
    #allocation10 [shape = 'u8[8192]{0}', space=vmem, size = 0x2000, scoped, tag = 'input window, operand 6, single buffered']
    #allocation11 [shape = 'u8[512]{0}', space=vmem, size = 0x400, scoped, tag = 'input window, operand 7, single buffered']
    #allocation12 [shape = 's32[1]{0}', space=sflag, size = 0x4, scoped, tag = 'scoped memory for tpu_custom_call.1']
    #allocation13 [shape = 'u8[8192]{0}', space=vmem, size = 0x2000, scoped, tag = 'input window, operand 8, single buffered']
    #allocation14 [shape = 'u8[512]{0}', space=vmem, size = 0x400, scoped, tag = 'input window, operand 9, single buffered']
    #allocation15 [shape = 's32[1]{0}', space=sflag, size = 0x4, scoped, tag = 'scoped memory for tpu_custom_call.1']
    #allocation16 [shape = 'u8[512]{0}', space=vmem, size = 0x400, scoped, tag = 'input window, operand 11, single buffered']
    #allocation17 [shape = 'u8[512]{0}', space=vmem, size = 0x400, scoped, tag = 'input window, operand 12, single buffered']
    #allocation18 [shape = 's32[1]{0}', space=sflag, size = 0x4, scoped, tag = 'scoped memory for tpu_custom_call.1']
    #allocation19 [shape = 'u8[512]{0}', space=vmem, size = 0x400, scoped, tag = 'input window, operand 13, single buffered']
    #allocation20 [shape = 'u8[512]{0}', space=vmem, size = 0x400, scoped, tag = 'input window, operand 14, single buffered']
    #allocation21 [shape = 's32[1]{0}', space=sflag, size = 0x4, scoped, tag = 'scoped memory for tpu_custom_call.1']
    #allocation22 [shape = 'u8[512]{0}', space=vmem, size = 0x400, scoped, tag = 'input window, operand 15, single buffered']
    #allocation23 [shape = 'u8[512]{0}', space=vmem, size = 0x400, scoped, tag = 'input window, operand 16, single buffered']
    #allocation24 [shape = 's32[1]{0}', space=sflag, size = 0x4, scoped, tag = 'scoped memory for tpu_custom_call.1']
    #allocation25 [shape = 'u8[512]{0}', space=vmem, size = 0x400, scoped, tag = 'input window, operand 17, single buffered']
    #allocation26 [shape = 'u8[8192]{0}', space=vmem, size = 0x2000, scoped, tag = 'input window, operand 18, single buffered']
    #allocation27 [shape = 's32[1]{0}', space=sflag, size = 0x4, scoped, tag = 'scoped memory for tpu_custom_call.1']
    #allocation28 [shape = 'u8[8192]{0}', space=vmem, size = 0x2000, scoped, tag = 'output window, operand 0, single buffered']
    %27 = vsyncpa [#allocation3], 0
    %28 = vsyncpa [#allocation6], 0
    %29 = vsyncpa [#allocation9], 0
    %30 = vsyncpa [#allocation12], 0
    %31 = vsyncpa [#allocation15], 0
    %32 = vsyncpa [#allocation18], 0
    %33 = vsyncpa [#allocation21], 0
    %34 = vsyncpa [#allocation24], 0
    %35 = vsyncpa [#allocation27], 0
    %36 = vsyncpa [#allocation4], 0
    // Predicated region
    $region2: #{tpu_custom_call.1} parent=1 // pred_check
      _
    $region3: #{tpu_custom_call.1} parent=1 // pred_check_branch
      %38 = sbr.rel (0) target = $region5
    $region4: #{tpu_custom_call.1} parent=1 // pred_region
      _
    $region5: #{tpu_custom_call.1} parent=1 // pred_fallthru
      _
    // Predicated region
    $region6: #{tpu_custom_call.1} parent=1 // pred_check
      _
    $region7: #{tpu_custom_call.1} parent=1 // pred_check_branch
      %40 = sbr.rel (0) target = $region9
    $region8: #{tpu_custom_call.1} parent=1 // pred_region
      _
    $region9: #{tpu_custom_call.1} parent=1 // pred_fallthru
      _
    // Predicated region
    $region10: #{tpu_custom_call.1} parent=1 // pred_check
      _
    $region11: #{tpu_custom_call.1} parent=1 // pred_check_branch
      %42 = sbr.rel (0) target = $region13
    $region12: #{tpu_custom_call.1} parent=1 // pred_region
      %s44 = ssub.s32 256, 256
      %45 = vsyncadd [#allocation3], %s44
      %s46 = sshll.u32 [#allocation2], 4
      %s47 = int_to_ptr.vmem [resolvable:$true] %s46
      %52 = dma.hbm_to_vmem [thread:$0]  %s2, 256, %s47, [#allocation3], 128, 128, 8
    $region13: #{tpu_custom_call.1} parent=1 // pred_fallthru
      _
    // Predicated region
    $region14: #{tpu_custom_call.1} parent=1 // pred_check
      _
    $region15: #{tpu_custom_call.1} parent=1 // pred_check_branch
      %54 = sbr.rel (0) target = $region17
    $region16: #{tpu_custom_call.1} parent=1 // pred_region
      %s56 = ssub.s32 512, 512
      %57 = vsyncadd [#allocation6], %s56
      %s58 = sshll.u32 [#allocation5], 4
      %s59 = int_to_ptr.vmem [resolvable:$true] %s58
      %64 = dma.hbm_to_vmem [thread:$0]  %s3, 512, %s59, [#allocation6], 128, 128, 8
    $region17: #{tpu_custom_call.1} parent=1 // pred_fallthru
      _
    // Predicated region
    $region18: #{tpu_custom_call.1} parent=1 // pred_check
      _
    $region19: #{tpu_custom_call.1} parent=1 // pred_check_branch
      %66 = sbr.rel (0) target = $region21
    $region20: #{tpu_custom_call.1} parent=1 // pred_region
      %s68 = ssub.s32 256, 256
      %69 = vsyncadd [#allocation6], %s68
      %s70 = sshll.u32 [#allocation7], 4
      %s71 = int_to_ptr.vmem [resolvable:$true] %s70
      %76 = dma.hbm_to_vmem [thread:$0]  %s4, 256, %s71, [#allocation6], 64, 64, 4
    $region21: #{tpu_custom_call.1} parent=1 // pred_fallthru
      _
    // Predicated region
    $region22: #{tpu_custom_call.1} parent=1 // pred_check
      _
    $region23: #{tpu_custom_call.1} parent=1 // pred_check_branch
      %78 = sbr.rel (0) target = $region25
    $region24: #{tpu_custom_call.1} parent=1 // pred_region
      %s80 = ssub.s32 16, 16
      %81 = vsyncadd [#allocation9], %s80
      %s83 = sshll.u32 [#allocation8], 4
      %s84 = int_to_ptr.vmem [resolvable:$true] %s83
      %86 = dma.hbm_to_vmem [thread:$0]  %s5, 16, %s84, [#allocation9]
    $region25: #{tpu_custom_call.1} parent=1 // pred_fallthru
      _
    // Predicated region
    $region26: #{tpu_custom_call.1} parent=1 // pred_check
      _
    $region27: #{tpu_custom_call.1} parent=1 // pred_check_branch
      %88 = sbr.rel (0) target = $region29
    $region28: #{tpu_custom_call.1} parent=1 // pred_region
      %s90 = ssub.s32 256, 256
      %91 = vsyncadd [#allocation9], %s90
      %s92 = sshll.u32 [#allocation10], 4
      %s93 = int_to_ptr.vmem [resolvable:$true] %s92
      %98 = dma.hbm_to_vmem [thread:$0]  %s6, 256, %s93, [#allocation9], 64, 64, 4
    $region29: #{tpu_custom_call.1} parent=1 // pred_fallthru
      _
    // Predicated region
    $region30: #{tpu_custom_call.1} parent=1 // pred_check
      _
    $region31: #{tpu_custom_call.1} parent=1 // pred_check_branch
      %100 = sbr.rel (0) target = $region33
    $region32: #{tpu_custom_call.1} parent=1 // pred_region
      %s102 = ssub.s32 16, 16
      %103 = vsyncadd [#allocation12], %s102
      %s105 = sshll.u32 [#allocation11], 4
      %s106 = int_to_ptr.vmem [resolvable:$true] %s105
      %108 = dma.hbm_to_vmem [thread:$0]  %s7, 16, %s106, [#allocation12]
    $region33: #{tpu_custom_call.1} parent=1 // pred_fallthru
      _
    // Predicated region
    $region34: #{tpu_custom_call.1} parent=1 // pred_check
      _
    $region35: #{tpu_custom_call.1} parent=1 // pred_check_branch
      %110 = sbr.rel (0) target = $region37
    $region36: #{tpu_custom_call.1} parent=1 // pred_region
      %s112 = ssub.s32 256, 256
      %113 = vsyncadd [#allocation12], %s112
      %s114 = sshll.u32 [#allocation13], 4
      %s115 = int_to_ptr.vmem [resolvable:$true] %s114
      %120 = dma.hbm_to_vmem [thread:$0]  %s8, 256, %s115, [#allocation12], 64, 64, 4
    $region37: #{tpu_custom_call.1} parent=1 // pred_fallthru
      _
    // Predicated region
    $region38: #{tpu_custom_call.1} parent=1 // pred_check
      _
    $region39: #{tpu_custom_call.1} parent=1 // pred_check_branch
      %122 = sbr.rel (0) target = $region41
    $region40: #{tpu_custom_call.1} parent=1 // pred_region
      %s124 = ssub.s32 16, 16
      %125 = vsyncadd [#allocation15], %s124
      %s127 = sshll.u32 [#allocation14], 4
      %s128 = int_to_ptr.vmem [resolvable:$true] %s127
      %130 = dma.hbm_to_vmem [thread:$0]  %s9, 16, %s128, [#allocation15]
    $region41: #{tpu_custom_call.1} parent=1 // pred_fallthru
      _
    // Predicated region
    $region42: #{tpu_custom_call.1} parent=1 // pred_check
      _
    $region43: #{tpu_custom_call.1} parent=1 // pred_check_branch
      %132 = sbr.rel (0) target = $region45
    $region44: #{tpu_custom_call.1} parent=1 // pred_region
      _
    $region45: #{tpu_custom_call.1} parent=1 // pred_fallthru
      _
    // Predicated region
    $region46: #{tpu_custom_call.1} parent=1 // pred_check
      _
    $region47: #{tpu_custom_call.1} parent=1 // pred_check_branch
      %134 = sbr.rel (0) target = $region49
    $region48: #{tpu_custom_call.1} parent=1 // pred_region
      %s136 = ssub.s32 16, 16
      %137 = vsyncadd [#allocation15], %s136
      %s139 = sshll.u32 [#allocation16], 4
      %s140 = int_to_ptr.vmem [resolvable:$true] %s139
      %142 = dma.hbm_to_vmem [thread:$0]  %s11, 16, %s140, [#allocation15]
    $region49: #{tpu_custom_call.1} parent=1 // pred_fallthru
      _
    // Predicated region
    $region50: #{tpu_custom_call.1} parent=1 // pred_check
      _
    $region51: #{tpu_custom_call.1} parent=1 // pred_check_branch
      %144 = sbr.rel (0) target = $region53
    $region52: #{tpu_custom_call.1} parent=1 // pred_region
      %s146 = ssub.s32 16, 16
      %147 = vsyncadd [#allocation18], %s146
      %s149 = sshll.u32 [#allocation17], 4
      %s150 = int_to_ptr.vmem [resolvable:$true] %s149
      %152 = dma.hbm_to_vmem [thread:$0]  %s12, 16, %s150, [#allocation18]
    $region53: #{tpu_custom_call.1} parent=1 // pred_fallthru
      _
    // Predicated region
    $region54: #{tpu_custom_call.1} parent=1 // pred_check
      _
    $region55: #{tpu_custom_call.1} parent=1 // pred_check_branch
      %154 = sbr.rel (0) target = $region57
    $region56: #{tpu_custom_call.1} parent=1 // pred_region
      %s156 = ssub.s32 16, 16
      %157 = vsyncadd [#allocation18], %s156
      %s159 = sshll.u32 [#allocation19], 4
      %s160 = int_to_ptr.vmem [resolvable:$true] %s159
      %162 = dma.hbm_to_vmem [thread:$0]  %s13, 16, %s160, [#allocation18]
    $region57: #{tpu_custom_call.1} parent=1 // pred_fallthru
      _
    // Predicated region
    $region58: #{tpu_custom_call.1} parent=1 // pred_check
      _
    $region59: #{tpu_custom_call.1} parent=1 // pred_check_branch
      %164 = sbr.rel (0) target = $region61
    $region60: #{tpu_custom_call.1} parent=1 // pred_region
      %s166 = ssub.s32 16, 16
      %167 = vsyncadd [#allocation21], %s166
      %s169 = sshll.u32 [#allocation20], 4
      %s170 = int_to_ptr.vmem [resolvable:$true] %s169
      %172 = dma.hbm_to_vmem [thread:$0]  %s14, 16, %s170, [#allocation21]
    $region61: #{tpu_custom_call.1} parent=1 // pred_fallthru
      _
    // Predicated region
    $region62: #{tpu_custom_call.1} parent=1 // pred_check
      _
    $region63: #{tpu_custom_call.1} parent=1 // pred_check_branch
      %174 = sbr.rel (0) target = $region65
    $region64: #{tpu_custom_call.1} parent=1 // pred_region
      %s176 = ssub.s32 16, 16
      %177 = vsyncadd [#allocation21], %s176
      %s179 = sshll.u32 [#allocation22], 4
      %s180 = int_to_ptr.vmem [resolvable:$true] %s179
      %182 = dma.hbm_to_vmem [thread:$0]  %s15, 16, %s180, [#allocation21]
    $region65: #{tpu_custom_call.1} parent=1 // pred_fallthru
      _
    // Predicated region
    $region66: #{tpu_custom_call.1} parent=1 // pred_check
      _
    $region67: #{tpu_custom_call.1} parent=1 // pred_check_branch
      %184 = sbr.rel (0) target = $region69
    $region68: #{tpu_custom_call.1} parent=1 // pred_region
      %s186 = ssub.s32 16, 16
      %187 = vsyncadd [#allocation24], %s186
      %s189 = sshll.u32 [#allocation23], 4
      %s190 = int_to_ptr.vmem [resolvable:$true] %s189
      %192 = dma.hbm_to_vmem [thread:$0]  %s16, 16, %s190, [#allocation24]
    $region69: #{tpu_custom_call.1} parent=1 // pred_fallthru
      _
    // Predicated region
    $region70: #{tpu_custom_call.1} parent=1 // pred_check
      _
    $region71: #{tpu_custom_call.1} parent=1 // pred_check_branch
      %194 = sbr.rel (0) target = $region73
    $region72: #{tpu_custom_call.1} parent=1 // pred_region
      %s196 = ssub.s32 16, 16
      %197 = vsyncadd [#allocation24], %s196
      %s199 = sshll.u32 [#allocation25], 4
      %s200 = int_to_ptr.vmem [resolvable:$true] %s199
      %202 = dma.hbm_to_vmem [thread:$0]  %s17, 16, %s200, [#allocation24]
    $region73: #{tpu_custom_call.1} parent=1 // pred_fallthru
      _
    // Predicated region
    $region74: #{tpu_custom_call.1} parent=1 // pred_check
      _
    $region75: #{tpu_custom_call.1} parent=1 // pred_check_branch
      %204 = sbr.rel (0) target = $region77
    $region76: #{tpu_custom_call.1} parent=1 // pred_region
      %s206 = ssub.s32 256, 256
      %207 = vsyncadd [#allocation27], %s206
      %s208 = sshll.u32 [#allocation26], 4
      %s209 = int_to_ptr.vmem [resolvable:$true] %s208
      %214 = dma.hbm_to_vmem [thread:$0]  %s18, 256, %s209, [#allocation27], 64, 64, 4
    $region77: #{tpu_custom_call.1} parent=1 // pred_fallthru
      _
    // Predicated region
    $region78: #{tpu_custom_call.1} parent=1 // pred_check
      _
    $region79: #{tpu_custom_call.1} parent=1 // pred_check_branch
      %216 = sbr.rel (0) target = $region81
    $region80: #{tpu_custom_call.1} parent=1 // pred_region
      _
    $region81: #{tpu_custom_call.1} parent=1 // pred_fallthru
      _
    // Predicated region
    $region82: #{tpu_custom_call.1} parent=1 // pred_check
      _
    $region83: #{tpu_custom_call.1} parent=1 // pred_check_branch
      %218 = sbr.rel (0) target = $region85
    $region84: #{tpu_custom_call.1} parent=1 // pred_region
      _
    $region85: #{tpu_custom_call.1} parent=1 // pred_fallthru
      _
    // Predicated region
    $region86: #{tpu_custom_call.1} parent=1 // pred_check
      _
    $region87: #{tpu_custom_call.1} parent=1 // pred_check_branch
      %220 = sbr.rel (0) target = $region89
    $region88: #{tpu_custom_call.1} parent=1 // pred_region
      _
    $region89: #{tpu_custom_call.1} parent=1 // pred_fallthru
      _
    // Predicated region
    $region90: #{tpu_custom_call.1} parent=1 // pred_check
      _
    $region91: #{tpu_custom_call.1} parent=1 // pred_check_branch
      %222 = sbr.rel (0) target = $region93
    $region92: #{tpu_custom_call.1} parent=1 // pred_region
      %223 = dma.done [#allocation3], 256
    $region93: #{tpu_custom_call.1} parent=1 // pred_fallthru
      _
    // Predicated region
    $region94: #{tpu_custom_call.1} parent=1 // pred_check
      _
    $region95: #{tpu_custom_call.1} parent=1 // pred_check_branch
      %225 = sbr.rel (0) target = $region97
    $region96: #{tpu_custom_call.1} parent=1 // pred_region
      %226 = dma.done [#allocation6], 512
    $region97: #{tpu_custom_call.1} parent=1 // pred_fallthru
      _
    // Predicated region
    $region98: #{tpu_custom_call.1} parent=1 // pred_check
      _
    $region99: #{tpu_custom_call.1} parent=1 // pred_check_branch
      %228 = sbr.rel (0) target = $region101
    $region100: #{tpu_custom_call.1} parent=1 // pred_region
      %229 = dma.done [#allocation6], 256
    $region101: #{tpu_custom_call.1} parent=1 // pred_fallthru
      _
    // Predicated region
    $region102: #{tpu_custom_call.1} parent=1 // pred_check
      _
    $region103: #{tpu_custom_call.1} parent=1 // pred_check_branch
      %231 = sbr.rel (0) target = $region105
    $region104: #{tpu_custom_call.1} parent=1 // pred_region
      %232 = dma.done [#allocation9], 16
    $region105: #{tpu_custom_call.1} parent=1 // pred_fallthru
      _
    // Predicated region
    $region106: #{tpu_custom_call.1} parent=1 // pred_check
      _
    $region107: #{tpu_custom_call.1} parent=1 // pred_check_branch
      %234 = sbr.rel (0) target = $region109
    $region108: #{tpu_custom_call.1} parent=1 // pred_region
      %235 = dma.done [#allocation9], 256
    $region109: #{tpu_custom_call.1} parent=1 // pred_fallthru
      _
    // Predicated region
    $region110: #{tpu_custom_call.1} parent=1 // pred_check
      _
    $region111: #{tpu_custom_call.1} parent=1 // pred_check_branch
      %237 = sbr.rel (0) target = $region113
    $region112: #{tpu_custom_call.1} parent=1 // pred_region
      %238 = dma.done [#allocation12], 16
    $region113: #{tpu_custom_call.1} parent=1 // pred_fallthru
      _
    // Predicated region
    $region114: #{tpu_custom_call.1} parent=1 // pred_check
      _
    $region115: #{tpu_custom_call.1} parent=1 // pred_check_branch
      %240 = sbr.rel (0) target = $region117
    $region116: #{tpu_custom_call.1} parent=1 // pred_region
      %241 = dma.done [#allocation12], 256
    $region117: #{tpu_custom_call.1} parent=1 // pred_fallthru
      _
    // Predicated region
    $region118: #{tpu_custom_call.1} parent=1 // pred_check
      _
    $region119: #{tpu_custom_call.1} parent=1 // pred_check_branch
      %243 = sbr.rel (0) target = $region121
    $region120: #{tpu_custom_call.1} parent=1 // pred_region
      %244 = dma.done [#allocation15], 16
    $region121: #{tpu_custom_call.1} parent=1 // pred_fallthru
      _
    // Predicated region
    $region122: #{tpu_custom_call.1} parent=1 // pred_check
      _
    $region123: #{tpu_custom_call.1} parent=1 // pred_check_branch
      %246 = sbr.rel (0) target = $region125
    $region124: #{tpu_custom_call.1} parent=1 // pred_region
      %247 = dma.done [#allocation15], 16
    $region125: #{tpu_custom_call.1} parent=1 // pred_fallthru
      _
    // Predicated region
    $region126: #{tpu_custom_call.1} parent=1 // pred_check
      _
    $region127: #{tpu_custom_call.1} parent=1 // pred_check_branch
      %249 = sbr.rel (0) target = $region129
    $region128: #{tpu_custom_call.1} parent=1 // pred_region
      %250 = dma.done [#allocation18], 16
    $region129: #{tpu_custom_call.1} parent=1 // pred_fallthru
      _
    // Predicated region
    $region130: #{tpu_custom_call.1} parent=1 // pred_check
      _
    $region131: #{tpu_custom_call.1} parent=1 // pred_check_branch
      %252 = sbr.rel (0) target = $region133
    $region132: #{tpu_custom_call.1} parent=1 // pred_region
      %253 = dma.done [#allocation18], 16
    $region133: #{tpu_custom_call.1} parent=1 // pred_fallthru
      _
    // Predicated region
    $region134: #{tpu_custom_call.1} parent=1 // pred_check
      _
    $region135: #{tpu_custom_call.1} parent=1 // pred_check_branch
      %255 = sbr.rel (0) target = $region137
    $region136: #{tpu_custom_call.1} parent=1 // pred_region
      %256 = dma.done [#allocation21], 16
    $region137: #{tpu_custom_call.1} parent=1 // pred_fallthru
      _
    // Predicated region
    $region138: #{tpu_custom_call.1} parent=1 // pred_check
      _
    $region139: #{tpu_custom_call.1} parent=1 // pred_check_branch
      %258 = sbr.rel (0) target = $region141
    $region140: #{tpu_custom_call.1} parent=1 // pred_region
      %259 = dma.done [#allocation21], 16
    $region141: #{tpu_custom_call.1} parent=1 // pred_fallthru
      _
    // Predicated region
    $region142: #{tpu_custom_call.1} parent=1 // pred_check
      _
    $region143: #{tpu_custom_call.1} parent=1 // pred_check_branch
      %261 = sbr.rel (0) target = $region145
    $region144: #{tpu_custom_call.1} parent=1 // pred_region
      %262 = dma.done [#allocation24], 16
    $region145: #{tpu_custom_call.1} parent=1 // pred_fallthru
      _
    // Predicated region
    $region146: #{tpu_custom_call.1} parent=1 // pred_check
      _
    $region147: #{tpu_custom_call.1} parent=1 // pred_check_branch
      %264 = sbr.rel (0) target = $region149
    $region148: #{tpu_custom_call.1} parent=1 // pred_region
      %265 = dma.done [#allocation24], 16
    $region149: #{tpu_custom_call.1} parent=1 // pred_fallthru
      _
    // Predicated region
    $region150: #{tpu_custom_call.1} parent=1 // pred_check
      _
    $region151: #{tpu_custom_call.1} parent=1 // pred_check_branch
      %267 = sbr.rel (0) target = $region153
    $region152: #{tpu_custom_call.1} parent=1 // pred_region
      %268 = dma.done [#allocation27], 256
    $region153: #{tpu_custom_call.1} parent=1 // pred_fallthru
      _
    %v270 = vld [vmem:[%s0] sm:$0xff]
    %v271 = vld [vmem:[%s0 + $0x8] sm:$0xff]
    %v272 = vld [vmem:[#allocation2] sm:$0xff]
    %v273 = vld [vmem:[#allocation2 + $0x8] sm:$0xff]
    %v274 = vld [vmem:[%s1] sm:$0xff]
    %v275 = vld [vmem:[%s1 + $0x8] sm:$0xff]
    %v276 = vld [vmem:[%s1 + $0x10] sm:$0xff]
    %v277 = vld [vmem:[%s1 + $0x18] sm:$0xff]
    %v278 = vld [vmem:[#allocation5] sm:$0xff]
    %v279 = vld [vmem:[#allocation5 + $0x8] sm:$0xff]
    %v280 = vld [vmem:[#allocation5 + $0x10] sm:$0xff]
    %v281 = vld [vmem:[#allocation5 + $0x18] sm:$0xff]
    %v282 = vadd.f32 %v270, %v272
    %v283 = vadd.f32 %v271, %v273
    %v284 = vld [vmem:[#allocation7] sm:$0xf]
    %v285 = vld [vmem:[#allocation7 + $0x4] sm:$0xf]
    %v286 = vld [vmem:[#allocation7 + $0x8] sm:$0xf]
    %v287 = vld [vmem:[#allocation7 + $0xc] sm:$0xf]
    %v288 = vld [vmem:[#allocation8] sm:$0x1]
    %v289 = vpack.c.bf16 %v283, %v282
    %v291 = vlaneseq
    %v292 = vshrl.u32 %v291, 7
    %v293 = vsub.s32 0, %v292
    %v294 = vrot.slane %v288, %v293
    %v300 = vunpack.c.l.b16 %v284
    %v301 = vunpack.c.l.b16 %v285
    %v302 = vunpack.c.l.b16 %v286
    %v303 = vunpack.c.l.b16 %v287
    %v304 = vpack.c.b16 %v301, %v300
    %v305 = vpack.c.b16 %v303, %v302
    %vm308 = vcmask 261120
    %v310 = vsel %vm308, %v289, 0
    %312 = vmatprep.subr.bf16.mxu0 0
    %313 = vmatpush1.bf16.msra.mxu0 0
    %314 = vmatprep.subr.bf16.mxu0 0
    %315 = vmatpush1.bf16.msra.mxu0 0
    %316 = vmatprep.subr.bf16.mxu0 0
    %317 = vmatpush1.bf16.msra.mxu0 0
    %318 = vmatprep.subr.bf16.mxu0 0
    %319 = vmatpush1.bf16.msra.mxu0 0
    %320 = vmatprep.subr.bf16.mxu0 0
    %321 = vmatpush1.bf16.msra.mxu0 0
    %322 = vmatprep.subr.bf16.mxu0 0
    %323 = vmatpush1.bf16.msra.mxu0 0
    %324 = vmatprep.subr.bf16.mxu0 0
    %325 = vmatpush1.bf16.msra.mxu0 %v305
    %326 = vmatprep.subr.bf16.mxu0 0
    %327 = vmatpush1.bf16.msra.mxu0 %v304
    %328 = vmatprep.subr.bf16.mxu0 0
    %329 = vmatpush2.bf16.msra.mxu0 0
    %330 = vmatprep.subr.bf16.mxu0 0
    %331 = vmatpush2.bf16.msra.mxu0 0
    %332 = vmatprep.subr.bf16.mxu0 0
    %333 = vmatpush2.bf16.msra.mxu0 0
    %334 = vmatprep.subr.bf16.mxu0 0
    %335 = vmatpush2.bf16.msra.mxu0 0
    %336 = vmatprep.subr.bf16.mxu0 0
    %337 = vmatpush2.bf16.msra.mxu0 0
    %338 = vmatprep.subr.bf16.mxu0 0
    %339 = vmatpush2.bf16.msra.mxu0 0
    %340 = vmatprep.subr.bf16.mxu0 0
    %341 = vmatpush2.bf16.msra.mxu0 0
    %342 = vmatprep.subr.bf16.mxu0 0
    %343 = vmatpush2.bf16.msra.mxu0 0
    %344 = vmatprep.mubr.bf16.mxu0 0
    %345 = vmatmul.mubr.bf16.gmra.mxu0 %v310
    %v346 = vpop.f32.mrf.mxu0
    %v347 = vadd.f32 %v294, %v346
    %v348 = vpop.f32.mrf.mxu0
    %v349 = vpop.f32.mrf.mxu0
    %v350 = vadd.f32 %v294, %v349
    %v351 = vpop.f32.mrf.mxu0
    %352 = vdwg.mxu0
    %v353 = vpack.c.bf16 %v271, %v270
    %354 = vrot.lane.b32.xlu0 %v304, 64
    %v355 = vpop.permute.xlu0 %354
    %356 = vrot.lane.b32.xlu0 %v305, 64
    %v357 = vpop.permute.xlu0 %356
    %360 = vrot.lane.b32.xlu0 %v294, 64
    %v361 = vpop.permute.xlu0 %360
    %v364 = vsel %vm308, %v353, 0
    %366 = vmatprep.subr.bf16.mxu0 0
    %367 = vmatpush1.bf16.msra.mxu0 0
    %368 = vmatprep.subr.bf16.mxu0 0
    %369 = vmatpush1.bf16.msra.mxu0 0
    %370 = vmatprep.subr.bf16.mxu0 0
    %371 = vmatpush1.bf16.msra.mxu0 0
    %372 = vmatprep.subr.bf16.mxu0 0
    %373 = vmatpush1.bf16.msra.mxu0 0
    %374 = vmatprep.subr.bf16.mxu0 0
    %375 = vmatpush1.bf16.msra.mxu0 0
    %376 = vmatprep.subr.bf16.mxu0 0
    %377 = vmatpush1.bf16.msra.mxu0 0
    %378 = vmatprep.subr.bf16.mxu0 0
    %379 = vmatpush1.bf16.msra.mxu0 %v357
    %380 = vmatprep.subr.bf16.mxu0 0
    %381 = vmatpush1.bf16.msra.mxu0 %v355
    %382 = vmatprep.subr.bf16.mxu0 0
    %383 = vmatpush2.bf16.msra.mxu0 0
    %384 = vmatprep.subr.bf16.mxu0 0
    %385 = vmatpush2.bf16.msra.mxu0 0
    %386 = vmatprep.subr.bf16.mxu0 0
    %387 = vmatpush2.bf16.msra.mxu0 0
    %388 = vmatprep.subr.bf16.mxu0 0
    %389 = vmatpush2.bf16.msra.mxu0 0
    %390 = vmatprep.subr.bf16.mxu0 0
    %391 = vmatpush2.bf16.msra.mxu0 0
    %392 = vmatprep.subr.bf16.mxu0 0
    %393 = vmatpush2.bf16.msra.mxu0 0
    %394 = vmatprep.subr.bf16.mxu0 0
    %395 = vmatpush2.bf16.msra.mxu0 0
    %396 = vmatprep.subr.bf16.mxu0 0
    %397 = vmatpush2.bf16.msra.mxu0 0
    %398 = vmatprep.mubr.bf16.mxu0 0
    %399 = vmatmul.mubr.bf16.gmra.mxu0 %v364
    %v400 = vpop.f32.mrf.mxu0
    %v401 = vadd.f32 %v361, %v400
    %v402 = vpop.f32.mrf.mxu0
    %v403 = vpop.f32.mrf.mxu0
    %v404 = vadd.f32 %v361, %v403
    %v405 = vpop.f32.mrf.mxu0
    %406 = vdwg.mxu0
    %v407 = vmul.f32 %v347, 0.35355338
    %v408 = vmul.f32 %v350, 0.35355338
    %v409 = vpack.c.bf16 %v408, %v407
    %v411 = vunpack.c.l.b16 %v409
    %v412 = vunpack.c.h.b16 %v409
    %v413 = vpack.c.b16 %v411, %v411
    %v414 = vpack.c.b16 %v412, %v412
    %v415 = vpack.c.bf16 %v350, %v347
    %v417 = vunpack.c.l.b16 %v415
    %v418 = vunpack.c.h.b16 %v415
    %v419 = vpack.c.b16 %v417, %v417
    %v420 = vpack.c.b16 %v418, %v418
    %v421 = vpack.c.bf16 %v404, %v401
    %v423 = vunpack.c.l.b16 %v421
    %v424 = vunpack.c.h.b16 %v421
    %v425 = vpack.c.b16 %v423, %v423
    %v426 = vpack.c.b16 %v424, %v424
    %427 = vrot.lane.b32.xlu0 %v413, 120
    %v428 = vpop.permute.xlu0 %427
    %429 = vrot.lane.b32.xlu0 %v414, 120
    %v430 = vpop.permute.xlu0 %429
    %431 = vrot.lane.b32.xlu0 %v413, 112
    %v432 = vpop.permute.xlu0 %431
    %433 = vrot.lane.b32.xlu0 %v414, 112
    %v434 = vpop.permute.xlu0 %433
    %435 = vrot.lane.b32.xlu0 %v413, 104
    %v436 = vpop.permute.xlu0 %435
    %437 = vrot.lane.b32.xlu0 %v414, 104
    %v438 = vpop.permute.xlu0 %437
    %439 = vrot.lane.b32.xlu0 %v419, 120
    %v440 = vpop.permute.xlu0 %439
    %441 = vrot.lane.b32.xlu0 %v420, 120
    %v442 = vpop.permute.xlu0 %441
    %443 = vrot.lane.b32.xlu0 %v419, 112
    %v444 = vpop.permute.xlu0 %443
    %445 = vrot.lane.b32.xlu0 %v420, 112
    %v446 = vpop.permute.xlu0 %445
    %447 = vrot.lane.b32.xlu0 %v419, 104
    %v448 = vpop.permute.xlu0 %447
    %449 = vrot.lane.b32.xlu0 %v420, 104
    %v450 = vpop.permute.xlu0 %449
    %451 = vrot.lane.b32.xlu0 %v425, 120
    %v452 = vpop.permute.xlu0 %451
    %453 = vrot.lane.b32.xlu0 %v426, 120
    %v454 = vpop.permute.xlu0 %453
    %455 = vrot.lane.b32.xlu0 %v425, 112
    %v456 = vpop.permute.xlu0 %455
    %457 = vrot.lane.b32.xlu0 %v426, 112
    %v458 = vpop.permute.xlu0 %457
    %459 = vrot.lane.b32.xlu0 %v425, 104
    %v460 = vpop.permute.xlu0 %459
    %461 = vrot.lane.b32.xlu0 %v426, 104
    %v462 = vpop.permute.xlu0 %461
    %463 = vrot.lane.b32.xlu0 %v419, 96
    %v464 = vpop.permute.xlu0 %463
    %vm465 = vcmask 64512
    %v467 = vsel %vm465, %v413, 0
    %v470 = vsel %vm465, %v464, 0
    %472 = vmatprep.subr.bf16.mxu0 0
    %473 = vmatpush1.bf16.xpose.msra.mxu0 0
    %474 = vmatprep.subr.bf16.mxu0 0
    %475 = vmatpush1.bf16.xpose.msra.mxu0 0
    %476 = vmatprep.subr.bf16.mxu0 0
    %477 = vmatpush1.bf16.xpose.msra.mxu0 0
    %478 = vmatprep.subr.bf16.mxu0 0
    %479 = vmatpush1.bf16.xpose.msra.mxu0 0
    %480 = vmatprep.subr.bf16.mxu0 0
    %481 = vmatpush1.bf16.xpose.msra.mxu0 0
    %482 = vmatprep.subr.bf16.mxu0 0
    %483 = vmatpush1.bf16.xpose.msra.mxu0 0
    %484 = vmatprep.subr.bf16.mxu0 0
    %485 = vmatpush1.bf16.xpose.msra.mxu0 0
    %486 = vmatprep.subr.bf16.mxu0 0
    %487 = vmatpush1.bf16.xpose.msra.mxu0 %v470
    %488 = vmatprep.subr.bf16.mxu0 0
    %489 = vmatpush2.bf16.xpose.msra.mxu0 0
    %490 = vmatprep.subr.bf16.mxu0 0
    %491 = vmatpush2.bf16.xpose.msra.mxu0 0
    %492 = vmatprep.subr.bf16.mxu0 0
    %493 = vmatpush2.bf16.xpose.msra.mxu0 0
    %494 = vmatprep.subr.bf16.mxu0 0
    %495 = vmatpush2.bf16.xpose.msra.mxu0 0
    %496 = vmatprep.subr.bf16.mxu0 0
    %497 = vmatpush2.bf16.xpose.msra.mxu0 0
    %498 = vmatprep.subr.bf16.mxu0 0
    %499 = vmatpush2.bf16.xpose.msra.mxu0 0
    %500 = vmatprep.subr.bf16.mxu0 0
    %501 = vmatpush2.bf16.xpose.msra.mxu0 0
    %502 = vmatprep.subr.bf16.mxu0 0
    %503 = vmatpush2.bf16.xpose.msra.mxu0 0
    %504 = vmatprep.mubr.bf16.mxu0 0
    %505 = vmatmul.mubr.bf16.gmra.mxu0 %v467
    %v506 = vpop.f32.mrf.mxu0
    %v507 = vadd.f32 0.0, %v506
    %v508 = vpop.f32.mrf.mxu0
    %v509 = vpop.f32.mrf.mxu0
    %v510 = vpop.f32.mrf.mxu0
    %511 = vdwg.mxu0
    %512 = vrot.lane.b32.xlu0 %v420, 96
    %v513 = vpop.permute.xlu0 %512
    %v515 = vsel %vm465, %v414, 0
    %v518 = vsel %vm465, %v513, 0
    %520 = vmatprep.subr.bf16.mxu0 0
    %521 = vmatpush1.bf16.xpose.msra.mxu0 0
    %522 = vmatprep.subr.bf16.mxu0 0
    %523 = vmatpush1.bf16.xpose.msra.mxu0 0
    %524 = vmatprep.subr.bf16.mxu0 0
    %525 = vmatpush1.bf16.xpose.msra.mxu0 0
    %526 = vmatprep.subr.bf16.mxu0 0
    %527 = vmatpush1.bf16.xpose.msra.mxu0 0
    %528 = vmatprep.subr.bf16.mxu0 0
    %529 = vmatpush1.bf16.xpose.msra.mxu0 0
    %530 = vmatprep.subr.bf16.mxu0 0
    %531 = vmatpush1.bf16.xpose.msra.mxu0 0
    %532 = vmatprep.subr.bf16.mxu0 0
    %533 = vmatpush1.bf16.xpose.msra.mxu0 0
    %534 = vmatprep.subr.bf16.mxu0 0
    %535 = vmatpush1.bf16.xpose.msra.mxu0 %v518
    %536 = vmatprep.subr.bf16.mxu0 0
    %537 = vmatpush2.bf16.xpose.msra.mxu0 0
    %538 = vmatprep.subr.bf16.mxu0 0
    %539 = vmatpush2.bf16.xpose.msra.mxu0 0
    %540 = vmatprep.subr.bf16.mxu0 0
    %541 = vmatpush2.bf16.xpose.msra.mxu0 0
    %542 = vmatprep.subr.bf16.mxu0 0
    %543 = vmatpush2.bf16.xpose.msra.mxu0 0
    %544 = vmatprep.subr.bf16.mxu0 0
    %545 = vmatpush2.bf16.xpose.msra.mxu0 0
    %546 = vmatprep.subr.bf16.mxu0 0
    %547 = vmatpush2.bf16.xpose.msra.mxu0 0
    %548 = vmatprep.subr.bf16.mxu0 0
    %549 = vmatpush2.bf16.xpose.msra.mxu0 0
    %550 = vmatprep.subr.bf16.mxu0 0
    %551 = vmatpush2.bf16.xpose.msra.mxu0 0
    %552 = vmatprep.mubr.bf16.mxu0 0
    %553 = vmatmul.mubr.bf16.gmra.mxu0 %v515
    %v554 = vpop.f32.mrf.mxu0
    %v555 = vadd.f32 0.0, %v554
    %v556 = vpop.f32.mrf.mxu0
    %v557 = vpop.f32.mrf.mxu0
    %v558 = vpop.f32.mrf.mxu0
    %559 = vdwg.mxu0
    %v560 = vunpack.c.l.b16 %v440
    %v561 = vpack.c.b16 %v560, %v560
    %562 = vrot.lane.b32.xlu0 %v561, 96
    %v563 = vpop.permute.xlu0 %562
    %v565 = vsel %vm465, %v428, 0
    %v568 = vsel %vm465, %v563, 0
    %570 = vmatprep.subr.bf16.mxu0 0
    %571 = vmatpush1.bf16.xpose.msra.mxu0 0
    %572 = vmatprep.subr.bf16.mxu0 0
    %573 = vmatpush1.bf16.xpose.msra.mxu0 0
    %574 = vmatprep.subr.bf16.mxu0 0
    %575 = vmatpush1.bf16.xpose.msra.mxu0 0
    %576 = vmatprep.subr.bf16.mxu0 0
    %577 = vmatpush1.bf16.xpose.msra.mxu0 0
    %578 = vmatprep.subr.bf16.mxu0 0
    %579 = vmatpush1.bf16.xpose.msra.mxu0 0
    %580 = vmatprep.subr.bf16.mxu0 0
    %581 = vmatpush1.bf16.xpose.msra.mxu0 0
    %582 = vmatprep.subr.bf16.mxu0 0
    %583 = vmatpush1.bf16.xpose.msra.mxu0 0
    %584 = vmatprep.subr.bf16.mxu0 0
    %585 = vmatpush1.bf16.xpose.msra.mxu0 %v568
    %586 = vmatprep.subr.bf16.mxu0 0
    %587 = vmatpush2.bf16.xpose.msra.mxu0 0
    %588 = vmatprep.subr.bf16.mxu0 0
    %589 = vmatpush2.bf16.xpose.msra.mxu0 0
    %590 = vmatprep.subr.bf16.mxu0 0
    %591 = vmatpush2.bf16.xpose.msra.mxu0 0
    %592 = vmatprep.subr.bf16.mxu0 0
    %593 = vmatpush2.bf16.xpose.msra.mxu0 0
    %594 = vmatprep.subr.bf16.mxu0 0
    %595 = vmatpush2.bf16.xpose.msra.mxu0 0
    %596 = vmatprep.subr.bf16.mxu0 0
    %597 = vmatpush2.bf16.xpose.msra.mxu0 0
    %598 = vmatprep.subr.bf16.mxu0 0
    %599 = vmatpush2.bf16.xpose.msra.mxu0 0
    %600 = vmatprep.subr.bf16.mxu0 0
    %601 = vmatpush2.bf16.xpose.msra.mxu0 0
    %602 = vmatprep.mubr.bf16.mxu0 0
    %603 = vmatmul.mubr.bf16.gmra.mxu0 %v565
    %v604 = vpop.f32.mrf.mxu0
    %v605 = vadd.f32 0.0, %v604
    %v606 = vpop.f32.mrf.mxu0
    %v607 = vpop.f32.mrf.mxu0
    %v608 = vpop.f32.mrf.mxu0
    %609 = vdwg.mxu0
    %v610 = vunpack.c.l.b16 %v442
    %v611 = vpack.c.b16 %v610, %v610
    %612 = vrot.lane.b32.xlu0 %v611, 96
    %v613 = vpop.permute.xlu0 %612
    %v615 = vsel %vm465, %v430, 0
    %v618 = vsel %vm465, %v613, 0
    %620 = vmatprep.subr.bf16.mxu0 0
    %621 = vmatpush1.bf16.xpose.msra.mxu0 0
    %622 = vmatprep.subr.bf16.mxu0 0
    %623 = vmatpush1.bf16.xpose.msra.mxu0 0
    %624 = vmatprep.subr.bf16.mxu0 0
    %625 = vmatpush1.bf16.xpose.msra.mxu0 0
    %626 = vmatprep.subr.bf16.mxu0 0
    %627 = vmatpush1.bf16.xpose.msra.mxu0 0
    %628 = vmatprep.subr.bf16.mxu0 0
    %629 = vmatpush1.bf16.xpose.msra.mxu0 0
    %630 = vmatprep.subr.bf16.mxu0 0
    %631 = vmatpush1.bf16.xpose.msra.mxu0 0
    %632 = vmatprep.subr.bf16.mxu0 0
    %633 = vmatpush1.bf16.xpose.msra.mxu0 0
    %634 = vmatprep.subr.bf16.mxu0 0
    %635 = vmatpush1.bf16.xpose.msra.mxu0 %v618
    %636 = vmatprep.subr.bf16.mxu0 0
    %637 = vmatpush2.bf16.xpose.msra.mxu0 0
    %638 = vmatprep.subr.bf16.mxu0 0
    %639 = vmatpush2.bf16.xpose.msra.mxu0 0
    %640 = vmatprep.subr.bf16.mxu0 0
    %641 = vmatpush2.bf16.xpose.msra.mxu0 0
    %642 = vmatprep.subr.bf16.mxu0 0
    %643 = vmatpush2.bf16.xpose.msra.mxu0 0
    %644 = vmatprep.subr.bf16.mxu0 0
    %645 = vmatpush2.bf16.xpose.msra.mxu0 0
    %646 = vmatprep.subr.bf16.mxu0 0
    %647 = vmatpush2.bf16.xpose.msra.mxu0 0
    %648 = vmatprep.subr.bf16.mxu0 0
    %649 = vmatpush2.bf16.xpose.msra.mxu0 0
    %650 = vmatprep.subr.bf16.mxu0 0
    %651 = vmatpush2.bf16.xpose.msra.mxu0 0
    %652 = vmatprep.mubr.bf16.mxu0 0
    %653 = vmatmul.mubr.bf16.gmra.mxu0 %v615
    %v654 = vpop.f32.mrf.mxu0
    %v655 = vadd.f32 0.0, %v654
    %v656 = vpop.f32.mrf.mxu0
    %v657 = vpop.f32.mrf.mxu0
    %v658 = vpop.f32.mrf.mxu0
    %659 = vdwg.mxu0
    %v660 = vunpack.c.l.b16 %v444
    %v661 = vpack.c.b16 %v660, %v660
    %662 = vrot.lane.b32.xlu0 %v661, 96
    %v663 = vpop.permute.xlu0 %662
    %v665 = vsel %vm465, %v432, 0
    %v668 = vsel %vm465, %v663, 0
    %670 = vmatprep.subr.bf16.mxu0 0
    %671 = vmatpush1.bf16.xpose.msra.mxu0 0
    %672 = vmatprep.subr.bf16.mxu0 0
    %673 = vmatpush1.bf16.xpose.msra.mxu0 0
    %674 = vmatprep.subr.bf16.mxu0 0
    %675 = vmatpush1.bf16.xpose.msra.mxu0 0
    %676 = vmatprep.subr.bf16.mxu0 0
    %677 = vmatpush1.bf16.xpose.msra.mxu0 0
    %678 = vmatprep.subr.bf16.mxu0 0
    %679 = vmatpush1.bf16.xpose.msra.mxu0 0
    %680 = vmatprep.subr.bf16.mxu0 0
    %681 = vmatpush1.bf16.xpose.msra.mxu0 0
    %682 = vmatprep.subr.bf16.mxu0 0
    %683 = vmatpush1.bf16.xpose.msra.mxu0 0
    %684 = vmatprep.subr.bf16.mxu0 0
    %685 = vmatpush1.bf16.xpose.msra.mxu0 %v668
    %686 = vmatprep.subr.bf16.mxu0 0
    %687 = vmatpush2.bf16.xpose.msra.mxu0 0
    %688 = vmatprep.subr.bf16.mxu0 0
    %689 = vmatpush2.bf16.xpose.msra.mxu0 0
    %690 = vmatprep.subr.bf16.mxu0 0
    %691 = vmatpush2.bf16.xpose.msra.mxu0 0
    %692 = vmatprep.subr.bf16.mxu0 0
    %693 = vmatpush2.bf16.xpose.msra.mxu0 0
    %694 = vmatprep.subr.bf16.mxu0 0
    %695 = vmatpush2.bf16.xpose.msra.mxu0 0
    %696 = vmatprep.subr.bf16.mxu0 0
    %697 = vmatpush2.bf16.xpose.msra.mxu0 0
    %698 = vmatprep.subr.bf16.mxu0 0
    %699 = vmatpush2.bf16.xpose.msra.mxu0 0
    %700 = vmatprep.subr.bf16.mxu0 0
    %701 = vmatpush2.bf16.xpose.msra.mxu0 0
    %702 = vmatprep.mubr.bf16.mxu0 0
    %703 = vmatmul.mubr.bf16.gmra.mxu0 %v665
    %v704 = vpop.f32.mrf.mxu0
    %v705 = vadd.f32 0.0, %v704
    %v706 = vpop.f32.mrf.mxu0
    %v707 = vpop.f32.mrf.mxu0
    %v708 = vpop.f32.mrf.mxu0
    %709 = vdwg.mxu0
    %v710 = vunpack.c.l.b16 %v446
    %v711 = vpack.c.b16 %v710, %v710
    %712 = vrot.lane.b32.xlu0 %v711, 96
    %v713 = vpop.permute.xlu0 %712
    %v715 = vsel %vm465, %v434, 0
    %v718 = vsel %vm465, %v713, 0
    %720 = vmatprep.subr.bf16.mxu0 0
    %721 = vmatpush1.bf16.xpose.msra.mxu0 0
    %722 = vmatprep.subr.bf16.mxu0 0
    %723 = vmatpush1.bf16.xpose.msra.mxu0 0
    %724 = vmatprep.subr.bf16.mxu0 0
    %725 = vmatpush1.bf16.xpose.msra.mxu0 0
    %726 = vmatprep.subr.bf16.mxu0 0
    %727 = vmatpush1.bf16.xpose.msra.mxu0 0
    %728 = vmatprep.subr.bf16.mxu0 0
    %729 = vmatpush1.bf16.xpose.msra.mxu0 0
    %730 = vmatprep.subr.bf16.mxu0 0
    %731 = vmatpush1.bf16.xpose.msra.mxu0 0
    %732 = vmatprep.subr.bf16.mxu0 0
    %733 = vmatpush1.bf16.xpose.msra.mxu0 0
    %734 = vmatprep.subr.bf16.mxu0 0
    %735 = vmatpush1.bf16.xpose.msra.mxu0 %v718
    %736 = vmatprep.subr.bf16.mxu0 0
    %737 = vmatpush2.bf16.xpose.msra.mxu0 0
    %738 = vmatprep.subr.bf16.mxu0 0
    %739 = vmatpush2.bf16.xpose.msra.mxu0 0
    %740 = vmatprep.subr.bf16.mxu0 0
    %741 = vmatpush2.bf16.xpose.msra.mxu0 0
    %742 = vmatprep.subr.bf16.mxu0 0
    %743 = vmatpush2.bf16.xpose.msra.mxu0 0
    %744 = vmatprep.subr.bf16.mxu0 0
    %745 = vmatpush2.bf16.xpose.msra.mxu0 0
    %746 = vmatprep.subr.bf16.mxu0 0
    %747 = vmatpush2.bf16.xpose.msra.mxu0 0
    %748 = vmatprep.subr.bf16.mxu0 0
    %749 = vmatpush2.bf16.xpose.msra.mxu0 0
    %750 = vmatprep.subr.bf16.mxu0 0
    %751 = vmatpush2.bf16.xpose.msra.mxu0 0
    %752 = vmatprep.mubr.bf16.mxu0 0
    %753 = vmatmul.mubr.bf16.gmra.mxu0 %v715
    %v754 = vpop.f32.mrf.mxu0
    %v755 = vadd.f32 0.0, %v754
    %v756 = vpop.f32.mrf.mxu0
    %v757 = vpop.f32.mrf.mxu0
    %v758 = vpop.f32.mrf.mxu0
    %759 = vdwg.mxu0
    %v760 = vunpack.c.l.b16 %v448
    %v761 = vpack.c.b16 %v760, %v760
    %762 = vrot.lane.b32.xlu0 %v761, 96
    %v763 = vpop.permute.xlu0 %762
    %v765 = vsel %vm465, %v436, 0
    %v768 = vsel %vm465, %v763, 0
    %770 = vmatprep.subr.bf16.mxu0 0
    %771 = vmatpush1.bf16.xpose.msra.mxu0 0
    %772 = vmatprep.subr.bf16.mxu0 0
    %773 = vmatpush1.bf16.xpose.msra.mxu0 0
    %774 = vmatprep.subr.bf16.mxu0 0
    %775 = vmatpush1.bf16.xpose.msra.mxu0 0
    %776 = vmatprep.subr.bf16.mxu0 0
    %777 = vmatpush1.bf16.xpose.msra.mxu0 0
    %778 = vmatprep.subr.bf16.mxu0 0
    %779 = vmatpush1.bf16.xpose.msra.mxu0 0
    %780 = vmatprep.subr.bf16.mxu0 0
    %781 = vmatpush1.bf16.xpose.msra.mxu0 0
    %782 = vmatprep.subr.bf16.mxu0 0
    %783 = vmatpush1.bf16.xpose.msra.mxu0 0
    %784 = vmatprep.subr.bf16.mxu0 0
    %785 = vmatpush1.bf16.xpose.msra.mxu0 %v768
    %786 = vmatprep.subr.bf16.mxu0 0
    %787 = vmatpush2.bf16.xpose.msra.mxu0 0
    %788 = vmatprep.subr.bf16.mxu0 0
    %789 = vmatpush2.bf16.xpose.msra.mxu0 0
    %790 = vmatprep.subr.bf16.mxu0 0
    %791 = vmatpush2.bf16.xpose.msra.mxu0 0
    %792 = vmatprep.subr.bf16.mxu0 0
    %793 = vmatpush2.bf16.xpose.msra.mxu0 0
    %794 = vmatprep.subr.bf16.mxu0 0
    %795 = vmatpush2.bf16.xpose.msra.mxu0 0
    %796 = vmatprep.subr.bf16.mxu0 0
    %797 = vmatpush2.bf16.xpose.msra.mxu0 0
    %798 = vmatprep.subr.bf16.mxu0 0
    %799 = vmatpush2.bf16.xpose.msra.mxu0 0
    %800 = vmatprep.subr.bf16.mxu0 0
    %801 = vmatpush2.bf16.xpose.msra.mxu0 0
    %802 = vmatprep.mubr.bf16.mxu0 0
    %803 = vmatmul.mubr.bf16.gmra.mxu0 %v765
    %v804 = vpop.f32.mrf.mxu0
    %v805 = vadd.f32 0.0, %v804
    %v806 = vpop.f32.mrf.mxu0
    %v807 = vpop.f32.mrf.mxu0
    %v808 = vpop.f32.mrf.mxu0
    %809 = vdwg.mxu0
    %v810 = vunpack.c.l.b16 %v450
    %v811 = vpack.c.b16 %v810, %v810
    %812 = vrot.lane.b32.xlu0 %v811, 96
    %v813 = vpop.permute.xlu0 %812
    %v815 = vsel %vm465, %v438, 0
    %v818 = vsel %vm465, %v813, 0
    %820 = vmatprep.subr.bf16.mxu0 0
    %821 = vmatpush1.bf16.xpose.msra.mxu0 0
    %822 = vmatprep.subr.bf16.mxu0 0
    %823 = vmatpush1.bf16.xpose.msra.mxu0 0
    %824 = vmatprep.subr.bf16.mxu0 0
    %825 = vmatpush1.bf16.xpose.msra.mxu0 0
    %826 = vmatprep.subr.bf16.mxu0 0
    %827 = vmatpush1.bf16.xpose.msra.mxu0 0
    %828 = vmatprep.subr.bf16.mxu0 0
    %829 = vmatpush1.bf16.xpose.msra.mxu0 0
    %830 = vmatprep.subr.bf16.mxu0 0
    %831 = vmatpush1.bf16.xpose.msra.mxu0 0
    %832 = vmatprep.subr.bf16.mxu0 0
    %833 = vmatpush1.bf16.xpose.msra.mxu0 0
    %834 = vmatprep.subr.bf16.mxu0 0
    %835 = vmatpush1.bf16.xpose.msra.mxu0 %v818
    %836 = vmatprep.subr.bf16.mxu0 0
    %837 = vmatpush2.bf16.xpose.msra.mxu0 0
    %838 = vmatprep.subr.bf16.mxu0 0
    %839 = vmatpush2.bf16.xpose.msra.mxu0 0
    %840 = vmatprep.subr.bf16.mxu0 0
    %841 = vmatpush2.bf16.xpose.msra.mxu0 0
    %842 = vmatprep.subr.bf16.mxu0 0
    %843 = vmatpush2.bf16.xpose.msra.mxu0 0
    %844 = vmatprep.subr.bf16.mxu0 0
    %845 = vmatpush2.bf16.xpose.msra.mxu0 0
    %846 = vmatprep.subr.bf16.mxu0 0
    %847 = vmatpush2.bf16.xpose.msra.mxu0 0
    %848 = vmatprep.subr.bf16.mxu0 0
    %849 = vmatpush2.bf16.xpose.msra.mxu0 0
    %850 = vmatprep.subr.bf16.mxu0 0
    %851 = vmatpush2.bf16.xpose.msra.mxu0 0
    %852 = vmatprep.mubr.bf16.mxu0 0
    %853 = vmatmul.mubr.bf16.gmra.mxu0 %v815
    %v854 = vpop.f32.mrf.mxu0
    %v855 = vadd.f32 0.0, %v854
    %v856 = vpop.f32.mrf.mxu0
    %v857 = vpop.f32.mrf.mxu0
    %v858 = vpop.f32.mrf.mxu0
    %859 = vdwg.mxu0
    %v860 = vsel %vm465, %v507, -inf
    %861 = vmax.xlane.f32.xlu0 %v860
    %v862 = vpop.xlane.xlu0 %861
    %v863 = vsel %vm465, %v555, -inf
    %864 = vmax.xlane.f32.xlu0 %v863
    %v865 = vpop.xlane.xlu0 %864
    %v866 = vsel %vm465, %v605, -inf
    %867 = vmax.xlane.f32.xlu0 %v866
    %v868 = vpop.xlane.xlu0 %867
    %v869 = vsel %vm465, %v655, -inf
    %870 = vmax.xlane.f32.xlu0 %v869
    %v871 = vpop.xlane.xlu0 %870
    %v872 = vsel %vm465, %v705, -inf
    %873 = vmax.xlane.f32.xlu0 %v872
    %v874 = vpop.xlane.xlu0 %873
    %v875 = vsel %vm465, %v755, -inf
    %876 = vmax.xlane.f32.xlu0 %v875
    %v877 = vpop.xlane.xlu0 %876
    %v878 = vsel %vm465, %v805, -inf
    %879 = vmax.xlane.f32.xlu0 %v878
    %v880 = vpop.xlane.xlu0 %879
    %v881 = vsel %vm465, %v855, -inf
    %882 = vmax.xlane.f32.xlu0 %v881
    %v883 = vpop.xlane.xlu0 %882
    %v884 = vsub.f32 %v507, %v862
    %v885 = vsub.f32 %v555, %v865
    %v886 = vsub.f32 %v605, %v868
    %v887 = vsub.f32 %v655, %v871
    %v888 = vsub.f32 %v705, %v874
    %v889 = vsub.f32 %v755, %v877
    %v890 = vsub.f32 %v805, %v880
    %v891 = vsub.f32 %v855, %v883
    %v892 = vmul.f32 %v884, 1.442695
    %v893 = vpow.pop %v892
    %v894 = vmul.f32 %v885, 1.442695
    %v895 = vpow.pop %v894
    %v896 = vmul.f32 %v886, 1.442695
    %v897 = vpow.pop %v896
    %v898 = vmul.f32 %v887, 1.442695
    %v899 = vpow.pop %v898
    %v900 = vmul.f32 %v888, 1.442695
    %v901 = vpow.pop %v900
    %v902 = vmul.f32 %v889, 1.442695
    %v903 = vpow.pop %v902
    %v904 = vmul.f32 %v890, 1.442695
    %v905 = vpow.pop %v904
    %v906 = vmul.f32 %v891, 1.442695
    %v907 = vpow.pop %v906
    %v908 = vsel %vm465, %v893, 0.0
    %909 = vadd.xlane.f32.xlu0 %v908
    %v910 = vpop.xlane.xlu0 %909
    %v911 = vsel %vm465, %v895, 0.0
    %912 = vadd.xlane.f32.xlu0 %v911
    %v913 = vpop.xlane.xlu0 %912
    %v914 = vsel %vm465, %v897, 0.0
    %915 = vadd.xlane.f32.xlu0 %v914
    %v916 = vpop.xlane.xlu0 %915
    %v917 = vsel %vm465, %v899, 0.0
    %918 = vadd.xlane.f32.xlu0 %v917
    %v919 = vpop.xlane.xlu0 %918
    %v920 = vsel %vm465, %v901, 0.0
    %921 = vadd.xlane.f32.xlu0 %v920
    %v922 = vpop.xlane.xlu0 %921
    %v923 = vsel %vm465, %v903, 0.0
    %924 = vadd.xlane.f32.xlu0 %v923
    %v925 = vpop.xlane.xlu0 %924
    %v926 = vsel %vm465, %v905, 0.0
    %927 = vadd.xlane.f32.xlu0 %v926
    %v928 = vpop.xlane.xlu0 %927
    %v929 = vsel %vm465, %v907, 0.0
    %930 = vadd.xlane.f32.xlu0 %v929
    %v931 = vpop.xlane.xlu0 %930
    %v932 = vrcp.pop %v910
    %v933 = vrcp.pop %v913
    %v934 = vrcp.pop %v916
    %v935 = vrcp.pop %v919
    %v936 = vrcp.pop %v922
    %v937 = vrcp.pop %v925
    %v938 = vrcp.pop %v928
    %v939 = vrcp.pop %v931
    %v940 = vmul.f32 %v893, %v932
    %v941 = vmul.f32 %v895, %v933
    %v942 = vmul.f32 %v897, %v934
    %v943 = vmul.f32 %v899, %v935
    %v944 = vmul.f32 %v901, %v936
    %v945 = vmul.f32 %v903, %v937
    %v946 = vmul.f32 %v905, %v938
    %v947 = vmul.f32 %v907, %v939
    %v948 = vpack.c.bf16 %v940, %v940
    %v949 = vpack.c.bf16 %v941, %v941
    %v950 = vpack.c.bf16 %v942, %v942
    %v951 = vpack.c.bf16 %v943, %v943
    %v952 = vpack.c.bf16 %v944, %v944
    %v953 = vpack.c.bf16 %v945, %v945
    %v954 = vpack.c.bf16 %v946, %v946
    %v955 = vpack.c.bf16 %v947, %v947
    %v957 = vsel %vm465, %v948, 0
    %vm959 = vcmask 1043456
    %v961 = vsel %vm959, %v425, 0
    %963 = vmatprep.subr.bf16.mxu0 0
    %964 = vmatpush1.bf16.msra.mxu0 0
    %965 = vmatprep.subr.bf16.mxu0 0
    %966 = vmatpush1.bf16.msra.mxu0 0
    %967 = vmatprep.subr.bf16.mxu0 0
    %968 = vmatpush1.bf16.msra.mxu0 0
    %969 = vmatprep.subr.bf16.mxu0 0
    %970 = vmatpush1.bf16.msra.mxu0 0
    %971 = vmatprep.subr.bf16.mxu0 0
    %972 = vmatpush1.bf16.msra.mxu0 0
    %973 = vmatprep.subr.bf16.mxu0 0
    %974 = vmatpush1.bf16.msra.mxu0 0
    %975 = vmatprep.subr.bf16.mxu0 0
    %976 = vmatpush1.bf16.msra.mxu0 0
    %977 = vmatprep.subr.bf16.mxu0 0
    %978 = vmatpush1.bf16.msra.mxu0 %v961
    %979 = vmatprep.subr.bf16.mxu0 0
    %980 = vmatpush2.bf16.msra.mxu0 0
    %981 = vmatprep.subr.bf16.mxu0 0
    %982 = vmatpush2.bf16.msra.mxu0 0
    %983 = vmatprep.subr.bf16.mxu0 0
    %984 = vmatpush2.bf16.msra.mxu0 0
    %985 = vmatprep.subr.bf16.mxu0 0
    %986 = vmatpush2.bf16.msra.mxu0 0
    %987 = vmatprep.subr.bf16.mxu0 0
    %988 = vmatpush2.bf16.msra.mxu0 0
    %989 = vmatprep.subr.bf16.mxu0 0
    %990 = vmatpush2.bf16.msra.mxu0 0
    %991 = vmatprep.subr.bf16.mxu0 0
    %992 = vmatpush2.bf16.msra.mxu0 0
    %993 = vmatprep.subr.bf16.mxu0 0
    %994 = vmatpush2.bf16.msra.mxu0 0
    %995 = vmatprep.mubr.bf16.mxu0 0
    %996 = vmatmul.mubr.bf16.gmra.mxu0 %v957
    %v997 = vpop.f32.mrf.mxu0
    %v998 = vadd.f32 0.0, %v997
    %v999 = vpop.f32.mrf.mxu0
    %v1000 = vpop.f32.mrf.mxu0
    %v1001 = vpop.f32.mrf.mxu0
    %1002 = vdwg.mxu0
    %v1004 = vsel %vm465, %v949, 0
    %v1007 = vsel %vm959, %v426, 0
    %1009 = vmatprep.subr.bf16.mxu0 0
    %1010 = vmatpush1.bf16.msra.mxu0 0
    %1011 = vmatprep.subr.bf16.mxu0 0
    %1012 = vmatpush1.bf16.msra.mxu0 0
    %1013 = vmatprep.subr.bf16.mxu0 0
    %1014 = vmatpush1.bf16.msra.mxu0 0
    %1015 = vmatprep.subr.bf16.mxu0 0
    %1016 = vmatpush1.bf16.msra.mxu0 0
    %1017 = vmatprep.subr.bf16.mxu0 0
    %1018 = vmatpush1.bf16.msra.mxu0 0
    %1019 = vmatprep.subr.bf16.mxu0 0
    %1020 = vmatpush1.bf16.msra.mxu0 0
    %1021 = vmatprep.subr.bf16.mxu0 0
    %1022 = vmatpush1.bf16.msra.mxu0 0
    %1023 = vmatprep.subr.bf16.mxu0 0
    %1024 = vmatpush1.bf16.msra.mxu0 %v1007
    %1025 = vmatprep.subr.bf16.mxu0 0
    %1026 = vmatpush2.bf16.msra.mxu0 0
    %1027 = vmatprep.subr.bf16.mxu0 0
    %1028 = vmatpush2.bf16.msra.mxu0 0
    %1029 = vmatprep.subr.bf16.mxu0 0
    %1030 = vmatpush2.bf16.msra.mxu0 0
    %1031 = vmatprep.subr.bf16.mxu0 0
    %1032 = vmatpush2.bf16.msra.mxu0 0
    %1033 = vmatprep.subr.bf16.mxu0 0
    %1034 = vmatpush2.bf16.msra.mxu0 0
    %1035 = vmatprep.subr.bf16.mxu0 0
    %1036 = vmatpush2.bf16.msra.mxu0 0
    %1037 = vmatprep.subr.bf16.mxu0 0
    %1038 = vmatpush2.bf16.msra.mxu0 0
    %1039 = vmatprep.subr.bf16.mxu0 0
    %1040 = vmatpush2.bf16.msra.mxu0 0
    %1041 = vmatprep.mubr.bf16.mxu0 0
    %1042 = vmatmul.mubr.bf16.gmra.mxu0 %v1004
    %v1043 = vpop.f32.mrf.mxu0
    %v1044 = vadd.f32 0.0, %v1043
    %v1045 = vpop.f32.mrf.mxu0
    %v1046 = vpop.f32.mrf.mxu0
    %v1047 = vpop.f32.mrf.mxu0
    %1048 = vdwg.mxu0
    %v1050 = vsel %vm465, %v950, 0
    %v1053 = vsel %vm959, %v452, 0
    %1055 = vmatprep.subr.bf16.mxu0 0
    %1056 = vmatpush1.bf16.msra.mxu0 0
    %1057 = vmatprep.subr.bf16.mxu0 0
    %1058 = vmatpush1.bf16.msra.mxu0 0
    %1059 = vmatprep.subr.bf16.mxu0 0
    %1060 = vmatpush1.bf16.msra.mxu0 0
    %1061 = vmatprep.subr.bf16.mxu0 0
    %1062 = vmatpush1.bf16.msra.mxu0 0
    %1063 = vmatprep.subr.bf16.mxu0 0
    %1064 = vmatpush1.bf16.msra.mxu0 0
    %1065 = vmatprep.subr.bf16.mxu0 0
    %1066 = vmatpush1.bf16.msra.mxu0 0
    %1067 = vmatprep.subr.bf16.mxu0 0
    %1068 = vmatpush1.bf16.msra.mxu0 0
    %1069 = vmatprep.subr.bf16.mxu0 0
    %1070 = vmatpush1.bf16.msra.mxu0 %v1053
    %1071 = vmatprep.subr.bf16.mxu0 0
    %1072 = vmatpush2.bf16.msra.mxu0 0
    %1073 = vmatprep.subr.bf16.mxu0 0
    %1074 = vmatpush2.bf16.msra.mxu0 0
    %1075 = vmatprep.subr.bf16.mxu0 0
    %1076 = vmatpush2.bf16.msra.mxu0 0
    %1077 = vmatprep.subr.bf16.mxu0 0
    %1078 = vmatpush2.bf16.msra.mxu0 0
    %1079 = vmatprep.subr.bf16.mxu0 0
    %1080 = vmatpush2.bf16.msra.mxu0 0
    %1081 = vmatprep.subr.bf16.mxu0 0
    %1082 = vmatpush2.bf16.msra.mxu0 0
    %1083 = vmatprep.subr.bf16.mxu0 0
    %1084 = vmatpush2.bf16.msra.mxu0 0
    %1085 = vmatprep.subr.bf16.mxu0 0
    %1086 = vmatpush2.bf16.msra.mxu0 0
    %1087 = vmatprep.mubr.bf16.mxu0 0
    %1088 = vmatmul.mubr.bf16.gmra.mxu0 %v1050
    %v1089 = vpop.f32.mrf.mxu0
    %v1090 = vadd.f32 0.0, %v1089
    %v1091 = vpop.f32.mrf.mxu0
    %v1092 = vpop.f32.mrf.mxu0
    %v1093 = vpop.f32.mrf.mxu0
    %1094 = vdwg.mxu0
    %v1096 = vsel %vm465, %v951, 0
    %v1099 = vsel %vm959, %v454, 0
    %1101 = vmatprep.subr.bf16.mxu0 0
    %1102 = vmatpush1.bf16.msra.mxu0 0
    %1103 = vmatprep.subr.bf16.mxu0 0
    %1104 = vmatpush1.bf16.msra.mxu0 0
    %1105 = vmatprep.subr.bf16.mxu0 0
    %1106 = vmatpush1.bf16.msra.mxu0 0
    %1107 = vmatprep.subr.bf16.mxu0 0
    %1108 = vmatpush1.bf16.msra.mxu0 0
    %1109 = vmatprep.subr.bf16.mxu0 0
    %1110 = vmatpush1.bf16.msra.mxu0 0
    %1111 = vmatprep.subr.bf16.mxu0 0
    %1112 = vmatpush1.bf16.msra.mxu0 0
    %1113 = vmatprep.subr.bf16.mxu0 0
    %1114 = vmatpush1.bf16.msra.mxu0 0
    %1115 = vmatprep.subr.bf16.mxu0 0
    %1116 = vmatpush1.bf16.msra.mxu0 %v1099
    %1117 = vmatprep.subr.bf16.mxu0 0
    %1118 = vmatpush2.bf16.msra.mxu0 0
    %1119 = vmatprep.subr.bf16.mxu0 0
    %1120 = vmatpush2.bf16.msra.mxu0 0
    %1121 = vmatprep.subr.bf16.mxu0 0
    %1122 = vmatpush2.bf16.msra.mxu0 0
    %1123 = vmatprep.subr.bf16.mxu0 0
    %1124 = vmatpush2.bf16.msra.mxu0 0
    %1125 = vmatprep.subr.bf16.mxu0 0
    %1126 = vmatpush2.bf16.msra.mxu0 0
    %1127 = vmatprep.subr.bf16.mxu0 0
    %1128 = vmatpush2.bf16.msra.mxu0 0
    %1129 = vmatprep.subr.bf16.mxu0 0
    %1130 = vmatpush2.bf16.msra.mxu0 0
    %1131 = vmatprep.subr.bf16.mxu0 0
    %1132 = vmatpush2.bf16.msra.mxu0 0
    %1133 = vmatprep.mubr.bf16.mxu0 0
    %1134 = vmatmul.mubr.bf16.gmra.mxu0 %v1096
    %v1135 = vpop.f32.mrf.mxu0
    %v1136 = vadd.f32 0.0, %v1135
    %v1137 = vpop.f32.mrf.mxu0
    %v1138 = vpop.f32.mrf.mxu0
    %v1139 = vpop.f32.mrf.mxu0
    %1140 = vdwg.mxu0
    %v1142 = vsel %vm465, %v952, 0
    %v1145 = vsel %vm959, %v456, 0
    %1147 = vmatprep.subr.bf16.mxu0 0
    %1148 = vmatpush1.bf16.msra.mxu0 0
    %1149 = vmatprep.subr.bf16.mxu0 0
    %1150 = vmatpush1.bf16.msra.mxu0 0
    %1151 = vmatprep.subr.bf16.mxu0 0
    %1152 = vmatpush1.bf16.msra.mxu0 0
    %1153 = vmatprep.subr.bf16.mxu0 0
    %1154 = vmatpush1.bf16.msra.mxu0 0
    %1155 = vmatprep.subr.bf16.mxu0 0
    %1156 = vmatpush1.bf16.msra.mxu0 0
    %1157 = vmatprep.subr.bf16.mxu0 0
    %1158 = vmatpush1.bf16.msra.mxu0 0
    %1159 = vmatprep.subr.bf16.mxu0 0
    %1160 = vmatpush1.bf16.msra.mxu0 0
    %1161 = vmatprep.subr.bf16.mxu0 0
    %1162 = vmatpush1.bf16.msra.mxu0 %v1145
    %1163 = vmatprep.subr.bf16.mxu0 0
    %1164 = vmatpush2.bf16.msra.mxu0 0
    %1165 = vmatprep.subr.bf16.mxu0 0
    %1166 = vmatpush2.bf16.msra.mxu0 0
    %1167 = vmatprep.subr.bf16.mxu0 0
    %1168 = vmatpush2.bf16.msra.mxu0 0
    %1169 = vmatprep.subr.bf16.mxu0 0
    %1170 = vmatpush2.bf16.msra.mxu0 0
    %1171 = vmatprep.subr.bf16.mxu0 0
    %1172 = vmatpush2.bf16.msra.mxu0 0
    %1173 = vmatprep.subr.bf16.mxu0 0
    %1174 = vmatpush2.bf16.msra.mxu0 0
    %1175 = vmatprep.subr.bf16.mxu0 0
    %1176 = vmatpush2.bf16.msra.mxu0 0
    %1177 = vmatprep.subr.bf16.mxu0 0
    %1178 = vmatpush2.bf16.msra.mxu0 0
    %1179 = vmatprep.mubr.bf16.mxu0 0
    %1180 = vmatmul.mubr.bf16.gmra.mxu0 %v1142
    %v1181 = vpop.f32.mrf.mxu0
    %v1182 = vadd.f32 0.0, %v1181
    %v1183 = vpop.f32.mrf.mxu0
    %v1184 = vpop.f32.mrf.mxu0
    %v1185 = vpop.f32.mrf.mxu0
    %1186 = vdwg.mxu0
    %v1188 = vsel %vm465, %v953, 0
    %v1191 = vsel %vm959, %v458, 0
    %1193 = vmatprep.subr.bf16.mxu0 0
    %1194 = vmatpush1.bf16.msra.mxu0 0
    %1195 = vmatprep.subr.bf16.mxu0 0
    %1196 = vmatpush1.bf16.msra.mxu0 0
    %1197 = vmatprep.subr.bf16.mxu0 0
    %1198 = vmatpush1.bf16.msra.mxu0 0
    %1199 = vmatprep.subr.bf16.mxu0 0
    %1200 = vmatpush1.bf16.msra.mxu0 0
    %1201 = vmatprep.subr.bf16.mxu0 0
    %1202 = vmatpush1.bf16.msra.mxu0 0
    %1203 = vmatprep.subr.bf16.mxu0 0
    %1204 = vmatpush1.bf16.msra.mxu0 0
    %1205 = vmatprep.subr.bf16.mxu0 0
    %1206 = vmatpush1.bf16.msra.mxu0 0
    %1207 = vmatprep.subr.bf16.mxu0 0
    %1208 = vmatpush1.bf16.msra.mxu0 %v1191
    %1209 = vmatprep.subr.bf16.mxu0 0
    %1210 = vmatpush2.bf16.msra.mxu0 0
    %1211 = vmatprep.subr.bf16.mxu0 0
    %1212 = vmatpush2.bf16.msra.mxu0 0
    %1213 = vmatprep.subr.bf16.mxu0 0
    %1214 = vmatpush2.bf16.msra.mxu0 0
    %1215 = vmatprep.subr.bf16.mxu0 0
    %1216 = vmatpush2.bf16.msra.mxu0 0
    %1217 = vmatprep.subr.bf16.mxu0 0
    %1218 = vmatpush2.bf16.msra.mxu0 0
    %1219 = vmatprep.subr.bf16.mxu0 0
    %1220 = vmatpush2.bf16.msra.mxu0 0
    %1221 = vmatprep.subr.bf16.mxu0 0
    %1222 = vmatpush2.bf16.msra.mxu0 0
    %1223 = vmatprep.subr.bf16.mxu0 0
    %1224 = vmatpush2.bf16.msra.mxu0 0
    %1225 = vmatprep.mubr.bf16.mxu0 0
    %1226 = vmatmul.mubr.bf16.gmra.mxu0 %v1188
    %v1227 = vpop.f32.mrf.mxu0
    %v1228 = vadd.f32 0.0, %v1227
    %v1229 = vpop.f32.mrf.mxu0
    %v1230 = vpop.f32.mrf.mxu0
    %v1231 = vpop.f32.mrf.mxu0
    %1232 = vdwg.mxu0
    %v1234 = vsel %vm465, %v954, 0
    %v1237 = vsel %vm959, %v460, 0
    %1239 = vmatprep.subr.bf16.mxu0 0
    %1240 = vmatpush1.bf16.msra.mxu0 0
    %1241 = vmatprep.subr.bf16.mxu0 0
    %1242 = vmatpush1.bf16.msra.mxu0 0
    %1243 = vmatprep.subr.bf16.mxu0 0
    %1244 = vmatpush1.bf16.msra.mxu0 0
    %1245 = vmatprep.subr.bf16.mxu0 0
    %1246 = vmatpush1.bf16.msra.mxu0 0
    %1247 = vmatprep.subr.bf16.mxu0 0
    %1248 = vmatpush1.bf16.msra.mxu0 0
    %1249 = vmatprep.subr.bf16.mxu0 0
    %1250 = vmatpush1.bf16.msra.mxu0 0
    %1251 = vmatprep.subr.bf16.mxu0 0
    %1252 = vmatpush1.bf16.msra.mxu0 0
    %1253 = vmatprep.subr.bf16.mxu0 0
    %1254 = vmatpush1.bf16.msra.mxu0 %v1237
    %1255 = vmatprep.subr.bf16.mxu0 0
    %1256 = vmatpush2.bf16.msra.mxu0 0
    %1257 = vmatprep.subr.bf16.mxu0 0
    %1258 = vmatpush2.bf16.msra.mxu0 0
    %1259 = vmatprep.subr.bf16.mxu0 0
    %1260 = vmatpush2.bf16.msra.mxu0 0
    %1261 = vmatprep.subr.bf16.mxu0 0
    %1262 = vmatpush2.bf16.msra.mxu0 0
    %1263 = vmatprep.subr.bf16.mxu0 0
    %1264 = vmatpush2.bf16.msra.mxu0 0
    %1265 = vmatprep.subr.bf16.mxu0 0
    %1266 = vmatpush2.bf16.msra.mxu0 0
    %1267 = vmatprep.subr.bf16.mxu0 0
    %1268 = vmatpush2.bf16.msra.mxu0 0
    %1269 = vmatprep.subr.bf16.mxu0 0
    %1270 = vmatpush2.bf16.msra.mxu0 0
    %1271 = vmatprep.mubr.bf16.mxu0 0
    %1272 = vmatmul.mubr.bf16.gmra.mxu0 %v1234
    %v1273 = vpop.f32.mrf.mxu0
    %v1274 = vadd.f32 0.0, %v1273
    %v1275 = vpop.f32.mrf.mxu0
    %v1276 = vpop.f32.mrf.mxu0
    %v1277 = vpop.f32.mrf.mxu0
    %1278 = vdwg.mxu0
    %v1280 = vsel %vm465, %v955, 0
    %v1283 = vsel %vm959, %v462, 0
    %1285 = vmatprep.subr.bf16.mxu0 0
    %1286 = vmatpush1.bf16.msra.mxu0 0
    %1287 = vmatprep.subr.bf16.mxu0 0
    %1288 = vmatpush1.bf16.msra.mxu0 0
    %1289 = vmatprep.subr.bf16.mxu0 0
    %1290 = vmatpush1.bf16.msra.mxu0 0
    %1291 = vmatprep.subr.bf16.mxu0 0
    %1292 = vmatpush1.bf16.msra.mxu0 0
    %1293 = vmatprep.subr.bf16.mxu0 0
    %1294 = vmatpush1.bf16.msra.mxu0 0
    %1295 = vmatprep.subr.bf16.mxu0 0
    %1296 = vmatpush1.bf16.msra.mxu0 0
    %1297 = vmatprep.subr.bf16.mxu0 0
    %1298 = vmatpush1.bf16.msra.mxu0 0
    %1299 = vmatprep.subr.bf16.mxu0 0
    %1300 = vmatpush1.bf16.msra.mxu0 %v1283
    %1301 = vmatprep.subr.bf16.mxu0 0
    %1302 = vmatpush2.bf16.msra.mxu0 0
    %1303 = vmatprep.subr.bf16.mxu0 0
    %1304 = vmatpush2.bf16.msra.mxu0 0
    %1305 = vmatprep.subr.bf16.mxu0 0
    %1306 = vmatpush2.bf16.msra.mxu0 0
    %1307 = vmatprep.subr.bf16.mxu0 0
    %1308 = vmatpush2.bf16.msra.mxu0 0
    %1309 = vmatprep.subr.bf16.mxu0 0
    %1310 = vmatpush2.bf16.msra.mxu0 0
    %1311 = vmatprep.subr.bf16.mxu0 0
    %1312 = vmatpush2.bf16.msra.mxu0 0
    %1313 = vmatprep.subr.bf16.mxu0 0
    %1314 = vmatpush2.bf16.msra.mxu0 0
    %1315 = vmatprep.subr.bf16.mxu0 0
    %1316 = vmatpush2.bf16.msra.mxu0 0
    %1317 = vmatprep.mubr.bf16.mxu0 0
    %1318 = vmatmul.mubr.bf16.gmra.mxu0 %v1280
    %v1319 = vpop.f32.mrf.mxu0
    %v1320 = vadd.f32 0.0, %v1319
    %v1321 = vpop.f32.mrf.mxu0
    %v1322 = vpop.f32.mrf.mxu0
    %v1323 = vpop.f32.mrf.mxu0
    %1324 = vdwg.mxu0
    %v1325 = vpack.c.bf16 %v998, %v998
    %v1326 = vpack.c.bf16 %v1044, %v1044
    %v1327 = vpack.c.bf16 %v1090, %v1090
    %v1328 = vpack.c.bf16 %v1136, %v1136
    %v1329 = vpack.c.bf16 %v1182, %v1182
    %v1330 = vpack.c.bf16 %v1228, %v1228
    %v1331 = vpack.c.bf16 %v1274, %v1274
    %v1332 = vpack.c.bf16 %v1320, %v1320
    %1335 = vrot.lane.b32.xlu0 %v1327, 8
    %v1336 = vpop.permute.xlu0 %1335
    %1337 = vrot.lane.b32.xlu0 %v1328, 8
    %v1338 = vpop.permute.xlu0 %1337
    %1341 = vrot.lane.b32.xlu0 %v1329, 16
    %v1342 = vpop.permute.xlu0 %1341
    %1343 = vrot.lane.b32.xlu0 %v1330, 16
    %v1344 = vpop.permute.xlu0 %1343
    %1347 = vrot.lane.b32.xlu0 %v1331, 24
    %v1348 = vpop.permute.xlu0 %1347
    %1349 = vrot.lane.b32.xlu0 %v1332, 24
    %v1350 = vpop.permute.xlu0 %1349
    %v1353 = vsel %vm465, %v1325, %v1336
    %v1356 = vsel %vm465, %v1326, %v1338
    %vm1357 = vcmask 130048
    %v1359 = vsel %vm1357, %v1353, %v1342
    %v1361 = vsel %vm1357, %v1356, %v1344
    %vm1362 = vcmask 195584
    %v1364 = vsel %vm1362, %v1359, %v1348
    %v1366 = vsel %vm1362, %v1361, %v1350
    %v1367 = vld [vmem:[#allocation10] sm:$0xf]
    %v1368 = vld [vmem:[#allocation10 + $0x4] sm:$0xf]
    %v1369 = vld [vmem:[#allocation10 + $0x8] sm:$0xf]
    %v1370 = vld [vmem:[#allocation10 + $0xc] sm:$0xf]
    %v1371 = vld [vmem:[#allocation11] sm:$0x1]
    %v1373 = vlaneseq
    %v1374 = vshrl.u32 %v1373, 7
    %v1375 = vsub.s32 0, %v1374
    %v1376 = vrot.slane %v1371, %v1375
    %v1380 = vunpack.c.l.b16 %v1364
    %v1381 = vunpack.c.l.b16 %v1366
    %v1382 = vpack.c.b16 %v1381, %v1380
    %v1387 = vunpack.c.l.b16 %v1367
    %v1388 = vunpack.c.l.b16 %v1368
    %v1389 = vunpack.c.l.b16 %v1369
    %v1390 = vunpack.c.l.b16 %v1370
    %v1391 = vpack.c.b16 %v1388, %v1387
    %v1392 = vpack.c.b16 %v1390, %v1389
    %v1396 = vsel %vm308, %v1382, 0
    %1398 = vmatprep.subr.bf16.mxu0 0
    %1399 = vmatpush1.bf16.msra.mxu0 0
    %1400 = vmatprep.subr.bf16.mxu0 0
    %1401 = vmatpush1.bf16.msra.mxu0 0
    %1402 = vmatprep.subr.bf16.mxu0 0
    %1403 = vmatpush1.bf16.msra.mxu0 0
    %1404 = vmatprep.subr.bf16.mxu0 0
    %1405 = vmatpush1.bf16.msra.mxu0 0
    %1406 = vmatprep.subr.bf16.mxu0 0
    %1407 = vmatpush1.bf16.msra.mxu0 0
    %1408 = vmatprep.subr.bf16.mxu0 0
    %1409 = vmatpush1.bf16.msra.mxu0 0
    %1410 = vmatprep.subr.bf16.mxu0 0
    %1411 = vmatpush1.bf16.msra.mxu0 %v1392
    %1412 = vmatprep.subr.bf16.mxu0 0
    %1413 = vmatpush1.bf16.msra.mxu0 %v1391
    %1414 = vmatprep.subr.bf16.mxu0 0
    %1415 = vmatpush2.bf16.msra.mxu0 0
    %1416 = vmatprep.subr.bf16.mxu0 0
    %1417 = vmatpush2.bf16.msra.mxu0 0
    %1418 = vmatprep.subr.bf16.mxu0 0
    %1419 = vmatpush2.bf16.msra.mxu0 0
    %1420 = vmatprep.subr.bf16.mxu0 0
    %1421 = vmatpush2.bf16.msra.mxu0 0
    %1422 = vmatprep.subr.bf16.mxu0 0
    %1423 = vmatpush2.bf16.msra.mxu0 0
    %1424 = vmatprep.subr.bf16.mxu0 0
    %1425 = vmatpush2.bf16.msra.mxu0 0
    %1426 = vmatprep.subr.bf16.mxu0 0
    %1427 = vmatpush2.bf16.msra.mxu0 0
    %1428 = vmatprep.subr.bf16.mxu0 0
    %1429 = vmatpush2.bf16.msra.mxu0 0
    %1430 = vmatprep.mubr.bf16.mxu0 0
    %1431 = vmatmul.mubr.bf16.gmra.mxu0 %v1396
    %v1432 = vpop.f32.mrf.mxu0
    %v1433 = vadd.f32 %v1376, %v1432
    %v1434 = vpop.f32.mrf.mxu0
    %v1435 = vpop.f32.mrf.mxu0
    %v1436 = vadd.f32 %v1376, %v1435
    %v1437 = vpop.f32.mrf.mxu0
    %1438 = vdwg.mxu0
    %v1439 = vadd.f32 %v270, %v1433
    %v1440 = vadd.f32 %v271, %v1436
    %v1441 = vsel %vm308, %v1439, 0.0
    %1442 = vadd.xlane.f32.xlu0 %v1441
    %v1443 = vpop.xlane.xlu0 %1442
    %v1444 = vsel %vm308, %v1440, 0.0
    %1445 = vadd.xlane.f32.xlu0 %v1444
    %v1446 = vpop.xlane.xlu0 %1445
    %v1447 = vrcp.pop 32.0
    %v1448 = vmul.f32 %v1443, %v1447
    %v1449 = vmul.f32 %v1446, %v1447
    %v1450 = vsub.f32 %v1439, %v1448
    %v1451 = vsub.f32 %v1440, %v1449
    %v1452 = vmul.f32 %v1450, %v1450
    %v1453 = vmul.f32 %v1451, %v1451
    %v1454 = vsel %vm308, %v1452, 0.0
    %1455 = vadd.xlane.f32.xlu0 %v1454
    %v1456 = vpop.xlane.xlu0 %1455
    %v1457 = vsel %vm308, %v1453, 0.0
    %1458 = vadd.xlane.f32.xlu0 %v1457
    %v1459 = vpop.xlane.xlu0 %1458
    %v1460 = vmul.f32 %v1456, %v1447
    %v1461 = vmul.f32 %v1459, %v1447
    %v1462 = vadd.f32 %v1460, 1e-05
    %v1463 = vadd.f32 %v1461, 1e-05
    %v1464 = vrsqrt.pop %v1462
    %v1465 = vrsqrt.pop %v1463
    %v1466 = vmul.f32 %v1450, %v1464
    %v1467 = vmul.f32 %v1451, %v1465
    %v1468 = vld [vmem:[#allocation17] sm:$0x1]
    %v1470 = vlaneseq
    %v1471 = vshrl.u32 %v1470, 7
    %v1472 = vsub.s32 0, %v1471
    %v1473 = vrot.slane %v1468, %v1472
    %v1475 = vmul.f32 %v1466, %v1473
    %v1476 = vmul.f32 %v1467, %v1473
    %v1477 = vld [vmem:[#allocation19] sm:$0x1]
    %v1479 = vlaneseq
    %v1480 = vshrl.u32 %v1479, 7
    %v1481 = vsub.s32 0, %v1480
    %v1482 = vrot.slane %v1477, %v1481
    %v1484 = vadd.f32 %v1475, %v1482
    %v1485 = vadd.f32 %v1476, %v1482
    %v1486 = vadd.f32 %v1484, %v272
    %v1487 = vadd.f32 %v1485, %v273
    %v1488 = vadd.f32 %v274, %v278
    %v1489 = vadd.f32 %v275, %v279
    %v1490 = vadd.f32 %v276, %v280
    %v1491 = vadd.f32 %v277, %v281
    %v1492 = vld [vmem:[#allocation13] sm:$0xf]
    %v1493 = vld [vmem:[#allocation13 + $0x4] sm:$0xf]
    %v1494 = vld [vmem:[#allocation13 + $0x8] sm:$0xf]
    %v1495 = vld [vmem:[#allocation13 + $0xc] sm:$0xf]
    %v1496 = vld [vmem:[#allocation14] sm:$0x1]
    %v1497 = vpack.c.bf16 %v1487, %v1486
    %v1499 = vlaneseq
    %v1500 = vshrl.u32 %v1499, 7
    %v1501 = vsub.s32 0, %v1500
    %v1502 = vrot.slane %v1496, %v1501
    %v1508 = vunpack.c.l.b16 %v1492
    %v1509 = vunpack.c.l.b16 %v1493
    %v1510 = vunpack.c.l.b16 %v1494
    %v1511 = vunpack.c.l.b16 %v1495
    %v1512 = vpack.c.b16 %v1509, %v1508
    %v1513 = vpack.c.b16 %v1511, %v1510
    %v1517 = vsel %vm308, %v1497, 0
    %1519 = vmatprep.subr.bf16.mxu0 0
    %1520 = vmatpush1.bf16.msra.mxu0 0
    %1521 = vmatprep.subr.bf16.mxu0 0
    %1522 = vmatpush1.bf16.msra.mxu0 0
    %1523 = vmatprep.subr.bf16.mxu0 0
    %1524 = vmatpush1.bf16.msra.mxu0 0
    %1525 = vmatprep.subr.bf16.mxu0 0
    %1526 = vmatpush1.bf16.msra.mxu0 0
    %1527 = vmatprep.subr.bf16.mxu0 0
    %1528 = vmatpush1.bf16.msra.mxu0 0
    %1529 = vmatprep.subr.bf16.mxu0 0
    %1530 = vmatpush1.bf16.msra.mxu0 0
    %1531 = vmatprep.subr.bf16.mxu0 0
    %1532 = vmatpush1.bf16.msra.mxu0 %v1513
    %1533 = vmatprep.subr.bf16.mxu0 0
    %1534 = vmatpush1.bf16.msra.mxu0 %v1512
    %1535 = vmatprep.subr.bf16.mxu0 0
    %1536 = vmatpush2.bf16.msra.mxu0 0
    %1537 = vmatprep.subr.bf16.mxu0 0
    %1538 = vmatpush2.bf16.msra.mxu0 0
    %1539 = vmatprep.subr.bf16.mxu0 0
    %1540 = vmatpush2.bf16.msra.mxu0 0
    %1541 = vmatprep.subr.bf16.mxu0 0
    %1542 = vmatpush2.bf16.msra.mxu0 0
    %1543 = vmatprep.subr.bf16.mxu0 0
    %1544 = vmatpush2.bf16.msra.mxu0 0
    %1545 = vmatprep.subr.bf16.mxu0 0
    %1546 = vmatpush2.bf16.msra.mxu0 0
    %1547 = vmatprep.subr.bf16.mxu0 0
    %1548 = vmatpush2.bf16.msra.mxu0 0
    %1549 = vmatprep.subr.bf16.mxu0 0
    %1550 = vmatpush2.bf16.msra.mxu0 0
    %1551 = vmatprep.mubr.bf16.mxu0 0
    %1552 = vmatmul.mubr.bf16.gmra.mxu0 %v1517
    %v1553 = vpop.f32.mrf.mxu0
    %v1554 = vadd.f32 %v1502, %v1553
    %v1555 = vpop.f32.mrf.mxu0
    %v1556 = vpop.f32.mrf.mxu0
    %v1557 = vadd.f32 %v1502, %v1556
    %v1558 = vpop.f32.mrf.mxu0
    %1559 = vdwg.mxu0
    %v1560 = vpack.c.bf16 %v1489, %v1488
    %v1561 = vpack.c.bf16 %v1491, %v1490
    %1562 = vrot.lane.b32.xlu0 %v1512, 96
    %v1563 = vpop.permute.xlu0 %1562
    %1564 = vrot.lane.b32.xlu0 %v1513, 96
    %v1565 = vpop.permute.xlu0 %1564
    %1568 = vrot.lane.b32.xlu0 %v1502, 96
    %v1569 = vpop.permute.xlu0 %1568
    %v1572 = vsel %vm308, %v1560, 0
    %v1575 = vsel %vm308, %v1561, 0
    %1577 = vmatprep.subr.bf16.mxu0 0
    %1578 = vmatpush1.bf16.msra.mxu0 0
    %1579 = vmatprep.subr.bf16.mxu0 0
    %1580 = vmatpush1.bf16.msra.mxu0 0
    %1581 = vmatprep.subr.bf16.mxu0 0
    %1582 = vmatpush1.bf16.msra.mxu0 0
    %1583 = vmatprep.subr.bf16.mxu0 0
    %1584 = vmatpush1.bf16.msra.mxu0 0
    %1585 = vmatprep.subr.bf16.mxu0 0
    %1586 = vmatpush1.bf16.msra.mxu0 0
    %1587 = vmatprep.subr.bf16.mxu0 0
    %1588 = vmatpush1.bf16.msra.mxu0 0
    %1589 = vmatprep.subr.bf16.mxu0 0
    %1590 = vmatpush1.bf16.msra.mxu0 %v1565
    %1591 = vmatprep.subr.bf16.mxu0 0
    %1592 = vmatpush1.bf16.msra.mxu0 %v1563
    %1593 = vmatprep.subr.bf16.mxu0 0
    %1594 = vmatpush2.bf16.msra.mxu0 0
    %1595 = vmatprep.subr.bf16.mxu0 0
    %1596 = vmatpush2.bf16.msra.mxu0 0
    %1597 = vmatprep.subr.bf16.mxu0 0
    %1598 = vmatpush2.bf16.msra.mxu0 0
    %1599 = vmatprep.subr.bf16.mxu0 0
    %1600 = vmatpush2.bf16.msra.mxu0 0
    %1601 = vmatprep.subr.bf16.mxu0 0
    %1602 = vmatpush2.bf16.msra.mxu0 0
    %1603 = vmatprep.subr.bf16.mxu0 0
    %1604 = vmatpush2.bf16.msra.mxu0 0
    %1605 = vmatprep.subr.bf16.mxu0 0
    %1606 = vmatpush2.bf16.msra.mxu0 0
    %1607 = vmatprep.subr.bf16.mxu0 0
    %1608 = vmatpush2.bf16.msra.mxu0 0
    %1609 = vmatprep.mubr.bf16.mxu0 0
    %1610 = vmatmul.mubr.bf16.gmra.mxu0 %v1572
    %v1611 = vpop.f32.mrf.mxu0
    %v1612 = vadd.f32 %v1569, %v1611
    %v1613 = vpop.f32.mrf.mxu0
    %v1614 = vpop.f32.mrf.mxu0
    %v1615 = vadd.f32 %v1569, %v1614
    %v1616 = vpop.f32.mrf.mxu0
    %1617 = vmatprep.mubr.bf16.mxu0 0
    %1618 = vmatmul.mubr.bf16.gmra.mxu0 %v1575
    %v1619 = vpop.f32.mrf.mxu0
    %v1620 = vadd.f32 %v1569, %v1619
    %v1621 = vpop.f32.mrf.mxu0
    %v1622 = vpop.f32.mrf.mxu0
    %v1623 = vadd.f32 %v1569, %v1622
    %v1624 = vpop.f32.mrf.mxu0
    %1625 = vdwg.mxu0
    %v1626 = vpack.c.bf16 %v275, %v274
    %v1627 = vpack.c.bf16 %v277, %v276
    %1628 = vrot.lane.b32.xlu0 %v1512, 64
    %v1629 = vpop.permute.xlu0 %1628
    %1630 = vrot.lane.b32.xlu0 %v1513, 64
    %v1631 = vpop.permute.xlu0 %1630
    %1634 = vrot.lane.b32.xlu0 %v1502, 64
    %v1635 = vpop.permute.xlu0 %1634
    %v1638 = vsel %vm308, %v1626, 0
    %v1641 = vsel %vm308, %v1627, 0
    %1643 = vmatprep.subr.bf16.mxu0 0
    %1644 = vmatpush1.bf16.msra.mxu0 0
    %1645 = vmatprep.subr.bf16.mxu0 0
    %1646 = vmatpush1.bf16.msra.mxu0 0
    %1647 = vmatprep.subr.bf16.mxu0 0
    %1648 = vmatpush1.bf16.msra.mxu0 0
    %1649 = vmatprep.subr.bf16.mxu0 0
    %1650 = vmatpush1.bf16.msra.mxu0 0
    %1651 = vmatprep.subr.bf16.mxu0 0
    %1652 = vmatpush1.bf16.msra.mxu0 0
    %1653 = vmatprep.subr.bf16.mxu0 0
    %1654 = vmatpush1.bf16.msra.mxu0 0
    %1655 = vmatprep.subr.bf16.mxu0 0
    %1656 = vmatpush1.bf16.msra.mxu0 %v1631
    %1657 = vmatprep.subr.bf16.mxu0 0
    %1658 = vmatpush1.bf16.msra.mxu0 %v1629
    %1659 = vmatprep.subr.bf16.mxu0 0
    %1660 = vmatpush2.bf16.msra.mxu0 0
    %1661 = vmatprep.subr.bf16.mxu0 0
    %1662 = vmatpush2.bf16.msra.mxu0 0
    %1663 = vmatprep.subr.bf16.mxu0 0
    %1664 = vmatpush2.bf16.msra.mxu0 0
    %1665 = vmatprep.subr.bf16.mxu0 0
    %1666 = vmatpush2.bf16.msra.mxu0 0
    %1667 = vmatprep.subr.bf16.mxu0 0
    %1668 = vmatpush2.bf16.msra.mxu0 0
    %1669 = vmatprep.subr.bf16.mxu0 0
    %1670 = vmatpush2.bf16.msra.mxu0 0
    %1671 = vmatprep.subr.bf16.mxu0 0
    %1672 = vmatpush2.bf16.msra.mxu0 0
    %1673 = vmatprep.subr.bf16.mxu0 0
    %1674 = vmatpush2.bf16.msra.mxu0 0
    %1675 = vmatprep.mubr.bf16.mxu0 0
    %1676 = vmatmul.mubr.bf16.gmra.mxu0 %v1638
    %v1677 = vpop.f32.mrf.mxu0
    %v1678 = vadd.f32 %v1635, %v1677
    %v1679 = vpop.f32.mrf.mxu0
    %v1680 = vpop.f32.mrf.mxu0
    %v1681 = vadd.f32 %v1635, %v1680
    %v1682 = vpop.f32.mrf.mxu0
    %1683 = vmatprep.mubr.bf16.mxu0 0
    %1684 = vmatmul.mubr.bf16.gmra.mxu0 %v1641
    %v1685 = vpop.f32.mrf.mxu0
    %v1686 = vadd.f32 %v1635, %v1685
    %v1687 = vpop.f32.mrf.mxu0
    %v1688 = vpop.f32.mrf.mxu0
    %v1689 = vadd.f32 %v1635, %v1688
    %v1690 = vpop.f32.mrf.mxu0
    %1691 = vdwg.mxu0
    %v1692 = vmul.f32 %v1554, 0.35355338
    %v1693 = vmul.f32 %v1557, 0.35355338
    %v1694 = vpack.c.bf16 %v1693, %v1692
    %v1696 = vunpack.c.l.b16 %v1694
    %v1697 = vunpack.c.h.b16 %v1694
    %v1698 = vpack.c.b16 %v1696, %v1696
    %v1699 = vpack.c.b16 %v1697, %v1697
    %v1700 = vpack.c.bf16 %v1615, %v1612
    %v1701 = vpack.c.bf16 %v1623, %v1620
    %v1702 = vpack.c.bf16 %v1681, %v1678
    %v1703 = vpack.c.bf16 %v1689, %v1686
    %1704 = vrot.lane.b32.xlu0 %v1698, 120
    %v1705 = vpop.permute.xlu0 %1704
    %1706 = vrot.lane.b32.xlu0 %v1699, 120
    %v1707 = vpop.permute.xlu0 %1706
    %1708 = vrot.lane.b32.xlu0 %v1698, 112
    %v1709 = vpop.permute.xlu0 %1708
    %1710 = vrot.lane.b32.xlu0 %v1699, 112
    %v1711 = vpop.permute.xlu0 %1710
    %1712 = vrot.lane.b32.xlu0 %v1698, 104
    %v1713 = vpop.permute.xlu0 %1712
    %1714 = vrot.lane.b32.xlu0 %v1699, 104
    %v1715 = vpop.permute.xlu0 %1714
    %1718 = vrot.lane.b32.xlu0 %v1700, 120
    %v1719 = vpop.permute.xlu0 %1718
    %1720 = vrot.lane.b32.xlu0 %v1701, 120
    %v1721 = vpop.permute.xlu0 %1720
    %1722 = vrot.lane.b32.xlu0 %v1700, 112
    %v1723 = vpop.permute.xlu0 %1722
    %1724 = vrot.lane.b32.xlu0 %v1701, 112
    %v1725 = vpop.permute.xlu0 %1724
    %1726 = vrot.lane.b32.xlu0 %v1700, 104
    %v1727 = vpop.permute.xlu0 %1726
    %1728 = vrot.lane.b32.xlu0 %v1701, 104
    %v1729 = vpop.permute.xlu0 %1728
    %1732 = vrot.lane.b32.xlu0 %v1702, 120
    %v1733 = vpop.permute.xlu0 %1732
    %1734 = vrot.lane.b32.xlu0 %v1703, 120
    %v1735 = vpop.permute.xlu0 %1734
    %1738 = vrot.lane.b32.xlu0 %v1702, 112
    %v1739 = vpop.permute.xlu0 %1738
    %1740 = vrot.lane.b32.xlu0 %v1703, 112
    %v1741 = vpop.permute.xlu0 %1740
    %1744 = vrot.lane.b32.xlu0 %v1702, 104
    %v1745 = vpop.permute.xlu0 %1744
    %1746 = vrot.lane.b32.xlu0 %v1703, 104
    %v1747 = vpop.permute.xlu0 %1746
    %v1751 = vsel %vm465, %v1698, 0
    %v1754 = vsel %vm465, %v1700, 0
    %1756 = vmatprep.subr.bf16.mxu0 0
    %1757 = vmatpush1.bf16.xpose.msra.mxu0 0
    %1758 = vmatprep.subr.bf16.mxu0 0
    %1759 = vmatpush1.bf16.xpose.msra.mxu0 0
    %1760 = vmatprep.subr.bf16.mxu0 0
    %1761 = vmatpush1.bf16.xpose.msra.mxu0 0
    %1762 = vmatprep.subr.bf16.mxu0 0
    %1763 = vmatpush1.bf16.xpose.msra.mxu0 0
    %1764 = vmatprep.subr.bf16.mxu0 0
    %1765 = vmatpush1.bf16.xpose.msra.mxu0 0
    %1766 = vmatprep.subr.bf16.mxu0 0
    %1767 = vmatpush1.bf16.xpose.msra.mxu0 0
    %1768 = vmatprep.subr.bf16.mxu0 0
    %1769 = vmatpush1.bf16.xpose.msra.mxu0 0
    %1770 = vmatprep.subr.bf16.mxu0 0
    %1771 = vmatpush1.bf16.xpose.msra.mxu0 %v1754
    %1772 = vmatprep.subr.bf16.mxu0 0
    %1773 = vmatpush2.bf16.xpose.msra.mxu0 0
    %1774 = vmatprep.subr.bf16.mxu0 0
    %1775 = vmatpush2.bf16.xpose.msra.mxu0 0
    %1776 = vmatprep.subr.bf16.mxu0 0
    %1777 = vmatpush2.bf16.xpose.msra.mxu0 0
    %1778 = vmatprep.subr.bf16.mxu0 0
    %1779 = vmatpush2.bf16.xpose.msra.mxu0 0
    %1780 = vmatprep.subr.bf16.mxu0 0
    %1781 = vmatpush2.bf16.xpose.msra.mxu0 0
    %1782 = vmatprep.subr.bf16.mxu0 0
    %1783 = vmatpush2.bf16.xpose.msra.mxu0 0
    %1784 = vmatprep.subr.bf16.mxu0 0
    %1785 = vmatpush2.bf16.xpose.msra.mxu0 0
    %1786 = vmatprep.subr.bf16.mxu0 0
    %1787 = vmatpush2.bf16.xpose.msra.mxu0 0
    %1788 = vmatprep.mubr.bf16.mxu0 0
    %1789 = vmatmul.mubr.bf16.gmra.mxu0 %v1751
    %v1790 = vpop.f32.mrf.mxu0
    %v1791 = vadd.f32 0.0, %v1790
    %v1792 = vpop.f32.mrf.mxu0
    %v1793 = vpop.f32.mrf.mxu0
    %v1794 = vpop.f32.mrf.mxu0
    %1795 = vdwg.mxu0
    %v1797 = vsel %vm465, %v1699, 0
    %v1800 = vsel %vm465, %v1701, 0
    %1802 = vmatprep.subr.bf16.mxu0 0
    %1803 = vmatpush1.bf16.xpose.msra.mxu0 0
    %1804 = vmatprep.subr.bf16.mxu0 0
    %1805 = vmatpush1.bf16.xpose.msra.mxu0 0
    %1806 = vmatprep.subr.bf16.mxu0 0
    %1807 = vmatpush1.bf16.xpose.msra.mxu0 0
    %1808 = vmatprep.subr.bf16.mxu0 0
    %1809 = vmatpush1.bf16.xpose.msra.mxu0 0
    %1810 = vmatprep.subr.bf16.mxu0 0
    %1811 = vmatpush1.bf16.xpose.msra.mxu0 0
    %1812 = vmatprep.subr.bf16.mxu0 0
    %1813 = vmatpush1.bf16.xpose.msra.mxu0 0
    %1814 = vmatprep.subr.bf16.mxu0 0
    %1815 = vmatpush1.bf16.xpose.msra.mxu0 0
    %1816 = vmatprep.subr.bf16.mxu0 0
    %1817 = vmatpush1.bf16.xpose.msra.mxu0 %v1800
    %1818 = vmatprep.subr.bf16.mxu0 0
    %1819 = vmatpush2.bf16.xpose.msra.mxu0 0
    %1820 = vmatprep.subr.bf16.mxu0 0
    %1821 = vmatpush2.bf16.xpose.msra.mxu0 0
    %1822 = vmatprep.subr.bf16.mxu0 0
    %1823 = vmatpush2.bf16.xpose.msra.mxu0 0
    %1824 = vmatprep.subr.bf16.mxu0 0
    %1825 = vmatpush2.bf16.xpose.msra.mxu0 0
    %1826 = vmatprep.subr.bf16.mxu0 0
    %1827 = vmatpush2.bf16.xpose.msra.mxu0 0
    %1828 = vmatprep.subr.bf16.mxu0 0
    %1829 = vmatpush2.bf16.xpose.msra.mxu0 0
    %1830 = vmatprep.subr.bf16.mxu0 0
    %1831 = vmatpush2.bf16.xpose.msra.mxu0 0
    %1832 = vmatprep.subr.bf16.mxu0 0
    %1833 = vmatpush2.bf16.xpose.msra.mxu0 0
    %1834 = vmatprep.mubr.bf16.mxu0 0
    %1835 = vmatmul.mubr.bf16.gmra.mxu0 %v1797
    %v1836 = vpop.f32.mrf.mxu0
    %v1837 = vadd.f32 0.0, %v1836
    %v1838 = vpop.f32.mrf.mxu0
    %v1839 = vpop.f32.mrf.mxu0
    %v1840 = vpop.f32.mrf.mxu0
    %1841 = vdwg.mxu0
    %v1843 = vsel %vm465, %v1705, 0
    %v1846 = vsel %vm465, %v1719, 0
    %1848 = vmatprep.subr.bf16.mxu0 0
    %1849 = vmatpush1.bf16.xpose.msra.mxu0 0
    %1850 = vmatprep.subr.bf16.mxu0 0
    %1851 = vmatpush1.bf16.xpose.msra.mxu0 0
    %1852 = vmatprep.subr.bf16.mxu0 0
    %1853 = vmatpush1.bf16.xpose.msra.mxu0 0
    %1854 = vmatprep.subr.bf16.mxu0 0
    %1855 = vmatpush1.bf16.xpose.msra.mxu0 0
    %1856 = vmatprep.subr.bf16.mxu0 0
    %1857 = vmatpush1.bf16.xpose.msra.mxu0 0
    %1858 = vmatprep.subr.bf16.mxu0 0
    %1859 = vmatpush1.bf16.xpose.msra.mxu0 0
    %1860 = vmatprep.subr.bf16.mxu0 0
    %1861 = vmatpush1.bf16.xpose.msra.mxu0 0
    %1862 = vmatprep.subr.bf16.mxu0 0
    %1863 = vmatpush1.bf16.xpose.msra.mxu0 %v1846
    %1864 = vmatprep.subr.bf16.mxu0 0
    %1865 = vmatpush2.bf16.xpose.msra.mxu0 0
    %1866 = vmatprep.subr.bf16.mxu0 0
    %1867 = vmatpush2.bf16.xpose.msra.mxu0 0
    %1868 = vmatprep.subr.bf16.mxu0 0
    %1869 = vmatpush2.bf16.xpose.msra.mxu0 0
    %1870 = vmatprep.subr.bf16.mxu0 0
    %1871 = vmatpush2.bf16.xpose.msra.mxu0 0
    %1872 = vmatprep.subr.bf16.mxu0 0
    %1873 = vmatpush2.bf16.xpose.msra.mxu0 0
    %1874 = vmatprep.subr.bf16.mxu0 0
    %1875 = vmatpush2.bf16.xpose.msra.mxu0 0
    %1876 = vmatprep.subr.bf16.mxu0 0
    %1877 = vmatpush2.bf16.xpose.msra.mxu0 0
    %1878 = vmatprep.subr.bf16.mxu0 0
    %1879 = vmatpush2.bf16.xpose.msra.mxu0 0
    %1880 = vmatprep.mubr.bf16.mxu0 0
    %1881 = vmatmul.mubr.bf16.gmra.mxu0 %v1843
    %v1882 = vpop.f32.mrf.mxu0
    %v1883 = vadd.f32 0.0, %v1882
    %v1884 = vpop.f32.mrf.mxu0
    %v1885 = vpop.f32.mrf.mxu0
    %v1886 = vpop.f32.mrf.mxu0
    %1887 = vdwg.mxu0
    %v1889 = vsel %vm465, %v1707, 0
    %v1892 = vsel %vm465, %v1721, 0
    %1894 = vmatprep.subr.bf16.mxu0 0
    %1895 = vmatpush1.bf16.xpose.msra.mxu0 0
    %1896 = vmatprep.subr.bf16.mxu0 0
    %1897 = vmatpush1.bf16.xpose.msra.mxu0 0
    %1898 = vmatprep.subr.bf16.mxu0 0
    %1899 = vmatpush1.bf16.xpose.msra.mxu0 0
    %1900 = vmatprep.subr.bf16.mxu0 0
    %1901 = vmatpush1.bf16.xpose.msra.mxu0 0
    %1902 = vmatprep.subr.bf16.mxu0 0
    %1903 = vmatpush1.bf16.xpose.msra.mxu0 0
    %1904 = vmatprep.subr.bf16.mxu0 0
    %1905 = vmatpush1.bf16.xpose.msra.mxu0 0
    %1906 = vmatprep.subr.bf16.mxu0 0
    %1907 = vmatpush1.bf16.xpose.msra.mxu0 0
    %1908 = vmatprep.subr.bf16.mxu0 0
    %1909 = vmatpush1.bf16.xpose.msra.mxu0 %v1892
    %1910 = vmatprep.subr.bf16.mxu0 0
    %1911 = vmatpush2.bf16.xpose.msra.mxu0 0
    %1912 = vmatprep.subr.bf16.mxu0 0
    %1913 = vmatpush2.bf16.xpose.msra.mxu0 0
    %1914 = vmatprep.subr.bf16.mxu0 0
    %1915 = vmatpush2.bf16.xpose.msra.mxu0 0
    %1916 = vmatprep.subr.bf16.mxu0 0
    %1917 = vmatpush2.bf16.xpose.msra.mxu0 0
    %1918 = vmatprep.subr.bf16.mxu0 0
    %1919 = vmatpush2.bf16.xpose.msra.mxu0 0
    %1920 = vmatprep.subr.bf16.mxu0 0
    %1921 = vmatpush2.bf16.xpose.msra.mxu0 0
    %1922 = vmatprep.subr.bf16.mxu0 0
    %1923 = vmatpush2.bf16.xpose.msra.mxu0 0
    %1924 = vmatprep.subr.bf16.mxu0 0
    %1925 = vmatpush2.bf16.xpose.msra.mxu0 0
    %1926 = vmatprep.mubr.bf16.mxu0 0
    %1927 = vmatmul.mubr.bf16.gmra.mxu0 %v1889
    %v1928 = vpop.f32.mrf.mxu0
    %v1929 = vadd.f32 0.0, %v1928
    %v1930 = vpop.f32.mrf.mxu0
    %v1931 = vpop.f32.mrf.mxu0
    %v1932 = vpop.f32.mrf.mxu0
    %1933 = vdwg.mxu0
    %v1935 = vsel %vm465, %v1709, 0
    %v1938 = vsel %vm465, %v1723, 0
    %1940 = vmatprep.subr.bf16.mxu0 0
    %1941 = vmatpush1.bf16.xpose.msra.mxu0 0
    %1942 = vmatprep.subr.bf16.mxu0 0
    %1943 = vmatpush1.bf16.xpose.msra.mxu0 0
    %1944 = vmatprep.subr.bf16.mxu0 0
    %1945 = vmatpush1.bf16.xpose.msra.mxu0 0
    %1946 = vmatprep.subr.bf16.mxu0 0
    %1947 = vmatpush1.bf16.xpose.msra.mxu0 0
    %1948 = vmatprep.subr.bf16.mxu0 0
    %1949 = vmatpush1.bf16.xpose.msra.mxu0 0
    %1950 = vmatprep.subr.bf16.mxu0 0
    %1951 = vmatpush1.bf16.xpose.msra.mxu0 0
    %1952 = vmatprep.subr.bf16.mxu0 0
    %1953 = vmatpush1.bf16.xpose.msra.mxu0 0
    %1954 = vmatprep.subr.bf16.mxu0 0
    %1955 = vmatpush1.bf16.xpose.msra.mxu0 %v1938
    %1956 = vmatprep.subr.bf16.mxu0 0
    %1957 = vmatpush2.bf16.xpose.msra.mxu0 0
    %1958 = vmatprep.subr.bf16.mxu0 0
    %1959 = vmatpush2.bf16.xpose.msra.mxu0 0
    %1960 = vmatprep.subr.bf16.mxu0 0
    %1961 = vmatpush2.bf16.xpose.msra.mxu0 0
    %1962 = vmatprep.subr.bf16.mxu0 0
    %1963 = vmatpush2.bf16.xpose.msra.mxu0 0
    %1964 = vmatprep.subr.bf16.mxu0 0
    %1965 = vmatpush2.bf16.xpose.msra.mxu0 0
    %1966 = vmatprep.subr.bf16.mxu0 0
    %1967 = vmatpush2.bf16.xpose.msra.mxu0 0
    %1968 = vmatprep.subr.bf16.mxu0 0
    %1969 = vmatpush2.bf16.xpose.msra.mxu0 0
    %1970 = vmatprep.subr.bf16.mxu0 0
    %1971 = vmatpush2.bf16.xpose.msra.mxu0 0
    %1972 = vmatprep.mubr.bf16.mxu0 0
    %1973 = vmatmul.mubr.bf16.gmra.mxu0 %v1935
    %v1974 = vpop.f32.mrf.mxu0
    %v1975 = vadd.f32 0.0, %v1974
    %v1976 = vpop.f32.mrf.mxu0
    %v1977 = vpop.f32.mrf.mxu0
    %v1978 = vpop.f32.mrf.mxu0
    %1979 = vdwg.mxu0
    %v1981 = vsel %vm465, %v1711, 0
    %v1984 = vsel %vm465, %v1725, 0
    %1986 = vmatprep.subr.bf16.mxu0 0
    %1987 = vmatpush1.bf16.xpose.msra.mxu0 0
    %1988 = vmatprep.subr.bf16.mxu0 0
    %1989 = vmatpush1.bf16.xpose.msra.mxu0 0
    %1990 = vmatprep.subr.bf16.mxu0 0
    %1991 = vmatpush1.bf16.xpose.msra.mxu0 0
    %1992 = vmatprep.subr.bf16.mxu0 0
    %1993 = vmatpush1.bf16.xpose.msra.mxu0 0
    %1994 = vmatprep.subr.bf16.mxu0 0
    %1995 = vmatpush1.bf16.xpose.msra.mxu0 0
    %1996 = vmatprep.subr.bf16.mxu0 0
    %1997 = vmatpush1.bf16.xpose.msra.mxu0 0
    %1998 = vmatprep.subr.bf16.mxu0 0
    %1999 = vmatpush1.bf16.xpose.msra.mxu0 0
    %2000 = vmatprep.subr.bf16.mxu0 0
    %2001 = vmatpush1.bf16.xpose.msra.mxu0 %v1984
    %2002 = vmatprep.subr.bf16.mxu0 0
    %2003 = vmatpush2.bf16.xpose.msra.mxu0 0
    %2004 = vmatprep.subr.bf16.mxu0 0
    %2005 = vmatpush2.bf16.xpose.msra.mxu0 0
    %2006 = vmatprep.subr.bf16.mxu0 0
    %2007 = vmatpush2.bf16.xpose.msra.mxu0 0
    %2008 = vmatprep.subr.bf16.mxu0 0
    %2009 = vmatpush2.bf16.xpose.msra.mxu0 0
    %2010 = vmatprep.subr.bf16.mxu0 0
    %2011 = vmatpush2.bf16.xpose.msra.mxu0 0
    %2012 = vmatprep.subr.bf16.mxu0 0
    %2013 = vmatpush2.bf16.xpose.msra.mxu0 0
    %2014 = vmatprep.subr.bf16.mxu0 0
    %2015 = vmatpush2.bf16.xpose.msra.mxu0 0
    %2016 = vmatprep.subr.bf16.mxu0 0
    %2017 = vmatpush2.bf16.xpose.msra.mxu0 0
    %2018 = vmatprep.mubr.bf16.mxu0 0
    %2019 = vmatmul.mubr.bf16.gmra.mxu0 %v1981
    %v2020 = vpop.f32.mrf.mxu0
    %v2021 = vadd.f32 0.0, %v2020
    %v2022 = vpop.f32.mrf.mxu0
    %v2023 = vpop.f32.mrf.mxu0
    %v2024 = vpop.f32.mrf.mxu0
    %2025 = vdwg.mxu0
    %v2027 = vsel %vm465, %v1713, 0
    %v2030 = vsel %vm465, %v1727, 0
    %2032 = vmatprep.subr.bf16.mxu0 0
    %2033 = vmatpush1.bf16.xpose.msra.mxu0 0
    %2034 = vmatprep.subr.bf16.mxu0 0
    %2035 = vmatpush1.bf16.xpose.msra.mxu0 0
    %2036 = vmatprep.subr.bf16.mxu0 0
    %2037 = vmatpush1.bf16.xpose.msra.mxu0 0
    %2038 = vmatprep.subr.bf16.mxu0 0
    %2039 = vmatpush1.bf16.xpose.msra.mxu0 0
    %2040 = vmatprep.subr.bf16.mxu0 0
    %2041 = vmatpush1.bf16.xpose.msra.mxu0 0
    %2042 = vmatprep.subr.bf16.mxu0 0
    %2043 = vmatpush1.bf16.xpose.msra.mxu0 0
    %2044 = vmatprep.subr.bf16.mxu0 0
    %2045 = vmatpush1.bf16.xpose.msra.mxu0 0
    %2046 = vmatprep.subr.bf16.mxu0 0
    %2047 = vmatpush1.bf16.xpose.msra.mxu0 %v2030
    %2048 = vmatprep.subr.bf16.mxu0 0
    %2049 = vmatpush2.bf16.xpose.msra.mxu0 0
    %2050 = vmatprep.subr.bf16.mxu0 0
    %2051 = vmatpush2.bf16.xpose.msra.mxu0 0
    %2052 = vmatprep.subr.bf16.mxu0 0
    %2053 = vmatpush2.bf16.xpose.msra.mxu0 0
    %2054 = vmatprep.subr.bf16.mxu0 0
    %2055 = vmatpush2.bf16.xpose.msra.mxu0 0
    %2056 = vmatprep.subr.bf16.mxu0 0
    %2057 = vmatpush2.bf16.xpose.msra.mxu0 0
    %2058 = vmatprep.subr.bf16.mxu0 0
    %2059 = vmatpush2.bf16.xpose.msra.mxu0 0
    %2060 = vmatprep.subr.bf16.mxu0 0
    %2061 = vmatpush2.bf16.xpose.msra.mxu0 0
    %2062 = vmatprep.subr.bf16.mxu0 0
    %2063 = vmatpush2.bf16.xpose.msra.mxu0 0
    %2064 = vmatprep.mubr.bf16.mxu0 0
    %2065 = vmatmul.mubr.bf16.gmra.mxu0 %v2027
    %v2066 = vpop.f32.mrf.mxu0
    %v2067 = vadd.f32 0.0, %v2066
    %v2068 = vpop.f32.mrf.mxu0
    %v2069 = vpop.f32.mrf.mxu0
    %v2070 = vpop.f32.mrf.mxu0
    %2071 = vdwg.mxu0
    %v2073 = vsel %vm465, %v1715, 0
    %v2076 = vsel %vm465, %v1729, 0
    %2078 = vmatprep.subr.bf16.mxu0 0
    %2079 = vmatpush1.bf16.xpose.msra.mxu0 0
    %2080 = vmatprep.subr.bf16.mxu0 0
    %2081 = vmatpush1.bf16.xpose.msra.mxu0 0
    %2082 = vmatprep.subr.bf16.mxu0 0
    %2083 = vmatpush1.bf16.xpose.msra.mxu0 0
    %2084 = vmatprep.subr.bf16.mxu0 0
    %2085 = vmatpush1.bf16.xpose.msra.mxu0 0
    %2086 = vmatprep.subr.bf16.mxu0 0
    %2087 = vmatpush1.bf16.xpose.msra.mxu0 0
    %2088 = vmatprep.subr.bf16.mxu0 0
    %2089 = vmatpush1.bf16.xpose.msra.mxu0 0
    %2090 = vmatprep.subr.bf16.mxu0 0
    %2091 = vmatpush1.bf16.xpose.msra.mxu0 0
    %2092 = vmatprep.subr.bf16.mxu0 0
    %2093 = vmatpush1.bf16.xpose.msra.mxu0 %v2076
    %2094 = vmatprep.subr.bf16.mxu0 0
    %2095 = vmatpush2.bf16.xpose.msra.mxu0 0
    %2096 = vmatprep.subr.bf16.mxu0 0
    %2097 = vmatpush2.bf16.xpose.msra.mxu0 0
    %2098 = vmatprep.subr.bf16.mxu0 0
    %2099 = vmatpush2.bf16.xpose.msra.mxu0 0
    %2100 = vmatprep.subr.bf16.mxu0 0
    %2101 = vmatpush2.bf16.xpose.msra.mxu0 0
    %2102 = vmatprep.subr.bf16.mxu0 0
    %2103 = vmatpush2.bf16.xpose.msra.mxu0 0
    %2104 = vmatprep.subr.bf16.mxu0 0
    %2105 = vmatpush2.bf16.xpose.msra.mxu0 0
    %2106 = vmatprep.subr.bf16.mxu0 0
    %2107 = vmatpush2.bf16.xpose.msra.mxu0 0
    %2108 = vmatprep.subr.bf16.mxu0 0
    %2109 = vmatpush2.bf16.xpose.msra.mxu0 0
    %2110 = vmatprep.mubr.bf16.mxu0 0
    %2111 = vmatmul.mubr.bf16.gmra.mxu0 %v2073
    %v2112 = vpop.f32.mrf.mxu0
    %v2113 = vadd.f32 0.0, %v2112
    %v2114 = vpop.f32.mrf.mxu0
    %v2115 = vpop.f32.mrf.mxu0
    %v2116 = vpop.f32.mrf.mxu0
    %2117 = vdwg.mxu0
    %v2118 = vsel %vm1357, %v1791, -inf
    %2119 = vmax.xlane.f32.xlu0 %v2118
    %v2120 = vpop.xlane.xlu0 %2119
    %v2121 = vsel %vm1357, %v1837, -inf
    %2122 = vmax.xlane.f32.xlu0 %v2121
    %v2123 = vpop.xlane.xlu0 %2122
    %v2124 = vsel %vm1357, %v1883, -inf
    %2125 = vmax.xlane.f32.xlu0 %v2124
    %v2126 = vpop.xlane.xlu0 %2125
    %v2127 = vsel %vm1357, %v1929, -inf
    %2128 = vmax.xlane.f32.xlu0 %v2127
    %v2129 = vpop.xlane.xlu0 %2128
    %v2130 = vsel %vm1357, %v1975, -inf
    %2131 = vmax.xlane.f32.xlu0 %v2130
    %v2132 = vpop.xlane.xlu0 %2131
    %v2133 = vsel %vm1357, %v2021, -inf
    %2134 = vmax.xlane.f32.xlu0 %v2133
    %v2135 = vpop.xlane.xlu0 %2134
    %v2136 = vsel %vm1357, %v2067, -inf
    %2137 = vmax.xlane.f32.xlu0 %v2136
    %v2138 = vpop.xlane.xlu0 %2137
    %v2139 = vsel %vm1357, %v2113, -inf
    %2140 = vmax.xlane.f32.xlu0 %v2139
    %v2141 = vpop.xlane.xlu0 %2140
    %v2142 = vsub.f32 %v1791, %v2120
    %v2143 = vsub.f32 %v1837, %v2123
    %v2144 = vsub.f32 %v1883, %v2126
    %v2145 = vsub.f32 %v1929, %v2129
    %v2146 = vsub.f32 %v1975, %v2132
    %v2147 = vsub.f32 %v2021, %v2135
    %v2148 = vsub.f32 %v2067, %v2138
    %v2149 = vsub.f32 %v2113, %v2141
    %v2150 = vmul.f32 %v2142, 1.442695
    %v2151 = vpow.pop %v2150
    %v2152 = vmul.f32 %v2143, 1.442695
    %v2153 = vpow.pop %v2152
    %v2154 = vmul.f32 %v2144, 1.442695
    %v2155 = vpow.pop %v2154
    %v2156 = vmul.f32 %v2145, 1.442695
    %v2157 = vpow.pop %v2156
    %v2158 = vmul.f32 %v2146, 1.442695
    %v2159 = vpow.pop %v2158
    %v2160 = vmul.f32 %v2147, 1.442695
    %v2161 = vpow.pop %v2160
    %v2162 = vmul.f32 %v2148, 1.442695
    %v2163 = vpow.pop %v2162
    %v2164 = vmul.f32 %v2149, 1.442695
    %v2165 = vpow.pop %v2164
    %v2166 = vsel %vm1357, %v2151, 0.0
    %2167 = vadd.xlane.f32.xlu0 %v2166
    %v2168 = vpop.xlane.xlu0 %2167
    %v2169 = vsel %vm1357, %v2153, 0.0
    %2170 = vadd.xlane.f32.xlu0 %v2169
    %v2171 = vpop.xlane.xlu0 %2170
    %v2172 = vsel %vm1357, %v2155, 0.0
    %2173 = vadd.xlane.f32.xlu0 %v2172
    %v2174 = vpop.xlane.xlu0 %2173
    %v2175 = vsel %vm1357, %v2157, 0.0
    %2176 = vadd.xlane.f32.xlu0 %v2175
    %v2177 = vpop.xlane.xlu0 %2176
    %v2178 = vsel %vm1357, %v2159, 0.0
    %2179 = vadd.xlane.f32.xlu0 %v2178
    %v2180 = vpop.xlane.xlu0 %2179
    %v2181 = vsel %vm1357, %v2161, 0.0
    %2182 = vadd.xlane.f32.xlu0 %v2181
    %v2183 = vpop.xlane.xlu0 %2182
    %v2184 = vsel %vm1357, %v2163, 0.0
    %2185 = vadd.xlane.f32.xlu0 %v2184
    %v2186 = vpop.xlane.xlu0 %2185
    %v2187 = vsel %vm1357, %v2165, 0.0
    %2188 = vadd.xlane.f32.xlu0 %v2187
    %v2189 = vpop.xlane.xlu0 %2188
    %v2190 = vrcp.pop %v2168
    %v2191 = vrcp.pop %v2171
    %v2192 = vrcp.pop %v2174
    %v2193 = vrcp.pop %v2177
    %v2194 = vrcp.pop %v2180
    %v2195 = vrcp.pop %v2183
    %v2196 = vrcp.pop %v2186
    %v2197 = vrcp.pop %v2189
    %v2198 = vmul.f32 %v2151, %v2190
    %v2199 = vmul.f32 %v2153, %v2191
    %v2200 = vmul.f32 %v2155, %v2192
    %v2201 = vmul.f32 %v2157, %v2193
    %v2202 = vmul.f32 %v2159, %v2194
    %v2203 = vmul.f32 %v2161, %v2195
    %v2204 = vmul.f32 %v2163, %v2196
    %v2205 = vmul.f32 %v2165, %v2197
    %v2206 = vpack.c.bf16 %v2198, %v2198
    %v2207 = vpack.c.bf16 %v2199, %v2199
    %v2208 = vpack.c.bf16 %v2200, %v2200
    %v2209 = vpack.c.bf16 %v2201, %v2201
    %v2210 = vpack.c.bf16 %v2202, %v2202
    %v2211 = vpack.c.bf16 %v2203, %v2203
    %v2212 = vpack.c.bf16 %v2204, %v2204
    %v2213 = vpack.c.bf16 %v2205, %v2205
    %v2215 = vsel %vm1357, %v2206, 0
    %2217 = vmatprep.subr.bf16.mxu0 0
    %2218 = vmatpush1.bf16.msra.mxu0 0
    %2219 = vmatprep.subr.bf16.mxu0 0
    %2220 = vmatpush1.bf16.msra.mxu0 0
    %2221 = vmatprep.subr.bf16.mxu0 0
    %2222 = vmatpush1.bf16.msra.mxu0 0
    %2223 = vmatprep.subr.bf16.mxu0 0
    %2224 = vmatpush1.bf16.msra.mxu0 0
    %2225 = vmatprep.subr.bf16.mxu0 0
    %2226 = vmatpush1.bf16.msra.mxu0 0
    %2227 = vmatprep.subr.bf16.mxu0 0
    %2228 = vmatpush1.bf16.msra.mxu0 0
    %2229 = vmatprep.subr.bf16.mxu0 0
    %2230 = vmatpush1.bf16.msra.mxu0 0
    %2231 = vmatprep.subr.bf16.mxu0 0
    %2232 = vmatpush1.bf16.msra.mxu0 %v1702
    %2233 = vmatprep.subr.bf16.mxu0 0
    %2234 = vmatpush2.bf16.msra.mxu0 0
    %2235 = vmatprep.subr.bf16.mxu0 0
    %2236 = vmatpush2.bf16.msra.mxu0 0
    %2237 = vmatprep.subr.bf16.mxu0 0
    %2238 = vmatpush2.bf16.msra.mxu0 0
    %2239 = vmatprep.subr.bf16.mxu0 0
    %2240 = vmatpush2.bf16.msra.mxu0 0
    %2241 = vmatprep.subr.bf16.mxu0 0
    %2242 = vmatpush2.bf16.msra.mxu0 0
    %2243 = vmatprep.subr.bf16.mxu0 0
    %2244 = vmatpush2.bf16.msra.mxu0 0
    %2245 = vmatprep.subr.bf16.mxu0 0
    %2246 = vmatpush2.bf16.msra.mxu0 0
    %2247 = vmatprep.subr.bf16.mxu0 0
    %2248 = vmatpush2.bf16.msra.mxu0 0
    %2249 = vmatprep.mubr.bf16.mxu0 0
    %2250 = vmatmul.mubr.bf16.gmra.mxu0 %v2215
    %v2251 = vpop.f32.mrf.mxu0
    %v2252 = vadd.f32 0.0, %v2251
    %v2253 = vpop.f32.mrf.mxu0
    %v2254 = vpop.f32.mrf.mxu0
    %v2255 = vpop.f32.mrf.mxu0
    %2256 = vdwg.mxu0
    %v2258 = vsel %vm1357, %v2207, 0
    %2260 = vmatprep.subr.bf16.mxu0 0
    %2261 = vmatpush1.bf16.msra.mxu0 0
    %2262 = vmatprep.subr.bf16.mxu0 0
    %2263 = vmatpush1.bf16.msra.mxu0 0
    %2264 = vmatprep.subr.bf16.mxu0 0
    %2265 = vmatpush1.bf16.msra.mxu0 0
    %2266 = vmatprep.subr.bf16.mxu0 0
    %2267 = vmatpush1.bf16.msra.mxu0 0
    %2268 = vmatprep.subr.bf16.mxu0 0
    %2269 = vmatpush1.bf16.msra.mxu0 0
    %2270 = vmatprep.subr.bf16.mxu0 0
    %2271 = vmatpush1.bf16.msra.mxu0 0
    %2272 = vmatprep.subr.bf16.mxu0 0
    %2273 = vmatpush1.bf16.msra.mxu0 0
    %2274 = vmatprep.subr.bf16.mxu0 0
    %2275 = vmatpush1.bf16.msra.mxu0 %v1703
    %2276 = vmatprep.subr.bf16.mxu0 0
    %2277 = vmatpush2.bf16.msra.mxu0 0
    %2278 = vmatprep.subr.bf16.mxu0 0
    %2279 = vmatpush2.bf16.msra.mxu0 0
    %2280 = vmatprep.subr.bf16.mxu0 0
    %2281 = vmatpush2.bf16.msra.mxu0 0
    %2282 = vmatprep.subr.bf16.mxu0 0
    %2283 = vmatpush2.bf16.msra.mxu0 0
    %2284 = vmatprep.subr.bf16.mxu0 0
    %2285 = vmatpush2.bf16.msra.mxu0 0
    %2286 = vmatprep.subr.bf16.mxu0 0
    %2287 = vmatpush2.bf16.msra.mxu0 0
    %2288 = vmatprep.subr.bf16.mxu0 0
    %2289 = vmatpush2.bf16.msra.mxu0 0
    %2290 = vmatprep.subr.bf16.mxu0 0
    %2291 = vmatpush2.bf16.msra.mxu0 0
    %2292 = vmatprep.mubr.bf16.mxu0 0
    %2293 = vmatmul.mubr.bf16.gmra.mxu0 %v2258
    %v2294 = vpop.f32.mrf.mxu0
    %v2295 = vadd.f32 0.0, %v2294
    %v2296 = vpop.f32.mrf.mxu0
    %v2297 = vpop.f32.mrf.mxu0
    %v2298 = vpop.f32.mrf.mxu0
    %2299 = vdwg.mxu0
    %v2301 = vsel %vm1357, %v2208, 0
    %2303 = vmatprep.subr.bf16.mxu0 0
    %2304 = vmatpush1.bf16.msra.mxu0 0
    %2305 = vmatprep.subr.bf16.mxu0 0
    %2306 = vmatpush1.bf16.msra.mxu0 0
    %2307 = vmatprep.subr.bf16.mxu0 0
    %2308 = vmatpush1.bf16.msra.mxu0 0
    %2309 = vmatprep.subr.bf16.mxu0 0
    %2310 = vmatpush1.bf16.msra.mxu0 0
    %2311 = vmatprep.subr.bf16.mxu0 0
    %2312 = vmatpush1.bf16.msra.mxu0 0
    %2313 = vmatprep.subr.bf16.mxu0 0
    %2314 = vmatpush1.bf16.msra.mxu0 0
    %2315 = vmatprep.subr.bf16.mxu0 0
    %2316 = vmatpush1.bf16.msra.mxu0 0
    %2317 = vmatprep.subr.bf16.mxu0 0
    %2318 = vmatpush1.bf16.msra.mxu0 %v1733
    %2319 = vmatprep.subr.bf16.mxu0 0
    %2320 = vmatpush2.bf16.msra.mxu0 0
    %2321 = vmatprep.subr.bf16.mxu0 0
    %2322 = vmatpush2.bf16.msra.mxu0 0
    %2323 = vmatprep.subr.bf16.mxu0 0
    %2324 = vmatpush2.bf16.msra.mxu0 0
    %2325 = vmatprep.subr.bf16.mxu0 0
    %2326 = vmatpush2.bf16.msra.mxu0 0
    %2327 = vmatprep.subr.bf16.mxu0 0
    %2328 = vmatpush2.bf16.msra.mxu0 0
    %2329 = vmatprep.subr.bf16.mxu0 0
    %2330 = vmatpush2.bf16.msra.mxu0 0
    %2331 = vmatprep.subr.bf16.mxu0 0
    %2332 = vmatpush2.bf16.msra.mxu0 0
    %2333 = vmatprep.subr.bf16.mxu0 0
    %2334 = vmatpush2.bf16.msra.mxu0 0
    %2335 = vmatprep.mubr.bf16.mxu0 0
    %2336 = vmatmul.mubr.bf16.gmra.mxu0 %v2301
    %v2337 = vpop.f32.mrf.mxu0
    %v2338 = vadd.f32 0.0, %v2337
    %v2339 = vpop.f32.mrf.mxu0
    %v2340 = vpop.f32.mrf.mxu0
    %v2341 = vpop.f32.mrf.mxu0
    %2342 = vdwg.mxu0
    %v2344 = vsel %vm1357, %v2209, 0
    %2346 = vmatprep.subr.bf16.mxu0 0
    %2347 = vmatpush1.bf16.msra.mxu0 0
    %2348 = vmatprep.subr.bf16.mxu0 0
    %2349 = vmatpush1.bf16.msra.mxu0 0
    %2350 = vmatprep.subr.bf16.mxu0 0
    %2351 = vmatpush1.bf16.msra.mxu0 0
    %2352 = vmatprep.subr.bf16.mxu0 0
    %2353 = vmatpush1.bf16.msra.mxu0 0
    %2354 = vmatprep.subr.bf16.mxu0 0
    %2355 = vmatpush1.bf16.msra.mxu0 0
    %2356 = vmatprep.subr.bf16.mxu0 0
    %2357 = vmatpush1.bf16.msra.mxu0 0
    %2358 = vmatprep.subr.bf16.mxu0 0
    %2359 = vmatpush1.bf16.msra.mxu0 0
    %2360 = vmatprep.subr.bf16.mxu0 0
    %2361 = vmatpush1.bf16.msra.mxu0 %v1735
    %2362 = vmatprep.subr.bf16.mxu0 0
    %2363 = vmatpush2.bf16.msra.mxu0 0
    %2364 = vmatprep.subr.bf16.mxu0 0
    %2365 = vmatpush2.bf16.msra.mxu0 0
    %2366 = vmatprep.subr.bf16.mxu0 0
    %2367 = vmatpush2.bf16.msra.mxu0 0
    %2368 = vmatprep.subr.bf16.mxu0 0
    %2369 = vmatpush2.bf16.msra.mxu0 0
    %2370 = vmatprep.subr.bf16.mxu0 0
    %2371 = vmatpush2.bf16.msra.mxu0 0
    %2372 = vmatprep.subr.bf16.mxu0 0
    %2373 = vmatpush2.bf16.msra.mxu0 0
    %2374 = vmatprep.subr.bf16.mxu0 0
    %2375 = vmatpush2.bf16.msra.mxu0 0
    %2376 = vmatprep.subr.bf16.mxu0 0
    %2377 = vmatpush2.bf16.msra.mxu0 0
    %2378 = vmatprep.mubr.bf16.mxu0 0
    %2379 = vmatmul.mubr.bf16.gmra.mxu0 %v2344
    %v2380 = vpop.f32.mrf.mxu0
    %v2381 = vadd.f32 0.0, %v2380
    %v2382 = vpop.f32.mrf.mxu0
    %v2383 = vpop.f32.mrf.mxu0
    %v2384 = vpop.f32.mrf.mxu0
    %2385 = vdwg.mxu0
    %v2387 = vsel %vm1357, %v2210, 0
    %2389 = vmatprep.subr.bf16.mxu0 0
    %2390 = vmatpush1.bf16.msra.mxu0 0
    %2391 = vmatprep.subr.bf16.mxu0 0
    %2392 = vmatpush1.bf16.msra.mxu0 0
    %2393 = vmatprep.subr.bf16.mxu0 0
    %2394 = vmatpush1.bf16.msra.mxu0 0
    %2395 = vmatprep.subr.bf16.mxu0 0
    %2396 = vmatpush1.bf16.msra.mxu0 0
    %2397 = vmatprep.subr.bf16.mxu0 0
    %2398 = vmatpush1.bf16.msra.mxu0 0
    %2399 = vmatprep.subr.bf16.mxu0 0
    %2400 = vmatpush1.bf16.msra.mxu0 0
    %2401 = vmatprep.subr.bf16.mxu0 0
    %2402 = vmatpush1.bf16.msra.mxu0 0
    %2403 = vmatprep.subr.bf16.mxu0 0
    %2404 = vmatpush1.bf16.msra.mxu0 %v1739
    %2405 = vmatprep.subr.bf16.mxu0 0
    %2406 = vmatpush2.bf16.msra.mxu0 0
    %2407 = vmatprep.subr.bf16.mxu0 0
    %2408 = vmatpush2.bf16.msra.mxu0 0
    %2409 = vmatprep.subr.bf16.mxu0 0
    %2410 = vmatpush2.bf16.msra.mxu0 0
    %2411 = vmatprep.subr.bf16.mxu0 0
    %2412 = vmatpush2.bf16.msra.mxu0 0
    %2413 = vmatprep.subr.bf16.mxu0 0
    %2414 = vmatpush2.bf16.msra.mxu0 0
    %2415 = vmatprep.subr.bf16.mxu0 0
    %2416 = vmatpush2.bf16.msra.mxu0 0
    %2417 = vmatprep.subr.bf16.mxu0 0
    %2418 = vmatpush2.bf16.msra.mxu0 0
    %2419 = vmatprep.subr.bf16.mxu0 0
    %2420 = vmatpush2.bf16.msra.mxu0 0
    %2421 = vmatprep.mubr.bf16.mxu0 0
    %2422 = vmatmul.mubr.bf16.gmra.mxu0 %v2387
    %v2423 = vpop.f32.mrf.mxu0
    %v2424 = vadd.f32 0.0, %v2423
    %v2425 = vpop.f32.mrf.mxu0
    %v2426 = vpop.f32.mrf.mxu0
    %v2427 = vpop.f32.mrf.mxu0
    %2428 = vdwg.mxu0
    %v2430 = vsel %vm1357, %v2211, 0
    %2432 = vmatprep.subr.bf16.mxu0 0
    %2433 = vmatpush1.bf16.msra.mxu0 0
    %2434 = vmatprep.subr.bf16.mxu0 0
    %2435 = vmatpush1.bf16.msra.mxu0 0
    %2436 = vmatprep.subr.bf16.mxu0 0
    %2437 = vmatpush1.bf16.msra.mxu0 0
    %2438 = vmatprep.subr.bf16.mxu0 0
    %2439 = vmatpush1.bf16.msra.mxu0 0
    %2440 = vmatprep.subr.bf16.mxu0 0
    %2441 = vmatpush1.bf16.msra.mxu0 0
    %2442 = vmatprep.subr.bf16.mxu0 0
    %2443 = vmatpush1.bf16.msra.mxu0 0
    %2444 = vmatprep.subr.bf16.mxu0 0
    %2445 = vmatpush1.bf16.msra.mxu0 0
    %2446 = vmatprep.subr.bf16.mxu0 0
    %2447 = vmatpush1.bf16.msra.mxu0 %v1741
    %2448 = vmatprep.subr.bf16.mxu0 0
    %2449 = vmatpush2.bf16.msra.mxu0 0
    %2450 = vmatprep.subr.bf16.mxu0 0
    %2451 = vmatpush2.bf16.msra.mxu0 0
    %2452 = vmatprep.subr.bf16.mxu0 0
    %2453 = vmatpush2.bf16.msra.mxu0 0
    %2454 = vmatprep.subr.bf16.mxu0 0
    %2455 = vmatpush2.bf16.msra.mxu0 0
    %2456 = vmatprep.subr.bf16.mxu0 0
    %2457 = vmatpush2.bf16.msra.mxu0 0
    %2458 = vmatprep.subr.bf16.mxu0 0
    %2459 = vmatpush2.bf16.msra.mxu0 0
    %2460 = vmatprep.subr.bf16.mxu0 0
    %2461 = vmatpush2.bf16.msra.mxu0 0
    %2462 = vmatprep.subr.bf16.mxu0 0
    %2463 = vmatpush2.bf16.msra.mxu0 0
    %2464 = vmatprep.mubr.bf16.mxu0 0
    %2465 = vmatmul.mubr.bf16.gmra.mxu0 %v2430
    %v2466 = vpop.f32.mrf.mxu0
    %v2467 = vadd.f32 0.0, %v2466
    %v2468 = vpop.f32.mrf.mxu0
    %v2469 = vpop.f32.mrf.mxu0
    %v2470 = vpop.f32.mrf.mxu0
    %2471 = vdwg.mxu0
    %v2473 = vsel %vm1357, %v2212, 0
    %2475 = vmatprep.subr.bf16.mxu0 0
    %2476 = vmatpush1.bf16.msra.mxu0 0
    %2477 = vmatprep.subr.bf16.mxu0 0
    %2478 = vmatpush1.bf16.msra.mxu0 0
    %2479 = vmatprep.subr.bf16.mxu0 0
    %2480 = vmatpush1.bf16.msra.mxu0 0
    %2481 = vmatprep.subr.bf16.mxu0 0
    %2482 = vmatpush1.bf16.msra.mxu0 0
    %2483 = vmatprep.subr.bf16.mxu0 0
    %2484 = vmatpush1.bf16.msra.mxu0 0
    %2485 = vmatprep.subr.bf16.mxu0 0
    %2486 = vmatpush1.bf16.msra.mxu0 0
    %2487 = vmatprep.subr.bf16.mxu0 0
    %2488 = vmatpush1.bf16.msra.mxu0 0
    %2489 = vmatprep.subr.bf16.mxu0 0
    %2490 = vmatpush1.bf16.msra.mxu0 %v1745
    %2491 = vmatprep.subr.bf16.mxu0 0
    %2492 = vmatpush2.bf16.msra.mxu0 0
    %2493 = vmatprep.subr.bf16.mxu0 0
    %2494 = vmatpush2.bf16.msra.mxu0 0
    %2495 = vmatprep.subr.bf16.mxu0 0
    %2496 = vmatpush2.bf16.msra.mxu0 0
    %2497 = vmatprep.subr.bf16.mxu0 0
    %2498 = vmatpush2.bf16.msra.mxu0 0
    %2499 = vmatprep.subr.bf16.mxu0 0
    %2500 = vmatpush2.bf16.msra.mxu0 0
    %2501 = vmatprep.subr.bf16.mxu0 0
    %2502 = vmatpush2.bf16.msra.mxu0 0
    %2503 = vmatprep.subr.bf16.mxu0 0
    %2504 = vmatpush2.bf16.msra.mxu0 0
    %2505 = vmatprep.subr.bf16.mxu0 0
    %2506 = vmatpush2.bf16.msra.mxu0 0
    %2507 = vmatprep.mubr.bf16.mxu0 0
    %2508 = vmatmul.mubr.bf16.gmra.mxu0 %v2473
    %v2509 = vpop.f32.mrf.mxu0
    %v2510 = vadd.f32 0.0, %v2509
    %v2511 = vpop.f32.mrf.mxu0
    %v2512 = vpop.f32.mrf.mxu0
    %v2513 = vpop.f32.mrf.mxu0
    %2514 = vdwg.mxu0
    %v2516 = vsel %vm1357, %v2213, 0
    %2518 = vmatprep.subr.bf16.mxu0 0
    %2519 = vmatpush1.bf16.msra.mxu0 0
    %2520 = vmatprep.subr.bf16.mxu0 0
    %2521 = vmatpush1.bf16.msra.mxu0 0
    %2522 = vmatprep.subr.bf16.mxu0 0
    %2523 = vmatpush1.bf16.msra.mxu0 0
    %2524 = vmatprep.subr.bf16.mxu0 0
    %2525 = vmatpush1.bf16.msra.mxu0 0
    %2526 = vmatprep.subr.bf16.mxu0 0
    %2527 = vmatpush1.bf16.msra.mxu0 0
    %2528 = vmatprep.subr.bf16.mxu0 0
    %2529 = vmatpush1.bf16.msra.mxu0 0
    %2530 = vmatprep.subr.bf16.mxu0 0
    %2531 = vmatpush1.bf16.msra.mxu0 0
    %2532 = vmatprep.subr.bf16.mxu0 0
    %2533 = vmatpush1.bf16.msra.mxu0 %v1747
    %2534 = vmatprep.subr.bf16.mxu0 0
    %2535 = vmatpush2.bf16.msra.mxu0 0
    %2536 = vmatprep.subr.bf16.mxu0 0
    %2537 = vmatpush2.bf16.msra.mxu0 0
    %2538 = vmatprep.subr.bf16.mxu0 0
    %2539 = vmatpush2.bf16.msra.mxu0 0
    %2540 = vmatprep.subr.bf16.mxu0 0
    %2541 = vmatpush2.bf16.msra.mxu0 0
    %2542 = vmatprep.subr.bf16.mxu0 0
    %2543 = vmatpush2.bf16.msra.mxu0 0
    %2544 = vmatprep.subr.bf16.mxu0 0
    %2545 = vmatpush2.bf16.msra.mxu0 0
    %2546 = vmatprep.subr.bf16.mxu0 0
    %2547 = vmatpush2.bf16.msra.mxu0 0
    %2548 = vmatprep.subr.bf16.mxu0 0
    %2549 = vmatpush2.bf16.msra.mxu0 0
    %2550 = vmatprep.mubr.bf16.mxu0 0
    %2551 = vmatmul.mubr.bf16.gmra.mxu0 %v2516
    %v2552 = vpop.f32.mrf.mxu0
    %v2553 = vadd.f32 0.0, %v2552
    %v2554 = vpop.f32.mrf.mxu0
    %v2555 = vpop.f32.mrf.mxu0
    %v2556 = vpop.f32.mrf.mxu0
    %2557 = vdwg.mxu0
    %v2558 = vpack.c.bf16 %v2252, %v2252
    %v2559 = vpack.c.bf16 %v2295, %v2295
    %v2560 = vpack.c.bf16 %v2338, %v2338
    %v2561 = vpack.c.bf16 %v2381, %v2381
    %v2562 = vpack.c.bf16 %v2424, %v2424
    %v2563 = vpack.c.bf16 %v2467, %v2467
    %v2564 = vpack.c.bf16 %v2510, %v2510
    %v2565 = vpack.c.bf16 %v2553, %v2553
    %2568 = vrot.lane.b32.xlu0 %v2560, 8
    %v2569 = vpop.permute.xlu0 %2568
    %2570 = vrot.lane.b32.xlu0 %v2561, 8
    %v2571 = vpop.permute.xlu0 %2570
    %2574 = vrot.lane.b32.xlu0 %v2562, 16
    %v2575 = vpop.permute.xlu0 %2574
    %2576 = vrot.lane.b32.xlu0 %v2563, 16
    %v2577 = vpop.permute.xlu0 %2576
    %2580 = vrot.lane.b32.xlu0 %v2564, 24
    %v2581 = vpop.permute.xlu0 %2580
    %2582 = vrot.lane.b32.xlu0 %v2565, 24
    %v2583 = vpop.permute.xlu0 %2582
    %v2586 = vsel %vm465, %v2558, %v2569
    %v2589 = vsel %vm465, %v2559, %v2571
    %v2591 = vsel %vm1357, %v2586, %v2575
    %v2593 = vsel %vm1357, %v2589, %v2577
    %v2595 = vsel %vm1362, %v2591, %v2581
    %v2597 = vsel %vm1362, %v2593, %v2583
    %v2598 = vld [vmem:[%s10] sm:$0xf]
    %v2599 = vld [vmem:[%s10 + $0x4] sm:$0xf]
    %v2600 = vld [vmem:[%s10 + $0x8] sm:$0xf]
    %v2601 = vld [vmem:[%s10 + $0xc] sm:$0xf]
    %v2602 = vld [vmem:[#allocation16] sm:$0x1]
    %v2604 = vlaneseq
    %v2605 = vshrl.u32 %v2604, 7
    %v2606 = vsub.s32 0, %v2605
    %v2607 = vrot.slane %v2602, %v2606
    %v2611 = vunpack.c.l.b16 %v2595
    %v2612 = vunpack.c.l.b16 %v2597
    %v2613 = vpack.c.b16 %v2612, %v2611
    %v2618 = vunpack.c.l.b16 %v2598
    %v2619 = vunpack.c.l.b16 %v2599
    %v2620 = vunpack.c.l.b16 %v2600
    %v2621 = vunpack.c.l.b16 %v2601
    %v2622 = vpack.c.b16 %v2619, %v2618
    %v2623 = vpack.c.b16 %v2621, %v2620
    %v2627 = vsel %vm308, %v2613, 0
    %2629 = vmatprep.subr.bf16.mxu0 0
    %2630 = vmatpush1.bf16.msra.mxu0 0
    %2631 = vmatprep.subr.bf16.mxu0 0
    %2632 = vmatpush1.bf16.msra.mxu0 0
    %2633 = vmatprep.subr.bf16.mxu0 0
    %2634 = vmatpush1.bf16.msra.mxu0 0
    %2635 = vmatprep.subr.bf16.mxu0 0
    %2636 = vmatpush1.bf16.msra.mxu0 0
    %2637 = vmatprep.subr.bf16.mxu0 0
    %2638 = vmatpush1.bf16.msra.mxu0 0
    %2639 = vmatprep.subr.bf16.mxu0 0
    %2640 = vmatpush1.bf16.msra.mxu0 0
    %2641 = vmatprep.subr.bf16.mxu0 0
    %2642 = vmatpush1.bf16.msra.mxu0 %v2623
    %2643 = vmatprep.subr.bf16.mxu0 0
    %2644 = vmatpush1.bf16.msra.mxu0 %v2622
    %2645 = vmatprep.subr.bf16.mxu0 0
    %2646 = vmatpush2.bf16.msra.mxu0 0
    %2647 = vmatprep.subr.bf16.mxu0 0
    %2648 = vmatpush2.bf16.msra.mxu0 0
    %2649 = vmatprep.subr.bf16.mxu0 0
    %2650 = vmatpush2.bf16.msra.mxu0 0
    %2651 = vmatprep.subr.bf16.mxu0 0
    %2652 = vmatpush2.bf16.msra.mxu0 0
    %2653 = vmatprep.subr.bf16.mxu0 0
    %2654 = vmatpush2.bf16.msra.mxu0 0
    %2655 = vmatprep.subr.bf16.mxu0 0
    %2656 = vmatpush2.bf16.msra.mxu0 0
    %2657 = vmatprep.subr.bf16.mxu0 0
    %2658 = vmatpush2.bf16.msra.mxu0 0
    %2659 = vmatprep.subr.bf16.mxu0 0
    %2660 = vmatpush2.bf16.msra.mxu0 0
    %2661 = vmatprep.mubr.bf16.mxu0 0
    %2662 = vmatmul.mubr.bf16.gmra.mxu0 %v2627
    %v2663 = vpop.f32.mrf.mxu0
    %v2664 = vadd.f32 %v2607, %v2663
    %v2665 = vpop.f32.mrf.mxu0
    %v2666 = vpop.f32.mrf.mxu0
    %v2667 = vadd.f32 %v2607, %v2666
    %v2668 = vpop.f32.mrf.mxu0
    %2669 = vdwg.mxu0
    %v2670 = vadd.f32 %v1484, %v2664
    %v2671 = vadd.f32 %v1485, %v2667
    %v2672 = vsel %vm308, %v2670, 0.0
    %2673 = vadd.xlane.f32.xlu0 %v2672
    %v2674 = vpop.xlane.xlu0 %2673
    %v2675 = vsel %vm308, %v2671, 0.0
    %2676 = vadd.xlane.f32.xlu0 %v2675
    %v2677 = vpop.xlane.xlu0 %2676
    %v2678 = vmul.f32 %v2674, %v1447
    %v2679 = vmul.f32 %v2677, %v1447
    %v2680 = vsub.f32 %v2670, %v2678
    %v2681 = vsub.f32 %v2671, %v2679
    %v2682 = vmul.f32 %v2680, %v2680
    %v2683 = vmul.f32 %v2681, %v2681
    %v2684 = vsel %vm308, %v2682, 0.0
    %2685 = vadd.xlane.f32.xlu0 %v2684
    %v2686 = vpop.xlane.xlu0 %2685
    %v2687 = vsel %vm308, %v2683, 0.0
    %2688 = vadd.xlane.f32.xlu0 %v2687
    %v2689 = vpop.xlane.xlu0 %2688
    %v2690 = vmul.f32 %v2686, %v1447
    %v2691 = vmul.f32 %v2689, %v1447
    %v2692 = vadd.f32 %v2690, 1e-05
    %v2693 = vadd.f32 %v2691, 1e-05
    %v2694 = vrsqrt.pop %v2692
    %v2695 = vrsqrt.pop %v2693
    %v2696 = vmul.f32 %v2680, %v2694
    %v2697 = vmul.f32 %v2681, %v2695
    %v2698 = vld [vmem:[#allocation20] sm:$0x1]
    %v2700 = vlaneseq
    %v2701 = vshrl.u32 %v2700, 7
    %v2702 = vsub.s32 0, %v2701
    %v2703 = vrot.slane %v2698, %v2702
    %v2705 = vmul.f32 %v2696, %v2703
    %v2706 = vmul.f32 %v2697, %v2703
    %v2707 = vld [vmem:[#allocation22] sm:$0x1]
    %v2709 = vlaneseq
    %v2710 = vshrl.u32 %v2709, 7
    %v2711 = vsub.s32 0, %v2710
    %v2712 = vrot.slane %v2707, %v2711
    %v2714 = vadd.f32 %v2705, %v2712
    %v2715 = vadd.f32 %v2706, %v2712
    %v2716 = vpack.c.bf16 %v2715, %v2714
    %v2717 = vld [vmem:[#allocation26] sm:$0xf]
    %v2718 = vld [vmem:[#allocation26 + $0x4] sm:$0xf]
    %v2719 = vld [vmem:[#allocation26 + $0x8] sm:$0xf]
    %v2720 = vld [vmem:[#allocation26 + $0xc] sm:$0xf]
    %v2721 = vld [vmem:[%s19] sm:$0x1]
    %v2723 = vlaneseq
    %v2724 = vshrl.u32 %v2723, 7
    %v2725 = vsub.s32 0, %v2724
    %v2726 = vrot.slane %v2721, %v2725
    %v2732 = vunpack.c.l.b16 %v2717
    %v2733 = vunpack.c.l.b16 %v2718
    %v2734 = vunpack.c.l.b16 %v2719
    %v2735 = vunpack.c.l.b16 %v2720
    %v2736 = vpack.c.b16 %v2733, %v2732
    %v2737 = vpack.c.b16 %v2735, %v2734
    %v2741 = vsel %vm308, %v2716, 0
    %2743 = vmatprep.subr.bf16.mxu0 0
    %2744 = vmatpush1.bf16.msra.mxu0 0
    %2745 = vmatprep.subr.bf16.mxu0 0
    %2746 = vmatpush1.bf16.msra.mxu0 0
    %2747 = vmatprep.subr.bf16.mxu0 0
    %2748 = vmatpush1.bf16.msra.mxu0 0
    %2749 = vmatprep.subr.bf16.mxu0 0
    %2750 = vmatpush1.bf16.msra.mxu0 0
    %2751 = vmatprep.subr.bf16.mxu0 0
    %2752 = vmatpush1.bf16.msra.mxu0 0
    %2753 = vmatprep.subr.bf16.mxu0 0
    %2754 = vmatpush1.bf16.msra.mxu0 0
    %2755 = vmatprep.subr.bf16.mxu0 0
    %2756 = vmatpush1.bf16.msra.mxu0 %v2737
    %2757 = vmatprep.subr.bf16.mxu0 0
    %2758 = vmatpush1.bf16.msra.mxu0 %v2736
    %2759 = vmatprep.subr.bf16.mxu0 0
    %2760 = vmatpush2.bf16.msra.mxu0 0
    %2761 = vmatprep.subr.bf16.mxu0 0
    %2762 = vmatpush2.bf16.msra.mxu0 0
    %2763 = vmatprep.subr.bf16.mxu0 0
    %2764 = vmatpush2.bf16.msra.mxu0 0
    %2765 = vmatprep.subr.bf16.mxu0 0
    %2766 = vmatpush2.bf16.msra.mxu0 0
    %2767 = vmatprep.subr.bf16.mxu0 0
    %2768 = vmatpush2.bf16.msra.mxu0 0
    %2769 = vmatprep.subr.bf16.mxu0 0
    %2770 = vmatpush2.bf16.msra.mxu0 0
    %2771 = vmatprep.subr.bf16.mxu0 0
    %2772 = vmatpush2.bf16.msra.mxu0 0
    %2773 = vmatprep.subr.bf16.mxu0 0
    %2774 = vmatpush2.bf16.msra.mxu0 0
    %2775 = vmatprep.mubr.bf16.mxu0 0
    %2776 = vmatmul.mubr.bf16.gmra.mxu0 %v2741
    %v2777 = vpop.f32.mrf.mxu0
    %v2778 = vadd.f32 %v2726, %v2777
    %v2779 = vpop.f32.mrf.mxu0
    %v2780 = vpop.f32.mrf.mxu0
    %v2781 = vadd.f32 %v2726, %v2780
    %v2782 = vpop.f32.mrf.mxu0
    %2783 = vdwg.mxu0
    %v2784 = vmax.f32 %v2778, 0.0
    %v2785 = vmax.f32 %v2781, 0.0
    %v2786 = vpack.c.bf16 %v2785, %v2784
    %v2787 = vld [vmem:[%s20] sm:$0xf]
    %v2788 = vld [vmem:[%s20 + $0x4] sm:$0xf]
    %v2789 = vld [vmem:[%s20 + $0x8] sm:$0xf]
    %v2790 = vld [vmem:[%s20 + $0xc] sm:$0xf]
    %v2791 = vld [vmem:[%s20 + $0x10] sm:$0xf]
    %v2792 = vld [vmem:[%s20 + $0x14] sm:$0xf]
    %v2793 = vld [vmem:[%s20 + $0x18] sm:$0xf]
    %v2794 = vld [vmem:[%s20 + $0x1c] sm:$0xf]
    %v2795 = vld [vmem:[%s21] sm:$0x1]
    %v2797 = vlaneseq
    %v2798 = vshrl.u32 %v2797, 7
    %v2799 = vsub.s32 0, %v2798
    %v2800 = vrot.slane %v2795, %v2799
    %v2810 = vunpack.c.l.b16 %v2787
    %v2811 = vunpack.c.l.b16 %v2788
    %v2812 = vunpack.c.l.b16 %v2789
    %v2813 = vunpack.c.l.b16 %v2790
    %v2814 = vunpack.c.l.b16 %v2791
    %v2815 = vunpack.c.l.b16 %v2792
    %v2816 = vunpack.c.l.b16 %v2793
    %v2817 = vunpack.c.l.b16 %v2794
    %v2818 = vpack.c.b16 %v2811, %v2810
    %v2819 = vpack.c.b16 %v2813, %v2812
    %v2820 = vpack.c.b16 %v2815, %v2814
    %v2821 = vpack.c.b16 %v2817, %v2816
    %vm2826 = vcmask 523264
    %v2828 = vsel %vm2826, %v2786, 0
    %2830 = vmatprep.subr.bf16.mxu0 0
    %2831 = vmatpush1.bf16.msra.mxu0 0
    %2832 = vmatprep.subr.bf16.mxu0 0
    %2833 = vmatpush1.bf16.msra.mxu0 0
    %2834 = vmatprep.subr.bf16.mxu0 0
    %2835 = vmatpush1.bf16.msra.mxu0 0
    %2836 = vmatprep.subr.bf16.mxu0 0
    %2837 = vmatpush1.bf16.msra.mxu0 0
    %2838 = vmatprep.subr.bf16.mxu0 0
    %2839 = vmatpush1.bf16.msra.mxu0 %v2821
    %2840 = vmatprep.subr.bf16.mxu0 0
    %2841 = vmatpush1.bf16.msra.mxu0 %v2820
    %2842 = vmatprep.subr.bf16.mxu0 0
    %2843 = vmatpush1.bf16.msra.mxu0 %v2819
    %2844 = vmatprep.subr.bf16.mxu0 0
    %2845 = vmatpush1.bf16.msra.mxu0 %v2818
    %2846 = vmatprep.subr.bf16.mxu0 0
    %2847 = vmatpush2.bf16.msra.mxu0 0
    %2848 = vmatprep.subr.bf16.mxu0 0
    %2849 = vmatpush2.bf16.msra.mxu0 0
    %2850 = vmatprep.subr.bf16.mxu0 0
    %2851 = vmatpush2.bf16.msra.mxu0 0
    %2852 = vmatprep.subr.bf16.mxu0 0
    %2853 = vmatpush2.bf16.msra.mxu0 0
    %2854 = vmatprep.subr.bf16.mxu0 0
    %2855 = vmatpush2.bf16.msra.mxu0 0
    %2856 = vmatprep.subr.bf16.mxu0 0
    %2857 = vmatpush2.bf16.msra.mxu0 0
    %2858 = vmatprep.subr.bf16.mxu0 0
    %2859 = vmatpush2.bf16.msra.mxu0 0
    %2860 = vmatprep.subr.bf16.mxu0 0
    %2861 = vmatpush2.bf16.msra.mxu0 0
    %2862 = vmatprep.mubr.bf16.mxu0 0
    %2863 = vmatmul.mubr.bf16.gmra.mxu0 %v2828
    %v2864 = vpop.f32.mrf.mxu0
    %v2865 = vadd.f32 %v2800, %v2864
    %v2866 = vpop.f32.mrf.mxu0
    %v2867 = vpop.f32.mrf.mxu0
    %v2868 = vadd.f32 %v2800, %v2867
    %v2869 = vpop.f32.mrf.mxu0
    %2870 = vdwg.mxu0
    %v2871 = vadd.f32 %v2714, %v2865
    %v2872 = vadd.f32 %v2715, %v2868
    %v2873 = vsel %vm308, %v2871, 0.0
    %2874 = vadd.xlane.f32.xlu0 %v2873
    %v2875 = vpop.xlane.xlu0 %2874
    %v2876 = vsel %vm308, %v2872, 0.0
    %2877 = vadd.xlane.f32.xlu0 %v2876
    %v2878 = vpop.xlane.xlu0 %2877
    %v2879 = vmul.f32 %v2875, %v1447
    %v2880 = vmul.f32 %v2878, %v1447
    %v2881 = vsub.f32 %v2871, %v2879
    %v2882 = vsub.f32 %v2872, %v2880
    %v2883 = vmul.f32 %v2881, %v2881
    %v2884 = vmul.f32 %v2882, %v2882
    %v2885 = vsel %vm308, %v2883, 0.0
    %2886 = vadd.xlane.f32.xlu0 %v2885
    %v2887 = vpop.xlane.xlu0 %2886
    %v2888 = vsel %vm308, %v2884, 0.0
    %2889 = vadd.xlane.f32.xlu0 %v2888
    %v2890 = vpop.xlane.xlu0 %2889
    %v2891 = vmul.f32 %v2887, %v1447
    %v2892 = vmul.f32 %v2890, %v1447
    %v2893 = vadd.f32 %v2891, 1e-05
    %v2894 = vadd.f32 %v2892, 1e-05
    %v2895 = vrsqrt.pop %v2893
    %v2896 = vrsqrt.pop %v2894
    %v2897 = vmul.f32 %v2881, %v2895
    %v2898 = vmul.f32 %v2882, %v2896
    %v2899 = vld [vmem:[#allocation23] sm:$0x1]
    %v2901 = vlaneseq
    %v2902 = vshrl.u32 %v2901, 7
    %v2903 = vsub.s32 0, %v2902
    %v2904 = vrot.slane %v2899, %v2903
    %v2906 = vmul.f32 %v2897, %v2904
    %v2907 = vmul.f32 %v2898, %v2904
    %v2908 = vld [vmem:[#allocation25] sm:$0x1]
    %v2910 = vlaneseq
    %v2911 = vshrl.u32 %v2910, 7
    %v2912 = vsub.s32 0, %v2911
    %v2913 = vrot.slane %v2908, %v2912
    %v2915 = vadd.f32 %v2906, %v2913
    %v2916 = vadd.f32 %v2907, %v2913
    %2917 = vst.msk [vmem:[#allocation28] sm:$0xff] %vm308, %v2915
    %2918 = vst.msk [vmem:[#allocation28 + $0x8] sm:$0xff] %vm308, %v2916
    // Predicated region
    $region154: #{tpu_custom_call.1} parent=1 // pred_check
      _
    $region155: #{tpu_custom_call.1} parent=1 // pred_check_branch
      %2920 = sbr.rel (0) target = $region157
    $region156: #{tpu_custom_call.1} parent=1 // pred_region
      %s2922 = ssub.s32 256, 256
      %2923 = vsyncadd [#allocation4], %s2922
      %s2924 = sshll.u32 [#allocation28], 4
      %s2925 = int_to_ptr.vmem [resolvable:$true] %s2924
      %2930 = dma.vmem_to_hbm [thread:$0]  %s2925, 256, %s22, [#allocation4], 128, 128, 8
    $region157: #{tpu_custom_call.1} parent=1 // pred_fallthru
      _
    // Predicated region
    $region158: #{tpu_custom_call.1} parent=1 // pred_check
      _
    $region159: #{tpu_custom_call.1} parent=1 // pred_check_branch
      %2932 = sbr.rel (0) target = $region161
    $region160: #{tpu_custom_call.1} parent=1 // pred_region
      %2933 = dma.done [#allocation4], 256
    $region161: #{tpu_custom_call.1} parent=1 // pred_fallthru
      _
    %2934 = vsyncpa [#allocation3], 1
    %2935 = vsyncpa [#allocation6], 1
    %2936 = vsyncpa [#allocation9], 1
    %2937 = vsyncpa [#allocation12], 1
    %2938 = vsyncpa [#allocation15], 1
    %2939 = vsyncpa [#allocation18], 1
    %2940 = vsyncpa [#allocation21], 1
    %2941 = vsyncpa [#allocation24], 1
    %2942 = vsyncpa [#allocation27], 1
    %2943 = vsyncpa [#allocation4], 1

</llo_original>
